<compile_context>
chip_gen: v5e
topology: v5e:2x2
jax: 0.10.0
libtpu: 0.0.40
codegen_flags: <defaults>
</compile_context>

<pallas_src>
import functools

import jax
import jax.numpy as jnp
import numpy as np
from jax.experimental import pallas as pl
from jax.experimental.pallas import tpu as pltpu

C_MID = 32                 # hidden channels of TeacherNet
N_TAPS = 9                 # 3x3 kernel taps
K_COL = N_TAPS * C_MID     # im2col rows for the Cin=32 convs (no bias row)
N_CASC = 5                 # cascades in DCTeacherNet


# ------------------------------ fused kernel ---------------------------------

def _fused_kernel(x_ref, mk2_ref, om2_ref, tmask_ref,
                  w1_ref, b1_ref, wm_ref, bm_ref, w5_ref, b5_ref,
                  gcat_ref, gstack_ref,
                  x1234_ref, x5_ref, dc_ref,
                  colm_ref, cur_ref, pred_ref, *, H, W, bpb):
    HW = H * W
    L = bpb * HW
    offs = [(dy - 1) * W + (dx - 1) for dy in range(3) for dx in range(3)]
    c = pl.program_id(1)          # cascade index (arbitrary / sequential axis)

    # cascade 0 starts from the undersampled input image; later cascades from the
    # data-consistency output carried in the VMEM scratch `cur_ref`.
    @pl.when(c == 0)
    def _():
        cur_ref[...] = x_ref[...]

    def shifted(a, t, s):
        # Spatial tap t of activation a; circular XLU lane rotate, zero padding
        # (and image-boundary bleed in the lane-concatenated layout) handled by
        # the precomputed validity mask.
        shift = (-s) % L
        r = pltpu.roll(a, shift, axis=1) if shift else a
        return r * tmask_ref[t:t + 1, :]

    def im2col_mid(a):            # a: (C_MID, L) -> colm scratch, tap-major rows
        for t, s in enumerate(offs):
            colm_ref[t * C_MID:(t + 1) * C_MID, :] = shifted(a, t, s)

    # ---- conv1 (1 -> 32) + ReLU : tiny (9, L) column matrix built as a value ----
    xin = cur_ref[...]                                           # (1, L)
    col1 = jnp.concatenate([shifted(xin, t, s) for t, s in enumerate(offs)],
                           axis=0)                               # (9, L)
    a = jnp.maximum(
        jnp.dot(w1_ref[...], col1, preferred_element_type=jnp.float32)
        + b1_ref[...], 0.0)                                      # (32, L)
    x1234_ref[0] = a

    # ---- conv2..conv4 (32 -> 32) + ReLU ----
    for l in range(3):
        im2col_mid(a)
        a = jnp.maximum(
            jnp.dot(wm_ref[l], colm_ref[...],
                    preferred_element_type=jnp.float32) + bm_ref[l], 0.0)
        x1234_ref[l + 1] = a

    # ---- conv5 (32 -> 1), no ReLU ----
    im2col_mid(a)
    x5 = jnp.dot(w5_ref[...], colm_ref[...],
                 preferred_element_type=jnp.float32) + b5_ref[...]   # (1, L)
    x5_ref[...] = x5

    # ---- data consistency: ortho fft2/ifft2 as two merged kron-DFT matmuls ----
    if bpb == 1:
        pred = x5                                               # (1, HW)
    else:
        # lane-concatenated (1, bpb*HW) -> rows-per-image (bpb, HW)
        for i in range(bpb):
            pred_ref[i:i + 1, :] = x5[:, i * HW:(i + 1) * HW]
        pred = pred_ref[...]                                    # (bpb, HW)

    kp = jnp.dot(pred, gcat_ref[...],
                 preferred_element_type=jnp.float32)            # (bpb, 2HW) = [krp|kip]
    uk = mk2_ref[...] + om2_ref[...] * kp                       # mask*k + (1-mask)*kp
    dc = jnp.dot(uk, gstack_ref[...],
                 preferred_element_type=jnp.float32)            # (bpb, HW) real(ifft2)

    if bpb == 1:
        dc_flat = dc
    else:
        dc_flat = jnp.concatenate([dc[i:i + 1, :] for i in range(bpb)], axis=1)

    cur_ref[...] = dc_flat            # carry to next cascade (stays in VMEM)
    dc_ref[...] = dc_flat             # final output (last cascade's write survives)


def _fused_call(xf, mk2, om2, tap, w1s, b1s, wms, bms, w5s, b5s, gcat, gstack,
                *, H, W, bpb):
    nb = xf.shape[0]
    HW = H * W
    L = bpb * HW
    kernel = functools.partial(_fused_kernel, H=H, W=W, bpb=bpb)

    return pl.pallas_call(
        kernel,
        out_shape=(
            jax.ShapeDtypeStruct((nb, 4 * N_CASC, C_MID, L), jnp.float32),  # x1..x4
            jax.ShapeDtypeStruct((nb, N_CASC, 1, L), jnp.float32),          # x5
            jax.ShapeDtypeStruct((nb, 1, L), jnp.float32),                  # final DC
        ),
        grid_spec=pltpu.PrefetchScalarGridSpec(
            num_scalar_prefetch=0,
            grid=(nb, N_CASC),
            in_specs=[
                pl.BlockSpec((None, 1, L), lambda b, c: (b, 0, 0)),            # x
                pl.BlockSpec((None, bpb, 2 * HW), lambda b, c: (b, 0, 0)),     # m*k
                pl.BlockSpec((None, bpb, 2 * HW), lambda b, c: (b, 0, 0)),     # 1-m
                pl.BlockSpec((N_TAPS, L), lambda b, c: (0, 0)),                # tap masks
                pl.BlockSpec((None, C_MID, N_TAPS), lambda b, c: (c, 0, 0)),   # w1
                pl.BlockSpec((None, C_MID, 1), lambda b, c: (c, 0, 0)),        # b1
                pl.BlockSpec((None, 3, C_MID, K_COL), lambda b, c: (c, 0, 0, 0)),  # w2..4
                pl.BlockSpec((None, 3, C_MID, 1), lambda b, c: (c, 0, 0, 0)),      # b2..4
                pl.BlockSpec((None, 1, K_COL), lambda b, c: (c, 0, 0)),        # w5
                pl.BlockSpec((None, 1, 1), lambda b, c: (c, 0, 0)),            # b5
                pl.BlockSpec((HW, 2 * HW), lambda b, c: (0, 0)),               # [Gr|Gi]
                pl.BlockSpec((2 * HW, HW), lambda b, c: (0, 0)),               # [[Gr],[Gi]]
            ],
            out_specs=(
                pl.BlockSpec((None, 4, C_MID, L), lambda b, c: (b, c, 0, 0)),
                pl.BlockSpec((None, None, 1, L), lambda b, c: (b, c, 0, 0)),
                pl.BlockSpec((None, 1, L), lambda b, c: (b, 0, 0)),
            ),
            scratch_shapes=[
                pltpu.VMEM((K_COL, L), jnp.float32),   # im2col column matrix
                pltpu.VMEM((1, L), jnp.float32),       # cascade carry (DC output)
                pltpu.VMEM((bpb, HW), jnp.float32),    # per-image prediction rows
            ],
        ),
        compiler_params=pltpu.CompilerParams(
            dimension_semantics=("parallel", "arbitrary")),
    )(xf, mk2, om2, tap, w1s, b1s, wms, bms, w5s, b5s, gcat, gstack)


# --------------------------- host-side constants ------------------------------

def _tap_masks(H, W):
    """(9, H*W) validity mask per 3x3 tap (handles zero padding + lane wraps)."""
    ys, xs = np.divmod(np.arange(H * W), W)
    rows = []
    for dy in range(3):
        for dx in range(3):
            oy, ox = dy - 1, dx - 1
            valid = ((ys + oy >= 0) & (ys + oy < H)
                     & (xs + ox >= 0) & (xs + ox < W))
            rows.append(valid.astype(np.float32))
    return jnp.asarray(np.stack(rows, axis=0))


def _kron_dft(H, W):
    """Ortho 2D DFT as one (HW, HW) matrix: fft2(X).flat = X.flat @ G."""
    def f(n):
        k = np.arange(n)
        return np.exp(-2j * np.pi * np.outer(k, k) / n) / np.sqrt(n)
    g = np.kron(f(H), f(W))
    return (jnp.asarray(g.real, jnp.float32), jnp.asarray(g.imag, jnp.float32))


def _pack_all_params(params):
    """Stack the 5 cascades' conv weights tap-major; biases as (Cout, 1) columns."""
    def tap_major(w):   # (Cout, Cin, 3, 3) -> (Cout, 9*Cin), column = tap*Cin + cin
        return jnp.transpose(w, (0, 2, 3, 1)).reshape(w.shape[0], -1)

    w1s, b1s, wms, bms, w5s, b5s = [], [], [], [], [], []
    for cp in params:
        (w1, b1), (w2, b2), (w3, b3), (w4, b4), (w5, b5) = cp
        w1s.append(tap_major(w1))                                     # (32, 9)
        b1s.append(b1[:, None])                                       # (32, 1)
        wms.append(jnp.stack([tap_major(w2), tap_major(w3), tap_major(w4)]))  # (3,32,288)
        bms.append(jnp.stack([b2[:, None], b3[:, None], b4[:, None]]))        # (3,32,1)
        w5s.append(tap_major(w5))                                     # (1, 288)
        b5s.append(b5[:, None])                                       # (1, 1)
    return (jnp.stack(w1s), jnp.stack(b1s), jnp.stack(wms),
            jnp.stack(bms), jnp.stack(w5s), jnp.stack(b5s))


def _default_num_blocks(B):
    """One batch block per TensorCore: 2 on dual-core parts (v7x), else 1."""
    if B < 2 or B % 2:
        return 1
    try:
        kind = jax.devices()[0].device_kind.lower()
    except Exception:
        kind = ""
    return 2 if "7" in kind else 1


# ------------------------------ model wiring ---------------------------------

def init_teacher_params(key):
    keys = jax.random.split(key, 10)

    def conv_init(kw, kb, cout, cin):
        fan_in = cin * 9
        w = jax.random.normal(kw, (cout, cin, 3, 3), jnp.float32) * np.sqrt(2.0 / fan_in)
        b = jax.random.normal(kb, (cout,), jnp.float32) * 0.01
        return w, b

    return [conv_init(keys[0], keys[5], 32, 1),
            conv_init(keys[1], keys[6], 32, 32),
            conv_init(keys[2], keys[7], 32, 32),
            conv_init(keys[3], keys[8], 32, 32),
            conv_init(keys[4], keys[9], 1, 32)]


def dc_teacher_net(params, x, x_k, us_mask, num_batch_blocks=None):
    B, C, H, W = x.shape
    assert C == 1
    HW = H * W
    nb = num_batch_blocks if num_batch_blocks is not None else _default_num_blocks(B)
    assert B % nb == 0
    bpb = B // nb
    L = bpb * HW

    w1s, b1s, wms, bms, w5s, b5s = _pack_all_params(params)
    tap = jnp.tile(_tap_masks(H, W), (1, bpb))                   # (9, bpb*HW)
    gr, gi = _kron_dft(H, W)
    gcat = jnp.concatenate([gr, gi], axis=1)                     # (HW, 2HW)
    gstack = jnp.concatenate([gr, gi], axis=0)                   # (2HW, HW)

    xf = x.reshape(nb, 1, L)                                     # lane-concat batch
    kr = x_k[..., 0].reshape(B, HW)
    ki = x_k[..., 1].reshape(B, HW)
    m = us_mask.reshape(B, HW).astype(jnp.float32)
    mk2 = jnp.concatenate([m * kr, m * ki], axis=-1).reshape(nb, bpb, 2 * HW)
    om2 = jnp.concatenate([1.0 - m, 1.0 - m], axis=-1).reshape(nb, bpb, 2 * HW)

    x1234, x5, dc = _fused_call(xf, mk2, om2, tap, w1s, b1s, wms, bms, w5s, b5s,
                                gcat, gstack, H=H, W=W, bpb=bpb)
    x1234 = x1234.reshape(nb, N_CASC, 4, C_MID, L)

    def unpack(t):   # (nb, cout, bpb*HW) -> (B, cout, H, W)
        cout = t.shape[1]
        t = t.reshape(nb, cout, bpb, H, W)
        return jnp.transpose(t, (0, 2, 1, 3, 4)).reshape(B, cout, H, W)

    outs = []
    for c in range(N_CASC):
        cas = tuple(unpack(x1234[:, c, l]) for l in range(4)) + (unpack(x5[:, c]),)
        outs.append(cas)
    outs.append(unpack(dc))
    return tuple(outs)


# ------------------------------ pure-JAX reference ---------------------------

def _ref_conv(x, w, b, relu):
    y = jax.lax.conv_general_dilated(
        x, w, window_strides=(1, 1), padding=((1, 1), (1, 1)),
        dimension_numbers=('NCHW', 'OIHW', 'NCHW'))
    y = y + b.reshape(1, -1, 1, 1)
    return jnp.maximum(y, 0.0) if relu else y


def _ref_teacher(p, x):
    (w1, b1), (w2, b2), (w3, b3), (w4, b4), (w5, b5) = p
    x1 = _ref_conv(x, w1, b1, True)
    x2 = _ref_conv(x1, w2, b2, True)
    x3 = _ref_conv(x2, w3, b3, True)
    x4 = _ref_conv(x3, w4, b4, True)
    x5 = _ref_conv(x4, w5, b5, False)
    return (x1, x2, x3, x4, x5)


def _ref_dc(pred, us_k, mask):
    kp = jnp.fft.fft2(pred, norm='ortho')
    usc = us_k[..., 0] + 1j * us_k[..., 1]
    uk = mask * usc + (1.0 - mask) * kp
    return jnp.real(jnp.fft.ifft2(uk, norm='ortho')).astype(jnp.float32)


def _ref_dc_teacher(params, x, x_k, us_mask):
    cur = x
    outs = []
    for p in params:
        t = _ref_teacher(p, cur)
        outs.append(t)
        cur = _ref_dc(t[-1], x_k, us_mask)
    return outs, cur


# ----------------------------------- main -------------------------------------

if __name__ == "__main__":
    B, H, W = 2, 16, 16
    key = jax.random.PRNGKey(0)
    k_x, k_kspace, k_mask, k_params = jax.random.split(key, 4)

    x = jax.random.normal(k_x, (B, 1, H, W), jnp.float32)
    x_k = jax.random.normal(k_kspace, (B, 1, H, W, 2), jnp.float32)
    us_mask = jax.random.bernoulli(k_mask, 0.4, (B, 1, H, W)).astype(jnp.float32)

    params = [init_teacher_params(k) for k in jax.random.split(k_params, 5)]

    fwd = jax.jit(dc_teacher_net)
    out = jax.block_until_ready(fwd(params, x, x_k, us_mask))

    # Numerical sanity check against a pure-JAX reference (every cascade's x5,
    # cascade 5's x1, and the final DC output).
    ref_outs, ref_dc = _ref_dc_teacher(params, x, x_k, us_mask)
    for c in range(5):
        np.testing.assert_allclose(np.asarray(out[c][-1]), np.asarray(ref_outs[c][-1]),
                                   rtol=2e-3, atol=2e-3)
    np.testing.assert_allclose(np.asarray(out[4][0]), np.asarray(ref_outs[4][0]),
                               rtol=2e-3, atol=2e-3)
    np.testing.assert_allclose(np.asarray(out[5]), np.asarray(ref_dc),
                               rtol=2e-3, atol=2e-3)

    print("KERNEL_OK")
</pallas_src>

<mosaic_0001>
module attributes {stable_mosaic.version = 11 : i64} {
  func.func @_fused_kernel(%arg0: i32, %arg1: i32, %arg2: memref<1x1x512xf32, #tpu.memory_space<vmem>>, %arg3: memref<1x2x512xf32, #tpu.memory_space<vmem>>, %arg4: memref<1x2x512xf32, #tpu.memory_space<vmem>>, %arg5: memref<9x512xf32, #tpu.memory_space<vmem>>, %arg6: memref<1x32x9xf32, #tpu.memory_space<vmem>>, %arg7: memref<1x32x1xf32, #tpu.memory_space<vmem>>, %arg8: memref<1x3x32x288xf32, #tpu.memory_space<vmem>>, %arg9: memref<1x3x32x1xf32, #tpu.memory_space<vmem>>, %arg10: memref<1x1x288xf32, #tpu.memory_space<vmem>>, %arg11: memref<1x1x1xf32, #tpu.memory_space<vmem>>, %arg12: memref<256x512xf32, #tpu.memory_space<vmem>>, %arg13: memref<512x256xf32, #tpu.memory_space<vmem>>, %arg14: memref<1x4x32x512xf32, #tpu.memory_space<vmem>>, %arg15: memref<1x1x1x512xf32, #tpu.memory_space<vmem>>, %arg16: memref<1x1x512xf32, #tpu.memory_space<vmem>>, %arg17: memref<288x512xf32, #tpu.memory_space<vmem>>, %arg18: memref<1x512xf32, #tpu.memory_space<vmem>>, %arg19: memref<2x256xf32, #tpu.memory_space<vmem>>) attributes {dimension_semantics = [#tpu.dimension_semantics<parallel>, #tpu.dimension_semantics<arbitrary>], iteration_bounds = array<i64: 1, 5>, scalar_prefetch = 0 : i64, scratch_operands = 3 : i64, tpu.core_type = #tpu.core_type<tc>, window_params = [{transform_indices = @transform_0, window_bounds = array<i64: 1, 1, 512>}, {transform_indices = @transform_1, window_bounds = array<i64: 1, 2, 512>}, {transform_indices = @transform_2, window_bounds = array<i64: 1, 2, 512>}, {pipeline_mode = #tpu.pipeline_mode<synchronous>, transform_indices = @transform_3, window_bounds = array<i64: 9, 512>}, {transform_indices = @transform_4, window_bounds = array<i64: 1, 32, 9>}, {transform_indices = @transform_5, window_bounds = array<i64: 1, 32, 1>}, {transform_indices = @transform_6, window_bounds = array<i64: 1, 3, 32, 288>}, {transform_indices = @transform_7, window_bounds = array<i64: 1, 3, 32, 1>}, {transform_indices = @transform_8, window_bounds = array<i64: 1, 1, 288>}, {transform_indices = @transform_9, window_bounds = array<i64: 1, 1, 1>}, {pipeline_mode = #tpu.pipeline_mode<synchronous>, transform_indices = @transform_10, window_bounds = array<i64: 256, 512>}, {pipeline_mode = #tpu.pipeline_mode<synchronous>, transform_indices = @transform_11, window_bounds = array<i64: 512, 256>}, {transform_indices = @transform_12, window_bounds = array<i64: 1, 4, 32, 512>}, {transform_indices = @transform_13, window_bounds = array<i64: 1, 1, 1, 512>}, {transform_indices = @transform_14, window_bounds = array<i64: 1, 1, 512>}]} {
    %c0_i32 = arith.constant 0 : i32
    %0 = arith.cmpi eq, %arg1, %c0_i32 : i32
    %1 = arith.extui %0 : i1 to i32
    %c0_i32_0 = arith.constant 0 : i32
    %2 = arith.cmpi ne, %1, %c0_i32_0 : i32
    scf.if %2 {
      %c0_275 = arith.constant 0 : index
      %c0_276 = arith.constant 0 : index
      %c0_277 = arith.constant 0 : index
      %291 = vector.load %arg2[%c0_275, %c0_276, %c0_277] : memref<1x1x512xf32, #tpu.memory_space<vmem>>, vector<1x1x512xf32>
      %292 = vector.shape_cast %291 : vector<1x1x512xf32> to vector<1x512xf32>
      %c0_278 = arith.constant 0 : index
      %c0_279 = arith.constant 0 : index
      %293 = vector.load %arg18[%c0_278, %c0_279] : memref<1x512xf32, #tpu.memory_space<vmem>>, vector<1x512xf32>
      tpu.vector_store %arg18[%c0_278, %c0_279], %292 {strides = array<i32>} : memref<1x512xf32, #tpu.memory_space<vmem>>, vector<1x512xf32>,
    } else {
    }
    %c0 = arith.constant 0 : index
    %c0_1 = arith.constant 0 : index
    %3 = vector.load %arg18[%c0, %c0_1] : memref<1x512xf32, #tpu.memory_space<vmem>>, vector<1x512xf32>
    %c17_i32 = arith.constant 17 : i32
    %4 = tpu.dynamic_rotate %3 by %c17_i32 dim 1 : vector<1x512xf32>, i32 -> vector<1x512xf32>
    %c0_2 = arith.constant 0 : index
    %c0_3 = arith.constant 0 : index
    %5 = vector.load %arg5[%c0_2, %c0_3] : memref<9x512xf32, #tpu.memory_space<vmem>>, vector<1x512xf32>
    %6 = arith.mulf %4, %5 : vector<1x512xf32>
    %c16_i32 = arith.constant 16 : i32
    %7 = tpu.dynamic_rotate %3 by %c16_i32 dim 1 : vector<1x512xf32>, i32 -> vector<1x512xf32>
    %c1 = arith.constant 1 : index
    %c0_4 = arith.constant 0 : index
    %8 = vector.load %arg5[%c1, %c0_4] : memref<9x512xf32, #tpu.memory_space<vmem>>, vector<1x512xf32>
    %9 = arith.mulf %7, %8 : vector<1x512xf32>
    %c15_i32 = arith.constant 15 : i32
    %10 = tpu.dynamic_rotate %3 by %c15_i32 dim 1 : vector<1x512xf32>, i32 -> vector<1x512xf32>
    %c2 = arith.constant 2 : index
    %c0_5 = arith.constant 0 : index
    %11 = vector.load %arg5[%c2, %c0_5] : memref<9x512xf32, #tpu.memory_space<vmem>>, vector<1x512xf32>
    %12 = arith.mulf %10, %11 : vector<1x512xf32>
    %c1_i32 = arith.constant 1 : i32
    %13 = tpu.dynamic_rotate %3 by %c1_i32 dim 1 : vector<1x512xf32>, i32 -> vector<1x512xf32>
    %c3 = arith.constant 3 : index
    %c0_6 = arith.constant 0 : index
    %14 = vector.load %arg5[%c3, %c0_6] : memref<9x512xf32, #tpu.memory_space<vmem>>, vector<1x512xf32>
    %15 = arith.mulf %13, %14 : vector<1x512xf32>
    %c4 = arith.constant 4 : index
    %c0_7 = arith.constant 0 : index
    %16 = vector.load %arg5[%c4, %c0_7] : memref<9x512xf32, #tpu.memory_space<vmem>>, vector<1x512xf32>
    %17 = arith.mulf %3, %16 : vector<1x512xf32>
    %c511_i32 = arith.constant 511 : i32
    %18 = tpu.dynamic_rotate %3 by %c511_i32 dim 1 : vector<1x512xf32>, i32 -> vector<1x512xf32>
    %c5 = arith.constant 5 : index
    %c0_8 = arith.constant 0 : index
    %19 = vector.load %arg5[%c5, %c0_8] : memref<9x512xf32, #tpu.memory_space<vmem>>, vector<1x512xf32>
    %20 = arith.mulf %18, %19 : vector<1x512xf32>
    %c497_i32 = arith.constant 497 : i32
    %21 = tpu.dynamic_rotate %3 by %c497_i32 dim 1 : vector<1x512xf32>, i32 -> vector<1x512xf32>
    %c6 = arith.constant 6 : index
    %c0_9 = arith.constant 0 : index
    %22 = vector.load %arg5[%c6, %c0_9] : memref<9x512xf32, #tpu.memory_space<vmem>>, vector<1x512xf32>
    %23 = arith.mulf %21, %22 : vector<1x512xf32>
    %c496_i32 = arith.constant 496 : i32
    %24 = tpu.dynamic_rotate %3 by %c496_i32 dim 1 : vector<1x512xf32>, i32 -> vector<1x512xf32>
    %c7 = arith.constant 7 : index
    %c0_10 = arith.constant 0 : index
    %25 = vector.load %arg5[%c7, %c0_10] : memref<9x512xf32, #tpu.memory_space<vmem>>, vector<1x512xf32>
    %26 = arith.mulf %24, %25 : vector<1x512xf32>
    %c495_i32 = arith.constant 495 : i32
    %27 = tpu.dynamic_rotate %3 by %c495_i32 dim 1 : vector<1x512xf32>, i32 -> vector<1x512xf32>
    %c8 = arith.constant 8 : index
    %c0_11 = arith.constant 0 : index
    %28 = vector.load %arg5[%c8, %c0_11] : memref<9x512xf32, #tpu.memory_space<vmem>>, vector<1x512xf32>
    %29 = arith.mulf %27, %28 : vector<1x512xf32>
    %30 = tpu.concatenate %6, %9, %12, %15, %17, %20, %23, %26, %29 in 0 : vector<1x512xf32>, vector<1x512xf32>, vector<1x512xf32>, vector<1x512xf32>, vector<1x512xf32>, vector<1x512xf32>, vector<1x512xf32>, vector<1x512xf32>, vector<1x512xf32> -> vector<9x512xf32>
    %c0_12 = arith.constant 0 : index
    %c0_13 = arith.constant 0 : index
    %c0_14 = arith.constant 0 : index
    %31 = vector.load %arg6[%c0_12, %c0_13, %c0_14] : memref<1x32x9xf32, #tpu.memory_space<vmem>>, vector<1x32x9xf32>
    %32 = vector.shape_cast %31 : vector<1x32x9xf32> to vector<32x9xf32>
    %cst = arith.constant dense<0.000000e+00> : vector<32x512xf32>
    %33 = tpu.matmul %32, %30, %cst {dimension_numbers = #tpu.dot_dimension_numbers<[1], [0], [0], [1], [0, 0, 1, 1], [], []>} : vector<32x9xf32>, vector<9x512xf32>, vector<32x512xf32> -> vector<32x512xf32>
    %c0_15 = arith.constant 0 : index
    %c0_16 = arith.constant 0 : index
    %c0_17 = arith.constant 0 : index
    %34 = vector.load %arg7[%c0_15, %c0_16, %c0_17] : memref<1x32x1xf32, #tpu.memory_space<vmem>>, vector<1x32x1xf32>
    %35 = vector.shape_cast %34 : vector<1x32x1xf32> to vector<32x1xf32>
    %36 = vector.broadcast %35 : vector<32x1xf32> to vector<32x512xf32>
    %37 = arith.addf %33, %36 : vector<32x512xf32>
    %cst_18 = arith.constant 0.000000e+00 : f32
    %38 = vector.broadcast %cst_18 : f32 to vector<32x512xf32>
    %39 = arith.maximumf %37, %38 : vector<32x512xf32>
    %c0_19 = arith.constant 0 : index
    %c0_20 = arith.constant 0 : index
    %c0_21 = arith.constant 0 : index
    %c0_22 = arith.constant 0 : index
    %40 = vector.load %arg14[%c0_19, %c0_20, %c0_21, %c0_22] : memref<1x4x32x512xf32, #tpu.memory_space<vmem>>, vector<1x1x32x512xf32>
    %41 = vector.shape_cast %40 : vector<1x1x32x512xf32> to vector<32x512xf32>
    %42 = vector.shape_cast %39 : vector<32x512xf32> to vector<1x1x32x512xf32>
    tpu.vector_store %arg14[%c0_19, %c0_20, %c0_21, %c0_22], %42 {strides = array<i32>} : memref<1x4x32x512xf32, #tpu.memory_space<vmem>>, vector<1x1x32x512xf32>,
    %c17_i32_23 = arith.constant 17 : i32
    %43 = tpu.dynamic_rotate %39 by %c17_i32_23 dim 1 : vector<32x512xf32>, i32 -> vector<32x512xf32>
    %c0_24 = arith.constant 0 : index
    %c0_25 = arith.constant 0 : index
    %44 = vector.load %arg5[%c0_24, %c0_25] : memref<9x512xf32, #tpu.memory_space<vmem>>, vector<1x512xf32>
    %45 = vector.broadcast %44 : vector<1x512xf32> to vector<32x512xf32>
    %46 = arith.mulf %43, %45 : vector<32x512xf32>
    %c0_26 = arith.constant 0 : index
    %c0_27 = arith.constant 0 : index
    %47 = vector.load %arg17[%c0_26, %c0_27] : memref<288x512xf32, #tpu.memory_space<vmem>>, vector<32x512xf32>
    tpu.vector_store %arg17[%c0_26, %c0_27], %46 {strides = array<i32>} : memref<288x512xf32, #tpu.memory_space<vmem>>, vector<32x512xf32>,
    %c16_i32_28 = arith.constant 16 : i32
    %48 = tpu.dynamic_rotate %39 by %c16_i32_28 dim 1 : vector<32x512xf32>, i32 -> vector<32x512xf32>
    %c1_29 = arith.constant 1 : index
    %c0_30 = arith.constant 0 : index
    %49 = vector.load %arg5[%c1_29, %c0_30] : memref<9x512xf32, #tpu.memory_space<vmem>>, vector<1x512xf32>
    %50 = vector.broadcast %49 : vector<1x512xf32> to vector<32x512xf32>
    %51 = arith.mulf %48, %50 : vector<32x512xf32>
    %c32 = arith.constant 32 : index
    %c0_31 = arith.constant 0 : index
    %52 = vector.load %arg17[%c32, %c0_31] : memref<288x512xf32, #tpu.memory_space<vmem>>, vector<32x512xf32>
    tpu.vector_store %arg17[%c32, %c0_31], %51 {strides = array<i32>} : memref<288x512xf32, #tpu.memory_space<vmem>>, vector<32x512xf32>,
    %c15_i32_32 = arith.constant 15 : i32
    %53 = tpu.dynamic_rotate %39 by %c15_i32_32 dim 1 : vector<32x512xf32>, i32 -> vector<32x512xf32>
    %c2_33 = arith.constant 2 : index
    %c0_34 = arith.constant 0 : index
    %54 = vector.load %arg5[%c2_33, %c0_34] : memref<9x512xf32, #tpu.memory_space<vmem>>, vector<1x512xf32>
    %55 = vector.broadcast %54 : vector<1x512xf32> to vector<32x512xf32>
    %56 = arith.mulf %53, %55 : vector<32x512xf32>
    %c64 = arith.constant 64 : index
    %c0_35 = arith.constant 0 : index
    %57 = vector.load %arg17[%c64, %c0_35] : memref<288x512xf32, #tpu.memory_space<vmem>>, vector<32x512xf32>
    tpu.vector_store %arg17[%c64, %c0_35], %56 {strides = array<i32>} : memref<288x512xf32, #tpu.memory_space<vmem>>, vector<32x512xf32>,
    %c1_i32_36 = arith.constant 1 : i32
    %58 = tpu.dynamic_rotate %39 by %c1_i32_36 dim 1 : vector<32x512xf32>, i32 -> vector<32x512xf32>
    %c3_37 = arith.constant 3 : index
    %c0_38 = arith.constant 0 : index
    %59 = vector.load %arg5[%c3_37, %c0_38] : memref<9x512xf32, #tpu.memory_space<vmem>>, vector<1x512xf32>
    %60 = vector.broadcast %59 : vector<1x512xf32> to vector<32x512xf32>
    %61 = arith.mulf %58, %60 : vector<32x512xf32>
    %c96 = arith.constant 96 : index
    %c0_39 = arith.constant 0 : index
    %62 = vector.load %arg17[%c96, %c0_39] : memref<288x512xf32, #tpu.memory_space<vmem>>, vector<32x512xf32>
    tpu.vector_store %arg17[%c96, %c0_39], %61 {strides = array<i32>} : memref<288x512xf32, #tpu.memory_space<vmem>>, vector<32x512xf32>,
    %c4_40 = arith.constant 4 : index
    %c0_41 = arith.constant 0 : index
    %63 = vector.load %arg5[%c4_40, %c0_41] : memref<9x512xf32, #tpu.memory_space<vmem>>, vector<1x512xf32>
    %64 = vector.broadcast %63 : vector<1x512xf32> to vector<32x512xf32>
    %65 = arith.mulf %39, %64 : vector<32x512xf32>
    %c128 = arith.constant 128 : index
    %c0_42 = arith.constant 0 : index
    %66 = vector.load %arg17[%c128, %c0_42] : memref<288x512xf32, #tpu.memory_space<vmem>>, vector<32x512xf32>
    tpu.vector_store %arg17[%c128, %c0_42], %65 {strides = array<i32>} : memref<288x512xf32, #tpu.memory_space<vmem>>, vector<32x512xf32>,
    %c511_i32_43 = arith.constant 511 : i32
    %67 = tpu.dynamic_rotate %39 by %c511_i32_43 dim 1 : vector<32x512xf32>, i32 -> vector<32x512xf32>
    %c5_44 = arith.constant 5 : index
    %c0_45 = arith.constant 0 : index
    %68 = vector.load %arg5[%c5_44, %c0_45] : memref<9x512xf32, #tpu.memory_space<vmem>>, vector<1x512xf32>
    %69 = vector.broadcast %68 : vector<1x512xf32> to vector<32x512xf32>
    %70 = arith.mulf %67, %69 : vector<32x512xf32>
    %c160 = arith.constant 160 : index
    %c0_46 = arith.constant 0 : index
    %71 = vector.load %arg17[%c160, %c0_46] : memref<288x512xf32, #tpu.memory_space<vmem>>, vector<32x512xf32>
    tpu.vector_store %arg17[%c160, %c0_46], %70 {strides = array<i32>} : memref<288x512xf32, #tpu.memory_space<vmem>>, vector<32x512xf32>,
    %c497_i32_47 = arith.constant 497 : i32
    %72 = tpu.dynamic_rotate %39 by %c497_i32_47 dim 1 : vector<32x512xf32>, i32 -> vector<32x512xf32>
    %c6_48 = arith.constant 6 : index
    %c0_49 = arith.constant 0 : index
    %73 = vector.load %arg5[%c6_48, %c0_49] : memref<9x512xf32, #tpu.memory_space<vmem>>, vector<1x512xf32>
    %74 = vector.broadcast %73 : vector<1x512xf32> to vector<32x512xf32>
    %75 = arith.mulf %72, %74 : vector<32x512xf32>
    %c192 = arith.constant 192 : index
    %c0_50 = arith.constant 0 : index
    %76 = vector.load %arg17[%c192, %c0_50] : memref<288x512xf32, #tpu.memory_space<vmem>>, vector<32x512xf32>
    tpu.vector_store %arg17[%c192, %c0_50], %75 {strides = array<i32>} : memref<288x512xf32, #tpu.memory_space<vmem>>, vector<32x512xf32>,
    %c496_i32_51 = arith.constant 496 : i32
    %77 = tpu.dynamic_rotate %39 by %c496_i32_51 dim 1 : vector<32x512xf32>, i32 -> vector<32x512xf32>
    %c7_52 = arith.constant 7 : index
    %c0_53 = arith.constant 0 : index
    %78 = vector.load %arg5[%c7_52, %c0_53] : memref<9x512xf32, #tpu.memory_space<vmem>>, vector<1x512xf32>
    %79 = vector.broadcast %78 : vector<1x512xf32> to vector<32x512xf32>
    %80 = arith.mulf %77, %79 : vector<32x512xf32>
    %c224 = arith.constant 224 : index
    %c0_54 = arith.constant 0 : index
    %81 = vector.load %arg17[%c224, %c0_54] : memref<288x512xf32, #tpu.memory_space<vmem>>, vector<32x512xf32>
    tpu.vector_store %arg17[%c224, %c0_54], %80 {strides = array<i32>} : memref<288x512xf32, #tpu.memory_space<vmem>>, vector<32x512xf32>,
    %c495_i32_55 = arith.constant 495 : i32
    %82 = tpu.dynamic_rotate %39 by %c495_i32_55 dim 1 : vector<32x512xf32>, i32 -> vector<32x512xf32>
    %c8_56 = arith.constant 8 : index
    %c0_57 = arith.constant 0 : index
    %83 = vector.load %arg5[%c8_56, %c0_57] : memref<9x512xf32, #tpu.memory_space<vmem>>, vector<1x512xf32>
    %84 = vector.broadcast %83 : vector<1x512xf32> to vector<32x512xf32>
    %85 = arith.mulf %82, %84 : vector<32x512xf32>
    %c256 = arith.constant 256 : index
    %c0_58 = arith.constant 0 : index
    %86 = vector.load %arg17[%c256, %c0_58] : memref<288x512xf32, #tpu.memory_space<vmem>>, vector<32x512xf32>
    tpu.vector_store %arg17[%c256, %c0_58], %85 {strides = array<i32>} : memref<288x512xf32, #tpu.memory_space<vmem>>, vector<32x512xf32>,
    %c0_59 = arith.constant 0 : index
    %c0_60 = arith.constant 0 : index
    %c0_61 = arith.constant 0 : index
    %c0_62 = arith.constant 0 : index
    %87 = vector.load %arg8[%c0_59, %c0_60, %c0_61, %c0_62] : memref<1x3x32x288xf32, #tpu.memory_space<vmem>>, vector<1x1x32x288xf32>
    %88 = vector.shape_cast %87 : vector<1x1x32x288xf32> to vector<32x288xf32>
    %c0_63 = arith.constant 0 : index
    %c0_64 = arith.constant 0 : index
    %89 = vector.load %arg17[%c0_63, %c0_64] : memref<288x512xf32, #tpu.memory_space<vmem>>, vector<288x512xf32>
    %cst_65 = arith.constant dense<0.000000e+00> : vector<32x512xf32>
    %90 = tpu.matmul %88, %89, %cst_65 {dimension_numbers = #tpu.dot_dimension_numbers<[1], [0], [0], [1], [0, 0, 1, 1], [], []>} : vector<32x288xf32>, vector<288x512xf32>, vector<32x512xf32> -> vector<32x512xf32>
    %c0_66 = arith.constant 0 : index
    %c0_67 = arith.constant 0 : index
    %c0_68 = arith.constant 0 : index
    %c0_69 = arith.constant 0 : index
    %91 = vector.load %arg9[%c0_66, %c0_67, %c0_68, %c0_69] : memref<1x3x32x1xf32, #tpu.memory_space<vmem>>, vector<1x1x32x1xf32>
    %92 = vector.shape_cast %91 : vector<1x1x32x1xf32> to vector<32x1xf32>
    %93 = vector.broadcast %92 : vector<32x1xf32> to vector<32x512xf32>
    %94 = arith.addf %90, %93 : vector<32x512xf32>
    %cst_70 = arith.constant 0.000000e+00 : f32
    %95 = vector.broadcast %cst_70 : f32 to vector<32x512xf32>
    %96 = arith.maximumf %94, %95 : vector<32x512xf32>
    %c0_71 = arith.constant 0 : index
    %c1_72 = arith.constant 1 : index
    %c0_73 = arith.constant 0 : index
    %c0_74 = arith.constant 0 : index
    %97 = vector.load %arg14[%c0_71, %c1_72, %c0_73, %c0_74] : memref<1x4x32x512xf32, #tpu.memory_space<vmem>>, vector<1x1x32x512xf32>
    %98 = vector.shape_cast %97 : vector<1x1x32x512xf32> to vector<32x512xf32>
    %99 = vector.shape_cast %96 : vector<32x512xf32> to vector<1x1x32x512xf32>
    tpu.vector_store %arg14[%c0_71, %c1_72, %c0_73, %c0_74], %99 {strides = array<i32>} : memref<1x4x32x512xf32, #tpu.memory_space<vmem>>, vector<1x1x32x512xf32>,
    %c17_i32_75 = arith.constant 17 : i32
    %100 = tpu.dynamic_rotate %96 by %c17_i32_75 dim 1 : vector<32x512xf32>, i32 -> vector<32x512xf32>
    %c0_76 = arith.constant 0 : index
    %c0_77 = arith.constant 0 : index
    %101 = vector.load %arg5[%c0_76, %c0_77] : memref<9x512xf32, #tpu.memory_space<vmem>>, vector<1x512xf32>
    %102 = vector.broadcast %101 : vector<1x512xf32> to vector<32x512xf32>
    %103 = arith.mulf %100, %102 : vector<32x512xf32>
    %c0_78 = arith.constant 0 : index
    %c0_79 = arith.constant 0 : index
    %104 = vector.load %arg17[%c0_78, %c0_79] : memref<288x512xf32, #tpu.memory_space<vmem>>, vector<32x512xf32>
    tpu.vector_store %arg17[%c0_78, %c0_79], %103 {strides = array<i32>} : memref<288x512xf32, #tpu.memory_space<vmem>>, vector<32x512xf32>,
    %c16_i32_80 = arith.constant 16 : i32
    %105 = tpu.dynamic_rotate %96 by %c16_i32_80 dim 1 : vector<32x512xf32>, i32 -> vector<32x512xf32>
    %c1_81 = arith.constant 1 : index
    %c0_82 = arith.constant 0 : index
    %106 = vector.load %arg5[%c1_81, %c0_82] : memref<9x512xf32, #tpu.memory_space<vmem>>, vector<1x512xf32>
    %107 = vector.broadcast %106 : vector<1x512xf32> to vector<32x512xf32>
    %108 = arith.mulf %105, %107 : vector<32x512xf32>
    %c32_83 = arith.constant 32 : index
    %c0_84 = arith.constant 0 : index
    %109 = vector.load %arg17[%c32_83, %c0_84] : memref<288x512xf32, #tpu.memory_space<vmem>>, vector<32x512xf32>
    tpu.vector_store %arg17[%c32_83, %c0_84], %108 {strides = array<i32>} : memref<288x512xf32, #tpu.memory_space<vmem>>, vector<32x512xf32>,
    %c15_i32_85 = arith.constant 15 : i32
    %110 = tpu.dynamic_rotate %96 by %c15_i32_85 dim 1 : vector<32x512xf32>, i32 -> vector<32x512xf32>
    %c2_86 = arith.constant 2 : index
    %c0_87 = arith.constant 0 : index
    %111 = vector.load %arg5[%c2_86, %c0_87] : memref<9x512xf32, #tpu.memory_space<vmem>>, vector<1x512xf32>
    %112 = vector.broadcast %111 : vector<1x512xf32> to vector<32x512xf32>
    %113 = arith.mulf %110, %112 : vector<32x512xf32>
    %c64_88 = arith.constant 64 : index
    %c0_89 = arith.constant 0 : index
    %114 = vector.load %arg17[%c64_88, %c0_89] : memref<288x512xf32, #tpu.memory_space<vmem>>, vector<32x512xf32>
    tpu.vector_store %arg17[%c64_88, %c0_89], %113 {strides = array<i32>} : memref<288x512xf32, #tpu.memory_space<vmem>>, vector<32x512xf32>,
    %c1_i32_90 = arith.constant 1 : i32
    %115 = tpu.dynamic_rotate %96 by %c1_i32_90 dim 1 : vector<32x512xf32>, i32 -> vector<32x512xf32>
    %c3_91 = arith.constant 3 : index
    %c0_92 = arith.constant 0 : index
    %116 = vector.load %arg5[%c3_91, %c0_92] : memref<9x512xf32, #tpu.memory_space<vmem>>, vector<1x512xf32>
    %117 = vector.broadcast %116 : vector<1x512xf32> to vector<32x512xf32>
    %118 = arith.mulf %115, %117 : vector<32x512xf32>
    %c96_93 = arith.constant 96 : index
    %c0_94 = arith.constant 0 : index
    %119 = vector.load %arg17[%c96_93, %c0_94] : memref<288x512xf32, #tpu.memory_space<vmem>>, vector<32x512xf32>
    tpu.vector_store %arg17[%c96_93, %c0_94], %118 {strides = array<i32>} : memref<288x512xf32, #tpu.memory_space<vmem>>, vector<32x512xf32>,
    %c4_95 = arith.constant 4 : index
    %c0_96 = arith.constant 0 : index
    %120 = vector.load %arg5[%c4_95, %c0_96] : memref<9x512xf32, #tpu.memory_space<vmem>>, vector<1x512xf32>
    %121 = vector.broadcast %120 : vector<1x512xf32> to vector<32x512xf32>
    %122 = arith.mulf %96, %121 : vector<32x512xf32>
    %c128_97 = arith.constant 128 : index
    %c0_98 = arith.constant 0 : index
    %123 = vector.load %arg17[%c128_97, %c0_98] : memref<288x512xf32, #tpu.memory_space<vmem>>, vector<32x512xf32>
    tpu.vector_store %arg17[%c128_97, %c0_98], %122 {strides = array<i32>} : memref<288x512xf32, #tpu.memory_space<vmem>>, vector<32x512xf32>,
    %c511_i32_99 = arith.constant 511 : i32
    %124 = tpu.dynamic_rotate %96 by %c511_i32_99 dim 1 : vector<32x512xf32>, i32 -> vector<32x512xf32>
    %c5_100 = arith.constant 5 : index
    %c0_101 = arith.constant 0 : index
    %125 = vector.load %arg5[%c5_100, %c0_101] : memref<9x512xf32, #tpu.memory_space<vmem>>, vector<1x512xf32>
    %126 = vector.broadcast %125 : vector<1x512xf32> to vector<32x512xf32>
    %127 = arith.mulf %124, %126 : vector<32x512xf32>
    %c160_102 = arith.constant 160 : index
    %c0_103 = arith.constant 0 : index
    %128 = vector.load %arg17[%c160_102, %c0_103] : memref<288x512xf32, #tpu.memory_space<vmem>>, vector<32x512xf32>
    tpu.vector_store %arg17[%c160_102, %c0_103], %127 {strides = array<i32>} : memref<288x512xf32, #tpu.memory_space<vmem>>, vector<32x512xf32>,
    %c497_i32_104 = arith.constant 497 : i32
    %129 = tpu.dynamic_rotate %96 by %c497_i32_104 dim 1 : vector<32x512xf32>, i32 -> vector<32x512xf32>
    %c6_105 = arith.constant 6 : index
    %c0_106 = arith.constant 0 : index
    %130 = vector.load %arg5[%c6_105, %c0_106] : memref<9x512xf32, #tpu.memory_space<vmem>>, vector<1x512xf32>
    %131 = vector.broadcast %130 : vector<1x512xf32> to vector<32x512xf32>
    %132 = arith.mulf %129, %131 : vector<32x512xf32>
    %c192_107 = arith.constant 192 : index
    %c0_108 = arith.constant 0 : index
    %133 = vector.load %arg17[%c192_107, %c0_108] : memref<288x512xf32, #tpu.memory_space<vmem>>, vector<32x512xf32>
    tpu.vector_store %arg17[%c192_107, %c0_108], %132 {strides = array<i32>} : memref<288x512xf32, #tpu.memory_space<vmem>>, vector<32x512xf32>,
    %c496_i32_109 = arith.constant 496 : i32
    %134 = tpu.dynamic_rotate %96 by %c496_i32_109 dim 1 : vector<32x512xf32>, i32 -> vector<32x512xf32>
    %c7_110 = arith.constant 7 : index
    %c0_111 = arith.constant 0 : index
    %135 = vector.load %arg5[%c7_110, %c0_111] : memref<9x512xf32, #tpu.memory_space<vmem>>, vector<1x512xf32>
    %136 = vector.broadcast %135 : vector<1x512xf32> to vector<32x512xf32>
    %137 = arith.mulf %134, %136 : vector<32x512xf32>
    %c224_112 = arith.constant 224 : index
    %c0_113 = arith.constant 0 : index
    %138 = vector.load %arg17[%c224_112, %c0_113] : memref<288x512xf32, #tpu.memory_space<vmem>>, vector<32x512xf32>
    tpu.vector_store %arg17[%c224_112, %c0_113], %137 {strides = array<i32>} : memref<288x512xf32, #tpu.memory_space<vmem>>, vector<32x512xf32>,
    %c495_i32_114 = arith.constant 495 : i32
    %139 = tpu.dynamic_rotate %96 by %c495_i32_114 dim 1 : vector<32x512xf32>, i32 -> vector<32x512xf32>
    %c8_115 = arith.constant 8 : index
    %c0_116 = arith.constant 0 : index
    %140 = vector.load %arg5[%c8_115, %c0_116] : memref<9x512xf32, #tpu.memory_space<vmem>>, vector<1x512xf32>
    %141 = vector.broadcast %140 : vector<1x512xf32> to vector<32x512xf32>
    %142 = arith.mulf %139, %141 : vector<32x512xf32>
    %c256_117 = arith.constant 256 : index
    %c0_118 = arith.constant 0 : index
    %143 = vector.load %arg17[%c256_117, %c0_118] : memref<288x512xf32, #tpu.memory_space<vmem>>, vector<32x512xf32>
    tpu.vector_store %arg17[%c256_117, %c0_118], %142 {strides = array<i32>} : memref<288x512xf32, #tpu.memory_space<vmem>>, vector<32x512xf32>,
    %c0_119 = arith.constant 0 : index
    %c1_120 = arith.constant 1 : index
    %c0_121 = arith.constant 0 : index
    %c0_122 = arith.constant 0 : index
    %144 = vector.load %arg8[%c0_119, %c1_120, %c0_121, %c0_122] : memref<1x3x32x288xf32, #tpu.memory_space<vmem>>, vector<1x1x32x288xf32>
    %145 = vector.shape_cast %144 : vector<1x1x32x288xf32> to vector<32x288xf32>
    %c0_123 = arith.constant 0 : index
    %c0_124 = arith.constant 0 : index
    %146 = vector.load %arg17[%c0_123, %c0_124] : memref<288x512xf32, #tpu.memory_space<vmem>>, vector<288x512xf32>
    %cst_125 = arith.constant dense<0.000000e+00> : vector<32x512xf32>
    %147 = tpu.matmul %145, %146, %cst_125 {dimension_numbers = #tpu.dot_dimension_numbers<[1], [0], [0], [1], [0, 0, 1, 1], [], []>} : vector<32x288xf32>, vector<288x512xf32>, vector<32x512xf32> -> vector<32x512xf32>
    %c0_126 = arith.constant 0 : index
    %c1_127 = arith.constant 1 : index
    %c0_128 = arith.constant 0 : index
    %c0_129 = arith.constant 0 : index
    %148 = vector.load %arg9[%c0_126, %c1_127, %c0_128, %c0_129] : memref<1x3x32x1xf32, #tpu.memory_space<vmem>>, vector<1x1x32x1xf32>
    %149 = vector.shape_cast %148 : vector<1x1x32x1xf32> to vector<32x1xf32>
    %150 = vector.broadcast %149 : vector<32x1xf32> to vector<32x512xf32>
    %151 = arith.addf %147, %150 : vector<32x512xf32>
    %cst_130 = arith.constant 0.000000e+00 : f32
    %152 = vector.broadcast %cst_130 : f32 to vector<32x512xf32>
    %153 = arith.maximumf %151, %152 : vector<32x512xf32>
    %c0_131 = arith.constant 0 : index
    %c2_132 = arith.constant 2 : index
    %c0_133 = arith.constant 0 : index
    %c0_134 = arith.constant 0 : index
    %154 = vector.load %arg14[%c0_131, %c2_132, %c0_133, %c0_134] : memref<1x4x32x512xf32, #tpu.memory_space<vmem>>, vector<1x1x32x512xf32>
    %155 = vector.shape_cast %154 : vector<1x1x32x512xf32> to vector<32x512xf32>
    %156 = vector.shape_cast %153 : vector<32x512xf32> to vector<1x1x32x512xf32>
    tpu.vector_store %arg14[%c0_131, %c2_132, %c0_133, %c0_134], %156 {strides = array<i32>} : memref<1x4x32x512xf32, #tpu.memory_space<vmem>>, vector<1x1x32x512xf32>,
    %c17_i32_135 = arith.constant 17 : i32
    %157 = tpu.dynamic_rotate %153 by %c17_i32_135 dim 1 : vector<32x512xf32>, i32 -> vector<32x512xf32>
    %c0_136 = arith.constant 0 : index
    %c0_137 = arith.constant 0 : index
    %158 = vector.load %arg5[%c0_136, %c0_137] : memref<9x512xf32, #tpu.memory_space<vmem>>, vector<1x512xf32>
    %159 = vector.broadcast %158 : vector<1x512xf32> to vector<32x512xf32>
    %160 = arith.mulf %157, %159 : vector<32x512xf32>
    %c0_138 = arith.constant 0 : index
    %c0_139 = arith.constant 0 : index
    %161 = vector.load %arg17[%c0_138, %c0_139] : memref<288x512xf32, #tpu.memory_space<vmem>>, vector<32x512xf32>
    tpu.vector_store %arg17[%c0_138, %c0_139], %160 {strides = array<i32>} : memref<288x512xf32, #tpu.memory_space<vmem>>, vector<32x512xf32>,
    %c16_i32_140 = arith.constant 16 : i32
    %162 = tpu.dynamic_rotate %153 by %c16_i32_140 dim 1 : vector<32x512xf32>, i32 -> vector<32x512xf32>
    %c1_141 = arith.constant 1 : index
    %c0_142 = arith.constant 0 : index
    %163 = vector.load %arg5[%c1_141, %c0_142] : memref<9x512xf32, #tpu.memory_space<vmem>>, vector<1x512xf32>
    %164 = vector.broadcast %163 : vector<1x512xf32> to vector<32x512xf32>
    %165 = arith.mulf %162, %164 : vector<32x512xf32>
    %c32_143 = arith.constant 32 : index
    %c0_144 = arith.constant 0 : index
    %166 = vector.load %arg17[%c32_143, %c0_144] : memref<288x512xf32, #tpu.memory_space<vmem>>, vector<32x512xf32>
    tpu.vector_store %arg17[%c32_143, %c0_144], %165 {strides = array<i32>} : memref<288x512xf32, #tpu.memory_space<vmem>>, vector<32x512xf32>,
    %c15_i32_145 = arith.constant 15 : i32
    %167 = tpu.dynamic_rotate %153 by %c15_i32_145 dim 1 : vector<32x512xf32>, i32 -> vector<32x512xf32>
    %c2_146 = arith.constant 2 : index
    %c0_147 = arith.constant 0 : index
    %168 = vector.load %arg5[%c2_146, %c0_147] : memref<9x512xf32, #tpu.memory_space<vmem>>, vector<1x512xf32>
    %169 = vector.broadcast %168 : vector<1x512xf32> to vector<32x512xf32>
    %170 = arith.mulf %167, %169 : vector<32x512xf32>
    %c64_148 = arith.constant 64 : index
    %c0_149 = arith.constant 0 : index
    %171 = vector.load %arg17[%c64_148, %c0_149] : memref<288x512xf32, #tpu.memory_space<vmem>>, vector<32x512xf32>
    tpu.vector_store %arg17[%c64_148, %c0_149], %170 {strides = array<i32>} : memref<288x512xf32, #tpu.memory_space<vmem>>, vector<32x512xf32>,
    %c1_i32_150 = arith.constant 1 : i32
    %172 = tpu.dynamic_rotate %153 by %c1_i32_150 dim 1 : vector<32x512xf32>, i32 -> vector<32x512xf32>
    %c3_151 = arith.constant 3 : index
    %c0_152 = arith.constant 0 : index
    %173 = vector.load %arg5[%c3_151, %c0_152] : memref<9x512xf32, #tpu.memory_space<vmem>>, vector<1x512xf32>
    %174 = vector.broadcast %173 : vector<1x512xf32> to vector<32x512xf32>
    %175 = arith.mulf %172, %174 : vector<32x512xf32>
    %c96_153 = arith.constant 96 : index
    %c0_154 = arith.constant 0 : index
    %176 = vector.load %arg17[%c96_153, %c0_154] : memref<288x512xf32, #tpu.memory_space<vmem>>, vector<32x512xf32>
    tpu.vector_store %arg17[%c96_153, %c0_154], %175 {strides = array<i32>} : memref<288x512xf32, #tpu.memory_space<vmem>>, vector<32x512xf32>,
    %c4_155 = arith.constant 4 : index
    %c0_156 = arith.constant 0 : index
    %177 = vector.load %arg5[%c4_155, %c0_156] : memref<9x512xf32, #tpu.memory_space<vmem>>, vector<1x512xf32>
    %178 = vector.broadcast %177 : vector<1x512xf32> to vector<32x512xf32>
    %179 = arith.mulf %153, %178 : vector<32x512xf32>
    %c128_157 = arith.constant 128 : index
    %c0_158 = arith.constant 0 : index
    %180 = vector.load %arg17[%c128_157, %c0_158] : memref<288x512xf32, #tpu.memory_space<vmem>>, vector<32x512xf32>
    tpu.vector_store %arg17[%c128_157, %c0_158], %179 {strides = array<i32>} : memref<288x512xf32, #tpu.memory_space<vmem>>, vector<32x512xf32>,
    %c511_i32_159 = arith.constant 511 : i32
    %181 = tpu.dynamic_rotate %153 by %c511_i32_159 dim 1 : vector<32x512xf32>, i32 -> vector<32x512xf32>
    %c5_160 = arith.constant 5 : index
    %c0_161 = arith.constant 0 : index
    %182 = vector.load %arg5[%c5_160, %c0_161] : memref<9x512xf32, #tpu.memory_space<vmem>>, vector<1x512xf32>
    %183 = vector.broadcast %182 : vector<1x512xf32> to vector<32x512xf32>
    %184 = arith.mulf %181, %183 : vector<32x512xf32>
    %c160_162 = arith.constant 160 : index
    %c0_163 = arith.constant 0 : index
    %185 = vector.load %arg17[%c160_162, %c0_163] : memref<288x512xf32, #tpu.memory_space<vmem>>, vector<32x512xf32>
    tpu.vector_store %arg17[%c160_162, %c0_163], %184 {strides = array<i32>} : memref<288x512xf32, #tpu.memory_space<vmem>>, vector<32x512xf32>,
    %c497_i32_164 = arith.constant 497 : i32
    %186 = tpu.dynamic_rotate %153 by %c497_i32_164 dim 1 : vector<32x512xf32>, i32 -> vector<32x512xf32>
    %c6_165 = arith.constant 6 : index
    %c0_166 = arith.constant 0 : index
    %187 = vector.load %arg5[%c6_165, %c0_166] : memref<9x512xf32, #tpu.memory_space<vmem>>, vector<1x512xf32>
    %188 = vector.broadcast %187 : vector<1x512xf32> to vector<32x512xf32>
    %189 = arith.mulf %186, %188 : vector<32x512xf32>
    %c192_167 = arith.constant 192 : index
    %c0_168 = arith.constant 0 : index
    %190 = vector.load %arg17[%c192_167, %c0_168] : memref<288x512xf32, #tpu.memory_space<vmem>>, vector<32x512xf32>
    tpu.vector_store %arg17[%c192_167, %c0_168], %189 {strides = array<i32>} : memref<288x512xf32, #tpu.memory_space<vmem>>, vector<32x512xf32>,
    %c496_i32_169 = arith.constant 496 : i32
    %191 = tpu.dynamic_rotate %153 by %c496_i32_169 dim 1 : vector<32x512xf32>, i32 -> vector<32x512xf32>
    %c7_170 = arith.constant 7 : index
    %c0_171 = arith.constant 0 : index
    %192 = vector.load %arg5[%c7_170, %c0_171] : memref<9x512xf32, #tpu.memory_space<vmem>>, vector<1x512xf32>
    %193 = vector.broadcast %192 : vector<1x512xf32> to vector<32x512xf32>
    %194 = arith.mulf %191, %193 : vector<32x512xf32>
    %c224_172 = arith.constant 224 : index
    %c0_173 = arith.constant 0 : index
    %195 = vector.load %arg17[%c224_172, %c0_173] : memref<288x512xf32, #tpu.memory_space<vmem>>, vector<32x512xf32>
    tpu.vector_store %arg17[%c224_172, %c0_173], %194 {strides = array<i32>} : memref<288x512xf32, #tpu.memory_space<vmem>>, vector<32x512xf32>,
    %c495_i32_174 = arith.constant 495 : i32
    %196 = tpu.dynamic_rotate %153 by %c495_i32_174 dim 1 : vector<32x512xf32>, i32 -> vector<32x512xf32>
    %c8_175 = arith.constant 8 : index
    %c0_176 = arith.constant 0 : index
    %197 = vector.load %arg5[%c8_175, %c0_176] : memref<9x512xf32, #tpu.memory_space<vmem>>, vector<1x512xf32>
    %198 = vector.broadcast %197 : vector<1x512xf32> to vector<32x512xf32>
    %199 = arith.mulf %196, %198 : vector<32x512xf32>
    %c256_177 = arith.constant 256 : index
    %c0_178 = arith.constant 0 : index
    %200 = vector.load %arg17[%c256_177, %c0_178] : memref<288x512xf32, #tpu.memory_space<vmem>>, vector<32x512xf32>
    tpu.vector_store %arg17[%c256_177, %c0_178], %199 {strides = array<i32>} : memref<288x512xf32, #tpu.memory_space<vmem>>, vector<32x512xf32>,
    %c0_179 = arith.constant 0 : index
    %c2_180 = arith.constant 2 : index
    %c0_181 = arith.constant 0 : index
    %c0_182 = arith.constant 0 : index
    %201 = vector.load %arg8[%c0_179, %c2_180, %c0_181, %c0_182] : memref<1x3x32x288xf32, #tpu.memory_space<vmem>>, vector<1x1x32x288xf32>
    %202 = vector.shape_cast %201 : vector<1x1x32x288xf32> to vector<32x288xf32>
    %c0_183 = arith.constant 0 : index
    %c0_184 = arith.constant 0 : index
    %203 = vector.load %arg17[%c0_183, %c0_184] : memref<288x512xf32, #tpu.memory_space<vmem>>, vector<288x512xf32>
    %cst_185 = arith.constant dense<0.000000e+00> : vector<32x512xf32>
    %204 = tpu.matmul %202, %203, %cst_185 {dimension_numbers = #tpu.dot_dimension_numbers<[1], [0], [0], [1], [0, 0, 1, 1], [], []>} : vector<32x288xf32>, vector<288x512xf32>, vector<32x512xf32> -> vector<32x512xf32>
    %c0_186 = arith.constant 0 : index
    %c2_187 = arith.constant 2 : index
    %c0_188 = arith.constant 0 : index
    %c0_189 = arith.constant 0 : index
    %205 = vector.load %arg9[%c0_186, %c2_187, %c0_188, %c0_189] : memref<1x3x32x1xf32, #tpu.memory_space<vmem>>, vector<1x1x32x1xf32>
    %206 = vector.shape_cast %205 : vector<1x1x32x1xf32> to vector<32x1xf32>
    %207 = vector.broadcast %206 : vector<32x1xf32> to vector<32x512xf32>
    %208 = arith.addf %204, %207 : vector<32x512xf32>
    %cst_190 = arith.constant 0.000000e+00 : f32
    %209 = vector.broadcast %cst_190 : f32 to vector<32x512xf32>
    %210 = arith.maximumf %208, %209 : vector<32x512xf32>
    %c0_191 = arith.constant 0 : index
    %c3_192 = arith.constant 3 : index
    %c0_193 = arith.constant 0 : index
    %c0_194 = arith.constant 0 : index
    %211 = vector.load %arg14[%c0_191, %c3_192, %c0_193, %c0_194] : memref<1x4x32x512xf32, #tpu.memory_space<vmem>>, vector<1x1x32x512xf32>
    %212 = vector.shape_cast %211 : vector<1x1x32x512xf32> to vector<32x512xf32>
    %213 = vector.shape_cast %210 : vector<32x512xf32> to vector<1x1x32x512xf32>
    tpu.vector_store %arg14[%c0_191, %c3_192, %c0_193, %c0_194], %213 {strides = array<i32>} : memref<1x4x32x512xf32, #tpu.memory_space<vmem>>, vector<1x1x32x512xf32>,
    %c17_i32_195 = arith.constant 17 : i32
    %214 = tpu.dynamic_rotate %210 by %c17_i32_195 dim 1 : vector<32x512xf32>, i32 -> vector<32x512xf32>
    %c0_196 = arith.constant 0 : index
    %c0_197 = arith.constant 0 : index
    %215 = vector.load %arg5[%c0_196, %c0_197] : memref<9x512xf32, #tpu.memory_space<vmem>>, vector<1x512xf32>
    %216 = vector.broadcast %215 : vector<1x512xf32> to vector<32x512xf32>
    %217 = arith.mulf %214, %216 : vector<32x512xf32>
    %c0_198 = arith.constant 0 : index
    %c0_199 = arith.constant 0 : index
    %218 = vector.load %arg17[%c0_198, %c0_199] : memref<288x512xf32, #tpu.memory_space<vmem>>, vector<32x512xf32>
    tpu.vector_store %arg17[%c0_198, %c0_199], %217 {strides = array<i32>} : memref<288x512xf32, #tpu.memory_space<vmem>>, vector<32x512xf32>,
    %c16_i32_200 = arith.constant 16 : i32
    %219 = tpu.dynamic_rotate %210 by %c16_i32_200 dim 1 : vector<32x512xf32>, i32 -> vector<32x512xf32>
    %c1_201 = arith.constant 1 : index
    %c0_202 = arith.constant 0 : index
    %220 = vector.load %arg5[%c1_201, %c0_202] : memref<9x512xf32, #tpu.memory_space<vmem>>, vector<1x512xf32>
    %221 = vector.broadcast %220 : vector<1x512xf32> to vector<32x512xf32>
    %222 = arith.mulf %219, %221 : vector<32x512xf32>
    %c32_203 = arith.constant 32 : index
    %c0_204 = arith.constant 0 : index
    %223 = vector.load %arg17[%c32_203, %c0_204] : memref<288x512xf32, #tpu.memory_space<vmem>>, vector<32x512xf32>
    tpu.vector_store %arg17[%c32_203, %c0_204], %222 {strides = array<i32>} : memref<288x512xf32, #tpu.memory_space<vmem>>, vector<32x512xf32>,
    %c15_i32_205 = arith.constant 15 : i32
    %224 = tpu.dynamic_rotate %210 by %c15_i32_205 dim 1 : vector<32x512xf32>, i32 -> vector<32x512xf32>
    %c2_206 = arith.constant 2 : index
    %c0_207 = arith.constant 0 : index
    %225 = vector.load %arg5[%c2_206, %c0_207] : memref<9x512xf32, #tpu.memory_space<vmem>>, vector<1x512xf32>
    %226 = vector.broadcast %225 : vector<1x512xf32> to vector<32x512xf32>
    %227 = arith.mulf %224, %226 : vector<32x512xf32>
    %c64_208 = arith.constant 64 : index
    %c0_209 = arith.constant 0 : index
    %228 = vector.load %arg17[%c64_208, %c0_209] : memref<288x512xf32, #tpu.memory_space<vmem>>, vector<32x512xf32>
    tpu.vector_store %arg17[%c64_208, %c0_209], %227 {strides = array<i32>} : memref<288x512xf32, #tpu.memory_space<vmem>>, vector<32x512xf32>,
    %c1_i32_210 = arith.constant 1 : i32
    %229 = tpu.dynamic_rotate %210 by %c1_i32_210 dim 1 : vector<32x512xf32>, i32 -> vector<32x512xf32>
    %c3_211 = arith.constant 3 : index
    %c0_212 = arith.constant 0 : index
    %230 = vector.load %arg5[%c3_211, %c0_212] : memref<9x512xf32, #tpu.memory_space<vmem>>, vector<1x512xf32>
    %231 = vector.broadcast %230 : vector<1x512xf32> to vector<32x512xf32>
    %232 = arith.mulf %229, %231 : vector<32x512xf32>
    %c96_213 = arith.constant 96 : index
    %c0_214 = arith.constant 0 : index
    %233 = vector.load %arg17[%c96_213, %c0_214] : memref<288x512xf32, #tpu.memory_space<vmem>>, vector<32x512xf32>
    tpu.vector_store %arg17[%c96_213, %c0_214], %232 {strides = array<i32>} : memref<288x512xf32, #tpu.memory_space<vmem>>, vector<32x512xf32>,
    %c4_215 = arith.constant 4 : index
    %c0_216 = arith.constant 0 : index
    %234 = vector.load %arg5[%c4_215, %c0_216] : memref<9x512xf32, #tpu.memory_space<vmem>>, vector<1x512xf32>
    %235 = vector.broadcast %234 : vector<1x512xf32> to vector<32x512xf32>
    %236 = arith.mulf %210, %235 : vector<32x512xf32>
    %c128_217 = arith.constant 128 : index
    %c0_218 = arith.constant 0 : index
    %237 = vector.load %arg17[%c128_217, %c0_218] : memref<288x512xf32, #tpu.memory_space<vmem>>, vector<32x512xf32>
    tpu.vector_store %arg17[%c128_217, %c0_218], %236 {strides = array<i32>} : memref<288x512xf32, #tpu.memory_space<vmem>>, vector<32x512xf32>,
    %c511_i32_219 = arith.constant 511 : i32
    %238 = tpu.dynamic_rotate %210 by %c511_i32_219 dim 1 : vector<32x512xf32>, i32 -> vector<32x512xf32>
    %c5_220 = arith.constant 5 : index
    %c0_221 = arith.constant 0 : index
    %239 = vector.load %arg5[%c5_220, %c0_221] : memref<9x512xf32, #tpu.memory_space<vmem>>, vector<1x512xf32>
    %240 = vector.broadcast %239 : vector<1x512xf32> to vector<32x512xf32>
    %241 = arith.mulf %238, %240 : vector<32x512xf32>
    %c160_222 = arith.constant 160 : index
    %c0_223 = arith.constant 0 : index
    %242 = vector.load %arg17[%c160_222, %c0_223] : memref<288x512xf32, #tpu.memory_space<vmem>>, vector<32x512xf32>
    tpu.vector_store %arg17[%c160_222, %c0_223], %241 {strides = array<i32>} : memref<288x512xf32, #tpu.memory_space<vmem>>, vector<32x512xf32>,
    %c497_i32_224 = arith.constant 497 : i32
    %243 = tpu.dynamic_rotate %210 by %c497_i32_224 dim 1 : vector<32x512xf32>, i32 -> vector<32x512xf32>
    %c6_225 = arith.constant 6 : index
    %c0_226 = arith.constant 0 : index
    %244 = vector.load %arg5[%c6_225, %c0_226] : memref<9x512xf32, #tpu.memory_space<vmem>>, vector<1x512xf32>
    %245 = vector.broadcast %244 : vector<1x512xf32> to vector<32x512xf32>
    %246 = arith.mulf %243, %245 : vector<32x512xf32>
    %c192_227 = arith.constant 192 : index
    %c0_228 = arith.constant 0 : index
    %247 = vector.load %arg17[%c192_227, %c0_228] : memref<288x512xf32, #tpu.memory_space<vmem>>, vector<32x512xf32>
    tpu.vector_store %arg17[%c192_227, %c0_228], %246 {strides = array<i32>} : memref<288x512xf32, #tpu.memory_space<vmem>>, vector<32x512xf32>,
    %c496_i32_229 = arith.constant 496 : i32
    %248 = tpu.dynamic_rotate %210 by %c496_i32_229 dim 1 : vector<32x512xf32>, i32 -> vector<32x512xf32>
    %c7_230 = arith.constant 7 : index
    %c0_231 = arith.constant 0 : index
    %249 = vector.load %arg5[%c7_230, %c0_231] : memref<9x512xf32, #tpu.memory_space<vmem>>, vector<1x512xf32>
    %250 = vector.broadcast %249 : vector<1x512xf32> to vector<32x512xf32>
    %251 = arith.mulf %248, %250 : vector<32x512xf32>
    %c224_232 = arith.constant 224 : index
    %c0_233 = arith.constant 0 : index
    %252 = vector.load %arg17[%c224_232, %c0_233] : memref<288x512xf32, #tpu.memory_space<vmem>>, vector<32x512xf32>
    tpu.vector_store %arg17[%c224_232, %c0_233], %251 {strides = array<i32>} : memref<288x512xf32, #tpu.memory_space<vmem>>, vector<32x512xf32>,
    %c495_i32_234 = arith.constant 495 : i32
    %253 = tpu.dynamic_rotate %210 by %c495_i32_234 dim 1 : vector<32x512xf32>, i32 -> vector<32x512xf32>
    %c8_235 = arith.constant 8 : index
    %c0_236 = arith.constant 0 : index
    %254 = vector.load %arg5[%c8_235, %c0_236] : memref<9x512xf32, #tpu.memory_space<vmem>>, vector<1x512xf32>
    %255 = vector.broadcast %254 : vector<1x512xf32> to vector<32x512xf32>
    %256 = arith.mulf %253, %255 : vector<32x512xf32>
    %c256_237 = arith.constant 256 : index
    %c0_238 = arith.constant 0 : index
    %257 = vector.load %arg17[%c256_237, %c0_238] : memref<288x512xf32, #tpu.memory_space<vmem>>, vector<32x512xf32>
    tpu.vector_store %arg17[%c256_237, %c0_238], %256 {strides = array<i32>} : memref<288x512xf32, #tpu.memory_space<vmem>>, vector<32x512xf32>,
    %c0_239 = arith.constant 0 : index
    %c0_240 = arith.constant 0 : index
    %c0_241 = arith.constant 0 : index
    %258 = vector.load %arg10[%c0_239, %c0_240, %c0_241] : memref<1x1x288xf32, #tpu.memory_space<vmem>>, vector<1x1x288xf32>
    %259 = vector.shape_cast %258 : vector<1x1x288xf32> to vector<1x288xf32>
    %c0_242 = arith.constant 0 : index
    %c0_243 = arith.constant 0 : index
    %260 = vector.load %arg17[%c0_242, %c0_243] : memref<288x512xf32, #tpu.memory_space<vmem>>, vector<288x512xf32>
    %cst_244 = arith.constant dense<0.000000e+00> : vector<1x512xf32>
    %261 = tpu.matmul %259, %260, %cst_244 {dimension_numbers = #tpu.dot_dimension_numbers<[1], [0], [0], [1], [0, 0, 1, 1], [], []>} : vector<1x288xf32>, vector<288x512xf32>, vector<1x512xf32> -> vector<1x512xf32>
    %c0_245 = arith.constant 0 : index
    %c0_246 = arith.constant 0 : index
    %c0_247 = arith.constant 0 : index
    %262 = vector.load %arg11[%c0_245, %c0_246, %c0_247] : memref<1x1x1xf32, #tpu.memory_space<vmem>>, vector<1x1x1xf32>
    %263 = vector.shape_cast %262 : vector<1x1x1xf32> to vector<1x1xf32>
    %264 = vector.broadcast %263 : vector<1x1xf32> to vector<1x512xf32>
    %265 = arith.addf %261, %264 : vector<1x512xf32>
    %c0_248 = arith.constant 0 : index
    %c0_249 = arith.constant 0 : index
    %c0_250 = arith.constant 0 : index
    %c0_251 = arith.constant 0 : index
    %266 = vector.load %arg15[%c0_248, %c0_249, %c0_250, %c0_251] : memref<1x1x1x512xf32, #tpu.memory_space<vmem>>, vector<1x1x1x512xf32>
    %267 = vector.shape_cast %266 : vector<1x1x1x512xf32> to vector<1x512xf32>
    %268 = vector.shape_cast %265 : vector<1x512xf32> to vector<1x1x1x512xf32>
    tpu.vector_store %arg15[%c0_248, %c0_249, %c0_250, %c0_251], %268 {strides = array<i32>} : memref<1x1x1x512xf32, #tpu.memory_space<vmem>>, vector<1x1x1x512xf32>,
    %269 = vector.extract_strided_slice %265 {offsets = [0, 0], sizes = [1, 256], strides = [1, 1]} : vector<1x512xf32> to vector<1x256xf32>
    %c0_252 = arith.constant 0 : index
    %c0_253 = arith.constant 0 : index
    %270 = vector.load %arg19[%c0_252, %c0_253] : memref<2x256xf32, #tpu.memory_space<vmem>>, vector<1x256xf32>
    tpu.vector_store %arg19[%c0_252, %c0_253], %269 {strides = array<i32>} : memref<2x256xf32, #tpu.memory_space<vmem>>, vector<1x256xf32>,
    %271 = vector.extract_strided_slice %265 {offsets = [0, 256], sizes = [1, 256], strides = [1, 1]} : vector<1x512xf32> to vector<1x256xf32>
    %c1_254 = arith.constant 1 : index
    %c0_255 = arith.constant 0 : index
    %272 = vector.load %arg19[%c1_254, %c0_255] : memref<2x256xf32, #tpu.memory_space<vmem>>, vector<1x256xf32>
    tpu.vector_store %arg19[%c1_254, %c0_255], %271 {strides = array<i32>} : memref<2x256xf32, #tpu.memory_space<vmem>>, vector<1x256xf32>,
    %c0_256 = arith.constant 0 : index
    %c0_257 = arith.constant 0 : index
    %273 = vector.load %arg19[%c0_256, %c0_257] : memref<2x256xf32, #tpu.memory_space<vmem>>, vector<2x256xf32>
    %c0_258 = arith.constant 0 : index
    %c0_259 = arith.constant 0 : index
    %274 = vector.load %arg12[%c0_258, %c0_259] : memref<256x512xf32, #tpu.memory_space<vmem>>, vector<256x512xf32>
    %cst_260 = arith.constant dense<0.000000e+00> : vector<2x512xf32>
    %275 = tpu.matmul %273, %274, %cst_260 {dimension_numbers = #tpu.dot_dimension_numbers<[1], [0], [0], [1], [0, 0, 1, 1], [], []>} : vector<2x256xf32>, vector<256x512xf32>, vector<2x512xf32> -> vector<2x512xf32>
    %c0_261 = arith.constant 0 : index
    %c0_262 = arith.constant 0 : index
    %c0_263 = arith.constant 0 : index
    %276 = vector.load %arg3[%c0_261, %c0_262, %c0_263] : memref<1x2x512xf32, #tpu.memory_space<vmem>>, vector<1x2x512xf32>
    %277 = vector.shape_cast %276 : vector<1x2x512xf32> to vector<2x512xf32>
    %c0_264 = arith.constant 0 : index
    %c0_265 = arith.constant 0 : index
    %c0_266 = arith.constant 0 : index
    %278 = vector.load %arg4[%c0_264, %c0_265, %c0_266] : memref<1x2x512xf32, #tpu.memory_space<vmem>>, vector<1x2x512xf32>
    %279 = vector.shape_cast %278 : vector<1x2x512xf32> to vector<2x512xf32>
    %280 = arith.mulf %279, %275 : vector<2x512xf32>
    %281 = arith.addf %277, %280 : vector<2x512xf32>
    %c0_267 = arith.constant 0 : index
    %c0_268 = arith.constant 0 : index
    %282 = vector.load %arg13[%c0_267, %c0_268] : memref<512x256xf32, #tpu.memory_space<vmem>>, vector<512x256xf32>
    %cst_269 = arith.constant dense<0.000000e+00> : vector<2x256xf32>
    %283 = tpu.matmul %281, %282, %cst_269 {dimension_numbers = #tpu.dot_dimension_numbers<[1], [0], [0], [1], [0, 0, 1, 1], [], []>} : vector<2x512xf32>, vector<512x256xf32>, vector<2x256xf32> -> vector<2x256xf32>
    %284 = vector.extract_strided_slice %283 {offsets = [0, 0], sizes = [1, 256], strides = [1, 1]} : vector<2x256xf32> to vector<1x256xf32>
    %285 = vector.extract_strided_slice %283 {offsets = [1, 0], sizes = [1, 256], strides = [1, 1]} : vector<2x256xf32> to vector<1x256xf32>
    %286 = tpu.concatenate %284, %285 in 1 : vector<1x256xf32>, vector<1x256xf32> -> vector<1x512xf32>
    %c0_270 = arith.constant 0 : index
    %c0_271 = arith.constant 0 : index
    %287 = vector.load %arg18[%c0_270, %c0_271] : memref<1x512xf32, #tpu.memory_space<vmem>>, vector<1x512xf32>
    tpu.vector_store %arg18[%c0_270, %c0_271], %286 {strides = array<i32>} : memref<1x512xf32, #tpu.memory_space<vmem>>, vector<1x512xf32>,
    %c0_272 = arith.constant 0 : index
    %c0_273 = arith.constant 0 : index
    %c0_274 = arith.constant 0 : index
    %288 = vector.load %arg16[%c0_272, %c0_273, %c0_274] : memref<1x1x512xf32, #tpu.memory_space<vmem>>, vector<1x1x512xf32>
    %289 = vector.shape_cast %288 : vector<1x1x512xf32> to vector<1x512xf32>
    %290 = vector.shape_cast %286 : vector<1x512xf32> to vector<1x1x512xf32>
    tpu.vector_store %arg16[%c0_272, %c0_273, %c0_274], %290 {strides = array<i32>} : memref<1x1x512xf32, #tpu.memory_space<vmem>>, vector<1x1x512xf32>,
    return
  }
  func.func @transform_0(%arg0: i32, %arg1: i32) -> (i32, i32, i32) {
    %c0_i32 = arith.constant 0 : i32
    %c0_i32_0 = arith.constant 0 : i32
    %c0_i32_1 = arith.constant 0 : i32
    return %arg0, %c0_i32, %c0_i32_0 : i32, i32, i32
  }
  func.func @transform_1(%arg0: i32, %arg1: i32) -> (i32, i32, i32) {
    %c0_i32 = arith.constant 0 : i32
    %c0_i32_0 = arith.constant 0 : i32
    %c0_i32_1 = arith.constant 0 : i32
    return %arg0, %c0_i32, %c0_i32_0 : i32, i32, i32
  }
  func.func @transform_2(%arg0: i32, %arg1: i32) -> (i32, i32, i32) {
    %c0_i32 = arith.constant 0 : i32
    %c0_i32_0 = arith.constant 0 : i32
    %c0_i32_1 = arith.constant 0 : i32
    return %arg0, %c0_i32, %c0_i32_0 : i32, i32, i32
  }
  func.func @transform_3(%arg0: i32, %arg1: i32) -> (i32, i32) {
    %c0_i32 = arith.constant 0 : i32
    %c0_i32_0 = arith.constant 0 : i32
    %c0_i32_1 = arith.constant 0 : i32
    return %c0_i32, %c0_i32_0 : i32, i32
  }
  func.func @transform_4(%arg0: i32, %arg1: i32) -> (i32, i32, i32) {
    %c0_i32 = arith.constant 0 : i32
    %c0_i32_0 = arith.constant 0 : i32
    %c0_i32_1 = arith.constant 0 : i32
    return %arg1, %c0_i32, %c0_i32_0 : i32, i32, i32
  }
  func.func @transform_5(%arg0: i32, %arg1: i32) -> (i32, i32, i32) {
    %c0_i32 = arith.constant 0 : i32
    %c0_i32_0 = arith.constant 0 : i32
    %c0_i32_1 = arith.constant 0 : i32
    return %arg1, %c0_i32, %c0_i32_0 : i32, i32, i32
  }
  func.func @transform_6(%arg0: i32, %arg1: i32) -> (i32, i32, i32, i32) {
    %c0_i32 = arith.constant 0 : i32
    %c0_i32_0 = arith.constant 0 : i32
    %c0_i32_1 = arith.constant 0 : i32
    %c0_i32_2 = arith.constant 0 : i32
    return %arg1, %c0_i32, %c0_i32_0, %c0_i32_1 : i32, i32, i32, i32
  }
  func.func @transform_7(%arg0: i32, %arg1: i32) -> (i32, i32, i32, i32) {
    %c0_i32 = arith.constant 0 : i32
    %c0_i32_0 = arith.constant 0 : i32
    %c0_i32_1 = arith.constant 0 : i32
    %c0_i32_2 = arith.constant 0 : i32
    return %arg1, %c0_i32, %c0_i32_0, %c0_i32_1 : i32, i32, i32, i32
  }
  func.func @transform_8(%arg0: i32, %arg1: i32) -> (i32, i32, i32) {
    %c0_i32 = arith.constant 0 : i32
    %c0_i32_0 = arith.constant 0 : i32
    %c0_i32_1 = arith.constant 0 : i32
    return %arg1, %c0_i32, %c0_i32_0 : i32, i32, i32
  }
  func.func @transform_9(%arg0: i32, %arg1: i32) -> (i32, i32, i32) {
    %c0_i32 = arith.constant 0 : i32
    %c0_i32_0 = arith.constant 0 : i32
    %c0_i32_1 = arith.constant 0 : i32
    return %arg1, %c0_i32, %c0_i32_0 : i32, i32, i32
  }
  func.func @transform_10(%arg0: i32, %arg1: i32) -> (i32, i32) {
    %c0_i32 = arith.constant 0 : i32
    %c0_i32_0 = arith.constant 0 : i32
    %c0_i32_1 = arith.constant 0 : i32
    return %c0_i32, %c0_i32_0 : i32, i32
  }
  func.func @transform_11(%arg0: i32, %arg1: i32) -> (i32, i32) {
    %c0_i32 = arith.constant 0 : i32
    %c0_i32_0 = arith.constant 0 : i32
    %c0_i32_1 = arith.constant 0 : i32
    return %c0_i32, %c0_i32_0 : i32, i32
  }
  func.func @transform_12(%arg0: i32, %arg1: i32) -> (i32, i32, i32, i32) {
    %c0_i32 = arith.constant 0 : i32
    %c0_i32_0 = arith.constant 0 : i32
    %c0_i32_1 = arith.constant 0 : i32
    return %arg0, %arg1, %c0_i32, %c0_i32_0 : i32, i32, i32, i32
  }
  func.func @transform_13(%arg0: i32, %arg1: i32) -> (i32, i32, i32, i32) {
    %c0_i32 = arith.constant 0 : i32
    %c0_i32_0 = arith.constant 0 : i32
    %c0_i32_1 = arith.constant 0 : i32
    return %arg0, %arg1, %c0_i32, %c0_i32_0 : i32, i32, i32, i32
  }
  func.func @transform_14(%arg0: i32, %arg1: i32) -> (i32, i32, i32) {
    %c0_i32 = arith.constant 0 : i32
    %c0_i32_0 = arith.constant 0 : i32
    %c0_i32_1 = arith.constant 0 : i32
    return %arg0, %c0_i32, %c0_i32_0 : i32, i32, i32
  }
}

</mosaic_0001>

<llo_original>
// kernel: squeeze.28
$region0: #{squeeze.28}
  %s0 = inlined_call_operand.vmem [shape: f32[2,16,16], index: 0, kind: input, shape index: {}]
  %s1 = inlined_call_operand.vmem [shape: f32[2,256], index: 1, kind: output, shape index: {}]
  $region1: #{squeeze.28} parent=0
    #allocation0 [shape = 'u8[8192]{0}', space=vmem, size = 0x2000, scoped, tag = 'scoped mem for output reshape']
    %v2 = vld [vmem:[%s0] ss:$8 sm:$0xf]
    %vm3 = vcmask 130048
    %4 = vst.msk [vmem:[#allocation0] ss:$8 sm:$0x3] %vm3, %v2
    %s5 = scalar_lea.vmem [#allocation0], 4294967281
    %6 = vst.msk [vmem:[%s5] ss:$8 sm:$0xc] %vm3, %v2
    %s7 = scalar_lea.vmem %s0, 7
    %s8 = smov 3
    %v9 = vld [vmem:[%s7] ss:$16 sm:%s8]
    %s10 = scalar_lea.vmem %s0, 4294967279
    %s11 = smov 12
    %v12 = vld [vmem:[%s10] ss:$16 sm:%s11]
    %vm13 = vcmask 1043458
    %v14 = vsel %vm13, %v12, %v9
    %15 = vrot.lane.b32.xlu0 %v14, 112
    %v16 = vpop.permute.xlu0 %15
    %vm17 = vcmask 1048448
    %18 = vst.msk [vmem:[#allocation0] sm:$0x3] %vm17, %v16
    %s19 = scalar_lea.vmem [#allocation0], 6
    %20 = vst.msk [vmem:[%s19] sm:$0xc] %vm17, %v16
    %s21 = scalar_lea.vmem %s0, 6
    %s22 = smov 3
    %v23 = vld [vmem:[%s21] ss:$16 sm:%s22]
    %s24 = scalar_lea.vmem %s0, 4294967278
    %s25 = smov 12
    %v26 = vld [vmem:[%s24] ss:$16 sm:%s25]
    %vm27 = vcmask 1043458
    %v28 = vsel %vm27, %v26, %v23
    %29 = vrot.lane.b32.xlu0 %v28, 96
    %v30 = vpop.permute.xlu0 %29
    %vm31 = vcmask 917248
    %32 = vst.msk [vmem:[#allocation0] sm:$0x3] %vm31, %v30
    %s33 = scalar_lea.vmem [#allocation0], 6
    %34 = vst.msk [vmem:[%s33] sm:$0xc] %vm31, %v30
    %s35 = scalar_lea.vmem %s0, 5
    %s36 = smov 3
    %v37 = vld [vmem:[%s35] ss:$16 sm:%s36]
    %s38 = scalar_lea.vmem %s0, 4294967277
    %s39 = smov 12
    %v40 = vld [vmem:[%s38] ss:$16 sm:%s39]
    %vm41 = vcmask 1043458
    %v42 = vsel %vm41, %v40, %v37
    %43 = vrot.lane.b32.xlu0 %v42, 80
    %v44 = vpop.permute.xlu0 %43
    %vm45 = vcmask 786048
    %46 = vst.msk [vmem:[#allocation0] sm:$0x3] %vm45, %v44
    %s47 = scalar_lea.vmem [#allocation0], 6
    %48 = vst.msk [vmem:[%s47] sm:$0xc] %vm45, %v44
    %s49 = scalar_lea.vmem %s0, 4
    %s50 = smov 3
    %v51 = vld [vmem:[%s49] ss:$16 sm:%s50]
    %s52 = scalar_lea.vmem %s0, 4294967276
    %s53 = smov 12
    %v54 = vld [vmem:[%s52] ss:$16 sm:%s53]
    %vm55 = vcmask 1043458
    %v56 = vsel %vm55, %v54, %v51
    %57 = vrot.lane.b32.xlu0 %v56, 64
    %v58 = vpop.permute.xlu0 %57
    %vm59 = vcmask 654848
    %60 = vst.msk [vmem:[#allocation0] sm:$0x3] %vm59, %v58
    %s61 = scalar_lea.vmem [#allocation0], 6
    %62 = vst.msk [vmem:[%s61] sm:$0xc] %vm59, %v58
    %s63 = scalar_lea.vmem %s0, 3
    %s64 = smov 3
    %v65 = vld [vmem:[%s63] ss:$16 sm:%s64]
    %s66 = scalar_lea.vmem %s0, 4294967275
    %s67 = smov 12
    %v68 = vld [vmem:[%s66] ss:$16 sm:%s67]
    %vm69 = vcmask 1043458
    %v70 = vsel %vm69, %v68, %v65
    %71 = vrot.lane.b32.xlu0 %v70, 48
    %v72 = vpop.permute.xlu0 %71
    %vm73 = vcmask 523648
    %74 = vst.msk [vmem:[#allocation0] sm:$0x3] %vm73, %v72
    %s75 = scalar_lea.vmem [#allocation0], 6
    %76 = vst.msk [vmem:[%s75] sm:$0xc] %vm73, %v72
    %s77 = scalar_lea.vmem %s0, 2
    %s78 = smov 3
    %v79 = vld [vmem:[%s77] ss:$16 sm:%s78]
    %s80 = scalar_lea.vmem %s0, 4294967274
    %s81 = smov 12
    %v82 = vld [vmem:[%s80] ss:$16 sm:%s81]
    %vm83 = vcmask 1043458
    %v84 = vsel %vm83, %v82, %v79
    %85 = vrot.lane.b32.xlu0 %v84, 32
    %v86 = vpop.permute.xlu0 %85
    %vm87 = vcmask 392448
    %88 = vst.msk [vmem:[#allocation0] sm:$0x3] %vm87, %v86
    %s89 = scalar_lea.vmem [#allocation0], 6
    %90 = vst.msk [vmem:[%s89] sm:$0xc] %vm87, %v86
    %s91 = scalar_lea.vmem %s0, 1
    %s92 = smov 3
    %v93 = vld [vmem:[%s91] ss:$16 sm:%s92]
    %s94 = scalar_lea.vmem %s0, 4294967273
    %s95 = smov 12
    %v96 = vld [vmem:[%s94] ss:$16 sm:%s95]
    %vm97 = vcmask 1043458
    %v98 = vsel %vm97, %v96, %v93
    %99 = vrot.lane.b32.xlu0 %v98, 16
    %v100 = vpop.permute.xlu0 %99
    %vm101 = vcmask 261248
    %102 = vst.msk [vmem:[#allocation0] sm:$0x3] %vm101, %v100
    %s103 = scalar_lea.vmem [#allocation0], 6
    %104 = vst.msk [vmem:[%s103] sm:$0xc] %vm101, %v100
    %s106 = ssub.s32 4, 1
    %v107 = vld [vmem:[#allocation0] sm:%s106]
    %s109 = ssub.s32 4, 1
    %110 = vst [vmem:[%s1] sm:%s109] %v107
    %s111 = scalar_lea.vmem [#allocation0], 8
    %v112 = vld [vmem:[%s111] sm:%s106]
    %s114 = ssub.s32 4, 1
    %s115 = scalar_lea.vmem %s1, 2
    %116 = vst [vmem:[%s115] sm:%s114] %v112

// kernel: squeeze.33
$region0: #{squeeze.33}
  %s0 = inlined_call_operand.vmem [shape: f32[512], index: 0, kind: input, shape index: {}]
  %s1 = inlined_call_operand.hbm [shape: f32[2,1,16,16], index: 1, kind: output, shape index: {}]
  $region1: #{squeeze.33} parent=0
    #allocation0 [shape = 'u8[16384]{0}', space=vmem, size = 0x4000, scoped, tag = 'operand span for operand 1']
    #allocation1 [shape = 's32[1]{0}', space=sflag, size = 0x4, scoped, tag = 'scoped memory for squeeze.33']
    #allocation2 [shape = 'u8[4096]{0}', space=vmem, size = 0x1000, scoped, tag = 'scoped mem for input reshape']
    %2 = vsyncpa [#allocation1], 0
    %s4 = ssub.s32 16, 1
    %v5 = vld [vmem:[%s0] sm:%s4]
    %6 = vst [vmem:[#allocation2] sm:%s4] %v5
    %v7 = vld [vmem:[#allocation2] sm:$0xf]
    %vm8 = vcmask 130048
    %9 = vst.msk [vmem:[#allocation0] ss:$8 sm:$0xf] %vm8, %v7
    %v10 = vld [vmem:[#allocation2] sm:$0xf]
    %11 = vrot.lane.b32.xlu0 %v10, 112
    %v12 = vpop.permute.xlu0 %11
    %vm13 = vcmask 130048
    %s14 = scalar_lea.vmem [#allocation0], 1
    %15 = vst.msk [vmem:[%s14] ss:$8 sm:$0xf] %vm13, %v12
    %v16 = vld [vmem:[#allocation2] sm:$0xf]
    %17 = vrot.lane.b32.xlu0 %v16, 96
    %v18 = vpop.permute.xlu0 %17
    %vm19 = vcmask 130048
    %s20 = scalar_lea.vmem [#allocation0], 2
    %21 = vst.msk [vmem:[%s20] ss:$8 sm:$0xf] %vm19, %v18
    %v22 = vld [vmem:[#allocation2] sm:$0xf]
    %23 = vrot.lane.b32.xlu0 %v22, 80
    %v24 = vpop.permute.xlu0 %23
    %vm25 = vcmask 130048
    %s26 = scalar_lea.vmem [#allocation0], 3
    %27 = vst.msk [vmem:[%s26] ss:$8 sm:$0xf] %vm25, %v24
    %v28 = vld [vmem:[#allocation2] sm:$0xf]
    %29 = vrot.lane.b32.xlu0 %v28, 64
    %v30 = vpop.permute.xlu0 %29
    %vm31 = vcmask 130048
    %s32 = scalar_lea.vmem [#allocation0], 4
    %33 = vst.msk [vmem:[%s32] ss:$8 sm:$0xf] %vm31, %v30
    %v34 = vld [vmem:[#allocation2] sm:$0xf]
    %35 = vrot.lane.b32.xlu0 %v34, 48
    %v36 = vpop.permute.xlu0 %35
    %vm37 = vcmask 130048
    %s38 = scalar_lea.vmem [#allocation0], 5
    %39 = vst.msk [vmem:[%s38] ss:$8 sm:$0xf] %vm37, %v36
    %v40 = vld [vmem:[#allocation2] sm:$0xf]
    %41 = vrot.lane.b32.xlu0 %v40, 32
    %v42 = vpop.permute.xlu0 %41
    %vm43 = vcmask 130048
    %s44 = scalar_lea.vmem [#allocation0], 6
    %45 = vst.msk [vmem:[%s44] ss:$8 sm:$0xf] %vm43, %v42
    %v46 = vld [vmem:[#allocation2] sm:$0xf]
    %47 = vrot.lane.b32.xlu0 %v46, 16
    %v48 = vpop.permute.xlu0 %47
    %vm49 = vcmask 130048
    %s50 = scalar_lea.vmem [#allocation0], 7
    %51 = vst.msk [vmem:[%s50] ss:$8 sm:$0xf] %vm49, %v48
    %53 = vsyncadd [#allocation1], 0
    %s55 = sshll.u32 [#allocation0], 4
    %s56 = int_to_ptr.vmem [resolvable:$true] %s55
    %s57 = sshll.u32 %s1, 4
    %s58 = int_to_ptr.hbm [resolvable:$true] %s57
    %60 = dma.vmem_to_hbm [thread:$0]  %s56, 512, %s58, [#allocation1]
    %62 = dma.done [#allocation1], 512
    %63 = vsyncpa [#allocation1], 1

// kernel: dc_teacher_net.1
$region0: #{dc_teacher_net.1}
  #allocation0 [shape = 'u32[]', space=smem, size = 0x4, offset = 0x4, fixed_abs, tag = 'smem constant byte address 0x4 - core index']
  #allocation1 [shape = 'u32[72,128]{1,0:T(1,128)}', space=vmem, size = 0x9000, scoped, tag = 'internal scratch']
  #allocation2 [shape = 'f32[288,512]{1,0:T(8,128)}', space=vmem, size = 0x90000, scoped, tag = 'scratch operand']
  #allocation3 [shape = 'f32[1,512]{1,0:T(1,128)}', space=vmem, size = 0x800, scoped, tag = 'scratch operand']
  #allocation4 [shape = 'f32[2,256]{1,0:T(2,128)}', space=vmem, size = 0x800, scoped, tag = 'scratch operand']
  %s0 = inlined_call_operand.vmem [shape: f32[1,1,512], index: 0, kind: input, shape index: {}]
  %s1 = inlined_call_operand.vmem [shape: f32[1,2,512], index: 1, kind: input, shape index: {}]
  %s2 = inlined_call_operand.vmem [shape: f32[1,2,512], index: 2, kind: input, shape index: {}]
  %s3 = inlined_call_operand.vmem [shape: f32[9,512], index: 3, kind: input, shape index: {}]
  %s4 = inlined_call_operand.vmem [shape: f32[5,32,9], index: 4, kind: input, shape index: {}]
  %s5 = inlined_call_operand.vmem [shape: f32[5,32,1], index: 5, kind: input, shape index: {}]
  %s6 = inlined_call_operand.vmem [shape: f32[5,3,32,288], index: 6, kind: input, shape index: {}]
  %s7 = inlined_call_operand.vmem [shape: f32[5,3,32,1], index: 7, kind: input, shape index: {}]
  %s8 = inlined_call_operand.vmem [shape: f32[5,1,288], index: 8, kind: input, shape index: {}]
  %s9 = inlined_call_operand.vmem [shape: f32[5,1,1], index: 9, kind: input, shape index: {}]
  %s10 = inlined_call_operand.vmem [shape: f32[256,512], index: 10, kind: input, shape index: {}]
  %s11 = inlined_call_operand.vmem [shape: f32[512,256], index: 11, kind: input, shape index: {}]
  %s12 = inlined_call_operand.vmem [shape: f32[1,20,32,512], index: 12, kind: output, shape index: {0}]
  %s13 = inlined_call_operand.vmem [shape: f32[1,5,1,512], index: 13, kind: output, shape index: {1}]
  %s14 = inlined_call_operand.vmem [shape: f32[1,1,512], index: 14, kind: output, shape index: {2}]
  %15 = xla_tuple %s12, %s13, %s14
  %s16 = sld [smem:[#allocation0]]
  $region101: #{dc_teacher_net.1} parent=0
    _
  %s18 = ssub.s32 1, %s16
  %s19 = scalar_select 0, %s18, %s16
  loop: start=0, step=1, limit=7
  $region2: #{dc_teacher_net.1} parent=0 // loop_pre_header
    _
  $region3: #{dc_teacher_net.1} parent=0 // loop_header
    %s21 = sphi 0, %s25
    %p22 = scmp.ge.s32.totalorder %s21, 7
    %s28 = sphi 0, %s40
    %s29 = sphi 0, %s36
    %s30 = sphi 0, %s28
    %s31 = sphi 0, %s29
    %s32 = sphi 0, %s30
    %s33 = sphi 0, %s31
    %s43 = sphi 0, %s45
    %s46 = sphi 0, %s43
    %s47 = sphi 0, %s46
    %s63 = sphi 0, %s47
    %s69 = sphi 0, %s71
    %s72 = sphi 0, %s69
    %s73 = sphi 0, %s72
    %s89 = sphi 0, %s73
    %s95 = sphi 0, %s97
    %s98 = sphi 0, %s95
    %s99 = sphi 0, %s98
    %s115 = sphi 0, %s99
    %s119 = sphi 0, %s119
    %s121 = sphi 0, %s119
    %s122 = sphi 0, %s121
    %s136 = sphi 0, %s122
    %s142 = sphi 0, %s144
    %s145 = sphi 0, %s142
    %s146 = sphi 0, %s145
    %s162 = sphi 0, %s146
    %s168 = sphi 0, %s170
    %s171 = sphi 0, %s168
    %s172 = sphi 0, %s171
    %s188 = sphi 0, %s172
    %s194 = sphi 0, %s196
    %s197 = sphi 0, %s194
    %s198 = sphi 0, %s197
    %s214 = sphi 0, %s198
    %s220 = sphi 0, %s222
    %s223 = sphi 0, %s220
    %s224 = sphi 0, %s223
    %s240 = sphi 0, %s224
    %s246 = sphi 0, %s248
    %s249 = sphi 0, %s246
    %s250 = sphi 0, %s249
    %s266 = sphi 0, %s250
    %s272 = sphi 0, %s274
    %s275 = sphi 0, %s272
    %s276 = sphi 0, %s275
    %s292 = sphi 0, %s276
    %s296 = sphi 0, %s296
    %s298 = sphi 0, %s296
    %s299 = sphi 0, %s298
    %s313 = sphi 0, %s299
    %s317 = sphi 0, %s317
    %s319 = sphi 0, %s317
    %s320 = sphi 0, %s319
    %s334 = sphi 0, %s320
    %s342 = sphi 0, %s344
    %s345 = sphi 0, %s342
    %s346 = sphi 0, %s345
    %s362 = sphi 0, %s346
    %s370 = sphi 0, %s372
    %s373 = sphi 0, %s370
    %s374 = sphi 0, %s373
    %s390 = sphi 0, %s374
    %s396 = sphi 0, %s398
    %s399 = sphi 0, %s396
    %s400 = sphi 0, %s399
    %s416 = sphi 0, %s400
  $region4: #{dc_teacher_net.1} parent=0 // loop_header_branch
    %24 = sbr.rel (%p22) target = $region8
  $region5: #{dc_teacher_net.1} parent=0 // loop_body
    %s26 = ssub.s32 %s21, 1
    %s27 = ssub.s32 %s21, 2
    %s34 = sadd.s32 1, %s29
    %p35 = scmp.ge.s32.totalorder %s34, 5
    %s36 = scalar_select %p35, 0, %s34
    %s37 = sadd.s32 1, %s28
    %s38 = scalar_select %p35, %s37, %s28
    %p39 = scmp.ge.s32.totalorder %s38, 1
    %s40 = scalar_select %p39, 0, %s38
    %s41 = ssub.s32 %s28, %s40
    %p42 = scmp.eq.s32.totalorder %s41, 0
    %s44 = sadd.s32 %s43, 1
    %s45 = scalar_select %p42, %s43, %s44
    %p48 = pneg %p42
    %p49 = scmp.eq.s32.totalorder %s21, 4
    %p50 = por %p48, %p49
    %p51 = scmp.ne.s32.totalorder %s43, %s46
    %p52 = scmp.eq.s32.totalorder %s21, 0
    %p53 = por %p51, %p52
    %p54 = scmp.ne.s32.totalorder %s43, %s46
    %p55 = scmp.eq.s32.totalorder %s26, 4
    %p56 = por %p54, %p55
    %p57 = scmp.ne.s32.totalorder %s46, %s47
    %p58 = scmp.eq.s32.totalorder %s26, 0
    %p59 = por %p57, %p58
    %p60 = scmp.ne.s32.totalorder %s46, %s47
    %p61 = scmp.eq.s32.totalorder %s27, 4
    %p62 = por %p60, %p61
    %p64 = scmp.ne.s32.totalorder %s47, %s63
    %p65 = scmp.eq.s32.totalorder %s27, 0
    %p66 = por %p64, %p65
    %s67 = ssub.s32 %s28, %s40
    %p68 = scmp.eq.s32.totalorder %s67, 0
    %s70 = sadd.s32 %s69, 1
    %s71 = scalar_select %p68, %s69, %s70
    %p74 = pneg %p68
    %p75 = scmp.eq.s32.totalorder %s21, 4
    %p76 = por %p74, %p75
    %p77 = scmp.ne.s32.totalorder %s69, %s72
    %p78 = scmp.eq.s32.totalorder %s21, 0
    %p79 = por %p77, %p78
    %p80 = scmp.ne.s32.totalorder %s69, %s72
    %p81 = scmp.eq.s32.totalorder %s26, 4
    %p82 = por %p80, %p81
    %p83 = scmp.ne.s32.totalorder %s72, %s73
    %p84 = scmp.eq.s32.totalorder %s26, 0
    %p85 = por %p83, %p84
    %p86 = scmp.ne.s32.totalorder %s72, %s73
    %p87 = scmp.eq.s32.totalorder %s27, 4
    %p88 = por %p86, %p87
    %p90 = scmp.ne.s32.totalorder %s73, %s89
    %p91 = scmp.eq.s32.totalorder %s27, 0
    %p92 = por %p90, %p91
    %s93 = ssub.s32 %s28, %s40
    %p94 = scmp.eq.s32.totalorder %s93, 0
    %s96 = sadd.s32 %s95, 1
    %s97 = scalar_select %p94, %s95, %s96
    %p100 = pneg %p94
    %p101 = scmp.eq.s32.totalorder %s21, 4
    %p102 = por %p100, %p101
    %p103 = scmp.ne.s32.totalorder %s95, %s98
    %p104 = scmp.eq.s32.totalorder %s21, 0
    %p105 = por %p103, %p104
    %p106 = scmp.ne.s32.totalorder %s95, %s98
    %p107 = scmp.eq.s32.totalorder %s26, 4
    %p108 = por %p106, %p107
    %p109 = scmp.ne.s32.totalorder %s98, %s99
    %p110 = scmp.eq.s32.totalorder %s26, 0
    %p111 = por %p109, %p110
    %p112 = scmp.ne.s32.totalorder %s98, %s99
    %p113 = scmp.eq.s32.totalorder %s27, 4
    %p114 = por %p112, %p113
    %p116 = scmp.ne.s32.totalorder %s99, %s115
    %p117 = scmp.eq.s32.totalorder %s27, 0
    %p118 = por %p116, %p117
    %s120 = sadd.s32 %s119, 1
    %p123 = scmp.eq.s32.totalorder %s21, 4
    %p124 = scmp.ne.s32.totalorder %s119, %s121
    %p125 = scmp.eq.s32.totalorder %s21, 0
    %p126 = por %p124, %p125
    %p127 = scmp.ne.s32.totalorder %s119, %s121
    %p128 = scmp.eq.s32.totalorder %s26, 4
    %p129 = por %p127, %p128
    %p130 = scmp.ne.s32.totalorder %s121, %s122
    %p131 = scmp.eq.s32.totalorder %s26, 0
    %p132 = por %p130, %p131
    %p133 = scmp.ne.s32.totalorder %s121, %s122
    %p134 = scmp.eq.s32.totalorder %s27, 4
    %p135 = por %p133, %p134
    %p137 = scmp.ne.s32.totalorder %s122, %s136
    %p138 = scmp.eq.s32.totalorder %s27, 0
    %p139 = por %p137, %p138
    %s140 = ssub.s32 %s29, %s36
    %p141 = scmp.eq.s32.totalorder %s140, 0
    %s143 = sadd.s32 %s142, 1
    %s144 = scalar_select %p141, %s142, %s143
    %p147 = pneg %p141
    %p148 = scmp.eq.s32.totalorder %s21, 4
    %p149 = por %p147, %p148
    %p150 = scmp.ne.s32.totalorder %s142, %s145
    %p151 = scmp.eq.s32.totalorder %s21, 0
    %p152 = por %p150, %p151
    %p153 = scmp.ne.s32.totalorder %s142, %s145
    %p154 = scmp.eq.s32.totalorder %s26, 4
    %p155 = por %p153, %p154
    %p156 = scmp.ne.s32.totalorder %s145, %s146
    %p157 = scmp.eq.s32.totalorder %s26, 0
    %p158 = por %p156, %p157
    %p159 = scmp.ne.s32.totalorder %s145, %s146
    %p160 = scmp.eq.s32.totalorder %s27, 4
    %p161 = por %p159, %p160
    %p163 = scmp.ne.s32.totalorder %s146, %s162
    %p164 = scmp.eq.s32.totalorder %s27, 0
    %p165 = por %p163, %p164
    %s166 = ssub.s32 %s29, %s36
    %p167 = scmp.eq.s32.totalorder %s166, 0
    %s169 = sadd.s32 %s168, 1
    %s170 = scalar_select %p167, %s168, %s169
    %p173 = pneg %p167
    %p174 = scmp.eq.s32.totalorder %s21, 4
    %p175 = por %p173, %p174
    %p176 = scmp.ne.s32.totalorder %s168, %s171
    %p177 = scmp.eq.s32.totalorder %s21, 0
    %p178 = por %p176, %p177
    %p179 = scmp.ne.s32.totalorder %s168, %s171
    %p180 = scmp.eq.s32.totalorder %s26, 4
    %p181 = por %p179, %p180
    %p182 = scmp.ne.s32.totalorder %s171, %s172
    %p183 = scmp.eq.s32.totalorder %s26, 0
    %p184 = por %p182, %p183
    %p185 = scmp.ne.s32.totalorder %s171, %s172
    %p186 = scmp.eq.s32.totalorder %s27, 4
    %p187 = por %p185, %p186
    %p189 = scmp.ne.s32.totalorder %s172, %s188
    %p190 = scmp.eq.s32.totalorder %s27, 0
    %p191 = por %p189, %p190
    %s192 = ssub.s32 %s29, %s36
    %p193 = scmp.eq.s32.totalorder %s192, 0
    %s195 = sadd.s32 %s194, 1
    %s196 = scalar_select %p193, %s194, %s195
    %p199 = pneg %p193
    %p200 = scmp.eq.s32.totalorder %s21, 4
    %p201 = por %p199, %p200
    %p202 = scmp.ne.s32.totalorder %s194, %s197
    %p203 = scmp.eq.s32.totalorder %s21, 0
    %p204 = por %p202, %p203
    %p205 = scmp.ne.s32.totalorder %s194, %s197
    %p206 = scmp.eq.s32.totalorder %s26, 4
    %p207 = por %p205, %p206
    %p208 = scmp.ne.s32.totalorder %s197, %s198
    %p209 = scmp.eq.s32.totalorder %s26, 0
    %p210 = por %p208, %p209
    %p211 = scmp.ne.s32.totalorder %s197, %s198
    %p212 = scmp.eq.s32.totalorder %s27, 4
    %p213 = por %p211, %p212
    %p215 = scmp.ne.s32.totalorder %s198, %s214
    %p216 = scmp.eq.s32.totalorder %s27, 0
    %p217 = por %p215, %p216
    %s218 = ssub.s32 %s29, %s36
    %p219 = scmp.eq.s32.totalorder %s218, 0
    %s221 = sadd.s32 %s220, 1
    %s222 = scalar_select %p219, %s220, %s221
    %p225 = pneg %p219
    %p226 = scmp.eq.s32.totalorder %s21, 4
    %p227 = por %p225, %p226
    %p228 = scmp.ne.s32.totalorder %s220, %s223
    %p229 = scmp.eq.s32.totalorder %s21, 0
    %p230 = por %p228, %p229
    %p231 = scmp.ne.s32.totalorder %s220, %s223
    %p232 = scmp.eq.s32.totalorder %s26, 4
    %p233 = por %p231, %p232
    %p234 = scmp.ne.s32.totalorder %s223, %s224
    %p235 = scmp.eq.s32.totalorder %s26, 0
    %p236 = por %p234, %p235
    %p237 = scmp.ne.s32.totalorder %s223, %s224
    %p238 = scmp.eq.s32.totalorder %s27, 4
    %p239 = por %p237, %p238
    %p241 = scmp.ne.s32.totalorder %s224, %s240
    %p242 = scmp.eq.s32.totalorder %s27, 0
    %p243 = por %p241, %p242
    %s244 = ssub.s32 %s29, %s36
    %p245 = scmp.eq.s32.totalorder %s244, 0
    %s247 = sadd.s32 %s246, 1
    %s248 = scalar_select %p245, %s246, %s247
    %p251 = pneg %p245
    %p252 = scmp.eq.s32.totalorder %s21, 4
    %p253 = por %p251, %p252
    %p254 = scmp.ne.s32.totalorder %s246, %s249
    %p255 = scmp.eq.s32.totalorder %s21, 0
    %p256 = por %p254, %p255
    %p257 = scmp.ne.s32.totalorder %s246, %s249
    %p258 = scmp.eq.s32.totalorder %s26, 4
    %p259 = por %p257, %p258
    %p260 = scmp.ne.s32.totalorder %s249, %s250
    %p261 = scmp.eq.s32.totalorder %s26, 0
    %p262 = por %p260, %p261
    %p263 = scmp.ne.s32.totalorder %s249, %s250
    %p264 = scmp.eq.s32.totalorder %s27, 4
    %p265 = por %p263, %p264
    %p267 = scmp.ne.s32.totalorder %s250, %s266
    %p268 = scmp.eq.s32.totalorder %s27, 0
    %p269 = por %p267, %p268
    %s270 = ssub.s32 %s29, %s36
    %p271 = scmp.eq.s32.totalorder %s270, 0
    %s273 = sadd.s32 %s272, 1
    %s274 = scalar_select %p271, %s272, %s273
    %p277 = pneg %p271
    %p278 = scmp.eq.s32.totalorder %s21, 4
    %p279 = por %p277, %p278
    %p280 = scmp.ne.s32.totalorder %s272, %s275
    %p281 = scmp.eq.s32.totalorder %s21, 0
    %p282 = por %p280, %p281
    %p283 = scmp.ne.s32.totalorder %s272, %s275
    %p284 = scmp.eq.s32.totalorder %s26, 4
    %p285 = por %p283, %p284
    %p286 = scmp.ne.s32.totalorder %s275, %s276
    %p287 = scmp.eq.s32.totalorder %s26, 0
    %p288 = por %p286, %p287
    %p289 = scmp.ne.s32.totalorder %s275, %s276
    %p290 = scmp.eq.s32.totalorder %s27, 4
    %p291 = por %p289, %p290
    %p293 = scmp.ne.s32.totalorder %s276, %s292
    %p294 = scmp.eq.s32.totalorder %s27, 0
    %p295 = por %p293, %p294
    %s297 = sadd.s32 %s296, 1
    %p300 = scmp.eq.s32.totalorder %s21, 4
    %p301 = scmp.ne.s32.totalorder %s296, %s298
    %p302 = scmp.eq.s32.totalorder %s21, 0
    %p303 = por %p301, %p302
    %p304 = scmp.ne.s32.totalorder %s296, %s298
    %p305 = scmp.eq.s32.totalorder %s26, 4
    %p306 = por %p304, %p305
    %p307 = scmp.ne.s32.totalorder %s298, %s299
    %p308 = scmp.eq.s32.totalorder %s26, 0
    %p309 = por %p307, %p308
    %p310 = scmp.ne.s32.totalorder %s298, %s299
    %p311 = scmp.eq.s32.totalorder %s27, 4
    %p312 = por %p310, %p311
    %p314 = scmp.ne.s32.totalorder %s299, %s313
    %p315 = scmp.eq.s32.totalorder %s27, 0
    %p316 = por %p314, %p315
    %s318 = sadd.s32 %s317, 1
    %p321 = scmp.eq.s32.totalorder %s21, 4
    %p322 = scmp.ne.s32.totalorder %s317, %s319
    %p323 = scmp.eq.s32.totalorder %s21, 0
    %p324 = por %p322, %p323
    %p325 = scmp.ne.s32.totalorder %s317, %s319
    %p326 = scmp.eq.s32.totalorder %s26, 4
    %p327 = por %p325, %p326
    %p328 = scmp.ne.s32.totalorder %s319, %s320
    %p329 = scmp.eq.s32.totalorder %s26, 0
    %p330 = por %p328, %p329
    %p331 = scmp.ne.s32.totalorder %s319, %s320
    %p332 = scmp.eq.s32.totalorder %s27, 4
    %p333 = por %p331, %p332
    %p335 = scmp.ne.s32.totalorder %s320, %s334
    %p336 = scmp.eq.s32.totalorder %s27, 0
    %p337 = por %p335, %p336
    %s338 = ssub.s32 %s28, %s40
    %s339 = ssub.s32 %s29, %s36
    %s340 = sor.u32 %s338, %s339
    %p341 = scmp.eq.s32.totalorder %s340, 0
    %s343 = sadd.s32 %s342, 1
    %s344 = scalar_select %p341, %s342, %s343
    %p347 = pneg %p341
    %p348 = scmp.eq.s32.totalorder %s21, 4
    %p349 = por %p347, %p348
    %p350 = scmp.ne.s32.totalorder %s342, %s345
    %p351 = scmp.eq.s32.totalorder %s21, 0
    %p352 = por %p350, %p351
    %p353 = scmp.ne.s32.totalorder %s342, %s345
    %p354 = scmp.eq.s32.totalorder %s26, 4
    %p355 = por %p353, %p354
    %p356 = scmp.ne.s32.totalorder %s345, %s346
    %p357 = scmp.eq.s32.totalorder %s26, 0
    %p358 = por %p356, %p357
    %p359 = scmp.ne.s32.totalorder %s345, %s346
    %p360 = scmp.eq.s32.totalorder %s27, 4
    %p361 = por %p359, %p360
    %p363 = scmp.ne.s32.totalorder %s346, %s362
    %p364 = scmp.eq.s32.totalorder %s27, 0
    %p365 = por %p363, %p364
    %s366 = ssub.s32 %s28, %s40
    %s367 = ssub.s32 %s29, %s36
    %s368 = sor.u32 %s366, %s367
    %p369 = scmp.eq.s32.totalorder %s368, 0
    %s371 = sadd.s32 %s370, 1
    %s372 = scalar_select %p369, %s370, %s371
    %p375 = pneg %p369
    %p376 = scmp.eq.s32.totalorder %s21, 4
    %p377 = por %p375, %p376
    %p378 = scmp.ne.s32.totalorder %s370, %s373
    %p379 = scmp.eq.s32.totalorder %s21, 0
    %p380 = por %p378, %p379
    %p381 = scmp.ne.s32.totalorder %s370, %s373
    %p382 = scmp.eq.s32.totalorder %s26, 4
    %p383 = por %p381, %p382
    %p384 = scmp.ne.s32.totalorder %s373, %s374
    %p385 = scmp.eq.s32.totalorder %s26, 0
    %p386 = por %p384, %p385
    %p387 = scmp.ne.s32.totalorder %s373, %s374
    %p388 = scmp.eq.s32.totalorder %s27, 4
    %p389 = por %p387, %p388
    %p391 = scmp.ne.s32.totalorder %s374, %s390
    %p392 = scmp.eq.s32.totalorder %s27, 0
    %p393 = por %p391, %p392
    %s394 = ssub.s32 %s28, %s40
    %p395 = scmp.eq.s32.totalorder %s394, 0
    %s397 = sadd.s32 %s396, 1
    %s398 = scalar_select %p395, %s396, %s397
    %p401 = pneg %p395
    %p402 = scmp.eq.s32.totalorder %s21, 4
    %p403 = por %p401, %p402
    %p404 = scmp.ne.s32.totalorder %s396, %s399
    %p405 = scmp.eq.s32.totalorder %s21, 0
    %p406 = por %p404, %p405
    %p407 = scmp.ne.s32.totalorder %s396, %s399
    %p408 = scmp.eq.s32.totalorder %s26, 4
    %p409 = por %p407, %p408
    %p410 = scmp.ne.s32.totalorder %s399, %s400
    %p411 = scmp.eq.s32.totalorder %s26, 0
    %p412 = por %p410, %p411
    %p413 = scmp.ne.s32.totalorder %s399, %s400
    %p414 = scmp.eq.s32.totalorder %s27, 4
    %p415 = por %p413, %p414
    %p417 = scmp.ne.s32.totalorder %s400, %s416
    %p418 = scmp.eq.s32.totalorder %s27, 0
    %p419 = por %p417, %p418
    %p420 = scmp.le.s32.totalorder 1, %s21
    %p421 = scmp.lt.s32.totalorder %s21, 6
    %p422 = pnand %p420, %p421
    %p423 = pneg %p422
    // Predicated region
    $region9: #{dc_teacher_net.1} parent=5 // pred_check
      _
    $region10: #{dc_teacher_net.1} parent=5 // pred_check_branch
      %425 = sbr.rel (%p422) target = $region12
    $region11: #{dc_teacher_net.1} parent=5 // pred_region
      %s426 = ssub.s32 %s21, 1
      // Predicated region
      $region13: #{dc_teacher_net.1} parent=11 // pred_check
        %p427 = pneg %p59
      $region14: #{dc_teacher_net.1} parent=11 // pred_check_branch
        %429 = sbr.rel (%p427) target = $region16
      $region15: #{dc_teacher_net.1} parent=11 // pred_region
        %p430 = scmp.lt.s32.totalorder %s30, 0
        %s431 = scalar_select %p430, %s30, 0
        %s432 = smul.addr %s431, 4
        %s433 = scalar_lea.vmem %s0, %s432
      $region16: #{dc_teacher_net.1} parent=11 // pred_fallthru
        _
      // Predicated region
      $region17: #{dc_teacher_net.1} parent=11 // pred_check
        %p434 = pneg %p85
      $region18: #{dc_teacher_net.1} parent=11 // pred_check_branch
        %436 = sbr.rel (%p434) target = $region20
      $region19: #{dc_teacher_net.1} parent=11 // pred_region
        %p437 = scmp.lt.s32.totalorder %s30, 0
        %s438 = scalar_select %p437, %s30, 0
        %s439 = smul.addr %s438, 4
        %s440 = smul.addr %s439, 2
        %s441 = scalar_lea.vmem %s1, %s440
      $region20: #{dc_teacher_net.1} parent=11 // pred_fallthru
        _
      // Predicated region
      $region21: #{dc_teacher_net.1} parent=11 // pred_check
        %p442 = pneg %p111
      $region22: #{dc_teacher_net.1} parent=11 // pred_check_branch
        %444 = sbr.rel (%p442) target = $region24
      $region23: #{dc_teacher_net.1} parent=11 // pred_region
        %p445 = scmp.lt.s32.totalorder %s30, 0
        %s446 = scalar_select %p445, %s30, 0
        %s447 = smul.addr %s446, 4
        %s448 = smul.addr %s447, 2
        %s449 = scalar_lea.vmem %s2, %s448
      $region24: #{dc_teacher_net.1} parent=11 // pred_fallthru
        _
      // Predicated region
      $region25: #{dc_teacher_net.1} parent=11 // pred_check
        %p450 = pneg %p132
      $region26: #{dc_teacher_net.1} parent=11 // pred_check_branch
        %452 = sbr.rel (%p450) target = $region28
      $region27: #{dc_teacher_net.1} parent=11 // pred_region
        _
      $region28: #{dc_teacher_net.1} parent=11 // pred_fallthru
        _
      // Predicated region
      $region29: #{dc_teacher_net.1} parent=11 // pred_check
        %p453 = pneg %p309
      $region30: #{dc_teacher_net.1} parent=11 // pred_check_branch
        %455 = sbr.rel (%p453) target = $region32
      $region31: #{dc_teacher_net.1} parent=11 // pred_region
        _
      $region32: #{dc_teacher_net.1} parent=11 // pred_fallthru
        _
      // Predicated region
      $region33: #{dc_teacher_net.1} parent=11 // pred_check
        %p456 = pneg %p330
      $region34: #{dc_teacher_net.1} parent=11 // pred_check_branch
        %458 = sbr.rel (%p456) target = $region36
      $region35: #{dc_teacher_net.1} parent=11 // pred_region
        _
      $region36: #{dc_teacher_net.1} parent=11 // pred_fallthru
        _
    $region12: #{dc_teacher_net.1} parent=5 // pred_fallthru
      _
    %p459 = scmp.lt.s32.totalorder %s21, 5
    // Predicated region
    $region37: #{dc_teacher_net.1} parent=5 // pred_check
      %p460 = pneg %p459
    $region38: #{dc_teacher_net.1} parent=5 // pred_check_branch
      %462 = sbr.rel (%p460) target = $region40
    $region39: #{dc_teacher_net.1} parent=5 // pred_region
      // Predicated region
      $region41: #{dc_teacher_net.1} parent=39 // pred_check
        %p463 = pneg %p152
      $region42: #{dc_teacher_net.1} parent=39 // pred_check_branch
        %465 = sbr.rel (%p463) target = $region44
      $region43: #{dc_teacher_net.1} parent=39 // pred_region
        %p466 = scmp.lt.s32.totalorder %s29, 4
        %s467 = scalar_select %p466, %s29, 4
        %s468 = smul.addr %s467, 4
        %s469 = smul.addr %s468, 8
        %s470 = scalar_lea.vmem %s4, %s469
      $region44: #{dc_teacher_net.1} parent=39 // pred_fallthru
        _
      // Predicated region
      $region45: #{dc_teacher_net.1} parent=39 // pred_check
        %p471 = pneg %p178
      $region46: #{dc_teacher_net.1} parent=39 // pred_check_branch
        %473 = sbr.rel (%p471) target = $region48
      $region47: #{dc_teacher_net.1} parent=39 // pred_region
        %p474 = scmp.lt.s32.totalorder %s29, 4
        %s475 = scalar_select %p474, %s29, 4
        %s476 = smul.addr %s475, 4
        %s477 = smul.addr %s476, 8
        %s478 = scalar_lea.vmem %s5, %s477
      $region48: #{dc_teacher_net.1} parent=39 // pred_fallthru
        _
      // Predicated region
      $region49: #{dc_teacher_net.1} parent=39 // pred_check
        %p479 = pneg %p204
      $region50: #{dc_teacher_net.1} parent=39 // pred_check_branch
        %481 = sbr.rel (%p479) target = $region52
      $region51: #{dc_teacher_net.1} parent=39 // pred_region
        %p482 = scmp.lt.s32.totalorder %s29, 4
        %s483 = scalar_select %p482, %s29, 4
        %s484 = smul.addr %s483, 36
        %s485 = smul.addr %s484, 8
        %s486 = scalar_lea.vmem %s6, %s485
      $region52: #{dc_teacher_net.1} parent=39 // pred_fallthru
        _
      // Predicated region
      $region53: #{dc_teacher_net.1} parent=39 // pred_check
        %p487 = pneg %p230
      $region54: #{dc_teacher_net.1} parent=39 // pred_check_branch
        %489 = sbr.rel (%p487) target = $region56
      $region55: #{dc_teacher_net.1} parent=39 // pred_region
        %p490 = scmp.lt.s32.totalorder %s29, 4
        %s491 = scalar_select %p490, %s29, 4
        %s492 = smul.addr %s491, 12
        %s493 = smul.addr %s492, 8
        %s494 = scalar_lea.vmem %s7, %s493
      $region56: #{dc_teacher_net.1} parent=39 // pred_fallthru
        _
      // Predicated region
      $region57: #{dc_teacher_net.1} parent=39 // pred_check
        %p495 = pneg %p256
      $region58: #{dc_teacher_net.1} parent=39 // pred_check_branch
        %497 = sbr.rel (%p495) target = $region60
      $region59: #{dc_teacher_net.1} parent=39 // pred_region
        %p498 = scmp.lt.s32.totalorder %s29, 4
        %s499 = scalar_select %p498, %s29, 4
        %s500 = smul.addr %s499, 3
        %s501 = scalar_lea.vmem %s8, %s500
      $region60: #{dc_teacher_net.1} parent=39 // pred_fallthru
        _
      // Predicated region
      $region61: #{dc_teacher_net.1} parent=39 // pred_check
        %p502 = pneg %p282
      $region62: #{dc_teacher_net.1} parent=39 // pred_check_branch
        %504 = sbr.rel (%p502) target = $region64
      $region63: #{dc_teacher_net.1} parent=39 // pred_region
        %p505 = scmp.lt.s32.totalorder %s29, 4
        %s506 = scalar_select %p505, %s29, 4
        %s507 = scalar_lea.vmem %s9, %s506
      $region64: #{dc_teacher_net.1} parent=39 // pred_fallthru
        _
    $region40: #{dc_teacher_net.1} parent=5 // pred_fallthru
      _
    %p508 = scmp.le.s32.totalorder 1, %s21
    %p509 = scmp.lt.s32.totalorder %s21, 6
    %p510 = pnand %p508, %p509
    %p511 = pneg %p510
    // Predicated region
    $region65: #{dc_teacher_net.1} parent=5 // pred_check
      _
    $region66: #{dc_teacher_net.1} parent=5 // pred_check_branch
      %513 = sbr.rel (%p510) target = $region68
    $region67: #{dc_teacher_net.1} parent=5 // pred_region
      %s514 = ssub.s32 %s21, 1
      %p515 = scmp.lt.s32.totalorder %s30, 0
      %s516 = scalar_select %p515, %s30, 0
      %s517 = smul.addr %s516, 4
      %s518 = scalar_lea.vmem %s0, %s517
      %p519 = pneg %p59
      %p520 = pneg %p56
      %p521 = scmp.lt.s32.totalorder %s30, 0
      %s522 = scalar_select %p521, %s30, 0
      %s523 = smul.addr %s522, 4
      %s524 = smul.addr %s523, 2
      %s525 = scalar_lea.vmem %s1, %s524
      %p526 = pneg %p85
      %p527 = pneg %p82
      %p528 = scmp.lt.s32.totalorder %s30, 0
      %s529 = scalar_select %p528, %s30, 0
      %s530 = smul.addr %s529, 4
      %s531 = smul.addr %s530, 2
      %s532 = scalar_lea.vmem %s2, %s531
      %p533 = pneg %p111
      %p534 = pneg %p108
      %p535 = pneg %p132
      %p536 = pneg %p129
      %p537 = scmp.lt.s32.totalorder %s31, 4
      %s538 = scalar_select %p537, %s31, 4
      %s539 = smul.addr %s538, 4
      %s540 = smul.addr %s539, 8
      %s541 = scalar_lea.vmem %s4, %s540
      %p542 = pneg %p158
      %p543 = pneg %p155
      %p544 = scmp.lt.s32.totalorder %s31, 4
      %s545 = scalar_select %p544, %s31, 4
      %s546 = smul.addr %s545, 4
      %s547 = smul.addr %s546, 8
      %s548 = scalar_lea.vmem %s5, %s547
      %p549 = pneg %p184
      %p550 = pneg %p181
      %p551 = scmp.lt.s32.totalorder %s31, 4
      %s552 = scalar_select %p551, %s31, 4
      %s553 = smul.addr %s552, 36
      %s554 = smul.addr %s553, 8
      %s555 = scalar_lea.vmem %s6, %s554
      %p556 = pneg %p210
      %p557 = pneg %p207
      %p558 = scmp.lt.s32.totalorder %s31, 4
      %s559 = scalar_select %p558, %s31, 4
      %s560 = smul.addr %s559, 12
      %s561 = smul.addr %s560, 8
      %s562 = scalar_lea.vmem %s7, %s561
      %p563 = pneg %p236
      %p564 = pneg %p233
      %p565 = scmp.lt.s32.totalorder %s31, 4
      %s566 = scalar_select %p565, %s31, 4
      %s567 = smul.addr %s566, 3
      %s568 = scalar_lea.vmem %s8, %s567
      %p569 = pneg %p262
      %p570 = pneg %p259
      %p571 = scmp.lt.s32.totalorder %s31, 4
      %s572 = scalar_select %p571, %s31, 4
      %s573 = scalar_lea.vmem %s9, %s572
      %p574 = pneg %p288
      %p575 = pneg %p285
      %p576 = pneg %p309
      %p577 = pneg %p306
      %p578 = pneg %p330
      %p579 = pneg %p327
      %p580 = pneg %p358
      %p581 = pneg %p355
      %s582 = smul.u32 4, %s31
      %p583 = scmp.lt.s32.totalorder %s30, 0
      %s584 = scalar_select %p583, %s30, 0
      %p585 = scmp.lt.s32.totalorder %s582, 19
      %s586 = scalar_select %p585, %s582, 19
      %s587 = smul.addr %s586, 16
      %s588 = smul.addr %s584, 320
      %s589 = sadd.s32 %s587, %s588
      %s590 = smul.addr %s589, 8
      %s591 = scalar_lea.vmem %s12, %s590
      %p592 = pneg %p386
      %p593 = pneg %p383
      %p594 = scmp.lt.s32.totalorder %s30, 0
      %s595 = scalar_select %p594, %s30, 0
      %p596 = scmp.lt.s32.totalorder %s31, 4
      %s597 = scalar_select %p596, %s31, 4
      %s598 = smul.addr %s597, 4
      %s599 = smul.addr %s595, 20
      %s600 = sadd.s32 %s598, %s599
      %s601 = scalar_lea.vmem %s13, %s600
      %p602 = pneg %p412
      %p603 = pneg %p409
      %p604 = scmp.lt.s32.totalorder %s30, 0
      %s605 = scalar_select %p604, %s30, 0
      %s606 = smul.addr %s605, 4
      %s607 = scalar_lea.vmem %s14, %s606
      %p608 = scmp.lt.s32.totalorder %s30, 0
      %s609 = scalar_select %p608, %s30, 0
      %s610 = smul.addr %s609, 4
      %s611 = scalar_lea.vmem %s0, %s610
      %p612 = scmp.lt.s32.totalorder %s30, 0
      %s613 = scalar_select %p612, %s30, 0
      %s614 = smul.addr %s613, 4
      %s615 = smul.addr %s614, 2
      %s616 = scalar_lea.vmem %s1, %s615
      %p617 = scmp.lt.s32.totalorder %s30, 0
      %s618 = scalar_select %p617, %s30, 0
      %s619 = smul.addr %s618, 4
      %s620 = smul.addr %s619, 2
      %s621 = scalar_lea.vmem %s2, %s620
      %p622 = scmp.lt.s32.totalorder %s31, 4
      %s623 = scalar_select %p622, %s31, 4
      %s624 = smul.addr %s623, 4
      %s625 = smul.addr %s624, 8
      %s626 = scalar_lea.vmem %s4, %s625
      %p627 = scmp.lt.s32.totalorder %s31, 4
      %s628 = scalar_select %p627, %s31, 4
      %s629 = smul.addr %s628, 4
      %s630 = smul.addr %s629, 8
      %s631 = scalar_lea.vmem %s5, %s630
      %p632 = scmp.lt.s32.totalorder %s31, 4
      %s633 = scalar_select %p632, %s31, 4
      %s634 = smul.addr %s633, 36
      %s635 = smul.addr %s634, 8
      %s636 = scalar_lea.vmem %s6, %s635
      %p637 = scmp.lt.s32.totalorder %s31, 4
      %s638 = scalar_select %p637, %s31, 4
      %s639 = smul.addr %s638, 12
      %s640 = smul.addr %s639, 8
      %s641 = scalar_lea.vmem %s7, %s640
      %p642 = scmp.lt.s32.totalorder %s31, 4
      %s643 = scalar_select %p642, %s31, 4
      %s644 = smul.addr %s643, 3
      %s645 = scalar_lea.vmem %s8, %s644
      %p646 = scmp.lt.s32.totalorder %s31, 4
      %s647 = scalar_select %p646, %s31, 4
      %s648 = scalar_lea.vmem %s9, %s647
      %s649 = smul.u32 4, %s31
      %p650 = scmp.lt.s32.totalorder %s30, 0
      %s651 = scalar_select %p650, %s30, 0
      %p652 = scmp.lt.s32.totalorder %s649, 19
      %s653 = scalar_select %p652, %s649, 19
      %s654 = smul.addr %s653, 16
      %s655 = smul.addr %s651, 320
      %s656 = sadd.s32 %s654, %s655
      %s657 = smul.addr %s656, 8
      %s658 = scalar_lea.vmem %s12, %s657
      %s659 = smul.u32 4, %s31
      %p660 = scmp.lt.s32.totalorder %s30, 0
      %s661 = scalar_select %p660, %s30, 0
      %p662 = scmp.lt.s32.totalorder %s31, 4
      %s663 = scalar_select %p662, %s31, 4
      %s664 = smul.addr %s663, 4
      %s665 = smul.addr %s661, 20
      %s666 = sadd.s32 %s664, %s665
      %s667 = scalar_lea.vmem %s13, %s666
      %p668 = scmp.lt.s32.totalorder %s30, 0
      %s669 = scalar_select %p668, %s30, 0
      %s670 = smul.addr %s669, 4
      %s671 = scalar_lea.vmem %s14, %s670
      %p672 = scmp.eq.s32.totalorder %s31, 0
      // Predicated region
      $region69: #{dc_teacher_net.1} parent=67 // pred_check
        %p673 = pneg %p672
      $region70: #{dc_teacher_net.1} parent=67 // pred_check_branch
        %675 = sbr.rel (%p673) target = $region72
      $region71: #{dc_teacher_net.1} parent=67 // pred_region
        %v676 = vld [vmem:[%s611] sm:$0xf]
        %v677 = vlaneseq
        %vm678 = vcmp.ge.s32.totalorder %v677, 0
        %vm679 = vcmp.lt.s32.totalorder %v677, 512
        %vm680 = vmand %vm678, %vm679
        %681 = vst.msk [vmem:[#allocation3] sm:$0xf] %vm680, %v676
      $region72: #{dc_teacher_net.1} parent=67 // pred_fallthru
        _
      %v682 = vld [vmem:[#allocation3] sm:$0xf]
      %v684 = vperm.slane %v682, 0
      %v685 = vperm.slane %v682, 1
      %v686 = vperm.slane %v682, 2
      %v687 = vperm.slane %v682, 3
      %692 = vrot.lane.b32.xlu0 %v684, 17
      %v693 = vpop.permute.xlu0 %692
      %694 = vrot.lane.b32.xlu0 %v685, 17
      %v695 = vpop.permute.xlu0 %694
      %696 = vrot.lane.b32.xlu0 %v686, 17
      %v697 = vpop.permute.xlu0 %696
      %698 = vrot.lane.b32.xlu0 %v687, 17
      %v699 = vpop.permute.xlu0 %698
      %v700 = vlaneseq
      %v701 = vand.u32 %v700, 127
      %vm702 = vcmp.lt.s32.totalorder %v701, 17
      %v703 = vsel %vm702, %v697, %v699
      %v704 = vsel %vm702, %v695, %v697
      %v705 = vsel %vm702, %v693, %v695
      %v706 = vsel %vm702, %v699, %v693
      %v707 = vld [vmem:[%s3] ss:$8 sm:$0xf]
      %v709 = vperm.slane %v707, 0
      %v710 = vperm.slane %v707, 1
      %v711 = vperm.slane %v707, 2
      %v712 = vperm.slane %v707, 3
      %v717 = vmul.f32 %v706, %v709
      %v718 = vmul.f32 %v705, %v710
      %v719 = vmul.f32 %v704, %v711
      %v720 = vmul.f32 %v703, %v712
      %721 = vrot.lane.b32.xlu0 %v684, 16
      %v722 = vpop.permute.xlu0 %721
      %723 = vrot.lane.b32.xlu0 %v685, 16
      %v724 = vpop.permute.xlu0 %723
      %725 = vrot.lane.b32.xlu0 %v686, 16
      %v726 = vpop.permute.xlu0 %725
      %727 = vrot.lane.b32.xlu0 %v687, 16
      %v728 = vpop.permute.xlu0 %727
      %vm729 = vcmp.lt.s32.totalorder %v701, 16
      %v730 = vsel %vm729, %v726, %v728
      %v731 = vsel %vm729, %v724, %v726
      %v732 = vsel %vm729, %v722, %v724
      %v733 = vsel %vm729, %v728, %v722
      %s734 = scalar_lea.vmem %s3, 1
      %v735 = vld [vmem:[%s734] ss:$8 sm:$0xf]
      %v737 = vperm.slane %v735, 0
      %v738 = vperm.slane %v735, 1
      %v739 = vperm.slane %v735, 2
      %v740 = vperm.slane %v735, 3
      %v745 = vmul.f32 %v733, %v737
      %v746 = vmul.f32 %v732, %v738
      %v747 = vmul.f32 %v731, %v739
      %v748 = vmul.f32 %v730, %v740
      %749 = vrot.lane.b32.xlu0 %v684, 15
      %v750 = vpop.permute.xlu0 %749
      %751 = vrot.lane.b32.xlu0 %v685, 15
      %v752 = vpop.permute.xlu0 %751
      %753 = vrot.lane.b32.xlu0 %v686, 15
      %v754 = vpop.permute.xlu0 %753
      %755 = vrot.lane.b32.xlu0 %v687, 15
      %v756 = vpop.permute.xlu0 %755
      %vm757 = vcmp.lt.s32.totalorder %v701, 15
      %v758 = vsel %vm757, %v754, %v756
      %v759 = vsel %vm757, %v752, %v754
      %v760 = vsel %vm757, %v750, %v752
      %v761 = vsel %vm757, %v756, %v750
      %s762 = scalar_lea.vmem %s3, 2
      %v763 = vld [vmem:[%s762] ss:$8 sm:$0xf]
      %v765 = vperm.slane %v763, 0
      %v766 = vperm.slane %v763, 1
      %v767 = vperm.slane %v763, 2
      %v768 = vperm.slane %v763, 3
      %v773 = vmul.f32 %v761, %v765
      %v774 = vmul.f32 %v760, %v766
      %v775 = vmul.f32 %v759, %v767
      %v776 = vmul.f32 %v758, %v768
      %777 = vrot.lane.b32.xlu0 %v684, 1
      %v778 = vpop.permute.xlu0 %777
      %779 = vrot.lane.b32.xlu0 %v685, 1
      %v780 = vpop.permute.xlu0 %779
      %781 = vrot.lane.b32.xlu0 %v686, 1
      %v782 = vpop.permute.xlu0 %781
      %783 = vrot.lane.b32.xlu0 %v687, 1
      %v784 = vpop.permute.xlu0 %783
      %vm785 = vcmp.lt.s32.totalorder %v701, 1
      %v786 = vsel %vm785, %v782, %v784
      %v787 = vsel %vm785, %v780, %v782
      %v788 = vsel %vm785, %v778, %v780
      %v789 = vsel %vm785, %v784, %v778
      %s790 = scalar_lea.vmem %s3, 3
      %v791 = vld [vmem:[%s790] ss:$8 sm:$0xf]
      %v793 = vperm.slane %v791, 0
      %v794 = vperm.slane %v791, 1
      %v795 = vperm.slane %v791, 2
      %v796 = vperm.slane %v791, 3
      %v801 = vmul.f32 %v789, %v793
      %v802 = vmul.f32 %v788, %v794
      %v803 = vmul.f32 %v787, %v795
      %v804 = vmul.f32 %v786, %v796
      %s805 = scalar_lea.vmem %s3, 4
      %v806 = vld [vmem:[%s805] ss:$8 sm:$0xf]
      %v807 = vmul.f32 %v682, %v806
      %808 = vrot.lane.b32.xlu0 %v684, 127
      %v809 = vpop.permute.xlu0 %808
      %810 = vrot.lane.b32.xlu0 %v685, 127
      %v811 = vpop.permute.xlu0 %810
      %812 = vrot.lane.b32.xlu0 %v686, 127
      %v813 = vpop.permute.xlu0 %812
      %814 = vrot.lane.b32.xlu0 %v687, 127
      %v815 = vpop.permute.xlu0 %814
      %vm816 = vcmp.lt.s32.totalorder %v701, 127
      %v817 = vsel %vm816, %v813, %v815
      %v818 = vsel %vm816, %v811, %v813
      %v819 = vsel %vm816, %v809, %v811
      %v820 = vsel %vm816, %v815, %v809
      %s821 = scalar_lea.vmem %s3, 5
      %v822 = vld [vmem:[%s821] ss:$8 sm:$0xf]
      %v824 = vperm.slane %v822, 0
      %v825 = vperm.slane %v822, 1
      %v826 = vperm.slane %v822, 2
      %v827 = vperm.slane %v822, 3
      %v832 = vmul.f32 %v819, %v824
      %v833 = vmul.f32 %v818, %v825
      %v834 = vmul.f32 %v817, %v826
      %v835 = vmul.f32 %v820, %v827
      %836 = vrot.lane.b32.xlu0 %v684, 113
      %v837 = vpop.permute.xlu0 %836
      %838 = vrot.lane.b32.xlu0 %v685, 113
      %v839 = vpop.permute.xlu0 %838
      %840 = vrot.lane.b32.xlu0 %v686, 113
      %v841 = vpop.permute.xlu0 %840
      %842 = vrot.lane.b32.xlu0 %v687, 113
      %v843 = vpop.permute.xlu0 %842
      %vm844 = vcmp.lt.s32.totalorder %v701, 113
      %v845 = vsel %vm844, %v841, %v843
      %v846 = vsel %vm844, %v839, %v841
      %v847 = vsel %vm844, %v837, %v839
      %v848 = vsel %vm844, %v843, %v837
      %s849 = scalar_lea.vmem %s3, 6
      %v850 = vld [vmem:[%s849] ss:$8 sm:$0xf]
      %v852 = vperm.slane %v850, 0
      %v853 = vperm.slane %v850, 1
      %v854 = vperm.slane %v850, 2
      %v855 = vperm.slane %v850, 3
      %v860 = vmul.f32 %v847, %v852
      %v861 = vmul.f32 %v846, %v853
      %v862 = vmul.f32 %v845, %v854
      %v863 = vmul.f32 %v848, %v855
      %864 = vrot.lane.b32.xlu0 %v684, 112
      %v865 = vpop.permute.xlu0 %864
      %866 = vrot.lane.b32.xlu0 %v685, 112
      %v867 = vpop.permute.xlu0 %866
      %868 = vrot.lane.b32.xlu0 %v686, 112
      %v869 = vpop.permute.xlu0 %868
      %870 = vrot.lane.b32.xlu0 %v687, 112
      %v871 = vpop.permute.xlu0 %870
      %vm872 = vcmp.lt.s32.totalorder %v701, 112
      %v873 = vsel %vm872, %v869, %v871
      %v874 = vsel %vm872, %v867, %v869
      %v875 = vsel %vm872, %v865, %v867
      %v876 = vsel %vm872, %v871, %v865
      %s877 = scalar_lea.vmem %s3, 7
      %v878 = vld [vmem:[%s877] ss:$8 sm:$0xf]
      %v880 = vperm.slane %v878, 0
      %v881 = vperm.slane %v878, 1
      %v882 = vperm.slane %v878, 2
      %v883 = vperm.slane %v878, 3
      %v888 = vmul.f32 %v875, %v880
      %v889 = vmul.f32 %v874, %v881
      %v890 = vmul.f32 %v873, %v882
      %v891 = vmul.f32 %v876, %v883
      %892 = vrot.lane.b32.xlu0 %v684, 111
      %v893 = vpop.permute.xlu0 %892
      %894 = vrot.lane.b32.xlu0 %v685, 111
      %v895 = vpop.permute.xlu0 %894
      %896 = vrot.lane.b32.xlu0 %v686, 111
      %v897 = vpop.permute.xlu0 %896
      %898 = vrot.lane.b32.xlu0 %v687, 111
      %v899 = vpop.permute.xlu0 %898
      %vm900 = vcmp.lt.s32.totalorder %v701, 111
      %v901 = vsel %vm900, %v897, %v899
      %v902 = vsel %vm900, %v895, %v897
      %v903 = vsel %vm900, %v893, %v895
      %v904 = vsel %vm900, %v899, %v893
      %s905 = scalar_lea.vmem %s3, 32
      %v906 = vld [vmem:[%s905] ss:$8 sm:$0xf]
      %v908 = vperm.slane %v906, 0
      %v909 = vperm.slane %v906, 1
      %v910 = vperm.slane %v906, 2
      %v911 = vperm.slane %v906, 3
      %v916 = vmul.f32 %v903, %v908
      %v917 = vmul.f32 %v902, %v909
      %v918 = vmul.f32 %v901, %v910
      %v919 = vmul.f32 %v904, %v911
      %v924 = vrot.slane %v745, 7
      %v925 = vrot.slane %v746, 7
      %v926 = vrot.slane %v747, 7
      %v927 = vrot.slane %v748, 7
      %v936 = vrot.slane %v773, 6
      %v937 = vrot.slane %v774, 6
      %v938 = vrot.slane %v775, 6
      %v939 = vrot.slane %v776, 6
      %v948 = vrot.slane %v801, 5
      %v949 = vrot.slane %v802, 5
      %v950 = vrot.slane %v803, 5
      %v951 = vrot.slane %v804, 5
      %v957 = vperm.slane %v807, 0
      %v958 = vperm.slane %v807, 1
      %v959 = vperm.slane %v807, 2
      %v960 = vperm.slane %v807, 3
      %v969 = vrot.slane %v832, 3
      %v970 = vrot.slane %v833, 3
      %v971 = vrot.slane %v834, 3
      %v972 = vrot.slane %v835, 3
      %v981 = vrot.slane %v860, 2
      %v982 = vrot.slane %v861, 2
      %v983 = vrot.slane %v862, 2
      %v984 = vrot.slane %v863, 2
      %v993 = vrot.slane %v888, 1
      %v994 = vrot.slane %v889, 1
      %v995 = vrot.slane %v890, 1
      %v996 = vrot.slane %v891, 1
      %vm1001 = vcmask 1040384
      %v1002 = vsel %vm1001, %v717, %v924
      %v1003 = vsel %vm1001, %v718, %v925
      %v1004 = vsel %vm1001, %v719, %v926
      %v1005 = vsel %vm1001, %v720, %v927
      %vm1006 = vcmask 1041408
      %v1007 = vsel %vm1006, %v1002, %v936
      %v1008 = vsel %vm1006, %v1003, %v937
      %v1009 = vsel %vm1006, %v1004, %v938
      %v1010 = vsel %vm1006, %v1005, %v939
      %vm1011 = vcmask 1042432
      %v1012 = vsel %vm1011, %v1007, %v948
      %v1013 = vsel %vm1011, %v1008, %v949
      %v1014 = vsel %vm1011, %v1009, %v950
      %v1015 = vsel %vm1011, %v1010, %v951
      %vm1016 = vcmask 1043456
      %v1017 = vsel %vm1016, %v1012, %v957
      %v1018 = vsel %vm1016, %v1013, %v958
      %v1019 = vsel %vm1016, %v1014, %v959
      %v1020 = vsel %vm1016, %v1015, %v960
      %vm1021 = vcmask 1044480
      %v1022 = vsel %vm1021, %v1017, %v969
      %v1023 = vsel %vm1021, %v1018, %v970
      %v1024 = vsel %vm1021, %v1019, %v971
      %v1025 = vsel %vm1021, %v1020, %v972
      %vm1026 = vcmask 1045504
      %v1027 = vsel %vm1026, %v1022, %v981
      %v1028 = vsel %vm1026, %v1023, %v982
      %v1029 = vsel %vm1026, %v1024, %v983
      %v1030 = vsel %vm1026, %v1025, %v984
      %vm1031 = vcmask 1046528
      %v1032 = vsel %vm1031, %v1027, %v993
      %v1033 = vsel %vm1031, %v1028, %v994
      %v1034 = vsel %vm1031, %v1029, %v995
      %v1035 = vsel %vm1031, %v1030, %v996
      %v1036 = vld [vmem:[%s626] sm:$0xff]
      %v1037 = vld [vmem:[%s626 + $0x8] sm:$0xff]
      %v1038 = vld [vmem:[%s626 + $0x10] sm:$0xff]
      %v1039 = vld [vmem:[%s626 + $0x18] sm:$0xff]
      %v1040 = vld [vmem:[%s631] sm:$0xff]
      %v1041 = vld [vmem:[%s631 + $0x8] sm:$0xff]
      %v1042 = vld [vmem:[%s631 + $0x10] sm:$0xff]
      %v1043 = vld [vmem:[%s631 + $0x18] sm:$0xff]
      %1045 = vset.pattern.permute.xlu0 0
      %1046 = vperm.xlu0 %1045, %v1040
      %v1047 = vpop.permute.xlu0 %1046
      %1050 = vset.pattern.permute.xlu0 0
      %1051 = vperm.xlu0 %1050, %v1041
      %v1052 = vpop.permute.xlu0 %1051
      %1055 = vset.pattern.permute.xlu0 0
      %1056 = vperm.xlu0 %1055, %v1042
      %v1057 = vpop.permute.xlu0 %1056
      %1060 = vset.pattern.permute.xlu0 0
      %1061 = vperm.xlu0 %1060, %v1043
      %v1062 = vpop.permute.xlu0 %1061
      %vm1064 = vcmask 72704
      %v1066 = vsel %vm1064, %v1036, 0
      %v1069 = vsel %vm1064, %v1037, 0
      %v1072 = vsel %vm1064, %v1038, 0
      %v1075 = vsel %vm1064, %v1039, 0
      %v1078 = vsel %vm1001, %v916, 0
      %v1081 = vsel %vm1001, %v917, 0
      %v1084 = vsel %vm1001, %v918, 0
      %v1087 = vsel %vm1001, %v919, 0
      %1089 = vmatpush.msra.mxu0 0.0
      %1090 = vmatpush.msra.mxu0 0.0
      %1091 = vmatpush.msra.mxu0 0.0
      %1092 = vmatpush.msra.mxu0 0.0
      %1093 = vmatpush.msra.mxu0 0.0
      %1094 = vmatpush.msra.mxu0 0.0
      %1095 = vmatpush.msra.mxu0 0.0
      %1096 = vmatpush.msra.mxu0 0.0
      %1097 = vmatpush.msra.mxu0 0.0
      %1098 = vmatpush.msra.mxu0 0.0
      %1099 = vmatpush.msra.mxu0 0.0
      %1100 = vmatpush.msra.mxu0 0.0
      %1101 = vmatpush.msra.mxu0 0.0
      %1102 = vmatpush.msra.mxu0 0.0
      %1103 = vmatpush.msra.mxu0 %v1078
      %1104 = vmatpush.msra.mxu0 %v1032
      %1105 = vmatmul.f32.gmra.mxu0 %v1066
      %v1106 = vpop.f32.mrf.mxu0
      %v1107 = vadd.f32 %v1047, %v1106
      %1108 = vmatmul.f32.gmra.mxu0 %v1069
      %v1109 = vpop.f32.mrf.mxu0
      %v1110 = vadd.f32 %v1052, %v1109
      %1111 = vmatmul.f32.gmra.mxu0 %v1072
      %v1112 = vpop.f32.mrf.mxu0
      %v1113 = vadd.f32 %v1057, %v1112
      %1114 = vmatmul.f32.gmra.mxu0 %v1075
      %v1115 = vpop.f32.mrf.mxu0
      %v1116 = vadd.f32 %v1062, %v1115
      %1117 = vdwg.mxu0
      %1118 = vmatpush.msra.mxu0 0.0
      %1119 = vmatpush.msra.mxu0 0.0
      %1120 = vmatpush.msra.mxu0 0.0
      %1121 = vmatpush.msra.mxu0 0.0
      %1122 = vmatpush.msra.mxu0 0.0
      %1123 = vmatpush.msra.mxu0 0.0
      %1124 = vmatpush.msra.mxu0 0.0
      %1125 = vmatpush.msra.mxu0 0.0
      %1126 = vmatpush.msra.mxu0 0.0
      %1127 = vmatpush.msra.mxu0 0.0
      %1128 = vmatpush.msra.mxu0 0.0
      %1129 = vmatpush.msra.mxu0 0.0
      %1130 = vmatpush.msra.mxu0 0.0
      %1131 = vmatpush.msra.mxu0 0.0
      %1132 = vmatpush.msra.mxu0 %v1081
      %1133 = vmatpush.msra.mxu0 %v1033
      %1134 = vmatmul.f32.gmra.mxu0 %v1066
      %v1135 = vpop.f32.mrf.mxu0
      %v1136 = vadd.f32 %v1047, %v1135
      %1137 = vmatmul.f32.gmra.mxu0 %v1069
      %v1138 = vpop.f32.mrf.mxu0
      %v1139 = vadd.f32 %v1052, %v1138
      %1140 = vmatmul.f32.gmra.mxu0 %v1072
      %v1141 = vpop.f32.mrf.mxu0
      %v1142 = vadd.f32 %v1057, %v1141
      %1143 = vmatmul.f32.gmra.mxu0 %v1075
      %v1144 = vpop.f32.mrf.mxu0
      %v1145 = vadd.f32 %v1062, %v1144
      %1146 = vdwg.mxu0
      %1147 = vmatpush.msra.mxu0 0.0
      %1148 = vmatpush.msra.mxu0 0.0
      %1149 = vmatpush.msra.mxu0 0.0
      %1150 = vmatpush.msra.mxu0 0.0
      %1151 = vmatpush.msra.mxu0 0.0
      %1152 = vmatpush.msra.mxu0 0.0
      %1153 = vmatpush.msra.mxu0 0.0
      %1154 = vmatpush.msra.mxu0 0.0
      %1155 = vmatpush.msra.mxu0 0.0
      %1156 = vmatpush.msra.mxu0 0.0
      %1157 = vmatpush.msra.mxu0 0.0
      %1158 = vmatpush.msra.mxu0 0.0
      %1159 = vmatpush.msra.mxu0 0.0
      %1160 = vmatpush.msra.mxu0 0.0
      %1161 = vmatpush.msra.mxu0 %v1084
      %1162 = vmatpush.msra.mxu0 %v1034
      %1163 = vmatmul.f32.gmra.mxu0 %v1066
      %v1164 = vpop.f32.mrf.mxu0
      %v1165 = vadd.f32 %v1047, %v1164
      %1166 = vmatmul.f32.gmra.mxu0 %v1069
      %v1167 = vpop.f32.mrf.mxu0
      %v1168 = vadd.f32 %v1052, %v1167
      %1169 = vmatmul.f32.gmra.mxu0 %v1072
      %v1170 = vpop.f32.mrf.mxu0
      %v1171 = vadd.f32 %v1057, %v1170
      %1172 = vmatmul.f32.gmra.mxu0 %v1075
      %v1173 = vpop.f32.mrf.mxu0
      %v1174 = vadd.f32 %v1062, %v1173
      %1175 = vdwg.mxu0
      %1176 = vmatpush.msra.mxu0 0.0
      %1177 = vmatpush.msra.mxu0 0.0
      %1178 = vmatpush.msra.mxu0 0.0
      %1179 = vmatpush.msra.mxu0 0.0
      %1180 = vmatpush.msra.mxu0 0.0
      %1181 = vmatpush.msra.mxu0 0.0
      %1182 = vmatpush.msra.mxu0 0.0
      %1183 = vmatpush.msra.mxu0 0.0
      %1184 = vmatpush.msra.mxu0 0.0
      %1185 = vmatpush.msra.mxu0 0.0
      %1186 = vmatpush.msra.mxu0 0.0
      %1187 = vmatpush.msra.mxu0 0.0
      %1188 = vmatpush.msra.mxu0 0.0
      %1189 = vmatpush.msra.mxu0 0.0
      %1190 = vmatpush.msra.mxu0 %v1087
      %1191 = vmatpush.msra.mxu0 %v1035
      %1192 = vmatmul.f32.gmra.mxu0 %v1066
      %v1193 = vpop.f32.mrf.mxu0
      %v1194 = vadd.f32 %v1047, %v1193
      %1195 = vmatmul.f32.gmra.mxu0 %v1069
      %v1196 = vpop.f32.mrf.mxu0
      %v1197 = vadd.f32 %v1052, %v1196
      %1198 = vmatmul.f32.gmra.mxu0 %v1072
      %v1199 = vpop.f32.mrf.mxu0
      %v1200 = vadd.f32 %v1057, %v1199
      %1201 = vmatmul.f32.gmra.mxu0 %v1075
      %v1202 = vpop.f32.mrf.mxu0
      %v1203 = vadd.f32 %v1062, %v1202
      %1204 = vdwg.mxu0
      %v1205 = vmax.f32 %v1107, 0.0
      %v1206 = vmax.f32 %v1136, 0.0
      %v1207 = vmax.f32 %v1165, 0.0
      %v1208 = vmax.f32 %v1194, 0.0
      %v1209 = vmax.f32 %v1110, 0.0
      %v1210 = vmax.f32 %v1139, 0.0
      %v1211 = vmax.f32 %v1168, 0.0
      %v1212 = vmax.f32 %v1197, 0.0
      %v1213 = vmax.f32 %v1113, 0.0
      %v1214 = vmax.f32 %v1142, 0.0
      %v1215 = vmax.f32 %v1171, 0.0
      %v1216 = vmax.f32 %v1200, 0.0
      %v1217 = vmax.f32 %v1116, 0.0
      %v1218 = vmax.f32 %v1145, 0.0
      %v1219 = vmax.f32 %v1174, 0.0
      %v1220 = vmax.f32 %v1203, 0.0
      %1221 = vst [vmem:[%s658] sm:$0xff] %v1205
      %1222 = vst [vmem:[%s658 + $0x8] sm:$0xff] %v1206
      %1223 = vst [vmem:[%s658 + $0x10] sm:$0xff] %v1207
      %1224 = vst [vmem:[%s658 + $0x18] sm:$0xff] %v1208
      %1225 = vst [vmem:[%s658 + $0x20] sm:$0xff] %v1209
      %1226 = vst [vmem:[%s658 + $0x28] sm:$0xff] %v1210
      %1227 = vst [vmem:[%s658 + $0x30] sm:$0xff] %v1211
      %1228 = vst [vmem:[%s658 + $0x38] sm:$0xff] %v1212
      %1229 = vst [vmem:[%s658 + $0x40] sm:$0xff] %v1213
      %1230 = vst [vmem:[%s658 + $0x48] sm:$0xff] %v1214
      %1231 = vst [vmem:[%s658 + $0x50] sm:$0xff] %v1215
      %1232 = vst [vmem:[%s658 + $0x58] sm:$0xff] %v1216
      %1233 = vst [vmem:[%s658 + $0x60] sm:$0xff] %v1217
      %1234 = vst [vmem:[%s658 + $0x68] sm:$0xff] %v1218
      %1235 = vst [vmem:[%s658 + $0x70] sm:$0xff] %v1219
      %1236 = vst [vmem:[%s658 + $0x78] sm:$0xff] %v1220
      %1237 = vrot.lane.b32.xlu0 %v1205, 17
      %v1238 = vpop.permute.xlu0 %1237
      %1239 = vrot.lane.b32.xlu0 %v1209, 17
      %v1240 = vpop.permute.xlu0 %1239
      %1241 = vrot.lane.b32.xlu0 %v1213, 17
      %v1242 = vpop.permute.xlu0 %1241
      %1243 = vrot.lane.b32.xlu0 %v1217, 17
      %v1244 = vpop.permute.xlu0 %1243
      %1245 = vrot.lane.b32.xlu0 %v1206, 17
      %v1246 = vpop.permute.xlu0 %1245
      %1247 = vrot.lane.b32.xlu0 %v1210, 17
      %v1248 = vpop.permute.xlu0 %1247
      %1249 = vrot.lane.b32.xlu0 %v1214, 17
      %v1250 = vpop.permute.xlu0 %1249
      %1251 = vrot.lane.b32.xlu0 %v1218, 17
      %v1252 = vpop.permute.xlu0 %1251
      %1253 = vrot.lane.b32.xlu0 %v1207, 17
      %v1254 = vpop.permute.xlu0 %1253
      %1255 = vrot.lane.b32.xlu0 %v1211, 17
      %v1256 = vpop.permute.xlu0 %1255
      %1257 = vrot.lane.b32.xlu0 %v1215, 17
      %v1258 = vpop.permute.xlu0 %1257
      %1259 = vrot.lane.b32.xlu0 %v1219, 17
      %v1260 = vpop.permute.xlu0 %1259
      %1261 = vrot.lane.b32.xlu0 %v1208, 17
      %v1262 = vpop.permute.xlu0 %1261
      %1263 = vrot.lane.b32.xlu0 %v1212, 17
      %v1264 = vpop.permute.xlu0 %1263
      %1265 = vrot.lane.b32.xlu0 %v1216, 17
      %v1266 = vpop.permute.xlu0 %1265
      %1267 = vrot.lane.b32.xlu0 %v1220, 17
      %v1268 = vpop.permute.xlu0 %1267
      %v1269 = vsel %vm702, %v1254, %v1262
      %v1270 = vsel %vm702, %v1256, %v1264
      %v1271 = vsel %vm702, %v1258, %v1266
      %v1272 = vsel %vm702, %v1260, %v1268
      %v1273 = vsel %vm702, %v1246, %v1254
      %v1274 = vsel %vm702, %v1248, %v1256
      %v1275 = vsel %vm702, %v1250, %v1258
      %v1276 = vsel %vm702, %v1252, %v1260
      %v1277 = vsel %vm702, %v1238, %v1246
      %v1278 = vsel %vm702, %v1240, %v1248
      %v1279 = vsel %vm702, %v1242, %v1250
      %v1280 = vsel %vm702, %v1244, %v1252
      %v1281 = vsel %vm702, %v1262, %v1238
      %v1282 = vsel %vm702, %v1264, %v1240
      %v1283 = vsel %vm702, %v1266, %v1242
      %v1284 = vsel %vm702, %v1268, %v1244
      %v1285 = vld [vmem:[%s3] ss:$8 sm:$0xf]
      %v1287 = vperm.slane %v1285, 0
      %v1288 = vperm.slane %v1285, 1
      %v1289 = vperm.slane %v1285, 2
      %v1290 = vperm.slane %v1285, 3
      %v1295 = vmul.f32 %v1281, %v1287
      %v1296 = vmul.f32 %v1277, %v1288
      %v1297 = vmul.f32 %v1273, %v1289
      %v1298 = vmul.f32 %v1269, %v1290
      %v1299 = vmul.f32 %v1282, %v1287
      %v1300 = vmul.f32 %v1278, %v1288
      %v1301 = vmul.f32 %v1274, %v1289
      %v1302 = vmul.f32 %v1270, %v1290
      %v1303 = vmul.f32 %v1283, %v1287
      %v1304 = vmul.f32 %v1279, %v1288
      %v1305 = vmul.f32 %v1275, %v1289
      %v1306 = vmul.f32 %v1271, %v1290
      %v1307 = vmul.f32 %v1284, %v1287
      %v1308 = vmul.f32 %v1280, %v1288
      %v1309 = vmul.f32 %v1276, %v1289
      %v1310 = vmul.f32 %v1272, %v1290
      %1311 = vst [vmem:[#allocation2] sm:$0xff] %v1295
      %1312 = vst [vmem:[#allocation2 + $0x8] sm:$0xff] %v1296
      %1313 = vst [vmem:[#allocation2 + $0x10] sm:$0xff] %v1297
      %1314 = vst [vmem:[#allocation2 + $0x18] sm:$0xff] %v1298
      %1315 = vst [vmem:[#allocation2 + $0x20] sm:$0xff] %v1299
      %1316 = vst [vmem:[#allocation2 + $0x28] sm:$0xff] %v1300
      %1317 = vst [vmem:[#allocation2 + $0x30] sm:$0xff] %v1301
      %1318 = vst [vmem:[#allocation2 + $0x38] sm:$0xff] %v1302
      %1319 = vst [vmem:[#allocation2 + $0x40] sm:$0xff] %v1303
      %1320 = vst [vmem:[#allocation2 + $0x48] sm:$0xff] %v1304
      %1321 = vst [vmem:[#allocation2 + $0x50] sm:$0xff] %v1305
      %1322 = vst [vmem:[#allocation2 + $0x58] sm:$0xff] %v1306
      %1323 = vst [vmem:[#allocation2 + $0x60] sm:$0xff] %v1307
      %1324 = vst [vmem:[#allocation2 + $0x68] sm:$0xff] %v1308
      %1325 = vst [vmem:[#allocation2 + $0x70] sm:$0xff] %v1309
      %1326 = vst [vmem:[#allocation2 + $0x78] sm:$0xff] %v1310
      %1327 = vrot.lane.b32.xlu0 %v1205, 16
      %v1328 = vpop.permute.xlu0 %1327
      %1329 = vrot.lane.b32.xlu0 %v1209, 16
      %v1330 = vpop.permute.xlu0 %1329
      %1331 = vrot.lane.b32.xlu0 %v1213, 16
      %v1332 = vpop.permute.xlu0 %1331
      %1333 = vrot.lane.b32.xlu0 %v1217, 16
      %v1334 = vpop.permute.xlu0 %1333
      %1335 = vrot.lane.b32.xlu0 %v1206, 16
      %v1336 = vpop.permute.xlu0 %1335
      %1337 = vrot.lane.b32.xlu0 %v1210, 16
      %v1338 = vpop.permute.xlu0 %1337
      %1339 = vrot.lane.b32.xlu0 %v1214, 16
      %v1340 = vpop.permute.xlu0 %1339
      %1341 = vrot.lane.b32.xlu0 %v1218, 16
      %v1342 = vpop.permute.xlu0 %1341
      %1343 = vrot.lane.b32.xlu0 %v1207, 16
      %v1344 = vpop.permute.xlu0 %1343
      %1345 = vrot.lane.b32.xlu0 %v1211, 16
      %v1346 = vpop.permute.xlu0 %1345
      %1347 = vrot.lane.b32.xlu0 %v1215, 16
      %v1348 = vpop.permute.xlu0 %1347
      %1349 = vrot.lane.b32.xlu0 %v1219, 16
      %v1350 = vpop.permute.xlu0 %1349
      %1351 = vrot.lane.b32.xlu0 %v1208, 16
      %v1352 = vpop.permute.xlu0 %1351
      %1353 = vrot.lane.b32.xlu0 %v1212, 16
      %v1354 = vpop.permute.xlu0 %1353
      %1355 = vrot.lane.b32.xlu0 %v1216, 16
      %v1356 = vpop.permute.xlu0 %1355
      %1357 = vrot.lane.b32.xlu0 %v1220, 16
      %v1358 = vpop.permute.xlu0 %1357
      %v1359 = vsel %vm729, %v1344, %v1352
      %v1360 = vsel %vm729, %v1346, %v1354
      %v1361 = vsel %vm729, %v1348, %v1356
      %v1362 = vsel %vm729, %v1350, %v1358
      %v1363 = vsel %vm729, %v1336, %v1344
      %v1364 = vsel %vm729, %v1338, %v1346
      %v1365 = vsel %vm729, %v1340, %v1348
      %v1366 = vsel %vm729, %v1342, %v1350
      %v1367 = vsel %vm729, %v1328, %v1336
      %v1368 = vsel %vm729, %v1330, %v1338
      %v1369 = vsel %vm729, %v1332, %v1340
      %v1370 = vsel %vm729, %v1334, %v1342
      %v1371 = vsel %vm729, %v1352, %v1328
      %v1372 = vsel %vm729, %v1354, %v1330
      %v1373 = vsel %vm729, %v1356, %v1332
      %v1374 = vsel %vm729, %v1358, %v1334
      %v1375 = vld [vmem:[%s734] ss:$8 sm:$0xf]
      %v1377 = vperm.slane %v1375, 0
      %v1378 = vperm.slane %v1375, 1
      %v1379 = vperm.slane %v1375, 2
      %v1380 = vperm.slane %v1375, 3
      %v1385 = vmul.f32 %v1371, %v1377
      %v1386 = vmul.f32 %v1367, %v1378
      %v1387 = vmul.f32 %v1363, %v1379
      %v1388 = vmul.f32 %v1359, %v1380
      %v1389 = vmul.f32 %v1372, %v1377
      %v1390 = vmul.f32 %v1368, %v1378
      %v1391 = vmul.f32 %v1364, %v1379
      %v1392 = vmul.f32 %v1360, %v1380
      %v1393 = vmul.f32 %v1373, %v1377
      %v1394 = vmul.f32 %v1369, %v1378
      %v1395 = vmul.f32 %v1365, %v1379
      %v1396 = vmul.f32 %v1361, %v1380
      %v1397 = vmul.f32 %v1374, %v1377
      %v1398 = vmul.f32 %v1370, %v1378
      %v1399 = vmul.f32 %v1366, %v1379
      %v1400 = vmul.f32 %v1362, %v1380
      %1401 = vst [vmem:[#allocation2 + $0x80] sm:$0xff] %v1385
      %1402 = vst [vmem:[#allocation2 + $0x88] sm:$0xff] %v1386
      %1403 = vst [vmem:[#allocation2 + $0x90] sm:$0xff] %v1387
      %1404 = vst [vmem:[#allocation2 + $0x98] sm:$0xff] %v1388
      %1405 = vst [vmem:[#allocation2 + $0xa0] sm:$0xff] %v1389
      %1406 = vst [vmem:[#allocation2 + $0xa8] sm:$0xff] %v1390
      %1407 = vst [vmem:[#allocation2 + $0xb0] sm:$0xff] %v1391
      %1408 = vst [vmem:[#allocation2 + $0xb8] sm:$0xff] %v1392
      %1409 = vst [vmem:[#allocation2 + $0xc0] sm:$0xff] %v1393
      %1410 = vst [vmem:[#allocation2 + $0xc8] sm:$0xff] %v1394
      %1411 = vst [vmem:[#allocation2 + $0xd0] sm:$0xff] %v1395
      %1412 = vst [vmem:[#allocation2 + $0xd8] sm:$0xff] %v1396
      %1413 = vst [vmem:[#allocation2 + $0xe0] sm:$0xff] %v1397
      %1414 = vst [vmem:[#allocation2 + $0xe8] sm:$0xff] %v1398
      %1415 = vst [vmem:[#allocation2 + $0xf0] sm:$0xff] %v1399
      %1416 = vst [vmem:[#allocation2 + $0xf8] sm:$0xff] %v1400
      %1417 = vrot.lane.b32.xlu0 %v1205, 15
      %v1418 = vpop.permute.xlu0 %1417
      %1419 = vrot.lane.b32.xlu0 %v1209, 15
      %v1420 = vpop.permute.xlu0 %1419
      %1421 = vrot.lane.b32.xlu0 %v1213, 15
      %v1422 = vpop.permute.xlu0 %1421
      %1423 = vrot.lane.b32.xlu0 %v1217, 15
      %v1424 = vpop.permute.xlu0 %1423
      %1425 = vrot.lane.b32.xlu0 %v1206, 15
      %v1426 = vpop.permute.xlu0 %1425
      %1427 = vrot.lane.b32.xlu0 %v1210, 15
      %v1428 = vpop.permute.xlu0 %1427
      %1429 = vrot.lane.b32.xlu0 %v1214, 15
      %v1430 = vpop.permute.xlu0 %1429
      %1431 = vrot.lane.b32.xlu0 %v1218, 15
      %v1432 = vpop.permute.xlu0 %1431
      %1433 = vrot.lane.b32.xlu0 %v1207, 15
      %v1434 = vpop.permute.xlu0 %1433
      %1435 = vrot.lane.b32.xlu0 %v1211, 15
      %v1436 = vpop.permute.xlu0 %1435
      %1437 = vrot.lane.b32.xlu0 %v1215, 15
      %v1438 = vpop.permute.xlu0 %1437
      %1439 = vrot.lane.b32.xlu0 %v1219, 15
      %v1440 = vpop.permute.xlu0 %1439
      %1441 = vrot.lane.b32.xlu0 %v1208, 15
      %v1442 = vpop.permute.xlu0 %1441
      %1443 = vrot.lane.b32.xlu0 %v1212, 15
      %v1444 = vpop.permute.xlu0 %1443
      %1445 = vrot.lane.b32.xlu0 %v1216, 15
      %v1446 = vpop.permute.xlu0 %1445
      %1447 = vrot.lane.b32.xlu0 %v1220, 15
      %v1448 = vpop.permute.xlu0 %1447
      %v1449 = vsel %vm757, %v1434, %v1442
      %v1450 = vsel %vm757, %v1436, %v1444
      %v1451 = vsel %vm757, %v1438, %v1446
      %v1452 = vsel %vm757, %v1440, %v1448
      %v1453 = vsel %vm757, %v1426, %v1434
      %v1454 = vsel %vm757, %v1428, %v1436
      %v1455 = vsel %vm757, %v1430, %v1438
      %v1456 = vsel %vm757, %v1432, %v1440
      %v1457 = vsel %vm757, %v1418, %v1426
      %v1458 = vsel %vm757, %v1420, %v1428
      %v1459 = vsel %vm757, %v1422, %v1430
      %v1460 = vsel %vm757, %v1424, %v1432
      %v1461 = vsel %vm757, %v1442, %v1418
      %v1462 = vsel %vm757, %v1444, %v1420
      %v1463 = vsel %vm757, %v1446, %v1422
      %v1464 = vsel %vm757, %v1448, %v1424
      %v1465 = vld [vmem:[%s762] ss:$8 sm:$0xf]
      %v1467 = vperm.slane %v1465, 0
      %v1468 = vperm.slane %v1465, 1
      %v1469 = vperm.slane %v1465, 2
      %v1470 = vperm.slane %v1465, 3
      %v1475 = vmul.f32 %v1461, %v1467
      %v1476 = vmul.f32 %v1457, %v1468
      %v1477 = vmul.f32 %v1453, %v1469
      %v1478 = vmul.f32 %v1449, %v1470
      %v1479 = vmul.f32 %v1462, %v1467
      %v1480 = vmul.f32 %v1458, %v1468
      %v1481 = vmul.f32 %v1454, %v1469
      %v1482 = vmul.f32 %v1450, %v1470
      %v1483 = vmul.f32 %v1463, %v1467
      %v1484 = vmul.f32 %v1459, %v1468
      %v1485 = vmul.f32 %v1455, %v1469
      %v1486 = vmul.f32 %v1451, %v1470
      %v1487 = vmul.f32 %v1464, %v1467
      %v1488 = vmul.f32 %v1460, %v1468
      %v1489 = vmul.f32 %v1456, %v1469
      %v1490 = vmul.f32 %v1452, %v1470
      %1491 = vst [vmem:[#allocation2 + $0x100] sm:$0xff] %v1475
      %1492 = vst [vmem:[#allocation2 + $0x108] sm:$0xff] %v1476
      %1493 = vst [vmem:[#allocation2 + $0x110] sm:$0xff] %v1477
      %1494 = vst [vmem:[#allocation2 + $0x118] sm:$0xff] %v1478
      %1495 = vst [vmem:[#allocation2 + $0x120] sm:$0xff] %v1479
      %1496 = vst [vmem:[#allocation2 + $0x128] sm:$0xff] %v1480
      %1497 = vst [vmem:[#allocation2 + $0x130] sm:$0xff] %v1481
      %1498 = vst [vmem:[#allocation2 + $0x138] sm:$0xff] %v1482
      %1499 = vst [vmem:[#allocation2 + $0x140] sm:$0xff] %v1483
      %1500 = vst [vmem:[#allocation2 + $0x148] sm:$0xff] %v1484
      %1501 = vst [vmem:[#allocation2 + $0x150] sm:$0xff] %v1485
      %1502 = vst [vmem:[#allocation2 + $0x158] sm:$0xff] %v1486
      %1503 = vst [vmem:[#allocation2 + $0x160] sm:$0xff] %v1487
      %1504 = vst [vmem:[#allocation2 + $0x168] sm:$0xff] %v1488
      %1505 = vst [vmem:[#allocation2 + $0x170] sm:$0xff] %v1489
      %1506 = vst [vmem:[#allocation2 + $0x178] sm:$0xff] %v1490
      %1507 = vrot.lane.b32.xlu0 %v1205, 1
      %v1508 = vpop.permute.xlu0 %1507
      %1509 = vrot.lane.b32.xlu0 %v1209, 1
      %v1510 = vpop.permute.xlu0 %1509
      %1511 = vrot.lane.b32.xlu0 %v1213, 1
      %v1512 = vpop.permute.xlu0 %1511
      %1513 = vrot.lane.b32.xlu0 %v1217, 1
      %v1514 = vpop.permute.xlu0 %1513
      %1515 = vrot.lane.b32.xlu0 %v1206, 1
      %v1516 = vpop.permute.xlu0 %1515
      %1517 = vrot.lane.b32.xlu0 %v1210, 1
      %v1518 = vpop.permute.xlu0 %1517
      %1519 = vrot.lane.b32.xlu0 %v1214, 1
      %v1520 = vpop.permute.xlu0 %1519
      %1521 = vrot.lane.b32.xlu0 %v1218, 1
      %v1522 = vpop.permute.xlu0 %1521
      %1523 = vrot.lane.b32.xlu0 %v1207, 1
      %v1524 = vpop.permute.xlu0 %1523
      %1525 = vrot.lane.b32.xlu0 %v1211, 1
      %v1526 = vpop.permute.xlu0 %1525
      %1527 = vrot.lane.b32.xlu0 %v1215, 1
      %v1528 = vpop.permute.xlu0 %1527
      %1529 = vrot.lane.b32.xlu0 %v1219, 1
      %v1530 = vpop.permute.xlu0 %1529
      %1531 = vrot.lane.b32.xlu0 %v1208, 1
      %v1532 = vpop.permute.xlu0 %1531
      %1533 = vrot.lane.b32.xlu0 %v1212, 1
      %v1534 = vpop.permute.xlu0 %1533
      %1535 = vrot.lane.b32.xlu0 %v1216, 1
      %v1536 = vpop.permute.xlu0 %1535
      %1537 = vrot.lane.b32.xlu0 %v1220, 1
      %v1538 = vpop.permute.xlu0 %1537
      %v1539 = vsel %vm785, %v1524, %v1532
      %v1540 = vsel %vm785, %v1526, %v1534
      %v1541 = vsel %vm785, %v1528, %v1536
      %v1542 = vsel %vm785, %v1530, %v1538
      %v1543 = vsel %vm785, %v1516, %v1524
      %v1544 = vsel %vm785, %v1518, %v1526
      %v1545 = vsel %vm785, %v1520, %v1528
      %v1546 = vsel %vm785, %v1522, %v1530
      %v1547 = vsel %vm785, %v1508, %v1516
      %v1548 = vsel %vm785, %v1510, %v1518
      %v1549 = vsel %vm785, %v1512, %v1520
      %v1550 = vsel %vm785, %v1514, %v1522
      %v1551 = vsel %vm785, %v1532, %v1508
      %v1552 = vsel %vm785, %v1534, %v1510
      %v1553 = vsel %vm785, %v1536, %v1512
      %v1554 = vsel %vm785, %v1538, %v1514
      %v1555 = vld [vmem:[%s790] ss:$8 sm:$0xf]
      %v1557 = vperm.slane %v1555, 0
      %v1558 = vperm.slane %v1555, 1
      %v1559 = vperm.slane %v1555, 2
      %v1560 = vperm.slane %v1555, 3
      %v1565 = vmul.f32 %v1551, %v1557
      %v1566 = vmul.f32 %v1547, %v1558
      %v1567 = vmul.f32 %v1543, %v1559
      %v1568 = vmul.f32 %v1539, %v1560
      %v1569 = vmul.f32 %v1552, %v1557
      %v1570 = vmul.f32 %v1548, %v1558
      %v1571 = vmul.f32 %v1544, %v1559
      %v1572 = vmul.f32 %v1540, %v1560
      %v1573 = vmul.f32 %v1553, %v1557
      %v1574 = vmul.f32 %v1549, %v1558
      %v1575 = vmul.f32 %v1545, %v1559
      %v1576 = vmul.f32 %v1541, %v1560
      %v1577 = vmul.f32 %v1554, %v1557
      %v1578 = vmul.f32 %v1550, %v1558
      %v1579 = vmul.f32 %v1546, %v1559
      %v1580 = vmul.f32 %v1542, %v1560
      %1581 = vst [vmem:[#allocation2 + $0x180] sm:$0xff] %v1565
      %1582 = vst [vmem:[#allocation2 + $0x188] sm:$0xff] %v1566
      %1583 = vst [vmem:[#allocation2 + $0x190] sm:$0xff] %v1567
      %1584 = vst [vmem:[#allocation2 + $0x198] sm:$0xff] %v1568
      %1585 = vst [vmem:[#allocation2 + $0x1a0] sm:$0xff] %v1569
      %1586 = vst [vmem:[#allocation2 + $0x1a8] sm:$0xff] %v1570
      %1587 = vst [vmem:[#allocation2 + $0x1b0] sm:$0xff] %v1571
      %1588 = vst [vmem:[#allocation2 + $0x1b8] sm:$0xff] %v1572
      %1589 = vst [vmem:[#allocation2 + $0x1c0] sm:$0xff] %v1573
      %1590 = vst [vmem:[#allocation2 + $0x1c8] sm:$0xff] %v1574
      %1591 = vst [vmem:[#allocation2 + $0x1d0] sm:$0xff] %v1575
      %1592 = vst [vmem:[#allocation2 + $0x1d8] sm:$0xff] %v1576
      %1593 = vst [vmem:[#allocation2 + $0x1e0] sm:$0xff] %v1577
      %1594 = vst [vmem:[#allocation2 + $0x1e8] sm:$0xff] %v1578
      %1595 = vst [vmem:[#allocation2 + $0x1f0] sm:$0xff] %v1579
      %1596 = vst [vmem:[#allocation2 + $0x1f8] sm:$0xff] %v1580
      %v1597 = vld [vmem:[%s805] ss:$8 sm:$0xf]
      %v1599 = vperm.slane %v1597, 0
      %v1600 = vperm.slane %v1597, 1
      %v1601 = vperm.slane %v1597, 2
      %v1602 = vperm.slane %v1597, 3
      %v1607 = vmul.f32 %v1205, %v1599
      %v1608 = vmul.f32 %v1206, %v1600
      %v1609 = vmul.f32 %v1207, %v1601
      %v1610 = vmul.f32 %v1208, %v1602
      %v1611 = vmul.f32 %v1209, %v1599
      %v1612 = vmul.f32 %v1210, %v1600
      %v1613 = vmul.f32 %v1211, %v1601
      %v1614 = vmul.f32 %v1212, %v1602
      %v1615 = vmul.f32 %v1213, %v1599
      %v1616 = vmul.f32 %v1214, %v1600
      %v1617 = vmul.f32 %v1215, %v1601
      %v1618 = vmul.f32 %v1216, %v1602
      %v1619 = vmul.f32 %v1217, %v1599
      %v1620 = vmul.f32 %v1218, %v1600
      %v1621 = vmul.f32 %v1219, %v1601
      %v1622 = vmul.f32 %v1220, %v1602
      %1623 = vst [vmem:[#allocation2 + $0x200] sm:$0xff] %v1607
      %1624 = vst [vmem:[#allocation2 + $0x208] sm:$0xff] %v1608
      %1625 = vst [vmem:[#allocation2 + $0x210] sm:$0xff] %v1609
      %1626 = vst [vmem:[#allocation2 + $0x218] sm:$0xff] %v1610
      %1627 = vst [vmem:[#allocation2 + $0x220] sm:$0xff] %v1611
      %1628 = vst [vmem:[#allocation2 + $0x228] sm:$0xff] %v1612
      %1629 = vst [vmem:[#allocation2 + $0x230] sm:$0xff] %v1613
      %1630 = vst [vmem:[#allocation2 + $0x238] sm:$0xff] %v1614
      %1631 = vst [vmem:[#allocation2 + $0x240] sm:$0xff] %v1615
      %1632 = vst [vmem:[#allocation2 + $0x248] sm:$0xff] %v1616
      %1633 = vst [vmem:[#allocation2 + $0x250] sm:$0xff] %v1617
      %1634 = vst [vmem:[#allocation2 + $0x258] sm:$0xff] %v1618
      %1635 = vst [vmem:[#allocation2 + $0x260] sm:$0xff] %v1619
      %1636 = vst [vmem:[#allocation2 + $0x268] sm:$0xff] %v1620
      %1637 = vst [vmem:[#allocation2 + $0x270] sm:$0xff] %v1621
      %1638 = vst [vmem:[#allocation2 + $0x278] sm:$0xff] %v1622
      %1639 = vrot.lane.b32.xlu0 %v1205, 127
      %v1640 = vpop.permute.xlu0 %1639
      %1641 = vrot.lane.b32.xlu0 %v1209, 127
      %v1642 = vpop.permute.xlu0 %1641
      %1643 = vrot.lane.b32.xlu0 %v1213, 127
      %v1644 = vpop.permute.xlu0 %1643
      %1645 = vrot.lane.b32.xlu0 %v1217, 127
      %v1646 = vpop.permute.xlu0 %1645
      %1647 = vrot.lane.b32.xlu0 %v1206, 127
      %v1648 = vpop.permute.xlu0 %1647
      %1649 = vrot.lane.b32.xlu0 %v1210, 127
      %v1650 = vpop.permute.xlu0 %1649
      %1651 = vrot.lane.b32.xlu0 %v1214, 127
      %v1652 = vpop.permute.xlu0 %1651
      %1653 = vrot.lane.b32.xlu0 %v1218, 127
      %v1654 = vpop.permute.xlu0 %1653
      %1655 = vrot.lane.b32.xlu0 %v1207, 127
      %v1656 = vpop.permute.xlu0 %1655
      %1657 = vrot.lane.b32.xlu0 %v1211, 127
      %v1658 = vpop.permute.xlu0 %1657
      %1659 = vrot.lane.b32.xlu0 %v1215, 127
      %v1660 = vpop.permute.xlu0 %1659
      %1661 = vrot.lane.b32.xlu0 %v1219, 127
      %v1662 = vpop.permute.xlu0 %1661
      %1663 = vrot.lane.b32.xlu0 %v1208, 127
      %v1664 = vpop.permute.xlu0 %1663
      %1665 = vrot.lane.b32.xlu0 %v1212, 127
      %v1666 = vpop.permute.xlu0 %1665
      %1667 = vrot.lane.b32.xlu0 %v1216, 127
      %v1668 = vpop.permute.xlu0 %1667
      %1669 = vrot.lane.b32.xlu0 %v1220, 127
      %v1670 = vpop.permute.xlu0 %1669
      %v1671 = vsel %vm816, %v1656, %v1664
      %v1672 = vsel %vm816, %v1658, %v1666
      %v1673 = vsel %vm816, %v1660, %v1668
      %v1674 = vsel %vm816, %v1662, %v1670
      %v1675 = vsel %vm816, %v1648, %v1656
      %v1676 = vsel %vm816, %v1650, %v1658
      %v1677 = vsel %vm816, %v1652, %v1660
      %v1678 = vsel %vm816, %v1654, %v1662
      %v1679 = vsel %vm816, %v1640, %v1648
      %v1680 = vsel %vm816, %v1642, %v1650
      %v1681 = vsel %vm816, %v1644, %v1652
      %v1682 = vsel %vm816, %v1646, %v1654
      %v1683 = vsel %vm816, %v1664, %v1640
      %v1684 = vsel %vm816, %v1666, %v1642
      %v1685 = vsel %vm816, %v1668, %v1644
      %v1686 = vsel %vm816, %v1670, %v1646
      %v1687 = vld [vmem:[%s821] ss:$8 sm:$0xf]
      %v1689 = vperm.slane %v1687, 0
      %v1690 = vperm.slane %v1687, 1
      %v1691 = vperm.slane %v1687, 2
      %v1692 = vperm.slane %v1687, 3
      %v1697 = vmul.f32 %v1679, %v1689
      %v1698 = vmul.f32 %v1675, %v1690
      %v1699 = vmul.f32 %v1671, %v1691
      %v1700 = vmul.f32 %v1683, %v1692
      %v1701 = vmul.f32 %v1680, %v1689
      %v1702 = vmul.f32 %v1676, %v1690
      %v1703 = vmul.f32 %v1672, %v1691
      %v1704 = vmul.f32 %v1684, %v1692
      %v1705 = vmul.f32 %v1681, %v1689
      %v1706 = vmul.f32 %v1677, %v1690
      %v1707 = vmul.f32 %v1673, %v1691
      %v1708 = vmul.f32 %v1685, %v1692
      %v1709 = vmul.f32 %v1682, %v1689
      %v1710 = vmul.f32 %v1678, %v1690
      %v1711 = vmul.f32 %v1674, %v1691
      %v1712 = vmul.f32 %v1686, %v1692
      %1713 = vst [vmem:[#allocation2 + $0x280] sm:$0xff] %v1697
      %1714 = vst [vmem:[#allocation2 + $0x288] sm:$0xff] %v1698
      %1715 = vst [vmem:[#allocation2 + $0x290] sm:$0xff] %v1699
      %1716 = vst [vmem:[#allocation2 + $0x298] sm:$0xff] %v1700
      %1717 = vst [vmem:[#allocation2 + $0x2a0] sm:$0xff] %v1701
      %1718 = vst [vmem:[#allocation2 + $0x2a8] sm:$0xff] %v1702
      %1719 = vst [vmem:[#allocation2 + $0x2b0] sm:$0xff] %v1703
      %1720 = vst [vmem:[#allocation2 + $0x2b8] sm:$0xff] %v1704
      %1721 = vst [vmem:[#allocation2 + $0x2c0] sm:$0xff] %v1705
      %1722 = vst [vmem:[#allocation2 + $0x2c8] sm:$0xff] %v1706
      %1723 = vst [vmem:[#allocation2 + $0x2d0] sm:$0xff] %v1707
      %1724 = vst [vmem:[#allocation2 + $0x2d8] sm:$0xff] %v1708
      %1725 = vst [vmem:[#allocation2 + $0x2e0] sm:$0xff] %v1709
      %1726 = vst [vmem:[#allocation2 + $0x2e8] sm:$0xff] %v1710
      %1727 = vst [vmem:[#allocation2 + $0x2f0] sm:$0xff] %v1711
      %1728 = vst [vmem:[#allocation2 + $0x2f8] sm:$0xff] %v1712
      %1729 = vrot.lane.b32.xlu0 %v1205, 113
      %v1730 = vpop.permute.xlu0 %1729
      %1731 = vrot.lane.b32.xlu0 %v1209, 113
      %v1732 = vpop.permute.xlu0 %1731
      %1733 = vrot.lane.b32.xlu0 %v1213, 113
      %v1734 = vpop.permute.xlu0 %1733
      %1735 = vrot.lane.b32.xlu0 %v1217, 113
      %v1736 = vpop.permute.xlu0 %1735
      %1737 = vrot.lane.b32.xlu0 %v1206, 113
      %v1738 = vpop.permute.xlu0 %1737
      %1739 = vrot.lane.b32.xlu0 %v1210, 113
      %v1740 = vpop.permute.xlu0 %1739
      %1741 = vrot.lane.b32.xlu0 %v1214, 113
      %v1742 = vpop.permute.xlu0 %1741
      %1743 = vrot.lane.b32.xlu0 %v1218, 113
      %v1744 = vpop.permute.xlu0 %1743
      %1745 = vrot.lane.b32.xlu0 %v1207, 113
      %v1746 = vpop.permute.xlu0 %1745
      %1747 = vrot.lane.b32.xlu0 %v1211, 113
      %v1748 = vpop.permute.xlu0 %1747
      %1749 = vrot.lane.b32.xlu0 %v1215, 113
      %v1750 = vpop.permute.xlu0 %1749
      %1751 = vrot.lane.b32.xlu0 %v1219, 113
      %v1752 = vpop.permute.xlu0 %1751
      %1753 = vrot.lane.b32.xlu0 %v1208, 113
      %v1754 = vpop.permute.xlu0 %1753
      %1755 = vrot.lane.b32.xlu0 %v1212, 113
      %v1756 = vpop.permute.xlu0 %1755
      %1757 = vrot.lane.b32.xlu0 %v1216, 113
      %v1758 = vpop.permute.xlu0 %1757
      %1759 = vrot.lane.b32.xlu0 %v1220, 113
      %v1760 = vpop.permute.xlu0 %1759
      %v1761 = vsel %vm844, %v1746, %v1754
      %v1762 = vsel %vm844, %v1748, %v1756
      %v1763 = vsel %vm844, %v1750, %v1758
      %v1764 = vsel %vm844, %v1752, %v1760
      %v1765 = vsel %vm844, %v1738, %v1746
      %v1766 = vsel %vm844, %v1740, %v1748
      %v1767 = vsel %vm844, %v1742, %v1750
      %v1768 = vsel %vm844, %v1744, %v1752
      %v1769 = vsel %vm844, %v1730, %v1738
      %v1770 = vsel %vm844, %v1732, %v1740
      %v1771 = vsel %vm844, %v1734, %v1742
      %v1772 = vsel %vm844, %v1736, %v1744
      %v1773 = vsel %vm844, %v1754, %v1730
      %v1774 = vsel %vm844, %v1756, %v1732
      %v1775 = vsel %vm844, %v1758, %v1734
      %v1776 = vsel %vm844, %v1760, %v1736
      %v1777 = vld [vmem:[%s849] ss:$8 sm:$0xf]
      %v1779 = vperm.slane %v1777, 0
      %v1780 = vperm.slane %v1777, 1
      %v1781 = vperm.slane %v1777, 2
      %v1782 = vperm.slane %v1777, 3
      %v1787 = vmul.f32 %v1769, %v1779
      %v1788 = vmul.f32 %v1765, %v1780
      %v1789 = vmul.f32 %v1761, %v1781
      %v1790 = vmul.f32 %v1773, %v1782
      %v1791 = vmul.f32 %v1770, %v1779
      %v1792 = vmul.f32 %v1766, %v1780
      %v1793 = vmul.f32 %v1762, %v1781
      %v1794 = vmul.f32 %v1774, %v1782
      %v1795 = vmul.f32 %v1771, %v1779
      %v1796 = vmul.f32 %v1767, %v1780
      %v1797 = vmul.f32 %v1763, %v1781
      %v1798 = vmul.f32 %v1775, %v1782
      %v1799 = vmul.f32 %v1772, %v1779
      %v1800 = vmul.f32 %v1768, %v1780
      %v1801 = vmul.f32 %v1764, %v1781
      %v1802 = vmul.f32 %v1776, %v1782
      %1803 = vst [vmem:[#allocation2 + $0x300] sm:$0xff] %v1787
      %1804 = vst [vmem:[#allocation2 + $0x308] sm:$0xff] %v1788
      %1805 = vst [vmem:[#allocation2 + $0x310] sm:$0xff] %v1789
      %1806 = vst [vmem:[#allocation2 + $0x318] sm:$0xff] %v1790
      %1807 = vst [vmem:[#allocation2 + $0x320] sm:$0xff] %v1791
      %1808 = vst [vmem:[#allocation2 + $0x328] sm:$0xff] %v1792
      %1809 = vst [vmem:[#allocation2 + $0x330] sm:$0xff] %v1793
      %1810 = vst [vmem:[#allocation2 + $0x338] sm:$0xff] %v1794
      %1811 = vst [vmem:[#allocation2 + $0x340] sm:$0xff] %v1795
      %1812 = vst [vmem:[#allocation2 + $0x348] sm:$0xff] %v1796
      %1813 = vst [vmem:[#allocation2 + $0x350] sm:$0xff] %v1797
      %1814 = vst [vmem:[#allocation2 + $0x358] sm:$0xff] %v1798
      %1815 = vst [vmem:[#allocation2 + $0x360] sm:$0xff] %v1799
      %1816 = vst [vmem:[#allocation2 + $0x368] sm:$0xff] %v1800
      %1817 = vst [vmem:[#allocation2 + $0x370] sm:$0xff] %v1801
      %1818 = vst [vmem:[#allocation2 + $0x378] sm:$0xff] %v1802
      %1819 = vrot.lane.b32.xlu0 %v1205, 112
      %v1820 = vpop.permute.xlu0 %1819
      %1821 = vrot.lane.b32.xlu0 %v1209, 112
      %v1822 = vpop.permute.xlu0 %1821
      %1823 = vrot.lane.b32.xlu0 %v1213, 112
      %v1824 = vpop.permute.xlu0 %1823
      %1825 = vrot.lane.b32.xlu0 %v1217, 112
      %v1826 = vpop.permute.xlu0 %1825
      %1827 = vrot.lane.b32.xlu0 %v1206, 112
      %v1828 = vpop.permute.xlu0 %1827
      %1829 = vrot.lane.b32.xlu0 %v1210, 112
      %v1830 = vpop.permute.xlu0 %1829
      %1831 = vrot.lane.b32.xlu0 %v1214, 112
      %v1832 = vpop.permute.xlu0 %1831
      %1833 = vrot.lane.b32.xlu0 %v1218, 112
      %v1834 = vpop.permute.xlu0 %1833
      %1835 = vrot.lane.b32.xlu0 %v1207, 112
      %v1836 = vpop.permute.xlu0 %1835
      %1837 = vrot.lane.b32.xlu0 %v1211, 112
      %v1838 = vpop.permute.xlu0 %1837
      %1839 = vrot.lane.b32.xlu0 %v1215, 112
      %v1840 = vpop.permute.xlu0 %1839
      %1841 = vrot.lane.b32.xlu0 %v1219, 112
      %v1842 = vpop.permute.xlu0 %1841
      %1843 = vrot.lane.b32.xlu0 %v1208, 112
      %v1844 = vpop.permute.xlu0 %1843
      %1845 = vrot.lane.b32.xlu0 %v1212, 112
      %v1846 = vpop.permute.xlu0 %1845
      %1847 = vrot.lane.b32.xlu0 %v1216, 112
      %v1848 = vpop.permute.xlu0 %1847
      %1849 = vrot.lane.b32.xlu0 %v1220, 112
      %v1850 = vpop.permute.xlu0 %1849
      %v1851 = vsel %vm872, %v1836, %v1844
      %v1852 = vsel %vm872, %v1838, %v1846
      %v1853 = vsel %vm872, %v1840, %v1848
      %v1854 = vsel %vm872, %v1842, %v1850
      %v1855 = vsel %vm872, %v1828, %v1836
      %v1856 = vsel %vm872, %v1830, %v1838
      %v1857 = vsel %vm872, %v1832, %v1840
      %v1858 = vsel %vm872, %v1834, %v1842
      %v1859 = vsel %vm872, %v1820, %v1828
      %v1860 = vsel %vm872, %v1822, %v1830
      %v1861 = vsel %vm872, %v1824, %v1832
      %v1862 = vsel %vm872, %v1826, %v1834
      %v1863 = vsel %vm872, %v1844, %v1820
      %v1864 = vsel %vm872, %v1846, %v1822
      %v1865 = vsel %vm872, %v1848, %v1824
      %v1866 = vsel %vm872, %v1850, %v1826
      %v1867 = vld [vmem:[%s877] ss:$8 sm:$0xf]
      %v1869 = vperm.slane %v1867, 0
      %v1870 = vperm.slane %v1867, 1
      %v1871 = vperm.slane %v1867, 2
      %v1872 = vperm.slane %v1867, 3
      %v1877 = vmul.f32 %v1859, %v1869
      %v1878 = vmul.f32 %v1855, %v1870
      %v1879 = vmul.f32 %v1851, %v1871
      %v1880 = vmul.f32 %v1863, %v1872
      %v1881 = vmul.f32 %v1860, %v1869
      %v1882 = vmul.f32 %v1856, %v1870
      %v1883 = vmul.f32 %v1852, %v1871
      %v1884 = vmul.f32 %v1864, %v1872
      %v1885 = vmul.f32 %v1861, %v1869
      %v1886 = vmul.f32 %v1857, %v1870
      %v1887 = vmul.f32 %v1853, %v1871
      %v1888 = vmul.f32 %v1865, %v1872
      %v1889 = vmul.f32 %v1862, %v1869
      %v1890 = vmul.f32 %v1858, %v1870
      %v1891 = vmul.f32 %v1854, %v1871
      %v1892 = vmul.f32 %v1866, %v1872
      %1893 = vst [vmem:[#allocation2 + $0x380] sm:$0xff] %v1877
      %1894 = vst [vmem:[#allocation2 + $0x388] sm:$0xff] %v1878
      %1895 = vst [vmem:[#allocation2 + $0x390] sm:$0xff] %v1879
      %1896 = vst [vmem:[#allocation2 + $0x398] sm:$0xff] %v1880
      %1897 = vst [vmem:[#allocation2 + $0x3a0] sm:$0xff] %v1881
      %1898 = vst [vmem:[#allocation2 + $0x3a8] sm:$0xff] %v1882
      %1899 = vst [vmem:[#allocation2 + $0x3b0] sm:$0xff] %v1883
      %1900 = vst [vmem:[#allocation2 + $0x3b8] sm:$0xff] %v1884
      %1901 = vst [vmem:[#allocation2 + $0x3c0] sm:$0xff] %v1885
      %1902 = vst [vmem:[#allocation2 + $0x3c8] sm:$0xff] %v1886
      %1903 = vst [vmem:[#allocation2 + $0x3d0] sm:$0xff] %v1887
      %1904 = vst [vmem:[#allocation2 + $0x3d8] sm:$0xff] %v1888
      %1905 = vst [vmem:[#allocation2 + $0x3e0] sm:$0xff] %v1889
      %1906 = vst [vmem:[#allocation2 + $0x3e8] sm:$0xff] %v1890
      %1907 = vst [vmem:[#allocation2 + $0x3f0] sm:$0xff] %v1891
      %1908 = vst [vmem:[#allocation2 + $0x3f8] sm:$0xff] %v1892
      %1909 = vrot.lane.b32.xlu0 %v1205, 111
      %v1910 = vpop.permute.xlu0 %1909
      %1911 = vrot.lane.b32.xlu0 %v1209, 111
      %v1912 = vpop.permute.xlu0 %1911
      %1913 = vrot.lane.b32.xlu0 %v1213, 111
      %v1914 = vpop.permute.xlu0 %1913
      %1915 = vrot.lane.b32.xlu0 %v1217, 111
      %v1916 = vpop.permute.xlu0 %1915
      %1917 = vrot.lane.b32.xlu0 %v1206, 111
      %v1918 = vpop.permute.xlu0 %1917
      %1919 = vrot.lane.b32.xlu0 %v1210, 111
      %v1920 = vpop.permute.xlu0 %1919
      %1921 = vrot.lane.b32.xlu0 %v1214, 111
      %v1922 = vpop.permute.xlu0 %1921
      %1923 = vrot.lane.b32.xlu0 %v1218, 111
      %v1924 = vpop.permute.xlu0 %1923
      %1925 = vrot.lane.b32.xlu0 %v1207, 111
      %v1926 = vpop.permute.xlu0 %1925
      %1927 = vrot.lane.b32.xlu0 %v1211, 111
      %v1928 = vpop.permute.xlu0 %1927
      %1929 = vrot.lane.b32.xlu0 %v1215, 111
      %v1930 = vpop.permute.xlu0 %1929
      %1931 = vrot.lane.b32.xlu0 %v1219, 111
      %v1932 = vpop.permute.xlu0 %1931
      %1933 = vrot.lane.b32.xlu0 %v1208, 111
      %v1934 = vpop.permute.xlu0 %1933
      %1935 = vrot.lane.b32.xlu0 %v1212, 111
      %v1936 = vpop.permute.xlu0 %1935
      %1937 = vrot.lane.b32.xlu0 %v1216, 111
      %v1938 = vpop.permute.xlu0 %1937
      %1939 = vrot.lane.b32.xlu0 %v1220, 111
      %v1940 = vpop.permute.xlu0 %1939
      %v1941 = vsel %vm900, %v1926, %v1934
      %v1942 = vsel %vm900, %v1928, %v1936
      %v1943 = vsel %vm900, %v1930, %v1938
      %v1944 = vsel %vm900, %v1932, %v1940
      %v1945 = vsel %vm900, %v1918, %v1926
      %v1946 = vsel %vm900, %v1920, %v1928
      %v1947 = vsel %vm900, %v1922, %v1930
      %v1948 = vsel %vm900, %v1924, %v1932
      %v1949 = vsel %vm900, %v1910, %v1918
      %v1950 = vsel %vm900, %v1912, %v1920
      %v1951 = vsel %vm900, %v1914, %v1922
      %v1952 = vsel %vm900, %v1916, %v1924
      %v1953 = vsel %vm900, %v1934, %v1910
      %v1954 = vsel %vm900, %v1936, %v1912
      %v1955 = vsel %vm900, %v1938, %v1914
      %v1956 = vsel %vm900, %v1940, %v1916
      %v1957 = vld [vmem:[%s905] ss:$8 sm:$0xf]
      %v1959 = vperm.slane %v1957, 0
      %v1960 = vperm.slane %v1957, 1
      %v1961 = vperm.slane %v1957, 2
      %v1962 = vperm.slane %v1957, 3
      %v1967 = vmul.f32 %v1949, %v1959
      %v1968 = vmul.f32 %v1945, %v1960
      %v1969 = vmul.f32 %v1941, %v1961
      %v1970 = vmul.f32 %v1953, %v1962
      %v1971 = vmul.f32 %v1950, %v1959
      %v1972 = vmul.f32 %v1946, %v1960
      %v1973 = vmul.f32 %v1942, %v1961
      %v1974 = vmul.f32 %v1954, %v1962
      %v1975 = vmul.f32 %v1951, %v1959
      %v1976 = vmul.f32 %v1947, %v1960
      %v1977 = vmul.f32 %v1943, %v1961
      %v1978 = vmul.f32 %v1955, %v1962
      %v1979 = vmul.f32 %v1952, %v1959
      %v1980 = vmul.f32 %v1948, %v1960
      %v1981 = vmul.f32 %v1944, %v1961
      %v1982 = vmul.f32 %v1956, %v1962
      %1983 = vst [vmem:[#allocation2 + $0x400] sm:$0xff] %v1967
      %1984 = vst [vmem:[#allocation2 + $0x408] sm:$0xff] %v1968
      %1985 = vst [vmem:[#allocation2 + $0x410] sm:$0xff] %v1969
      %1986 = vst [vmem:[#allocation2 + $0x418] sm:$0xff] %v1970
      %1987 = vst [vmem:[#allocation2 + $0x420] sm:$0xff] %v1971
      %1988 = vst [vmem:[#allocation2 + $0x428] sm:$0xff] %v1972
      %1989 = vst [vmem:[#allocation2 + $0x430] sm:$0xff] %v1973
      %1990 = vst [vmem:[#allocation2 + $0x438] sm:$0xff] %v1974
      %1991 = vst [vmem:[#allocation2 + $0x440] sm:$0xff] %v1975
      %1992 = vst [vmem:[#allocation2 + $0x448] sm:$0xff] %v1976
      %1993 = vst [vmem:[#allocation2 + $0x450] sm:$0xff] %v1977
      %1994 = vst [vmem:[#allocation2 + $0x458] sm:$0xff] %v1978
      %1995 = vst [vmem:[#allocation2 + $0x460] sm:$0xff] %v1979
      %1996 = vst [vmem:[#allocation2 + $0x468] sm:$0xff] %v1980
      %1997 = vst [vmem:[#allocation2 + $0x470] sm:$0xff] %v1981
      %1998 = vst [vmem:[#allocation2 + $0x478] sm:$0xff] %v1982
      %v1999 = vld [vmem:[%s636] sm:$0xff]
      %v2000 = vld [vmem:[%s636 + $0x8] sm:$0xff]
      %v2001 = vld [vmem:[%s636 + $0x10] sm:$0xff]
      %v2002 = vld [vmem:[%s636 + $0x18] sm:$0xff]
      %v2003 = vld [vmem:[%s636 + $0x20] sm:$0xff]
      %v2004 = vld [vmem:[%s636 + $0x28] sm:$0xff]
      %v2005 = vld [vmem:[%s636 + $0x30] sm:$0xff]
      %v2006 = vld [vmem:[%s636 + $0x38] sm:$0xff]
      %v2007 = vld [vmem:[%s636 + $0x40] sm:$0xff]
      %v2008 = vld [vmem:[%s636 + $0x48] sm:$0xff]
      %v2009 = vld [vmem:[%s636 + $0x50] sm:$0xff]
      %v2010 = vld [vmem:[%s636 + $0x58] sm:$0xff]
      %v2011 = vld [vmem:[#allocation2] sm:$0xff]
      %v2012 = vld [vmem:[#allocation2 + $0x8] sm:$0xff]
      %v2013 = vld [vmem:[#allocation2 + $0x10] sm:$0xff]
      %v2014 = vld [vmem:[#allocation2 + $0x18] sm:$0xff]
      %v2015 = vld [vmem:[#allocation2 + $0x20] sm:$0xff]
      %v2016 = vld [vmem:[#allocation2 + $0x28] sm:$0xff]
      %v2017 = vld [vmem:[#allocation2 + $0x30] sm:$0xff]
      %v2018 = vld [vmem:[#allocation2 + $0x38] sm:$0xff]
      %v2019 = vld [vmem:[#allocation2 + $0x40] sm:$0xff]
      %v2020 = vld [vmem:[#allocation2 + $0x48] sm:$0xff]
      %v2021 = vld [vmem:[#allocation2 + $0x50] sm:$0xff]
      %v2022 = vld [vmem:[#allocation2 + $0x58] sm:$0xff]
      %v2023 = vld [vmem:[#allocation2 + $0x60] sm:$0xff]
      %v2024 = vld [vmem:[#allocation2 + $0x68] sm:$0xff]
      %v2025 = vld [vmem:[#allocation2 + $0x70] sm:$0xff]
      %v2026 = vld [vmem:[#allocation2 + $0x78] sm:$0xff]
      %v2027 = vld [vmem:[#allocation2 + $0x80] sm:$0xff]
      %v2028 = vld [vmem:[#allocation2 + $0x88] sm:$0xff]
      %v2029 = vld [vmem:[#allocation2 + $0x90] sm:$0xff]
      %v2030 = vld [vmem:[#allocation2 + $0x98] sm:$0xff]
      %v2031 = vld [vmem:[#allocation2 + $0xa0] sm:$0xff]
      %v2032 = vld [vmem:[#allocation2 + $0xa8] sm:$0xff]
      %v2033 = vld [vmem:[#allocation2 + $0xb0] sm:$0xff]
      %v2034 = vld [vmem:[#allocation2 + $0xb8] sm:$0xff]
      %v2035 = vld [vmem:[#allocation2 + $0xc0] sm:$0xff]
      %v2036 = vld [vmem:[#allocation2 + $0xc8] sm:$0xff]
      %v2037 = vld [vmem:[#allocation2 + $0xd0] sm:$0xff]
      %v2038 = vld [vmem:[#allocation2 + $0xd8] sm:$0xff]
      %v2039 = vld [vmem:[#allocation2 + $0xe0] sm:$0xff]
      %v2040 = vld [vmem:[#allocation2 + $0xe8] sm:$0xff]
      %v2041 = vld [vmem:[#allocation2 + $0xf0] sm:$0xff]
      %v2042 = vld [vmem:[#allocation2 + $0xf8] sm:$0xff]
      %v2043 = vld [vmem:[#allocation2 + $0x100] sm:$0xff]
      %v2044 = vld [vmem:[#allocation2 + $0x108] sm:$0xff]
      %v2045 = vld [vmem:[#allocation2 + $0x110] sm:$0xff]
      %v2046 = vld [vmem:[#allocation2 + $0x118] sm:$0xff]
      %v2047 = vld [vmem:[#allocation2 + $0x120] sm:$0xff]
      %v2048 = vld [vmem:[#allocation2 + $0x128] sm:$0xff]
      %v2049 = vld [vmem:[#allocation2 + $0x130] sm:$0xff]
      %v2050 = vld [vmem:[#allocation2 + $0x138] sm:$0xff]
      %v2051 = vld [vmem:[#allocation2 + $0x140] sm:$0xff]
      %v2052 = vld [vmem:[#allocation2 + $0x148] sm:$0xff]
      %v2053 = vld [vmem:[#allocation2 + $0x150] sm:$0xff]
      %v2054 = vld [vmem:[#allocation2 + $0x158] sm:$0xff]
      %v2055 = vld [vmem:[#allocation2 + $0x160] sm:$0xff]
      %v2056 = vld [vmem:[#allocation2 + $0x168] sm:$0xff]
      %v2057 = vld [vmem:[#allocation2 + $0x170] sm:$0xff]
      %v2058 = vld [vmem:[#allocation2 + $0x178] sm:$0xff]
      %v2059 = vld [vmem:[#allocation2 + $0x180] sm:$0xff]
      %v2060 = vld [vmem:[#allocation2 + $0x188] sm:$0xff]
      %v2061 = vld [vmem:[#allocation2 + $0x190] sm:$0xff]
      %v2062 = vld [vmem:[#allocation2 + $0x198] sm:$0xff]
      %v2063 = vld [vmem:[#allocation2 + $0x1a0] sm:$0xff]
      %v2064 = vld [vmem:[#allocation2 + $0x1a8] sm:$0xff]
      %v2065 = vld [vmem:[#allocation2 + $0x1b0] sm:$0xff]
      %v2066 = vld [vmem:[#allocation2 + $0x1b8] sm:$0xff]
      %v2067 = vld [vmem:[#allocation2 + $0x1c0] sm:$0xff]
      %v2068 = vld [vmem:[#allocation2 + $0x1c8] sm:$0xff]
      %v2069 = vld [vmem:[#allocation2 + $0x1d0] sm:$0xff]
      %v2070 = vld [vmem:[#allocation2 + $0x1d8] sm:$0xff]
      %v2071 = vld [vmem:[#allocation2 + $0x1e0] sm:$0xff]
      %v2072 = vld [vmem:[#allocation2 + $0x1e8] sm:$0xff]
      %v2073 = vld [vmem:[#allocation2 + $0x1f0] sm:$0xff]
      %v2074 = vld [vmem:[#allocation2 + $0x1f8] sm:$0xff]
      %v2075 = vld [vmem:[#allocation2 + $0x200] sm:$0xff]
      %v2076 = vld [vmem:[#allocation2 + $0x208] sm:$0xff]
      %v2077 = vld [vmem:[#allocation2 + $0x210] sm:$0xff]
      %v2078 = vld [vmem:[#allocation2 + $0x218] sm:$0xff]
      %v2079 = vld [vmem:[#allocation2 + $0x220] sm:$0xff]
      %v2080 = vld [vmem:[#allocation2 + $0x228] sm:$0xff]
      %v2081 = vld [vmem:[#allocation2 + $0x230] sm:$0xff]
      %v2082 = vld [vmem:[#allocation2 + $0x238] sm:$0xff]
      %v2083 = vld [vmem:[#allocation2 + $0x240] sm:$0xff]
      %v2084 = vld [vmem:[#allocation2 + $0x248] sm:$0xff]
      %v2085 = vld [vmem:[#allocation2 + $0x250] sm:$0xff]
      %v2086 = vld [vmem:[#allocation2 + $0x258] sm:$0xff]
      %v2087 = vld [vmem:[#allocation2 + $0x260] sm:$0xff]
      %v2088 = vld [vmem:[#allocation2 + $0x268] sm:$0xff]
      %v2089 = vld [vmem:[#allocation2 + $0x270] sm:$0xff]
      %v2090 = vld [vmem:[#allocation2 + $0x278] sm:$0xff]
      %v2091 = vld [vmem:[#allocation2 + $0x280] sm:$0xff]
      %v2092 = vld [vmem:[#allocation2 + $0x288] sm:$0xff]
      %v2093 = vld [vmem:[#allocation2 + $0x290] sm:$0xff]
      %v2094 = vld [vmem:[#allocation2 + $0x298] sm:$0xff]
      %v2095 = vld [vmem:[#allocation2 + $0x2a0] sm:$0xff]
      %v2096 = vld [vmem:[#allocation2 + $0x2a8] sm:$0xff]
      %v2097 = vld [vmem:[#allocation2 + $0x2b0] sm:$0xff]
      %v2098 = vld [vmem:[#allocation2 + $0x2b8] sm:$0xff]
      %v2099 = vld [vmem:[#allocation2 + $0x2c0] sm:$0xff]
      %v2100 = vld [vmem:[#allocation2 + $0x2c8] sm:$0xff]
      %v2101 = vld [vmem:[#allocation2 + $0x2d0] sm:$0xff]
      %v2102 = vld [vmem:[#allocation2 + $0x2d8] sm:$0xff]
      %v2103 = vld [vmem:[#allocation2 + $0x2e0] sm:$0xff]
      %v2104 = vld [vmem:[#allocation2 + $0x2e8] sm:$0xff]
      %v2105 = vld [vmem:[#allocation2 + $0x2f0] sm:$0xff]
      %v2106 = vld [vmem:[#allocation2 + $0x2f8] sm:$0xff]
      %v2107 = vld [vmem:[#allocation2 + $0x300] sm:$0xff]
      %v2108 = vld [vmem:[#allocation2 + $0x308] sm:$0xff]
      %v2109 = vld [vmem:[#allocation2 + $0x310] sm:$0xff]
      %v2110 = vld [vmem:[#allocation2 + $0x318] sm:$0xff]
      %v2111 = vld [vmem:[#allocation2 + $0x320] sm:$0xff]
      %v2112 = vld [vmem:[#allocation2 + $0x328] sm:$0xff]
      %v2113 = vld [vmem:[#allocation2 + $0x330] sm:$0xff]
      %v2114 = vld [vmem:[#allocation2 + $0x338] sm:$0xff]
      %v2115 = vld [vmem:[#allocation2 + $0x340] sm:$0xff]
      %v2116 = vld [vmem:[#allocation2 + $0x348] sm:$0xff]
      %v2117 = vld [vmem:[#allocation2 + $0x350] sm:$0xff]
      %v2118 = vld [vmem:[#allocation2 + $0x358] sm:$0xff]
      %v2119 = vld [vmem:[#allocation2 + $0x360] sm:$0xff]
      %v2120 = vld [vmem:[#allocation2 + $0x368] sm:$0xff]
      %v2121 = vld [vmem:[#allocation2 + $0x370] sm:$0xff]
      %v2122 = vld [vmem:[#allocation2 + $0x378] sm:$0xff]
      %v2123 = vld [vmem:[#allocation2 + $0x380] sm:$0xff]
      %v2124 = vld [vmem:[#allocation2 + $0x388] sm:$0xff]
      %v2125 = vld [vmem:[#allocation2 + $0x390] sm:$0xff]
      %v2126 = vld [vmem:[#allocation2 + $0x398] sm:$0xff]
      %v2127 = vld [vmem:[#allocation2 + $0x3a0] sm:$0xff]
      %v2128 = vld [vmem:[#allocation2 + $0x3a8] sm:$0xff]
      %v2129 = vld [vmem:[#allocation2 + $0x3b0] sm:$0xff]
      %v2130 = vld [vmem:[#allocation2 + $0x3b8] sm:$0xff]
      %v2131 = vld [vmem:[#allocation2 + $0x3c0] sm:$0xff]
      %v2132 = vld [vmem:[#allocation2 + $0x3c8] sm:$0xff]
      %v2133 = vld [vmem:[#allocation2 + $0x3d0] sm:$0xff]
      %v2134 = vld [vmem:[#allocation2 + $0x3d8] sm:$0xff]
      %v2135 = vld [vmem:[#allocation2 + $0x3e0] sm:$0xff]
      %v2136 = vld [vmem:[#allocation2 + $0x3e8] sm:$0xff]
      %v2137 = vld [vmem:[#allocation2 + $0x3f0] sm:$0xff]
      %v2138 = vld [vmem:[#allocation2 + $0x3f8] sm:$0xff]
      %v2139 = vld [vmem:[#allocation2 + $0x400] sm:$0xff]
      %v2140 = vld [vmem:[#allocation2 + $0x408] sm:$0xff]
      %v2141 = vld [vmem:[#allocation2 + $0x410] sm:$0xff]
      %v2142 = vld [vmem:[#allocation2 + $0x418] sm:$0xff]
      %v2143 = vld [vmem:[#allocation2 + $0x420] sm:$0xff]
      %v2144 = vld [vmem:[#allocation2 + $0x428] sm:$0xff]
      %v2145 = vld [vmem:[#allocation2 + $0x430] sm:$0xff]
      %v2146 = vld [vmem:[#allocation2 + $0x438] sm:$0xff]
      %v2147 = vld [vmem:[#allocation2 + $0x440] sm:$0xff]
      %v2148 = vld [vmem:[#allocation2 + $0x448] sm:$0xff]
      %v2149 = vld [vmem:[#allocation2 + $0x450] sm:$0xff]
      %v2150 = vld [vmem:[#allocation2 + $0x458] sm:$0xff]
      %v2151 = vld [vmem:[#allocation2 + $0x460] sm:$0xff]
      %v2152 = vld [vmem:[#allocation2 + $0x468] sm:$0xff]
      %v2153 = vld [vmem:[#allocation2 + $0x470] sm:$0xff]
      %v2154 = vld [vmem:[#allocation2 + $0x478] sm:$0xff]
      %v2155 = vld [vmem:[%s641] sm:$0xff]
      %v2156 = vld [vmem:[%s641 + $0x8] sm:$0xff]
      %v2157 = vld [vmem:[%s641 + $0x10] sm:$0xff]
      %v2158 = vld [vmem:[%s641 + $0x18] sm:$0xff]
      %2160 = vset.pattern.permute.xlu0 0
      %2161 = vperm.xlu0 %2160, %v2155
      %v2162 = vpop.permute.xlu0 %2161
      %2165 = vset.pattern.permute.xlu0 0
      %2166 = vperm.xlu0 %2165, %v2156
      %v2167 = vpop.permute.xlu0 %2166
      %2170 = vset.pattern.permute.xlu0 0
      %2171 = vperm.xlu0 %2170, %v2157
      %v2172 = vpop.permute.xlu0 %2171
      %2175 = vset.pattern.permute.xlu0 0
      %2176 = vperm.xlu0 %2175, %v2158
      %v2177 = vpop.permute.xlu0 %2176
      %vm2179 = vcmask 261120
      %v2181 = vsel %vm2179, %v2001, 0
      %v2184 = vsel %vm2179, %v2004, 0
      %v2187 = vsel %vm2179, %v2007, 0
      %v2190 = vsel %vm2179, %v2010, 0
      %2192 = vmatpush.msra.mxu0 %v2071
      %2193 = vmatpush.msra.mxu0 %v2067
      %2194 = vmatpush.msra.mxu0 %v2063
      %2195 = vmatpush.msra.mxu0 %v2059
      %2196 = vmatpush.msra.mxu0 %v2055
      %2197 = vmatpush.msra.mxu0 %v2051
      %2198 = vmatpush.msra.mxu0 %v2047
      %2199 = vmatpush.msra.mxu0 %v2043
      %2200 = vmatpush.msra.mxu0 %v2039
      %2201 = vmatpush.msra.mxu0 %v2035
      %2202 = vmatpush.msra.mxu0 %v2031
      %2203 = vmatpush.msra.mxu0 %v2027
      %2204 = vmatpush.msra.mxu0 %v2023
      %2205 = vmatpush.msra.mxu0 %v2019
      %2206 = vmatpush.msra.mxu0 %v2015
      %2207 = vmatpush.msra.mxu0 %v2011
      %2208 = vmatmul.f32.gmra.mxu0 %v1999
      %v2209 = vpop.f32.mrf.mxu0
      %v2210 = vadd.f32 %v2162, %v2209
      %2211 = vmatmul.f32.gmra.mxu0 %v2002
      %v2212 = vpop.f32.mrf.mxu0
      %v2213 = vadd.f32 %v2167, %v2212
      %2214 = vmatmul.f32.gmra.mxu0 %v2005
      %v2215 = vpop.f32.mrf.mxu0
      %v2216 = vadd.f32 %v2172, %v2215
      %2217 = vmatmul.f32.gmra.mxu0 %v2008
      %v2218 = vpop.f32.mrf.mxu0
      %v2219 = vadd.f32 %v2177, %v2218
      %2220 = vdwg.mxu0
      %2221 = vmatpush.msra.mxu0 %v2135
      %2222 = vmatpush.msra.mxu0 %v2131
      %2223 = vmatpush.msra.mxu0 %v2127
      %2224 = vmatpush.msra.mxu0 %v2123
      %2225 = vmatpush.msra.mxu0 %v2119
      %2226 = vmatpush.msra.mxu0 %v2115
      %2227 = vmatpush.msra.mxu0 %v2111
      %2228 = vmatpush.msra.mxu0 %v2107
      %2229 = vmatpush.msra.mxu0 %v2103
      %2230 = vmatpush.msra.mxu0 %v2099
      %2231 = vmatpush.msra.mxu0 %v2095
      %2232 = vmatpush.msra.mxu0 %v2091
      %2233 = vmatpush.msra.mxu0 %v2087
      %2234 = vmatpush.msra.mxu0 %v2083
      %2235 = vmatpush.msra.mxu0 %v2079
      %2236 = vmatpush.msra.mxu0 %v2075
      %2237 = vmatmul.f32.gmra.mxu0 %v2000
      %v2238 = vpop.f32.mrf.mxu0
      %v2239 = vadd.f32 %v2210, %v2238
      %2240 = vmatmul.f32.gmra.mxu0 %v2003
      %v2241 = vpop.f32.mrf.mxu0
      %v2242 = vadd.f32 %v2213, %v2241
      %2243 = vmatmul.f32.gmra.mxu0 %v2006
      %v2244 = vpop.f32.mrf.mxu0
      %v2245 = vadd.f32 %v2216, %v2244
      %2246 = vmatmul.f32.gmra.mxu0 %v2009
      %v2247 = vpop.f32.mrf.mxu0
      %v2248 = vadd.f32 %v2219, %v2247
      %2249 = vdwg.mxu0
      %2250 = vmatpush.msra.mxu0 0.0
      %2251 = vmatpush.msra.mxu0 0.0
      %2252 = vmatpush.msra.mxu0 0.0
      %2253 = vmatpush.msra.mxu0 0.0
      %2254 = vmatpush.msra.mxu0 0.0
      %2255 = vmatpush.msra.mxu0 0.0
      %2256 = vmatpush.msra.mxu0 0.0
      %2257 = vmatpush.msra.mxu0 0.0
      %2258 = vmatpush.msra.mxu0 0.0
      %2259 = vmatpush.msra.mxu0 0.0
      %2260 = vmatpush.msra.mxu0 0.0
      %2261 = vmatpush.msra.mxu0 0.0
      %2262 = vmatpush.msra.mxu0 %v2151
      %2263 = vmatpush.msra.mxu0 %v2147
      %2264 = vmatpush.msra.mxu0 %v2143
      %2265 = vmatpush.msra.mxu0 %v2139
      %2266 = vmatmul.f32.gmra.mxu0 %v2181
      %v2267 = vpop.f32.mrf.mxu0
      %v2268 = vadd.f32 %v2239, %v2267
      %2269 = vmatmul.f32.gmra.mxu0 %v2184
      %v2270 = vpop.f32.mrf.mxu0
      %v2271 = vadd.f32 %v2242, %v2270
      %2272 = vmatmul.f32.gmra.mxu0 %v2187
      %v2273 = vpop.f32.mrf.mxu0
      %v2274 = vadd.f32 %v2245, %v2273
      %2275 = vmatmul.f32.gmra.mxu0 %v2190
      %v2276 = vpop.f32.mrf.mxu0
      %v2277 = vadd.f32 %v2248, %v2276
      %2278 = vdwg.mxu0
      %2279 = vmatpush.msra.mxu0 %v2072
      %2280 = vmatpush.msra.mxu0 %v2068
      %2281 = vmatpush.msra.mxu0 %v2064
      %2282 = vmatpush.msra.mxu0 %v2060
      %2283 = vmatpush.msra.mxu0 %v2056
      %2284 = vmatpush.msra.mxu0 %v2052
      %2285 = vmatpush.msra.mxu0 %v2048
      %2286 = vmatpush.msra.mxu0 %v2044
      %2287 = vmatpush.msra.mxu0 %v2040
      %2288 = vmatpush.msra.mxu0 %v2036
      %2289 = vmatpush.msra.mxu0 %v2032
      %2290 = vmatpush.msra.mxu0 %v2028
      %2291 = vmatpush.msra.mxu0 %v2024
      %2292 = vmatpush.msra.mxu0 %v2020
      %2293 = vmatpush.msra.mxu0 %v2016
      %2294 = vmatpush.msra.mxu0 %v2012
      %2295 = vmatmul.f32.gmra.mxu0 %v1999
      %v2296 = vpop.f32.mrf.mxu0
      %v2297 = vadd.f32 %v2162, %v2296
      %2298 = vmatmul.f32.gmra.mxu0 %v2002
      %v2299 = vpop.f32.mrf.mxu0
      %v2300 = vadd.f32 %v2167, %v2299
      %2301 = vmatmul.f32.gmra.mxu0 %v2005
      %v2302 = vpop.f32.mrf.mxu0
      %v2303 = vadd.f32 %v2172, %v2302
      %2304 = vmatmul.f32.gmra.mxu0 %v2008
      %v2305 = vpop.f32.mrf.mxu0
      %v2306 = vadd.f32 %v2177, %v2305
      %2307 = vdwg.mxu0
      %2308 = vmatpush.msra.mxu0 %v2136
      %2309 = vmatpush.msra.mxu0 %v2132
      %2310 = vmatpush.msra.mxu0 %v2128
      %2311 = vmatpush.msra.mxu0 %v2124
      %2312 = vmatpush.msra.mxu0 %v2120
      %2313 = vmatpush.msra.mxu0 %v2116
      %2314 = vmatpush.msra.mxu0 %v2112
      %2315 = vmatpush.msra.mxu0 %v2108
      %2316 = vmatpush.msra.mxu0 %v2104
      %2317 = vmatpush.msra.mxu0 %v2100
      %2318 = vmatpush.msra.mxu0 %v2096
      %2319 = vmatpush.msra.mxu0 %v2092
      %2320 = vmatpush.msra.mxu0 %v2088
      %2321 = vmatpush.msra.mxu0 %v2084
      %2322 = vmatpush.msra.mxu0 %v2080
      %2323 = vmatpush.msra.mxu0 %v2076
      %2324 = vmatmul.f32.gmra.mxu0 %v2000
      %v2325 = vpop.f32.mrf.mxu0
      %v2326 = vadd.f32 %v2297, %v2325
      %2327 = vmatmul.f32.gmra.mxu0 %v2003
      %v2328 = vpop.f32.mrf.mxu0
      %v2329 = vadd.f32 %v2300, %v2328
      %2330 = vmatmul.f32.gmra.mxu0 %v2006
      %v2331 = vpop.f32.mrf.mxu0
      %v2332 = vadd.f32 %v2303, %v2331
      %2333 = vmatmul.f32.gmra.mxu0 %v2009
      %v2334 = vpop.f32.mrf.mxu0
      %v2335 = vadd.f32 %v2306, %v2334
      %2336 = vdwg.mxu0
      %2337 = vmatpush.msra.mxu0 0.0
      %2338 = vmatpush.msra.mxu0 0.0
      %2339 = vmatpush.msra.mxu0 0.0
      %2340 = vmatpush.msra.mxu0 0.0
      %2341 = vmatpush.msra.mxu0 0.0
      %2342 = vmatpush.msra.mxu0 0.0
      %2343 = vmatpush.msra.mxu0 0.0
      %2344 = vmatpush.msra.mxu0 0.0
      %2345 = vmatpush.msra.mxu0 0.0
      %2346 = vmatpush.msra.mxu0 0.0
      %2347 = vmatpush.msra.mxu0 0.0
      %2348 = vmatpush.msra.mxu0 0.0
      %2349 = vmatpush.msra.mxu0 %v2152
      %2350 = vmatpush.msra.mxu0 %v2148
      %2351 = vmatpush.msra.mxu0 %v2144
      %2352 = vmatpush.msra.mxu0 %v2140
      %2353 = vmatmul.f32.gmra.mxu0 %v2181
      %v2354 = vpop.f32.mrf.mxu0
      %v2355 = vadd.f32 %v2326, %v2354
      %2356 = vmatmul.f32.gmra.mxu0 %v2184
      %v2357 = vpop.f32.mrf.mxu0
      %v2358 = vadd.f32 %v2329, %v2357
      %2359 = vmatmul.f32.gmra.mxu0 %v2187
      %v2360 = vpop.f32.mrf.mxu0
      %v2361 = vadd.f32 %v2332, %v2360
      %2362 = vmatmul.f32.gmra.mxu0 %v2190
      %v2363 = vpop.f32.mrf.mxu0
      %v2364 = vadd.f32 %v2335, %v2363
      %2365 = vdwg.mxu0
      %2366 = vmatpush.msra.mxu0 %v2073
      %2367 = vmatpush.msra.mxu0 %v2069
      %2368 = vmatpush.msra.mxu0 %v2065
      %2369 = vmatpush.msra.mxu0 %v2061
      %2370 = vmatpush.msra.mxu0 %v2057
      %2371 = vmatpush.msra.mxu0 %v2053
      %2372 = vmatpush.msra.mxu0 %v2049
      %2373 = vmatpush.msra.mxu0 %v2045
      %2374 = vmatpush.msra.mxu0 %v2041
      %2375 = vmatpush.msra.mxu0 %v2037
      %2376 = vmatpush.msra.mxu0 %v2033
      %2377 = vmatpush.msra.mxu0 %v2029
      %2378 = vmatpush.msra.mxu0 %v2025
      %2379 = vmatpush.msra.mxu0 %v2021
      %2380 = vmatpush.msra.mxu0 %v2017
      %2381 = vmatpush.msra.mxu0 %v2013
      %2382 = vmatmul.f32.gmra.mxu0 %v1999
      %v2383 = vpop.f32.mrf.mxu0
      %v2384 = vadd.f32 %v2162, %v2383
      %2385 = vmatmul.f32.gmra.mxu0 %v2002
      %v2386 = vpop.f32.mrf.mxu0
      %v2387 = vadd.f32 %v2167, %v2386
      %2388 = vmatmul.f32.gmra.mxu0 %v2005
      %v2389 = vpop.f32.mrf.mxu0
      %v2390 = vadd.f32 %v2172, %v2389
      %2391 = vmatmul.f32.gmra.mxu0 %v2008
      %v2392 = vpop.f32.mrf.mxu0
      %v2393 = vadd.f32 %v2177, %v2392
      %2394 = vdwg.mxu0
      %2395 = vmatpush.msra.mxu0 %v2137
      %2396 = vmatpush.msra.mxu0 %v2133
      %2397 = vmatpush.msra.mxu0 %v2129
      %2398 = vmatpush.msra.mxu0 %v2125
      %2399 = vmatpush.msra.mxu0 %v2121
      %2400 = vmatpush.msra.mxu0 %v2117
      %2401 = vmatpush.msra.mxu0 %v2113
      %2402 = vmatpush.msra.mxu0 %v2109
      %2403 = vmatpush.msra.mxu0 %v2105
      %2404 = vmatpush.msra.mxu0 %v2101
      %2405 = vmatpush.msra.mxu0 %v2097
      %2406 = vmatpush.msra.mxu0 %v2093
      %2407 = vmatpush.msra.mxu0 %v2089
      %2408 = vmatpush.msra.mxu0 %v2085
      %2409 = vmatpush.msra.mxu0 %v2081
      %2410 = vmatpush.msra.mxu0 %v2077
      %2411 = vmatmul.f32.gmra.mxu0 %v2000
      %v2412 = vpop.f32.mrf.mxu0
      %v2413 = vadd.f32 %v2384, %v2412
      %2414 = vmatmul.f32.gmra.mxu0 %v2003
      %v2415 = vpop.f32.mrf.mxu0
      %v2416 = vadd.f32 %v2387, %v2415
      %2417 = vmatmul.f32.gmra.mxu0 %v2006
      %v2418 = vpop.f32.mrf.mxu0
      %v2419 = vadd.f32 %v2390, %v2418
      %2420 = vmatmul.f32.gmra.mxu0 %v2009
      %v2421 = vpop.f32.mrf.mxu0
      %v2422 = vadd.f32 %v2393, %v2421
      %2423 = vdwg.mxu0
      %2424 = vmatpush.msra.mxu0 0.0
      %2425 = vmatpush.msra.mxu0 0.0
      %2426 = vmatpush.msra.mxu0 0.0
      %2427 = vmatpush.msra.mxu0 0.0
      %2428 = vmatpush.msra.mxu0 0.0
      %2429 = vmatpush.msra.mxu0 0.0
      %2430 = vmatpush.msra.mxu0 0.0
      %2431 = vmatpush.msra.mxu0 0.0
      %2432 = vmatpush.msra.mxu0 0.0
      %2433 = vmatpush.msra.mxu0 0.0
      %2434 = vmatpush.msra.mxu0 0.0
      %2435 = vmatpush.msra.mxu0 0.0
      %2436 = vmatpush.msra.mxu0 %v2153
      %2437 = vmatpush.msra.mxu0 %v2149
      %2438 = vmatpush.msra.mxu0 %v2145
      %2439 = vmatpush.msra.mxu0 %v2141
      %2440 = vmatmul.f32.gmra.mxu0 %v2181
      %v2441 = vpop.f32.mrf.mxu0
      %v2442 = vadd.f32 %v2413, %v2441
      %2443 = vmatmul.f32.gmra.mxu0 %v2184
      %v2444 = vpop.f32.mrf.mxu0
      %v2445 = vadd.f32 %v2416, %v2444
      %2446 = vmatmul.f32.gmra.mxu0 %v2187
      %v2447 = vpop.f32.mrf.mxu0
      %v2448 = vadd.f32 %v2419, %v2447
      %2449 = vmatmul.f32.gmra.mxu0 %v2190
      %v2450 = vpop.f32.mrf.mxu0
      %v2451 = vadd.f32 %v2422, %v2450
      %2452 = vdwg.mxu0
      %2453 = vmatpush.msra.mxu0 %v2074
      %2454 = vmatpush.msra.mxu0 %v2070
      %2455 = vmatpush.msra.mxu0 %v2066
      %2456 = vmatpush.msra.mxu0 %v2062
      %2457 = vmatpush.msra.mxu0 %v2058
      %2458 = vmatpush.msra.mxu0 %v2054
      %2459 = vmatpush.msra.mxu0 %v2050
      %2460 = vmatpush.msra.mxu0 %v2046
      %2461 = vmatpush.msra.mxu0 %v2042
      %2462 = vmatpush.msra.mxu0 %v2038
      %2463 = vmatpush.msra.mxu0 %v2034
      %2464 = vmatpush.msra.mxu0 %v2030
      %2465 = vmatpush.msra.mxu0 %v2026
      %2466 = vmatpush.msra.mxu0 %v2022
      %2467 = vmatpush.msra.mxu0 %v2018
      %2468 = vmatpush.msra.mxu0 %v2014
      %2469 = vmatmul.f32.gmra.mxu0 %v1999
      %v2470 = vpop.f32.mrf.mxu0
      %v2471 = vadd.f32 %v2162, %v2470
      %2472 = vmatmul.f32.gmra.mxu0 %v2002
      %v2473 = vpop.f32.mrf.mxu0
      %v2474 = vadd.f32 %v2167, %v2473
      %2475 = vmatmul.f32.gmra.mxu0 %v2005
      %v2476 = vpop.f32.mrf.mxu0
      %v2477 = vadd.f32 %v2172, %v2476
      %2478 = vmatmul.f32.gmra.mxu0 %v2008
      %v2479 = vpop.f32.mrf.mxu0
      %v2480 = vadd.f32 %v2177, %v2479
      %2481 = vdwg.mxu0
      %2482 = vmatpush.msra.mxu0 %v2138
      %2483 = vmatpush.msra.mxu0 %v2134
      %2484 = vmatpush.msra.mxu0 %v2130
      %2485 = vmatpush.msra.mxu0 %v2126
      %2486 = vmatpush.msra.mxu0 %v2122
      %2487 = vmatpush.msra.mxu0 %v2118
      %2488 = vmatpush.msra.mxu0 %v2114
      %2489 = vmatpush.msra.mxu0 %v2110
      %2490 = vmatpush.msra.mxu0 %v2106
      %2491 = vmatpush.msra.mxu0 %v2102
      %2492 = vmatpush.msra.mxu0 %v2098
      %2493 = vmatpush.msra.mxu0 %v2094
      %2494 = vmatpush.msra.mxu0 %v2090
      %2495 = vmatpush.msra.mxu0 %v2086
      %2496 = vmatpush.msra.mxu0 %v2082
      %2497 = vmatpush.msra.mxu0 %v2078
      %2498 = vmatmul.f32.gmra.mxu0 %v2000
      %v2499 = vpop.f32.mrf.mxu0
      %v2500 = vadd.f32 %v2471, %v2499
      %2501 = vmatmul.f32.gmra.mxu0 %v2003
      %v2502 = vpop.f32.mrf.mxu0
      %v2503 = vadd.f32 %v2474, %v2502
      %2504 = vmatmul.f32.gmra.mxu0 %v2006
      %v2505 = vpop.f32.mrf.mxu0
      %v2506 = vadd.f32 %v2477, %v2505
      %2507 = vmatmul.f32.gmra.mxu0 %v2009
      %v2508 = vpop.f32.mrf.mxu0
      %v2509 = vadd.f32 %v2480, %v2508
      %2510 = vdwg.mxu0
      %2511 = vmatpush.msra.mxu0 0.0
      %2512 = vmatpush.msra.mxu0 0.0
      %2513 = vmatpush.msra.mxu0 0.0
      %2514 = vmatpush.msra.mxu0 0.0
      %2515 = vmatpush.msra.mxu0 0.0
      %2516 = vmatpush.msra.mxu0 0.0
      %2517 = vmatpush.msra.mxu0 0.0
      %2518 = vmatpush.msra.mxu0 0.0
      %2519 = vmatpush.msra.mxu0 0.0
      %2520 = vmatpush.msra.mxu0 0.0
      %2521 = vmatpush.msra.mxu0 0.0
      %2522 = vmatpush.msra.mxu0 0.0
      %2523 = vmatpush.msra.mxu0 %v2154
      %2524 = vmatpush.msra.mxu0 %v2150
      %2525 = vmatpush.msra.mxu0 %v2146
      %2526 = vmatpush.msra.mxu0 %v2142
      %2527 = vmatmul.f32.gmra.mxu0 %v2181
      %v2528 = vpop.f32.mrf.mxu0
      %v2529 = vadd.f32 %v2500, %v2528
      %2530 = vmatmul.f32.gmra.mxu0 %v2184
      %v2531 = vpop.f32.mrf.mxu0
      %v2532 = vadd.f32 %v2503, %v2531
      %2533 = vmatmul.f32.gmra.mxu0 %v2187
      %v2534 = vpop.f32.mrf.mxu0
      %v2535 = vadd.f32 %v2506, %v2534
      %2536 = vmatmul.f32.gmra.mxu0 %v2190
      %v2537 = vpop.f32.mrf.mxu0
      %v2538 = vadd.f32 %v2509, %v2537
      %2539 = vdwg.mxu0
      %v2540 = vmax.f32 %v2268, 0.0
      %v2541 = vmax.f32 %v2355, 0.0
      %v2542 = vmax.f32 %v2442, 0.0
      %v2543 = vmax.f32 %v2529, 0.0
      %v2544 = vmax.f32 %v2271, 0.0
      %v2545 = vmax.f32 %v2358, 0.0
      %v2546 = vmax.f32 %v2445, 0.0
      %v2547 = vmax.f32 %v2532, 0.0
      %v2548 = vmax.f32 %v2274, 0.0
      %v2549 = vmax.f32 %v2361, 0.0
      %v2550 = vmax.f32 %v2448, 0.0
      %v2551 = vmax.f32 %v2535, 0.0
      %v2552 = vmax.f32 %v2277, 0.0
      %v2553 = vmax.f32 %v2364, 0.0
      %v2554 = vmax.f32 %v2451, 0.0
      %v2555 = vmax.f32 %v2538, 0.0
      %s2556 = scalar_lea.vmem %s658, 128
      %2557 = vst [vmem:[%s2556] sm:$0xff] %v2540
      %2558 = vst [vmem:[%s2556 + $0x8] sm:$0xff] %v2541
      %2559 = vst [vmem:[%s2556 + $0x10] sm:$0xff] %v2542
      %2560 = vst [vmem:[%s2556 + $0x18] sm:$0xff] %v2543
      %2561 = vst [vmem:[%s2556 + $0x20] sm:$0xff] %v2544
      %2562 = vst [vmem:[%s2556 + $0x28] sm:$0xff] %v2545
      %2563 = vst [vmem:[%s2556 + $0x30] sm:$0xff] %v2546
      %2564 = vst [vmem:[%s2556 + $0x38] sm:$0xff] %v2547
      %2565 = vst [vmem:[%s2556 + $0x40] sm:$0xff] %v2548
      %2566 = vst [vmem:[%s2556 + $0x48] sm:$0xff] %v2549
      %2567 = vst [vmem:[%s2556 + $0x50] sm:$0xff] %v2550
      %2568 = vst [vmem:[%s2556 + $0x58] sm:$0xff] %v2551
      %2569 = vst [vmem:[%s2556 + $0x60] sm:$0xff] %v2552
      %2570 = vst [vmem:[%s2556 + $0x68] sm:$0xff] %v2553
      %2571 = vst [vmem:[%s2556 + $0x70] sm:$0xff] %v2554
      %2572 = vst [vmem:[%s2556 + $0x78] sm:$0xff] %v2555
      %2573 = vrot.lane.b32.xlu0 %v2540, 17
      %v2574 = vpop.permute.xlu0 %2573
      %2575 = vrot.lane.b32.xlu0 %v2544, 17
      %v2576 = vpop.permute.xlu0 %2575
      %2577 = vrot.lane.b32.xlu0 %v2548, 17
      %v2578 = vpop.permute.xlu0 %2577
      %2579 = vrot.lane.b32.xlu0 %v2552, 17
      %v2580 = vpop.permute.xlu0 %2579
      %2581 = vrot.lane.b32.xlu0 %v2541, 17
      %v2582 = vpop.permute.xlu0 %2581
      %2583 = vrot.lane.b32.xlu0 %v2545, 17
      %v2584 = vpop.permute.xlu0 %2583
      %2585 = vrot.lane.b32.xlu0 %v2549, 17
      %v2586 = vpop.permute.xlu0 %2585
      %2587 = vrot.lane.b32.xlu0 %v2553, 17
      %v2588 = vpop.permute.xlu0 %2587
      %2589 = vrot.lane.b32.xlu0 %v2542, 17
      %v2590 = vpop.permute.xlu0 %2589
      %2591 = vrot.lane.b32.xlu0 %v2546, 17
      %v2592 = vpop.permute.xlu0 %2591
      %2593 = vrot.lane.b32.xlu0 %v2550, 17
      %v2594 = vpop.permute.xlu0 %2593
      %2595 = vrot.lane.b32.xlu0 %v2554, 17
      %v2596 = vpop.permute.xlu0 %2595
      %2597 = vrot.lane.b32.xlu0 %v2543, 17
      %v2598 = vpop.permute.xlu0 %2597
      %2599 = vrot.lane.b32.xlu0 %v2547, 17
      %v2600 = vpop.permute.xlu0 %2599
      %2601 = vrot.lane.b32.xlu0 %v2551, 17
      %v2602 = vpop.permute.xlu0 %2601
      %2603 = vrot.lane.b32.xlu0 %v2555, 17
      %v2604 = vpop.permute.xlu0 %2603
      %v2605 = vsel %vm702, %v2590, %v2598
      %v2606 = vsel %vm702, %v2592, %v2600
      %v2607 = vsel %vm702, %v2594, %v2602
      %v2608 = vsel %vm702, %v2596, %v2604
      %v2609 = vsel %vm702, %v2582, %v2590
      %v2610 = vsel %vm702, %v2584, %v2592
      %v2611 = vsel %vm702, %v2586, %v2594
      %v2612 = vsel %vm702, %v2588, %v2596
      %v2613 = vsel %vm702, %v2574, %v2582
      %v2614 = vsel %vm702, %v2576, %v2584
      %v2615 = vsel %vm702, %v2578, %v2586
      %v2616 = vsel %vm702, %v2580, %v2588
      %v2617 = vsel %vm702, %v2598, %v2574
      %v2618 = vsel %vm702, %v2600, %v2576
      %v2619 = vsel %vm702, %v2602, %v2578
      %v2620 = vsel %vm702, %v2604, %v2580
      %v2621 = vld [vmem:[%s3] ss:$8 sm:$0xf]
      %v2623 = vperm.slane %v2621, 0
      %v2624 = vperm.slane %v2621, 1
      %v2625 = vperm.slane %v2621, 2
      %v2626 = vperm.slane %v2621, 3
      %v2631 = vmul.f32 %v2617, %v2623
      %v2632 = vmul.f32 %v2613, %v2624
      %v2633 = vmul.f32 %v2609, %v2625
      %v2634 = vmul.f32 %v2605, %v2626
      %v2635 = vmul.f32 %v2618, %v2623
      %v2636 = vmul.f32 %v2614, %v2624
      %v2637 = vmul.f32 %v2610, %v2625
      %v2638 = vmul.f32 %v2606, %v2626
      %v2639 = vmul.f32 %v2619, %v2623
      %v2640 = vmul.f32 %v2615, %v2624
      %v2641 = vmul.f32 %v2611, %v2625
      %v2642 = vmul.f32 %v2607, %v2626
      %v2643 = vmul.f32 %v2620, %v2623
      %v2644 = vmul.f32 %v2616, %v2624
      %v2645 = vmul.f32 %v2612, %v2625
      %v2646 = vmul.f32 %v2608, %v2626
      %2647 = vst [vmem:[#allocation2] sm:$0xff] %v2631
      %2648 = vst [vmem:[#allocation2 + $0x8] sm:$0xff] %v2632
      %2649 = vst [vmem:[#allocation2 + $0x10] sm:$0xff] %v2633
      %2650 = vst [vmem:[#allocation2 + $0x18] sm:$0xff] %v2634
      %2651 = vst [vmem:[#allocation2 + $0x20] sm:$0xff] %v2635
      %2652 = vst [vmem:[#allocation2 + $0x28] sm:$0xff] %v2636
      %2653 = vst [vmem:[#allocation2 + $0x30] sm:$0xff] %v2637
      %2654 = vst [vmem:[#allocation2 + $0x38] sm:$0xff] %v2638
      %2655 = vst [vmem:[#allocation2 + $0x40] sm:$0xff] %v2639
      %2656 = vst [vmem:[#allocation2 + $0x48] sm:$0xff] %v2640
      %2657 = vst [vmem:[#allocation2 + $0x50] sm:$0xff] %v2641
      %2658 = vst [vmem:[#allocation2 + $0x58] sm:$0xff] %v2642
      %2659 = vst [vmem:[#allocation2 + $0x60] sm:$0xff] %v2643
      %2660 = vst [vmem:[#allocation2 + $0x68] sm:$0xff] %v2644
      %2661 = vst [vmem:[#allocation2 + $0x70] sm:$0xff] %v2645
      %2662 = vst [vmem:[#allocation2 + $0x78] sm:$0xff] %v2646
      %2663 = vrot.lane.b32.xlu0 %v2540, 16
      %v2664 = vpop.permute.xlu0 %2663
      %2665 = vrot.lane.b32.xlu0 %v2544, 16
      %v2666 = vpop.permute.xlu0 %2665
      %2667 = vrot.lane.b32.xlu0 %v2548, 16
      %v2668 = vpop.permute.xlu0 %2667
      %2669 = vrot.lane.b32.xlu0 %v2552, 16
      %v2670 = vpop.permute.xlu0 %2669
      %2671 = vrot.lane.b32.xlu0 %v2541, 16
      %v2672 = vpop.permute.xlu0 %2671
      %2673 = vrot.lane.b32.xlu0 %v2545, 16
      %v2674 = vpop.permute.xlu0 %2673
      %2675 = vrot.lane.b32.xlu0 %v2549, 16
      %v2676 = vpop.permute.xlu0 %2675
      %2677 = vrot.lane.b32.xlu0 %v2553, 16
      %v2678 = vpop.permute.xlu0 %2677
      %2679 = vrot.lane.b32.xlu0 %v2542, 16
      %v2680 = vpop.permute.xlu0 %2679
      %2681 = vrot.lane.b32.xlu0 %v2546, 16
      %v2682 = vpop.permute.xlu0 %2681
      %2683 = vrot.lane.b32.xlu0 %v2550, 16
      %v2684 = vpop.permute.xlu0 %2683
      %2685 = vrot.lane.b32.xlu0 %v2554, 16
      %v2686 = vpop.permute.xlu0 %2685
      %2687 = vrot.lane.b32.xlu0 %v2543, 16
      %v2688 = vpop.permute.xlu0 %2687
      %2689 = vrot.lane.b32.xlu0 %v2547, 16
      %v2690 = vpop.permute.xlu0 %2689
      %2691 = vrot.lane.b32.xlu0 %v2551, 16
      %v2692 = vpop.permute.xlu0 %2691
      %2693 = vrot.lane.b32.xlu0 %v2555, 16
      %v2694 = vpop.permute.xlu0 %2693
      %v2695 = vsel %vm729, %v2680, %v2688
      %v2696 = vsel %vm729, %v2682, %v2690
      %v2697 = vsel %vm729, %v2684, %v2692
      %v2698 = vsel %vm729, %v2686, %v2694
      %v2699 = vsel %vm729, %v2672, %v2680
      %v2700 = vsel %vm729, %v2674, %v2682
      %v2701 = vsel %vm729, %v2676, %v2684
      %v2702 = vsel %vm729, %v2678, %v2686
      %v2703 = vsel %vm729, %v2664, %v2672
      %v2704 = vsel %vm729, %v2666, %v2674
      %v2705 = vsel %vm729, %v2668, %v2676
      %v2706 = vsel %vm729, %v2670, %v2678
      %v2707 = vsel %vm729, %v2688, %v2664
      %v2708 = vsel %vm729, %v2690, %v2666
      %v2709 = vsel %vm729, %v2692, %v2668
      %v2710 = vsel %vm729, %v2694, %v2670
      %v2711 = vld [vmem:[%s734] ss:$8 sm:$0xf]
      %v2713 = vperm.slane %v2711, 0
      %v2714 = vperm.slane %v2711, 1
      %v2715 = vperm.slane %v2711, 2
      %v2716 = vperm.slane %v2711, 3
      %v2721 = vmul.f32 %v2707, %v2713
      %v2722 = vmul.f32 %v2703, %v2714
      %v2723 = vmul.f32 %v2699, %v2715
      %v2724 = vmul.f32 %v2695, %v2716
      %v2725 = vmul.f32 %v2708, %v2713
      %v2726 = vmul.f32 %v2704, %v2714
      %v2727 = vmul.f32 %v2700, %v2715
      %v2728 = vmul.f32 %v2696, %v2716
      %v2729 = vmul.f32 %v2709, %v2713
      %v2730 = vmul.f32 %v2705, %v2714
      %v2731 = vmul.f32 %v2701, %v2715
      %v2732 = vmul.f32 %v2697, %v2716
      %v2733 = vmul.f32 %v2710, %v2713
      %v2734 = vmul.f32 %v2706, %v2714
      %v2735 = vmul.f32 %v2702, %v2715
      %v2736 = vmul.f32 %v2698, %v2716
      %2737 = vst [vmem:[#allocation2 + $0x80] sm:$0xff] %v2721
      %2738 = vst [vmem:[#allocation2 + $0x88] sm:$0xff] %v2722
      %2739 = vst [vmem:[#allocation2 + $0x90] sm:$0xff] %v2723
      %2740 = vst [vmem:[#allocation2 + $0x98] sm:$0xff] %v2724
      %2741 = vst [vmem:[#allocation2 + $0xa0] sm:$0xff] %v2725
      %2742 = vst [vmem:[#allocation2 + $0xa8] sm:$0xff] %v2726
      %2743 = vst [vmem:[#allocation2 + $0xb0] sm:$0xff] %v2727
      %2744 = vst [vmem:[#allocation2 + $0xb8] sm:$0xff] %v2728
      %2745 = vst [vmem:[#allocation2 + $0xc0] sm:$0xff] %v2729
      %2746 = vst [vmem:[#allocation2 + $0xc8] sm:$0xff] %v2730
      %2747 = vst [vmem:[#allocation2 + $0xd0] sm:$0xff] %v2731
      %2748 = vst [vmem:[#allocation2 + $0xd8] sm:$0xff] %v2732
      %2749 = vst [vmem:[#allocation2 + $0xe0] sm:$0xff] %v2733
      %2750 = vst [vmem:[#allocation2 + $0xe8] sm:$0xff] %v2734
      %2751 = vst [vmem:[#allocation2 + $0xf0] sm:$0xff] %v2735
      %2752 = vst [vmem:[#allocation2 + $0xf8] sm:$0xff] %v2736
      %2753 = vrot.lane.b32.xlu0 %v2540, 15
      %v2754 = vpop.permute.xlu0 %2753
      %2755 = vrot.lane.b32.xlu0 %v2544, 15
      %v2756 = vpop.permute.xlu0 %2755
      %2757 = vrot.lane.b32.xlu0 %v2548, 15
      %v2758 = vpop.permute.xlu0 %2757
      %2759 = vrot.lane.b32.xlu0 %v2552, 15
      %v2760 = vpop.permute.xlu0 %2759
      %2761 = vrot.lane.b32.xlu0 %v2541, 15
      %v2762 = vpop.permute.xlu0 %2761
      %2763 = vrot.lane.b32.xlu0 %v2545, 15
      %v2764 = vpop.permute.xlu0 %2763
      %2765 = vrot.lane.b32.xlu0 %v2549, 15
      %v2766 = vpop.permute.xlu0 %2765
      %2767 = vrot.lane.b32.xlu0 %v2553, 15
      %v2768 = vpop.permute.xlu0 %2767
      %2769 = vrot.lane.b32.xlu0 %v2542, 15
      %v2770 = vpop.permute.xlu0 %2769
      %2771 = vrot.lane.b32.xlu0 %v2546, 15
      %v2772 = vpop.permute.xlu0 %2771
      %2773 = vrot.lane.b32.xlu0 %v2550, 15
      %v2774 = vpop.permute.xlu0 %2773
      %2775 = vrot.lane.b32.xlu0 %v2554, 15
      %v2776 = vpop.permute.xlu0 %2775
      %2777 = vrot.lane.b32.xlu0 %v2543, 15
      %v2778 = vpop.permute.xlu0 %2777
      %2779 = vrot.lane.b32.xlu0 %v2547, 15
      %v2780 = vpop.permute.xlu0 %2779
      %2781 = vrot.lane.b32.xlu0 %v2551, 15
      %v2782 = vpop.permute.xlu0 %2781
      %2783 = vrot.lane.b32.xlu0 %v2555, 15
      %v2784 = vpop.permute.xlu0 %2783
      %v2785 = vsel %vm757, %v2770, %v2778
      %v2786 = vsel %vm757, %v2772, %v2780
      %v2787 = vsel %vm757, %v2774, %v2782
      %v2788 = vsel %vm757, %v2776, %v2784
      %v2789 = vsel %vm757, %v2762, %v2770
      %v2790 = vsel %vm757, %v2764, %v2772
      %v2791 = vsel %vm757, %v2766, %v2774
      %v2792 = vsel %vm757, %v2768, %v2776
      %v2793 = vsel %vm757, %v2754, %v2762
      %v2794 = vsel %vm757, %v2756, %v2764
      %v2795 = vsel %vm757, %v2758, %v2766
      %v2796 = vsel %vm757, %v2760, %v2768
      %v2797 = vsel %vm757, %v2778, %v2754
      %v2798 = vsel %vm757, %v2780, %v2756
      %v2799 = vsel %vm757, %v2782, %v2758
      %v2800 = vsel %vm757, %v2784, %v2760
      %v2801 = vld [vmem:[%s762] ss:$8 sm:$0xf]
      %v2803 = vperm.slane %v2801, 0
      %v2804 = vperm.slane %v2801, 1
      %v2805 = vperm.slane %v2801, 2
      %v2806 = vperm.slane %v2801, 3
      %v2811 = vmul.f32 %v2797, %v2803
      %v2812 = vmul.f32 %v2793, %v2804
      %v2813 = vmul.f32 %v2789, %v2805
      %v2814 = vmul.f32 %v2785, %v2806
      %v2815 = vmul.f32 %v2798, %v2803
      %v2816 = vmul.f32 %v2794, %v2804
      %v2817 = vmul.f32 %v2790, %v2805
      %v2818 = vmul.f32 %v2786, %v2806
      %v2819 = vmul.f32 %v2799, %v2803
      %v2820 = vmul.f32 %v2795, %v2804
      %v2821 = vmul.f32 %v2791, %v2805
      %v2822 = vmul.f32 %v2787, %v2806
      %v2823 = vmul.f32 %v2800, %v2803
      %v2824 = vmul.f32 %v2796, %v2804
      %v2825 = vmul.f32 %v2792, %v2805
      %v2826 = vmul.f32 %v2788, %v2806
      %2827 = vst [vmem:[#allocation2 + $0x100] sm:$0xff] %v2811
      %2828 = vst [vmem:[#allocation2 + $0x108] sm:$0xff] %v2812
      %2829 = vst [vmem:[#allocation2 + $0x110] sm:$0xff] %v2813
      %2830 = vst [vmem:[#allocation2 + $0x118] sm:$0xff] %v2814
      %2831 = vst [vmem:[#allocation2 + $0x120] sm:$0xff] %v2815
      %2832 = vst [vmem:[#allocation2 + $0x128] sm:$0xff] %v2816
      %2833 = vst [vmem:[#allocation2 + $0x130] sm:$0xff] %v2817
      %2834 = vst [vmem:[#allocation2 + $0x138] sm:$0xff] %v2818
      %2835 = vst [vmem:[#allocation2 + $0x140] sm:$0xff] %v2819
      %2836 = vst [vmem:[#allocation2 + $0x148] sm:$0xff] %v2820
      %2837 = vst [vmem:[#allocation2 + $0x150] sm:$0xff] %v2821
      %2838 = vst [vmem:[#allocation2 + $0x158] sm:$0xff] %v2822
      %2839 = vst [vmem:[#allocation2 + $0x160] sm:$0xff] %v2823
      %2840 = vst [vmem:[#allocation2 + $0x168] sm:$0xff] %v2824
      %2841 = vst [vmem:[#allocation2 + $0x170] sm:$0xff] %v2825
      %2842 = vst [vmem:[#allocation2 + $0x178] sm:$0xff] %v2826
      %2843 = vrot.lane.b32.xlu0 %v2540, 1
      %v2844 = vpop.permute.xlu0 %2843
      %2845 = vrot.lane.b32.xlu0 %v2544, 1
      %v2846 = vpop.permute.xlu0 %2845
      %2847 = vrot.lane.b32.xlu0 %v2548, 1
      %v2848 = vpop.permute.xlu0 %2847
      %2849 = vrot.lane.b32.xlu0 %v2552, 1
      %v2850 = vpop.permute.xlu0 %2849
      %2851 = vrot.lane.b32.xlu0 %v2541, 1
      %v2852 = vpop.permute.xlu0 %2851
      %2853 = vrot.lane.b32.xlu0 %v2545, 1
      %v2854 = vpop.permute.xlu0 %2853
      %2855 = vrot.lane.b32.xlu0 %v2549, 1
      %v2856 = vpop.permute.xlu0 %2855
      %2857 = vrot.lane.b32.xlu0 %v2553, 1
      %v2858 = vpop.permute.xlu0 %2857
      %2859 = vrot.lane.b32.xlu0 %v2542, 1
      %v2860 = vpop.permute.xlu0 %2859
      %2861 = vrot.lane.b32.xlu0 %v2546, 1
      %v2862 = vpop.permute.xlu0 %2861
      %2863 = vrot.lane.b32.xlu0 %v2550, 1
      %v2864 = vpop.permute.xlu0 %2863
      %2865 = vrot.lane.b32.xlu0 %v2554, 1
      %v2866 = vpop.permute.xlu0 %2865
      %2867 = vrot.lane.b32.xlu0 %v2543, 1
      %v2868 = vpop.permute.xlu0 %2867
      %2869 = vrot.lane.b32.xlu0 %v2547, 1
      %v2870 = vpop.permute.xlu0 %2869
      %2871 = vrot.lane.b32.xlu0 %v2551, 1
      %v2872 = vpop.permute.xlu0 %2871
      %2873 = vrot.lane.b32.xlu0 %v2555, 1
      %v2874 = vpop.permute.xlu0 %2873
      %v2875 = vsel %vm785, %v2860, %v2868
      %v2876 = vsel %vm785, %v2862, %v2870
      %v2877 = vsel %vm785, %v2864, %v2872
      %v2878 = vsel %vm785, %v2866, %v2874
      %v2879 = vsel %vm785, %v2852, %v2860
      %v2880 = vsel %vm785, %v2854, %v2862
      %v2881 = vsel %vm785, %v2856, %v2864
      %v2882 = vsel %vm785, %v2858, %v2866
      %v2883 = vsel %vm785, %v2844, %v2852
      %v2884 = vsel %vm785, %v2846, %v2854
      %v2885 = vsel %vm785, %v2848, %v2856
      %v2886 = vsel %vm785, %v2850, %v2858
      %v2887 = vsel %vm785, %v2868, %v2844
      %v2888 = vsel %vm785, %v2870, %v2846
      %v2889 = vsel %vm785, %v2872, %v2848
      %v2890 = vsel %vm785, %v2874, %v2850
      %v2891 = vld [vmem:[%s790] ss:$8 sm:$0xf]
      %v2893 = vperm.slane %v2891, 0
      %v2894 = vperm.slane %v2891, 1
      %v2895 = vperm.slane %v2891, 2
      %v2896 = vperm.slane %v2891, 3
      %v2901 = vmul.f32 %v2887, %v2893
      %v2902 = vmul.f32 %v2883, %v2894
      %v2903 = vmul.f32 %v2879, %v2895
      %v2904 = vmul.f32 %v2875, %v2896
      %v2905 = vmul.f32 %v2888, %v2893
      %v2906 = vmul.f32 %v2884, %v2894
      %v2907 = vmul.f32 %v2880, %v2895
      %v2908 = vmul.f32 %v2876, %v2896
      %v2909 = vmul.f32 %v2889, %v2893
      %v2910 = vmul.f32 %v2885, %v2894
      %v2911 = vmul.f32 %v2881, %v2895
      %v2912 = vmul.f32 %v2877, %v2896
      %v2913 = vmul.f32 %v2890, %v2893
      %v2914 = vmul.f32 %v2886, %v2894
      %v2915 = vmul.f32 %v2882, %v2895
      %v2916 = vmul.f32 %v2878, %v2896
      %2917 = vst [vmem:[#allocation2 + $0x180] sm:$0xff] %v2901
      %2918 = vst [vmem:[#allocation2 + $0x188] sm:$0xff] %v2902
      %2919 = vst [vmem:[#allocation2 + $0x190] sm:$0xff] %v2903
      %2920 = vst [vmem:[#allocation2 + $0x198] sm:$0xff] %v2904
      %2921 = vst [vmem:[#allocation2 + $0x1a0] sm:$0xff] %v2905
      %2922 = vst [vmem:[#allocation2 + $0x1a8] sm:$0xff] %v2906
      %2923 = vst [vmem:[#allocation2 + $0x1b0] sm:$0xff] %v2907
      %2924 = vst [vmem:[#allocation2 + $0x1b8] sm:$0xff] %v2908
      %2925 = vst [vmem:[#allocation2 + $0x1c0] sm:$0xff] %v2909
      %2926 = vst [vmem:[#allocation2 + $0x1c8] sm:$0xff] %v2910
      %2927 = vst [vmem:[#allocation2 + $0x1d0] sm:$0xff] %v2911
      %2928 = vst [vmem:[#allocation2 + $0x1d8] sm:$0xff] %v2912
      %2929 = vst [vmem:[#allocation2 + $0x1e0] sm:$0xff] %v2913
      %2930 = vst [vmem:[#allocation2 + $0x1e8] sm:$0xff] %v2914
      %2931 = vst [vmem:[#allocation2 + $0x1f0] sm:$0xff] %v2915
      %2932 = vst [vmem:[#allocation2 + $0x1f8] sm:$0xff] %v2916
      %v2933 = vld [vmem:[%s805] ss:$8 sm:$0xf]
      %v2935 = vperm.slane %v2933, 0
      %v2936 = vperm.slane %v2933, 1
      %v2937 = vperm.slane %v2933, 2
      %v2938 = vperm.slane %v2933, 3
      %v2943 = vmul.f32 %v2540, %v2935
      %v2944 = vmul.f32 %v2541, %v2936
      %v2945 = vmul.f32 %v2542, %v2937
      %v2946 = vmul.f32 %v2543, %v2938
      %v2947 = vmul.f32 %v2544, %v2935
      %v2948 = vmul.f32 %v2545, %v2936
      %v2949 = vmul.f32 %v2546, %v2937
      %v2950 = vmul.f32 %v2547, %v2938
      %v2951 = vmul.f32 %v2548, %v2935
      %v2952 = vmul.f32 %v2549, %v2936
      %v2953 = vmul.f32 %v2550, %v2937
      %v2954 = vmul.f32 %v2551, %v2938
      %v2955 = vmul.f32 %v2552, %v2935
      %v2956 = vmul.f32 %v2553, %v2936
      %v2957 = vmul.f32 %v2554, %v2937
      %v2958 = vmul.f32 %v2555, %v2938
      %2959 = vst [vmem:[#allocation2 + $0x200] sm:$0xff] %v2943
      %2960 = vst [vmem:[#allocation2 + $0x208] sm:$0xff] %v2944
      %2961 = vst [vmem:[#allocation2 + $0x210] sm:$0xff] %v2945
      %2962 = vst [vmem:[#allocation2 + $0x218] sm:$0xff] %v2946
      %2963 = vst [vmem:[#allocation2 + $0x220] sm:$0xff] %v2947
      %2964 = vst [vmem:[#allocation2 + $0x228] sm:$0xff] %v2948
      %2965 = vst [vmem:[#allocation2 + $0x230] sm:$0xff] %v2949
      %2966 = vst [vmem:[#allocation2 + $0x238] sm:$0xff] %v2950
      %2967 = vst [vmem:[#allocation2 + $0x240] sm:$0xff] %v2951
      %2968 = vst [vmem:[#allocation2 + $0x248] sm:$0xff] %v2952
      %2969 = vst [vmem:[#allocation2 + $0x250] sm:$0xff] %v2953
      %2970 = vst [vmem:[#allocation2 + $0x258] sm:$0xff] %v2954
      %2971 = vst [vmem:[#allocation2 + $0x260] sm:$0xff] %v2955
      %2972 = vst [vmem:[#allocation2 + $0x268] sm:$0xff] %v2956
      %2973 = vst [vmem:[#allocation2 + $0x270] sm:$0xff] %v2957
      %2974 = vst [vmem:[#allocation2 + $0x278] sm:$0xff] %v2958
      %2975 = vrot.lane.b32.xlu0 %v2540, 127
      %v2976 = vpop.permute.xlu0 %2975
      %2977 = vrot.lane.b32.xlu0 %v2544, 127
      %v2978 = vpop.permute.xlu0 %2977
      %2979 = vrot.lane.b32.xlu0 %v2548, 127
      %v2980 = vpop.permute.xlu0 %2979
      %2981 = vrot.lane.b32.xlu0 %v2552, 127
      %v2982 = vpop.permute.xlu0 %2981
      %2983 = vrot.lane.b32.xlu0 %v2541, 127
      %v2984 = vpop.permute.xlu0 %2983
      %2985 = vrot.lane.b32.xlu0 %v2545, 127
      %v2986 = vpop.permute.xlu0 %2985
      %2987 = vrot.lane.b32.xlu0 %v2549, 127
      %v2988 = vpop.permute.xlu0 %2987
      %2989 = vrot.lane.b32.xlu0 %v2553, 127
      %v2990 = vpop.permute.xlu0 %2989
      %2991 = vrot.lane.b32.xlu0 %v2542, 127
      %v2992 = vpop.permute.xlu0 %2991
      %2993 = vrot.lane.b32.xlu0 %v2546, 127
      %v2994 = vpop.permute.xlu0 %2993
      %2995 = vrot.lane.b32.xlu0 %v2550, 127
      %v2996 = vpop.permute.xlu0 %2995
      %2997 = vrot.lane.b32.xlu0 %v2554, 127
      %v2998 = vpop.permute.xlu0 %2997
      %2999 = vrot.lane.b32.xlu0 %v2543, 127
      %v3000 = vpop.permute.xlu0 %2999
      %3001 = vrot.lane.b32.xlu0 %v2547, 127
      %v3002 = vpop.permute.xlu0 %3001
      %3003 = vrot.lane.b32.xlu0 %v2551, 127
      %v3004 = vpop.permute.xlu0 %3003
      %3005 = vrot.lane.b32.xlu0 %v2555, 127
      %v3006 = vpop.permute.xlu0 %3005
      %v3007 = vsel %vm816, %v2992, %v3000
      %v3008 = vsel %vm816, %v2994, %v3002
      %v3009 = vsel %vm816, %v2996, %v3004
      %v3010 = vsel %vm816, %v2998, %v3006
      %v3011 = vsel %vm816, %v2984, %v2992
      %v3012 = vsel %vm816, %v2986, %v2994
      %v3013 = vsel %vm816, %v2988, %v2996
      %v3014 = vsel %vm816, %v2990, %v2998
      %v3015 = vsel %vm816, %v2976, %v2984
      %v3016 = vsel %vm816, %v2978, %v2986
      %v3017 = vsel %vm816, %v2980, %v2988
      %v3018 = vsel %vm816, %v2982, %v2990
      %v3019 = vsel %vm816, %v3000, %v2976
      %v3020 = vsel %vm816, %v3002, %v2978
      %v3021 = vsel %vm816, %v3004, %v2980
      %v3022 = vsel %vm816, %v3006, %v2982
      %v3023 = vld [vmem:[%s821] ss:$8 sm:$0xf]
      %v3025 = vperm.slane %v3023, 0
      %v3026 = vperm.slane %v3023, 1
      %v3027 = vperm.slane %v3023, 2
      %v3028 = vperm.slane %v3023, 3
      %v3033 = vmul.f32 %v3015, %v3025
      %v3034 = vmul.f32 %v3011, %v3026
      %v3035 = vmul.f32 %v3007, %v3027
      %v3036 = vmul.f32 %v3019, %v3028
      %v3037 = vmul.f32 %v3016, %v3025
      %v3038 = vmul.f32 %v3012, %v3026
      %v3039 = vmul.f32 %v3008, %v3027
      %v3040 = vmul.f32 %v3020, %v3028
      %v3041 = vmul.f32 %v3017, %v3025
      %v3042 = vmul.f32 %v3013, %v3026
      %v3043 = vmul.f32 %v3009, %v3027
      %v3044 = vmul.f32 %v3021, %v3028
      %v3045 = vmul.f32 %v3018, %v3025
      %v3046 = vmul.f32 %v3014, %v3026
      %v3047 = vmul.f32 %v3010, %v3027
      %v3048 = vmul.f32 %v3022, %v3028
      %3049 = vst [vmem:[#allocation2 + $0x280] sm:$0xff] %v3033
      %3050 = vst [vmem:[#allocation2 + $0x288] sm:$0xff] %v3034
      %3051 = vst [vmem:[#allocation2 + $0x290] sm:$0xff] %v3035
      %3052 = vst [vmem:[#allocation2 + $0x298] sm:$0xff] %v3036
      %3053 = vst [vmem:[#allocation2 + $0x2a0] sm:$0xff] %v3037
      %3054 = vst [vmem:[#allocation2 + $0x2a8] sm:$0xff] %v3038
      %3055 = vst [vmem:[#allocation2 + $0x2b0] sm:$0xff] %v3039
      %3056 = vst [vmem:[#allocation2 + $0x2b8] sm:$0xff] %v3040
      %3057 = vst [vmem:[#allocation2 + $0x2c0] sm:$0xff] %v3041
      %3058 = vst [vmem:[#allocation2 + $0x2c8] sm:$0xff] %v3042
      %3059 = vst [vmem:[#allocation2 + $0x2d0] sm:$0xff] %v3043
      %3060 = vst [vmem:[#allocation2 + $0x2d8] sm:$0xff] %v3044
      %3061 = vst [vmem:[#allocation2 + $0x2e0] sm:$0xff] %v3045
      %3062 = vst [vmem:[#allocation2 + $0x2e8] sm:$0xff] %v3046
      %3063 = vst [vmem:[#allocation2 + $0x2f0] sm:$0xff] %v3047
      %3064 = vst [vmem:[#allocation2 + $0x2f8] sm:$0xff] %v3048
      %3065 = vrot.lane.b32.xlu0 %v2540, 113
      %v3066 = vpop.permute.xlu0 %3065
      %3067 = vrot.lane.b32.xlu0 %v2544, 113
      %v3068 = vpop.permute.xlu0 %3067
      %3069 = vrot.lane.b32.xlu0 %v2548, 113
      %v3070 = vpop.permute.xlu0 %3069
      %3071 = vrot.lane.b32.xlu0 %v2552, 113
      %v3072 = vpop.permute.xlu0 %3071
      %3073 = vrot.lane.b32.xlu0 %v2541, 113
      %v3074 = vpop.permute.xlu0 %3073
      %3075 = vrot.lane.b32.xlu0 %v2545, 113
      %v3076 = vpop.permute.xlu0 %3075
      %3077 = vrot.lane.b32.xlu0 %v2549, 113
      %v3078 = vpop.permute.xlu0 %3077
      %3079 = vrot.lane.b32.xlu0 %v2553, 113
      %v3080 = vpop.permute.xlu0 %3079
      %3081 = vrot.lane.b32.xlu0 %v2542, 113
      %v3082 = vpop.permute.xlu0 %3081
      %3083 = vrot.lane.b32.xlu0 %v2546, 113
      %v3084 = vpop.permute.xlu0 %3083
      %3085 = vrot.lane.b32.xlu0 %v2550, 113
      %v3086 = vpop.permute.xlu0 %3085
      %3087 = vrot.lane.b32.xlu0 %v2554, 113
      %v3088 = vpop.permute.xlu0 %3087
      %3089 = vrot.lane.b32.xlu0 %v2543, 113
      %v3090 = vpop.permute.xlu0 %3089
      %3091 = vrot.lane.b32.xlu0 %v2547, 113
      %v3092 = vpop.permute.xlu0 %3091
      %3093 = vrot.lane.b32.xlu0 %v2551, 113
      %v3094 = vpop.permute.xlu0 %3093
      %3095 = vrot.lane.b32.xlu0 %v2555, 113
      %v3096 = vpop.permute.xlu0 %3095
      %v3097 = vsel %vm844, %v3082, %v3090
      %v3098 = vsel %vm844, %v3084, %v3092
      %v3099 = vsel %vm844, %v3086, %v3094
      %v3100 = vsel %vm844, %v3088, %v3096
      %v3101 = vsel %vm844, %v3074, %v3082
      %v3102 = vsel %vm844, %v3076, %v3084
      %v3103 = vsel %vm844, %v3078, %v3086
      %v3104 = vsel %vm844, %v3080, %v3088
      %v3105 = vsel %vm844, %v3066, %v3074
      %v3106 = vsel %vm844, %v3068, %v3076
      %v3107 = vsel %vm844, %v3070, %v3078
      %v3108 = vsel %vm844, %v3072, %v3080
      %v3109 = vsel %vm844, %v3090, %v3066
      %v3110 = vsel %vm844, %v3092, %v3068
      %v3111 = vsel %vm844, %v3094, %v3070
      %v3112 = vsel %vm844, %v3096, %v3072
      %v3113 = vld [vmem:[%s849] ss:$8 sm:$0xf]
      %v3115 = vperm.slane %v3113, 0
      %v3116 = vperm.slane %v3113, 1
      %v3117 = vperm.slane %v3113, 2
      %v3118 = vperm.slane %v3113, 3
      %v3123 = vmul.f32 %v3105, %v3115
      %v3124 = vmul.f32 %v3101, %v3116
      %v3125 = vmul.f32 %v3097, %v3117
      %v3126 = vmul.f32 %v3109, %v3118
      %v3127 = vmul.f32 %v3106, %v3115
      %v3128 = vmul.f32 %v3102, %v3116
      %v3129 = vmul.f32 %v3098, %v3117
      %v3130 = vmul.f32 %v3110, %v3118
      %v3131 = vmul.f32 %v3107, %v3115
      %v3132 = vmul.f32 %v3103, %v3116
      %v3133 = vmul.f32 %v3099, %v3117
      %v3134 = vmul.f32 %v3111, %v3118
      %v3135 = vmul.f32 %v3108, %v3115
      %v3136 = vmul.f32 %v3104, %v3116
      %v3137 = vmul.f32 %v3100, %v3117
      %v3138 = vmul.f32 %v3112, %v3118
      %3139 = vst [vmem:[#allocation2 + $0x300] sm:$0xff] %v3123
      %3140 = vst [vmem:[#allocation2 + $0x308] sm:$0xff] %v3124
      %3141 = vst [vmem:[#allocation2 + $0x310] sm:$0xff] %v3125
      %3142 = vst [vmem:[#allocation2 + $0x318] sm:$0xff] %v3126
      %3143 = vst [vmem:[#allocation2 + $0x320] sm:$0xff] %v3127
      %3144 = vst [vmem:[#allocation2 + $0x328] sm:$0xff] %v3128
      %3145 = vst [vmem:[#allocation2 + $0x330] sm:$0xff] %v3129
      %3146 = vst [vmem:[#allocation2 + $0x338] sm:$0xff] %v3130
      %3147 = vst [vmem:[#allocation2 + $0x340] sm:$0xff] %v3131
      %3148 = vst [vmem:[#allocation2 + $0x348] sm:$0xff] %v3132
      %3149 = vst [vmem:[#allocation2 + $0x350] sm:$0xff] %v3133
      %3150 = vst [vmem:[#allocation2 + $0x358] sm:$0xff] %v3134
      %3151 = vst [vmem:[#allocation2 + $0x360] sm:$0xff] %v3135
      %3152 = vst [vmem:[#allocation2 + $0x368] sm:$0xff] %v3136
      %3153 = vst [vmem:[#allocation2 + $0x370] sm:$0xff] %v3137
      %3154 = vst [vmem:[#allocation2 + $0x378] sm:$0xff] %v3138
      %3155 = vrot.lane.b32.xlu0 %v2540, 112
      %v3156 = vpop.permute.xlu0 %3155
      %3157 = vrot.lane.b32.xlu0 %v2544, 112
      %v3158 = vpop.permute.xlu0 %3157
      %3159 = vrot.lane.b32.xlu0 %v2548, 112
      %v3160 = vpop.permute.xlu0 %3159
      %3161 = vrot.lane.b32.xlu0 %v2552, 112
      %v3162 = vpop.permute.xlu0 %3161
      %3163 = vrot.lane.b32.xlu0 %v2541, 112
      %v3164 = vpop.permute.xlu0 %3163
      %3165 = vrot.lane.b32.xlu0 %v2545, 112
      %v3166 = vpop.permute.xlu0 %3165
      %3167 = vrot.lane.b32.xlu0 %v2549, 112
      %v3168 = vpop.permute.xlu0 %3167
      %3169 = vrot.lane.b32.xlu0 %v2553, 112
      %v3170 = vpop.permute.xlu0 %3169
      %3171 = vrot.lane.b32.xlu0 %v2542, 112
      %v3172 = vpop.permute.xlu0 %3171
      %3173 = vrot.lane.b32.xlu0 %v2546, 112
      %v3174 = vpop.permute.xlu0 %3173
      %3175 = vrot.lane.b32.xlu0 %v2550, 112
      %v3176 = vpop.permute.xlu0 %3175
      %3177 = vrot.lane.b32.xlu0 %v2554, 112
      %v3178 = vpop.permute.xlu0 %3177
      %3179 = vrot.lane.b32.xlu0 %v2543, 112
      %v3180 = vpop.permute.xlu0 %3179
      %3181 = vrot.lane.b32.xlu0 %v2547, 112
      %v3182 = vpop.permute.xlu0 %3181
      %3183 = vrot.lane.b32.xlu0 %v2551, 112
      %v3184 = vpop.permute.xlu0 %3183
      %3185 = vrot.lane.b32.xlu0 %v2555, 112
      %v3186 = vpop.permute.xlu0 %3185
      %v3187 = vsel %vm872, %v3172, %v3180
      %v3188 = vsel %vm872, %v3174, %v3182
      %v3189 = vsel %vm872, %v3176, %v3184
      %v3190 = vsel %vm872, %v3178, %v3186
      %v3191 = vsel %vm872, %v3164, %v3172
      %v3192 = vsel %vm872, %v3166, %v3174
      %v3193 = vsel %vm872, %v3168, %v3176
      %v3194 = vsel %vm872, %v3170, %v3178
      %v3195 = vsel %vm872, %v3156, %v3164
      %v3196 = vsel %vm872, %v3158, %v3166
      %v3197 = vsel %vm872, %v3160, %v3168
      %v3198 = vsel %vm872, %v3162, %v3170
      %v3199 = vsel %vm872, %v3180, %v3156
      %v3200 = vsel %vm872, %v3182, %v3158
      %v3201 = vsel %vm872, %v3184, %v3160
      %v3202 = vsel %vm872, %v3186, %v3162
      %v3203 = vld [vmem:[%s877] ss:$8 sm:$0xf]
      %v3205 = vperm.slane %v3203, 0
      %v3206 = vperm.slane %v3203, 1
      %v3207 = vperm.slane %v3203, 2
      %v3208 = vperm.slane %v3203, 3
      %v3213 = vmul.f32 %v3195, %v3205
      %v3214 = vmul.f32 %v3191, %v3206
      %v3215 = vmul.f32 %v3187, %v3207
      %v3216 = vmul.f32 %v3199, %v3208
      %v3217 = vmul.f32 %v3196, %v3205
      %v3218 = vmul.f32 %v3192, %v3206
      %v3219 = vmul.f32 %v3188, %v3207
      %v3220 = vmul.f32 %v3200, %v3208
      %v3221 = vmul.f32 %v3197, %v3205
      %v3222 = vmul.f32 %v3193, %v3206
      %v3223 = vmul.f32 %v3189, %v3207
      %v3224 = vmul.f32 %v3201, %v3208
      %v3225 = vmul.f32 %v3198, %v3205
      %v3226 = vmul.f32 %v3194, %v3206
      %v3227 = vmul.f32 %v3190, %v3207
      %v3228 = vmul.f32 %v3202, %v3208
      %3229 = vst [vmem:[#allocation2 + $0x380] sm:$0xff] %v3213
      %3230 = vst [vmem:[#allocation2 + $0x388] sm:$0xff] %v3214
      %3231 = vst [vmem:[#allocation2 + $0x390] sm:$0xff] %v3215
      %3232 = vst [vmem:[#allocation2 + $0x398] sm:$0xff] %v3216
      %3233 = vst [vmem:[#allocation2 + $0x3a0] sm:$0xff] %v3217
      %3234 = vst [vmem:[#allocation2 + $0x3a8] sm:$0xff] %v3218
      %3235 = vst [vmem:[#allocation2 + $0x3b0] sm:$0xff] %v3219
      %3236 = vst [vmem:[#allocation2 + $0x3b8] sm:$0xff] %v3220
      %3237 = vst [vmem:[#allocation2 + $0x3c0] sm:$0xff] %v3221
      %3238 = vst [vmem:[#allocation2 + $0x3c8] sm:$0xff] %v3222
      %3239 = vst [vmem:[#allocation2 + $0x3d0] sm:$0xff] %v3223
      %3240 = vst [vmem:[#allocation2 + $0x3d8] sm:$0xff] %v3224
      %3241 = vst [vmem:[#allocation2 + $0x3e0] sm:$0xff] %v3225
      %3242 = vst [vmem:[#allocation2 + $0x3e8] sm:$0xff] %v3226
      %3243 = vst [vmem:[#allocation2 + $0x3f0] sm:$0xff] %v3227
      %3244 = vst [vmem:[#allocation2 + $0x3f8] sm:$0xff] %v3228
      %3245 = vrot.lane.b32.xlu0 %v2540, 111
      %v3246 = vpop.permute.xlu0 %3245
      %3247 = vrot.lane.b32.xlu0 %v2544, 111
      %v3248 = vpop.permute.xlu0 %3247
      %3249 = vrot.lane.b32.xlu0 %v2548, 111
      %v3250 = vpop.permute.xlu0 %3249
      %3251 = vrot.lane.b32.xlu0 %v2552, 111
      %v3252 = vpop.permute.xlu0 %3251
      %3253 = vrot.lane.b32.xlu0 %v2541, 111
      %v3254 = vpop.permute.xlu0 %3253
      %3255 = vrot.lane.b32.xlu0 %v2545, 111
      %v3256 = vpop.permute.xlu0 %3255
      %3257 = vrot.lane.b32.xlu0 %v2549, 111
      %v3258 = vpop.permute.xlu0 %3257
      %3259 = vrot.lane.b32.xlu0 %v2553, 111
      %v3260 = vpop.permute.xlu0 %3259
      %3261 = vrot.lane.b32.xlu0 %v2542, 111
      %v3262 = vpop.permute.xlu0 %3261
      %3263 = vrot.lane.b32.xlu0 %v2546, 111
      %v3264 = vpop.permute.xlu0 %3263
      %3265 = vrot.lane.b32.xlu0 %v2550, 111
      %v3266 = vpop.permute.xlu0 %3265
      %3267 = vrot.lane.b32.xlu0 %v2554, 111
      %v3268 = vpop.permute.xlu0 %3267
      %3269 = vrot.lane.b32.xlu0 %v2543, 111
      %v3270 = vpop.permute.xlu0 %3269
      %3271 = vrot.lane.b32.xlu0 %v2547, 111
      %v3272 = vpop.permute.xlu0 %3271
      %3273 = vrot.lane.b32.xlu0 %v2551, 111
      %v3274 = vpop.permute.xlu0 %3273
      %3275 = vrot.lane.b32.xlu0 %v2555, 111
      %v3276 = vpop.permute.xlu0 %3275
      %v3277 = vsel %vm900, %v3262, %v3270
      %v3278 = vsel %vm900, %v3264, %v3272
      %v3279 = vsel %vm900, %v3266, %v3274
      %v3280 = vsel %vm900, %v3268, %v3276
      %v3281 = vsel %vm900, %v3254, %v3262
      %v3282 = vsel %vm900, %v3256, %v3264
      %v3283 = vsel %vm900, %v3258, %v3266
      %v3284 = vsel %vm900, %v3260, %v3268
      %v3285 = vsel %vm900, %v3246, %v3254
      %v3286 = vsel %vm900, %v3248, %v3256
      %v3287 = vsel %vm900, %v3250, %v3258
      %v3288 = vsel %vm900, %v3252, %v3260
      %v3289 = vsel %vm900, %v3270, %v3246
      %v3290 = vsel %vm900, %v3272, %v3248
      %v3291 = vsel %vm900, %v3274, %v3250
      %v3292 = vsel %vm900, %v3276, %v3252
      %v3293 = vld [vmem:[%s905] ss:$8 sm:$0xf]
      %v3295 = vperm.slane %v3293, 0
      %v3296 = vperm.slane %v3293, 1
      %v3297 = vperm.slane %v3293, 2
      %v3298 = vperm.slane %v3293, 3
      %v3303 = vmul.f32 %v3285, %v3295
      %v3304 = vmul.f32 %v3281, %v3296
      %v3305 = vmul.f32 %v3277, %v3297
      %v3306 = vmul.f32 %v3289, %v3298
      %v3307 = vmul.f32 %v3286, %v3295
      %v3308 = vmul.f32 %v3282, %v3296
      %v3309 = vmul.f32 %v3278, %v3297
      %v3310 = vmul.f32 %v3290, %v3298
      %v3311 = vmul.f32 %v3287, %v3295
      %v3312 = vmul.f32 %v3283, %v3296
      %v3313 = vmul.f32 %v3279, %v3297
      %v3314 = vmul.f32 %v3291, %v3298
      %v3315 = vmul.f32 %v3288, %v3295
      %v3316 = vmul.f32 %v3284, %v3296
      %v3317 = vmul.f32 %v3280, %v3297
      %v3318 = vmul.f32 %v3292, %v3298
      %3319 = vst [vmem:[#allocation2 + $0x400] sm:$0xff] %v3303
      %3320 = vst [vmem:[#allocation2 + $0x408] sm:$0xff] %v3304
      %3321 = vst [vmem:[#allocation2 + $0x410] sm:$0xff] %v3305
      %3322 = vst [vmem:[#allocation2 + $0x418] sm:$0xff] %v3306
      %3323 = vst [vmem:[#allocation2 + $0x420] sm:$0xff] %v3307
      %3324 = vst [vmem:[#allocation2 + $0x428] sm:$0xff] %v3308
      %3325 = vst [vmem:[#allocation2 + $0x430] sm:$0xff] %v3309
      %3326 = vst [vmem:[#allocation2 + $0x438] sm:$0xff] %v3310
      %3327 = vst [vmem:[#allocation2 + $0x440] sm:$0xff] %v3311
      %3328 = vst [vmem:[#allocation2 + $0x448] sm:$0xff] %v3312
      %3329 = vst [vmem:[#allocation2 + $0x450] sm:$0xff] %v3313
      %3330 = vst [vmem:[#allocation2 + $0x458] sm:$0xff] %v3314
      %3331 = vst [vmem:[#allocation2 + $0x460] sm:$0xff] %v3315
      %3332 = vst [vmem:[#allocation2 + $0x468] sm:$0xff] %v3316
      %3333 = vst [vmem:[#allocation2 + $0x470] sm:$0xff] %v3317
      %3334 = vst [vmem:[#allocation2 + $0x478] sm:$0xff] %v3318
      %s3335 = scalar_lea.vmem %s636, 96
      %v3336 = vld [vmem:[%s3335] sm:$0xff]
      %v3337 = vld [vmem:[%s3335 + $0x8] sm:$0xff]
      %v3338 = vld [vmem:[%s3335 + $0x10] sm:$0xff]
      %v3339 = vld [vmem:[%s3335 + $0x18] sm:$0xff]
      %v3340 = vld [vmem:[%s3335 + $0x20] sm:$0xff]
      %v3341 = vld [vmem:[%s3335 + $0x28] sm:$0xff]
      %v3342 = vld [vmem:[%s3335 + $0x30] sm:$0xff]
      %v3343 = vld [vmem:[%s3335 + $0x38] sm:$0xff]
      %v3344 = vld [vmem:[%s3335 + $0x40] sm:$0xff]
      %v3345 = vld [vmem:[%s3335 + $0x48] sm:$0xff]
      %v3346 = vld [vmem:[%s3335 + $0x50] sm:$0xff]
      %v3347 = vld [vmem:[%s3335 + $0x58] sm:$0xff]
      %v3348 = vld [vmem:[#allocation2] sm:$0xff]
      %v3349 = vld [vmem:[#allocation2 + $0x8] sm:$0xff]
      %v3350 = vld [vmem:[#allocation2 + $0x10] sm:$0xff]
      %v3351 = vld [vmem:[#allocation2 + $0x18] sm:$0xff]
      %v3352 = vld [vmem:[#allocation2 + $0x20] sm:$0xff]
      %v3353 = vld [vmem:[#allocation2 + $0x28] sm:$0xff]
      %v3354 = vld [vmem:[#allocation2 + $0x30] sm:$0xff]
      %v3355 = vld [vmem:[#allocation2 + $0x38] sm:$0xff]
      %v3356 = vld [vmem:[#allocation2 + $0x40] sm:$0xff]
      %v3357 = vld [vmem:[#allocation2 + $0x48] sm:$0xff]
      %v3358 = vld [vmem:[#allocation2 + $0x50] sm:$0xff]
      %v3359 = vld [vmem:[#allocation2 + $0x58] sm:$0xff]
      %v3360 = vld [vmem:[#allocation2 + $0x60] sm:$0xff]
      %v3361 = vld [vmem:[#allocation2 + $0x68] sm:$0xff]
      %v3362 = vld [vmem:[#allocation2 + $0x70] sm:$0xff]
      %v3363 = vld [vmem:[#allocation2 + $0x78] sm:$0xff]
      %v3364 = vld [vmem:[#allocation2 + $0x80] sm:$0xff]
      %v3365 = vld [vmem:[#allocation2 + $0x88] sm:$0xff]
      %v3366 = vld [vmem:[#allocation2 + $0x90] sm:$0xff]
      %v3367 = vld [vmem:[#allocation2 + $0x98] sm:$0xff]
      %v3368 = vld [vmem:[#allocation2 + $0xa0] sm:$0xff]
      %v3369 = vld [vmem:[#allocation2 + $0xa8] sm:$0xff]
      %v3370 = vld [vmem:[#allocation2 + $0xb0] sm:$0xff]
      %v3371 = vld [vmem:[#allocation2 + $0xb8] sm:$0xff]
      %v3372 = vld [vmem:[#allocation2 + $0xc0] sm:$0xff]
      %v3373 = vld [vmem:[#allocation2 + $0xc8] sm:$0xff]
      %v3374 = vld [vmem:[#allocation2 + $0xd0] sm:$0xff]
      %v3375 = vld [vmem:[#allocation2 + $0xd8] sm:$0xff]
      %v3376 = vld [vmem:[#allocation2 + $0xe0] sm:$0xff]
      %v3377 = vld [vmem:[#allocation2 + $0xe8] sm:$0xff]
      %v3378 = vld [vmem:[#allocation2 + $0xf0] sm:$0xff]
      %v3379 = vld [vmem:[#allocation2 + $0xf8] sm:$0xff]
      %v3380 = vld [vmem:[#allocation2 + $0x100] sm:$0xff]
      %v3381 = vld [vmem:[#allocation2 + $0x108] sm:$0xff]
      %v3382 = vld [vmem:[#allocation2 + $0x110] sm:$0xff]
      %v3383 = vld [vmem:[#allocation2 + $0x118] sm:$0xff]
      %v3384 = vld [vmem:[#allocation2 + $0x120] sm:$0xff]
      %v3385 = vld [vmem:[#allocation2 + $0x128] sm:$0xff]
      %v3386 = vld [vmem:[#allocation2 + $0x130] sm:$0xff]
      %v3387 = vld [vmem:[#allocation2 + $0x138] sm:$0xff]
      %v3388 = vld [vmem:[#allocation2 + $0x140] sm:$0xff]
      %v3389 = vld [vmem:[#allocation2 + $0x148] sm:$0xff]
      %v3390 = vld [vmem:[#allocation2 + $0x150] sm:$0xff]
      %v3391 = vld [vmem:[#allocation2 + $0x158] sm:$0xff]
      %v3392 = vld [vmem:[#allocation2 + $0x160] sm:$0xff]
      %v3393 = vld [vmem:[#allocation2 + $0x168] sm:$0xff]
      %v3394 = vld [vmem:[#allocation2 + $0x170] sm:$0xff]
      %v3395 = vld [vmem:[#allocation2 + $0x178] sm:$0xff]
      %v3396 = vld [vmem:[#allocation2 + $0x180] sm:$0xff]
      %v3397 = vld [vmem:[#allocation2 + $0x188] sm:$0xff]
      %v3398 = vld [vmem:[#allocation2 + $0x190] sm:$0xff]
      %v3399 = vld [vmem:[#allocation2 + $0x198] sm:$0xff]
      %v3400 = vld [vmem:[#allocation2 + $0x1a0] sm:$0xff]
      %v3401 = vld [vmem:[#allocation2 + $0x1a8] sm:$0xff]
      %v3402 = vld [vmem:[#allocation2 + $0x1b0] sm:$0xff]
      %v3403 = vld [vmem:[#allocation2 + $0x1b8] sm:$0xff]
      %v3404 = vld [vmem:[#allocation2 + $0x1c0] sm:$0xff]
      %v3405 = vld [vmem:[#allocation2 + $0x1c8] sm:$0xff]
      %v3406 = vld [vmem:[#allocation2 + $0x1d0] sm:$0xff]
      %v3407 = vld [vmem:[#allocation2 + $0x1d8] sm:$0xff]
      %v3408 = vld [vmem:[#allocation2 + $0x1e0] sm:$0xff]
      %v3409 = vld [vmem:[#allocation2 + $0x1e8] sm:$0xff]
      %v3410 = vld [vmem:[#allocation2 + $0x1f0] sm:$0xff]
      %v3411 = vld [vmem:[#allocation2 + $0x1f8] sm:$0xff]
      %v3412 = vld [vmem:[#allocation2 + $0x200] sm:$0xff]
      %v3413 = vld [vmem:[#allocation2 + $0x208] sm:$0xff]
      %v3414 = vld [vmem:[#allocation2 + $0x210] sm:$0xff]
      %v3415 = vld [vmem:[#allocation2 + $0x218] sm:$0xff]
      %v3416 = vld [vmem:[#allocation2 + $0x220] sm:$0xff]
      %v3417 = vld [vmem:[#allocation2 + $0x228] sm:$0xff]
      %v3418 = vld [vmem:[#allocation2 + $0x230] sm:$0xff]
      %v3419 = vld [vmem:[#allocation2 + $0x238] sm:$0xff]
      %v3420 = vld [vmem:[#allocation2 + $0x240] sm:$0xff]
      %v3421 = vld [vmem:[#allocation2 + $0x248] sm:$0xff]
      %v3422 = vld [vmem:[#allocation2 + $0x250] sm:$0xff]
      %v3423 = vld [vmem:[#allocation2 + $0x258] sm:$0xff]
      %v3424 = vld [vmem:[#allocation2 + $0x260] sm:$0xff]
      %v3425 = vld [vmem:[#allocation2 + $0x268] sm:$0xff]
      %v3426 = vld [vmem:[#allocation2 + $0x270] sm:$0xff]
      %v3427 = vld [vmem:[#allocation2 + $0x278] sm:$0xff]
      %v3428 = vld [vmem:[#allocation2 + $0x280] sm:$0xff]
      %v3429 = vld [vmem:[#allocation2 + $0x288] sm:$0xff]
      %v3430 = vld [vmem:[#allocation2 + $0x290] sm:$0xff]
      %v3431 = vld [vmem:[#allocation2 + $0x298] sm:$0xff]
      %v3432 = vld [vmem:[#allocation2 + $0x2a0] sm:$0xff]
      %v3433 = vld [vmem:[#allocation2 + $0x2a8] sm:$0xff]
      %v3434 = vld [vmem:[#allocation2 + $0x2b0] sm:$0xff]
      %v3435 = vld [vmem:[#allocation2 + $0x2b8] sm:$0xff]
      %v3436 = vld [vmem:[#allocation2 + $0x2c0] sm:$0xff]
      %v3437 = vld [vmem:[#allocation2 + $0x2c8] sm:$0xff]
      %v3438 = vld [vmem:[#allocation2 + $0x2d0] sm:$0xff]
      %v3439 = vld [vmem:[#allocation2 + $0x2d8] sm:$0xff]
      %v3440 = vld [vmem:[#allocation2 + $0x2e0] sm:$0xff]
      %v3441 = vld [vmem:[#allocation2 + $0x2e8] sm:$0xff]
      %v3442 = vld [vmem:[#allocation2 + $0x2f0] sm:$0xff]
      %v3443 = vld [vmem:[#allocation2 + $0x2f8] sm:$0xff]
      %v3444 = vld [vmem:[#allocation2 + $0x300] sm:$0xff]
      %v3445 = vld [vmem:[#allocation2 + $0x308] sm:$0xff]
      %v3446 = vld [vmem:[#allocation2 + $0x310] sm:$0xff]
      %v3447 = vld [vmem:[#allocation2 + $0x318] sm:$0xff]
      %v3448 = vld [vmem:[#allocation2 + $0x320] sm:$0xff]
      %v3449 = vld [vmem:[#allocation2 + $0x328] sm:$0xff]
      %v3450 = vld [vmem:[#allocation2 + $0x330] sm:$0xff]
      %v3451 = vld [vmem:[#allocation2 + $0x338] sm:$0xff]
      %v3452 = vld [vmem:[#allocation2 + $0x340] sm:$0xff]
      %v3453 = vld [vmem:[#allocation2 + $0x348] sm:$0xff]
      %v3454 = vld [vmem:[#allocation2 + $0x350] sm:$0xff]
      %v3455 = vld [vmem:[#allocation2 + $0x358] sm:$0xff]
      %v3456 = vld [vmem:[#allocation2 + $0x360] sm:$0xff]
      %v3457 = vld [vmem:[#allocation2 + $0x368] sm:$0xff]
      %v3458 = vld [vmem:[#allocation2 + $0x370] sm:$0xff]
      %v3459 = vld [vmem:[#allocation2 + $0x378] sm:$0xff]
      %v3460 = vld [vmem:[#allocation2 + $0x380] sm:$0xff]
      %v3461 = vld [vmem:[#allocation2 + $0x388] sm:$0xff]
      %v3462 = vld [vmem:[#allocation2 + $0x390] sm:$0xff]
      %v3463 = vld [vmem:[#allocation2 + $0x398] sm:$0xff]
      %v3464 = vld [vmem:[#allocation2 + $0x3a0] sm:$0xff]
      %v3465 = vld [vmem:[#allocation2 + $0x3a8] sm:$0xff]
      %v3466 = vld [vmem:[#allocation2 + $0x3b0] sm:$0xff]
      %v3467 = vld [vmem:[#allocation2 + $0x3b8] sm:$0xff]
      %v3468 = vld [vmem:[#allocation2 + $0x3c0] sm:$0xff]
      %v3469 = vld [vmem:[#allocation2 + $0x3c8] sm:$0xff]
      %v3470 = vld [vmem:[#allocation2 + $0x3d0] sm:$0xff]
      %v3471 = vld [vmem:[#allocation2 + $0x3d8] sm:$0xff]
      %v3472 = vld [vmem:[#allocation2 + $0x3e0] sm:$0xff]
      %v3473 = vld [vmem:[#allocation2 + $0x3e8] sm:$0xff]
      %v3474 = vld [vmem:[#allocation2 + $0x3f0] sm:$0xff]
      %v3475 = vld [vmem:[#allocation2 + $0x3f8] sm:$0xff]
      %v3476 = vld [vmem:[#allocation2 + $0x400] sm:$0xff]
      %v3477 = vld [vmem:[#allocation2 + $0x408] sm:$0xff]
      %v3478 = vld [vmem:[#allocation2 + $0x410] sm:$0xff]
      %v3479 = vld [vmem:[#allocation2 + $0x418] sm:$0xff]
      %v3480 = vld [vmem:[#allocation2 + $0x420] sm:$0xff]
      %v3481 = vld [vmem:[#allocation2 + $0x428] sm:$0xff]
      %v3482 = vld [vmem:[#allocation2 + $0x430] sm:$0xff]
      %v3483 = vld [vmem:[#allocation2 + $0x438] sm:$0xff]
      %v3484 = vld [vmem:[#allocation2 + $0x440] sm:$0xff]
      %v3485 = vld [vmem:[#allocation2 + $0x448] sm:$0xff]
      %v3486 = vld [vmem:[#allocation2 + $0x450] sm:$0xff]
      %v3487 = vld [vmem:[#allocation2 + $0x458] sm:$0xff]
      %v3488 = vld [vmem:[#allocation2 + $0x460] sm:$0xff]
      %v3489 = vld [vmem:[#allocation2 + $0x468] sm:$0xff]
      %v3490 = vld [vmem:[#allocation2 + $0x470] sm:$0xff]
      %v3491 = vld [vmem:[#allocation2 + $0x478] sm:$0xff]
      %s3492 = scalar_lea.vmem %s641, 32
      %v3493 = vld [vmem:[%s3492] sm:$0xff]
      %v3494 = vld [vmem:[%s3492 + $0x8] sm:$0xff]
      %v3495 = vld [vmem:[%s3492 + $0x10] sm:$0xff]
      %v3496 = vld [vmem:[%s3492 + $0x18] sm:$0xff]
      %3498 = vset.pattern.permute.xlu0 0
      %3499 = vperm.xlu0 %3498, %v3493
      %v3500 = vpop.permute.xlu0 %3499
      %3503 = vset.pattern.permute.xlu0 0
      %3504 = vperm.xlu0 %3503, %v3494
      %v3505 = vpop.permute.xlu0 %3504
      %3508 = vset.pattern.permute.xlu0 0
      %3509 = vperm.xlu0 %3508, %v3495
      %v3510 = vpop.permute.xlu0 %3509
      %3513 = vset.pattern.permute.xlu0 0
      %3514 = vperm.xlu0 %3513, %v3496
      %v3515 = vpop.permute.xlu0 %3514
      %v3518 = vsel %vm2179, %v3338, 0
      %v3521 = vsel %vm2179, %v3341, 0
      %v3524 = vsel %vm2179, %v3344, 0
      %v3527 = vsel %vm2179, %v3347, 0
      %3529 = vmatpush.msra.mxu0 %v3408
      %3530 = vmatpush.msra.mxu0 %v3404
      %3531 = vmatpush.msra.mxu0 %v3400
      %3532 = vmatpush.msra.mxu0 %v3396
      %3533 = vmatpush.msra.mxu0 %v3392
      %3534 = vmatpush.msra.mxu0 %v3388
      %3535 = vmatpush.msra.mxu0 %v3384
      %3536 = vmatpush.msra.mxu0 %v3380
      %3537 = vmatpush.msra.mxu0 %v3376
      %3538 = vmatpush.msra.mxu0 %v3372
      %3539 = vmatpush.msra.mxu0 %v3368
      %3540 = vmatpush.msra.mxu0 %v3364
      %3541 = vmatpush.msra.mxu0 %v3360
      %3542 = vmatpush.msra.mxu0 %v3356
      %3543 = vmatpush.msra.mxu0 %v3352
      %3544 = vmatpush.msra.mxu0 %v3348
      %3545 = vmatmul.f32.gmra.mxu0 %v3336
      %v3546 = vpop.f32.mrf.mxu0
      %v3547 = vadd.f32 %v3500, %v3546
      %3548 = vmatmul.f32.gmra.mxu0 %v3339
      %v3549 = vpop.f32.mrf.mxu0
      %v3550 = vadd.f32 %v3505, %v3549
      %3551 = vmatmul.f32.gmra.mxu0 %v3342
      %v3552 = vpop.f32.mrf.mxu0
      %v3553 = vadd.f32 %v3510, %v3552
      %3554 = vmatmul.f32.gmra.mxu0 %v3345
      %v3555 = vpop.f32.mrf.mxu0
      %v3556 = vadd.f32 %v3515, %v3555
      %3557 = vdwg.mxu0
      %3558 = vmatpush.msra.mxu0 %v3472
      %3559 = vmatpush.msra.mxu0 %v3468
      %3560 = vmatpush.msra.mxu0 %v3464
      %3561 = vmatpush.msra.mxu0 %v3460
      %3562 = vmatpush.msra.mxu0 %v3456
      %3563 = vmatpush.msra.mxu0 %v3452
      %3564 = vmatpush.msra.mxu0 %v3448
      %3565 = vmatpush.msra.mxu0 %v3444
      %3566 = vmatpush.msra.mxu0 %v3440
      %3567 = vmatpush.msra.mxu0 %v3436
      %3568 = vmatpush.msra.mxu0 %v3432
      %3569 = vmatpush.msra.mxu0 %v3428
      %3570 = vmatpush.msra.mxu0 %v3424
      %3571 = vmatpush.msra.mxu0 %v3420
      %3572 = vmatpush.msra.mxu0 %v3416
      %3573 = vmatpush.msra.mxu0 %v3412
      %3574 = vmatmul.f32.gmra.mxu0 %v3337
      %v3575 = vpop.f32.mrf.mxu0
      %v3576 = vadd.f32 %v3547, %v3575
      %3577 = vmatmul.f32.gmra.mxu0 %v3340
      %v3578 = vpop.f32.mrf.mxu0
      %v3579 = vadd.f32 %v3550, %v3578
      %3580 = vmatmul.f32.gmra.mxu0 %v3343
      %v3581 = vpop.f32.mrf.mxu0
      %v3582 = vadd.f32 %v3553, %v3581
      %3583 = vmatmul.f32.gmra.mxu0 %v3346
      %v3584 = vpop.f32.mrf.mxu0
      %v3585 = vadd.f32 %v3556, %v3584
      %3586 = vdwg.mxu0
      %3587 = vmatpush.msra.mxu0 0.0
      %3588 = vmatpush.msra.mxu0 0.0
      %3589 = vmatpush.msra.mxu0 0.0
      %3590 = vmatpush.msra.mxu0 0.0
      %3591 = vmatpush.msra.mxu0 0.0
      %3592 = vmatpush.msra.mxu0 0.0
      %3593 = vmatpush.msra.mxu0 0.0
      %3594 = vmatpush.msra.mxu0 0.0
      %3595 = vmatpush.msra.mxu0 0.0
      %3596 = vmatpush.msra.mxu0 0.0
      %3597 = vmatpush.msra.mxu0 0.0
      %3598 = vmatpush.msra.mxu0 0.0
      %3599 = vmatpush.msra.mxu0 %v3488
      %3600 = vmatpush.msra.mxu0 %v3484
      %3601 = vmatpush.msra.mxu0 %v3480
      %3602 = vmatpush.msra.mxu0 %v3476
      %3603 = vmatmul.f32.gmra.mxu0 %v3518
      %v3604 = vpop.f32.mrf.mxu0
      %v3605 = vadd.f32 %v3576, %v3604
      %3606 = vmatmul.f32.gmra.mxu0 %v3521
      %v3607 = vpop.f32.mrf.mxu0
      %v3608 = vadd.f32 %v3579, %v3607
      %3609 = vmatmul.f32.gmra.mxu0 %v3524
      %v3610 = vpop.f32.mrf.mxu0
      %v3611 = vadd.f32 %v3582, %v3610
      %3612 = vmatmul.f32.gmra.mxu0 %v3527
      %v3613 = vpop.f32.mrf.mxu0
      %v3614 = vadd.f32 %v3585, %v3613
      %3615 = vdwg.mxu0
      %3616 = vmatpush.msra.mxu0 %v3409
      %3617 = vmatpush.msra.mxu0 %v3405
      %3618 = vmatpush.msra.mxu0 %v3401
      %3619 = vmatpush.msra.mxu0 %v3397
      %3620 = vmatpush.msra.mxu0 %v3393
      %3621 = vmatpush.msra.mxu0 %v3389
      %3622 = vmatpush.msra.mxu0 %v3385
      %3623 = vmatpush.msra.mxu0 %v3381
      %3624 = vmatpush.msra.mxu0 %v3377
      %3625 = vmatpush.msra.mxu0 %v3373
      %3626 = vmatpush.msra.mxu0 %v3369
      %3627 = vmatpush.msra.mxu0 %v3365
      %3628 = vmatpush.msra.mxu0 %v3361
      %3629 = vmatpush.msra.mxu0 %v3357
      %3630 = vmatpush.msra.mxu0 %v3353
      %3631 = vmatpush.msra.mxu0 %v3349
      %3632 = vmatmul.f32.gmra.mxu0 %v3336
      %v3633 = vpop.f32.mrf.mxu0
      %v3634 = vadd.f32 %v3500, %v3633
      %3635 = vmatmul.f32.gmra.mxu0 %v3339
      %v3636 = vpop.f32.mrf.mxu0
      %v3637 = vadd.f32 %v3505, %v3636
      %3638 = vmatmul.f32.gmra.mxu0 %v3342
      %v3639 = vpop.f32.mrf.mxu0
      %v3640 = vadd.f32 %v3510, %v3639
      %3641 = vmatmul.f32.gmra.mxu0 %v3345
      %v3642 = vpop.f32.mrf.mxu0
      %v3643 = vadd.f32 %v3515, %v3642
      %3644 = vdwg.mxu0
      %3645 = vmatpush.msra.mxu0 %v3473
      %3646 = vmatpush.msra.mxu0 %v3469
      %3647 = vmatpush.msra.mxu0 %v3465
      %3648 = vmatpush.msra.mxu0 %v3461
      %3649 = vmatpush.msra.mxu0 %v3457
      %3650 = vmatpush.msra.mxu0 %v3453
      %3651 = vmatpush.msra.mxu0 %v3449
      %3652 = vmatpush.msra.mxu0 %v3445
      %3653 = vmatpush.msra.mxu0 %v3441
      %3654 = vmatpush.msra.mxu0 %v3437
      %3655 = vmatpush.msra.mxu0 %v3433
      %3656 = vmatpush.msra.mxu0 %v3429
      %3657 = vmatpush.msra.mxu0 %v3425
      %3658 = vmatpush.msra.mxu0 %v3421
      %3659 = vmatpush.msra.mxu0 %v3417
      %3660 = vmatpush.msra.mxu0 %v3413
      %3661 = vmatmul.f32.gmra.mxu0 %v3337
      %v3662 = vpop.f32.mrf.mxu0
      %v3663 = vadd.f32 %v3634, %v3662
      %3664 = vmatmul.f32.gmra.mxu0 %v3340
      %v3665 = vpop.f32.mrf.mxu0
      %v3666 = vadd.f32 %v3637, %v3665
      %3667 = vmatmul.f32.gmra.mxu0 %v3343
      %v3668 = vpop.f32.mrf.mxu0
      %v3669 = vadd.f32 %v3640, %v3668
      %3670 = vmatmul.f32.gmra.mxu0 %v3346
      %v3671 = vpop.f32.mrf.mxu0
      %v3672 = vadd.f32 %v3643, %v3671
      %3673 = vdwg.mxu0
      %3674 = vmatpush.msra.mxu0 0.0
      %3675 = vmatpush.msra.mxu0 0.0
      %3676 = vmatpush.msra.mxu0 0.0
      %3677 = vmatpush.msra.mxu0 0.0
      %3678 = vmatpush.msra.mxu0 0.0
      %3679 = vmatpush.msra.mxu0 0.0
      %3680 = vmatpush.msra.mxu0 0.0
      %3681 = vmatpush.msra.mxu0 0.0
      %3682 = vmatpush.msra.mxu0 0.0
      %3683 = vmatpush.msra.mxu0 0.0
      %3684 = vmatpush.msra.mxu0 0.0
      %3685 = vmatpush.msra.mxu0 0.0
      %3686 = vmatpush.msra.mxu0 %v3489
      %3687 = vmatpush.msra.mxu0 %v3485
      %3688 = vmatpush.msra.mxu0 %v3481
      %3689 = vmatpush.msra.mxu0 %v3477
      %3690 = vmatmul.f32.gmra.mxu0 %v3518
      %v3691 = vpop.f32.mrf.mxu0
      %v3692 = vadd.f32 %v3663, %v3691
      %3693 = vmatmul.f32.gmra.mxu0 %v3521
      %v3694 = vpop.f32.mrf.mxu0
      %v3695 = vadd.f32 %v3666, %v3694
      %3696 = vmatmul.f32.gmra.mxu0 %v3524
      %v3697 = vpop.f32.mrf.mxu0
      %v3698 = vadd.f32 %v3669, %v3697
      %3699 = vmatmul.f32.gmra.mxu0 %v3527
      %v3700 = vpop.f32.mrf.mxu0
      %v3701 = vadd.f32 %v3672, %v3700
      %3702 = vdwg.mxu0
      %3703 = vmatpush.msra.mxu0 %v3410
      %3704 = vmatpush.msra.mxu0 %v3406
      %3705 = vmatpush.msra.mxu0 %v3402
      %3706 = vmatpush.msra.mxu0 %v3398
      %3707 = vmatpush.msra.mxu0 %v3394
      %3708 = vmatpush.msra.mxu0 %v3390
      %3709 = vmatpush.msra.mxu0 %v3386
      %3710 = vmatpush.msra.mxu0 %v3382
      %3711 = vmatpush.msra.mxu0 %v3378
      %3712 = vmatpush.msra.mxu0 %v3374
      %3713 = vmatpush.msra.mxu0 %v3370
      %3714 = vmatpush.msra.mxu0 %v3366
      %3715 = vmatpush.msra.mxu0 %v3362
      %3716 = vmatpush.msra.mxu0 %v3358
      %3717 = vmatpush.msra.mxu0 %v3354
      %3718 = vmatpush.msra.mxu0 %v3350
      %3719 = vmatmul.f32.gmra.mxu0 %v3336
      %v3720 = vpop.f32.mrf.mxu0
      %v3721 = vadd.f32 %v3500, %v3720
      %3722 = vmatmul.f32.gmra.mxu0 %v3339
      %v3723 = vpop.f32.mrf.mxu0
      %v3724 = vadd.f32 %v3505, %v3723
      %3725 = vmatmul.f32.gmra.mxu0 %v3342
      %v3726 = vpop.f32.mrf.mxu0
      %v3727 = vadd.f32 %v3510, %v3726
      %3728 = vmatmul.f32.gmra.mxu0 %v3345
      %v3729 = vpop.f32.mrf.mxu0
      %v3730 = vadd.f32 %v3515, %v3729
      %3731 = vdwg.mxu0
      %3732 = vmatpush.msra.mxu0 %v3474
      %3733 = vmatpush.msra.mxu0 %v3470
      %3734 = vmatpush.msra.mxu0 %v3466
      %3735 = vmatpush.msra.mxu0 %v3462
      %3736 = vmatpush.msra.mxu0 %v3458
      %3737 = vmatpush.msra.mxu0 %v3454
      %3738 = vmatpush.msra.mxu0 %v3450
      %3739 = vmatpush.msra.mxu0 %v3446
      %3740 = vmatpush.msra.mxu0 %v3442
      %3741 = vmatpush.msra.mxu0 %v3438
      %3742 = vmatpush.msra.mxu0 %v3434
      %3743 = vmatpush.msra.mxu0 %v3430
      %3744 = vmatpush.msra.mxu0 %v3426
      %3745 = vmatpush.msra.mxu0 %v3422
      %3746 = vmatpush.msra.mxu0 %v3418
      %3747 = vmatpush.msra.mxu0 %v3414
      %3748 = vmatmul.f32.gmra.mxu0 %v3337
      %v3749 = vpop.f32.mrf.mxu0
      %v3750 = vadd.f32 %v3721, %v3749
      %3751 = vmatmul.f32.gmra.mxu0 %v3340
      %v3752 = vpop.f32.mrf.mxu0
      %v3753 = vadd.f32 %v3724, %v3752
      %3754 = vmatmul.f32.gmra.mxu0 %v3343
      %v3755 = vpop.f32.mrf.mxu0
      %v3756 = vadd.f32 %v3727, %v3755
      %3757 = vmatmul.f32.gmra.mxu0 %v3346
      %v3758 = vpop.f32.mrf.mxu0
      %v3759 = vadd.f32 %v3730, %v3758
      %3760 = vdwg.mxu0
      %3761 = vmatpush.msra.mxu0 0.0
      %3762 = vmatpush.msra.mxu0 0.0
      %3763 = vmatpush.msra.mxu0 0.0
      %3764 = vmatpush.msra.mxu0 0.0
      %3765 = vmatpush.msra.mxu0 0.0
      %3766 = vmatpush.msra.mxu0 0.0
      %3767 = vmatpush.msra.mxu0 0.0
      %3768 = vmatpush.msra.mxu0 0.0
      %3769 = vmatpush.msra.mxu0 0.0
      %3770 = vmatpush.msra.mxu0 0.0
      %3771 = vmatpush.msra.mxu0 0.0
      %3772 = vmatpush.msra.mxu0 0.0
      %3773 = vmatpush.msra.mxu0 %v3490
      %3774 = vmatpush.msra.mxu0 %v3486
      %3775 = vmatpush.msra.mxu0 %v3482
      %3776 = vmatpush.msra.mxu0 %v3478
      %3777 = vmatmul.f32.gmra.mxu0 %v3518
      %v3778 = vpop.f32.mrf.mxu0
      %v3779 = vadd.f32 %v3750, %v3778
      %3780 = vmatmul.f32.gmra.mxu0 %v3521
      %v3781 = vpop.f32.mrf.mxu0
      %v3782 = vadd.f32 %v3753, %v3781
      %3783 = vmatmul.f32.gmra.mxu0 %v3524
      %v3784 = vpop.f32.mrf.mxu0
      %v3785 = vadd.f32 %v3756, %v3784
      %3786 = vmatmul.f32.gmra.mxu0 %v3527
      %v3787 = vpop.f32.mrf.mxu0
      %v3788 = vadd.f32 %v3759, %v3787
      %3789 = vdwg.mxu0
      %3790 = vmatpush.msra.mxu0 %v3411
      %3791 = vmatpush.msra.mxu0 %v3407
      %3792 = vmatpush.msra.mxu0 %v3403
      %3793 = vmatpush.msra.mxu0 %v3399
      %3794 = vmatpush.msra.mxu0 %v3395
      %3795 = vmatpush.msra.mxu0 %v3391
      %3796 = vmatpush.msra.mxu0 %v3387
      %3797 = vmatpush.msra.mxu0 %v3383
      %3798 = vmatpush.msra.mxu0 %v3379
      %3799 = vmatpush.msra.mxu0 %v3375
      %3800 = vmatpush.msra.mxu0 %v3371
      %3801 = vmatpush.msra.mxu0 %v3367
      %3802 = vmatpush.msra.mxu0 %v3363
      %3803 = vmatpush.msra.mxu0 %v3359
      %3804 = vmatpush.msra.mxu0 %v3355
      %3805 = vmatpush.msra.mxu0 %v3351
      %3806 = vmatmul.f32.gmra.mxu0 %v3336
      %v3807 = vpop.f32.mrf.mxu0
      %v3808 = vadd.f32 %v3500, %v3807
      %3809 = vmatmul.f32.gmra.mxu0 %v3339
      %v3810 = vpop.f32.mrf.mxu0
      %v3811 = vadd.f32 %v3505, %v3810
      %3812 = vmatmul.f32.gmra.mxu0 %v3342
      %v3813 = vpop.f32.mrf.mxu0
      %v3814 = vadd.f32 %v3510, %v3813
      %3815 = vmatmul.f32.gmra.mxu0 %v3345
      %v3816 = vpop.f32.mrf.mxu0
      %v3817 = vadd.f32 %v3515, %v3816
      %3818 = vdwg.mxu0
      %3819 = vmatpush.msra.mxu0 %v3475
      %3820 = vmatpush.msra.mxu0 %v3471
      %3821 = vmatpush.msra.mxu0 %v3467
      %3822 = vmatpush.msra.mxu0 %v3463
      %3823 = vmatpush.msra.mxu0 %v3459
      %3824 = vmatpush.msra.mxu0 %v3455
      %3825 = vmatpush.msra.mxu0 %v3451
      %3826 = vmatpush.msra.mxu0 %v3447
      %3827 = vmatpush.msra.mxu0 %v3443
      %3828 = vmatpush.msra.mxu0 %v3439
      %3829 = vmatpush.msra.mxu0 %v3435
      %3830 = vmatpush.msra.mxu0 %v3431
      %3831 = vmatpush.msra.mxu0 %v3427
      %3832 = vmatpush.msra.mxu0 %v3423
      %3833 = vmatpush.msra.mxu0 %v3419
      %3834 = vmatpush.msra.mxu0 %v3415
      %3835 = vmatmul.f32.gmra.mxu0 %v3337
      %v3836 = vpop.f32.mrf.mxu0
      %v3837 = vadd.f32 %v3808, %v3836
      %3838 = vmatmul.f32.gmra.mxu0 %v3340
      %v3839 = vpop.f32.mrf.mxu0
      %v3840 = vadd.f32 %v3811, %v3839
      %3841 = vmatmul.f32.gmra.mxu0 %v3343
      %v3842 = vpop.f32.mrf.mxu0
      %v3843 = vadd.f32 %v3814, %v3842
      %3844 = vmatmul.f32.gmra.mxu0 %v3346
      %v3845 = vpop.f32.mrf.mxu0
      %v3846 = vadd.f32 %v3817, %v3845
      %3847 = vdwg.mxu0
      %3848 = vmatpush.msra.mxu0 0.0
      %3849 = vmatpush.msra.mxu0 0.0
      %3850 = vmatpush.msra.mxu0 0.0
      %3851 = vmatpush.msra.mxu0 0.0
      %3852 = vmatpush.msra.mxu0 0.0
      %3853 = vmatpush.msra.mxu0 0.0
      %3854 = vmatpush.msra.mxu0 0.0
      %3855 = vmatpush.msra.mxu0 0.0
      %3856 = vmatpush.msra.mxu0 0.0
      %3857 = vmatpush.msra.mxu0 0.0
      %3858 = vmatpush.msra.mxu0 0.0
      %3859 = vmatpush.msra.mxu0 0.0
      %3860 = vmatpush.msra.mxu0 %v3491
      %3861 = vmatpush.msra.mxu0 %v3487
      %3862 = vmatpush.msra.mxu0 %v3483
      %3863 = vmatpush.msra.mxu0 %v3479
      %3864 = vmatmul.f32.gmra.mxu0 %v3518
      %v3865 = vpop.f32.mrf.mxu0
      %v3866 = vadd.f32 %v3837, %v3865
      %3867 = vmatmul.f32.gmra.mxu0 %v3521
      %v3868 = vpop.f32.mrf.mxu0
      %v3869 = vadd.f32 %v3840, %v3868
      %3870 = vmatmul.f32.gmra.mxu0 %v3524
      %v3871 = vpop.f32.mrf.mxu0
      %v3872 = vadd.f32 %v3843, %v3871
      %3873 = vmatmul.f32.gmra.mxu0 %v3527
      %v3874 = vpop.f32.mrf.mxu0
      %v3875 = vadd.f32 %v3846, %v3874
      %3876 = vdwg.mxu0
      %v3877 = vmax.f32 %v3605, 0.0
      %v3878 = vmax.f32 %v3692, 0.0
      %v3879 = vmax.f32 %v3779, 0.0
      %v3880 = vmax.f32 %v3866, 0.0
      %v3881 = vmax.f32 %v3608, 0.0
      %v3882 = vmax.f32 %v3695, 0.0
      %v3883 = vmax.f32 %v3782, 0.0
      %v3884 = vmax.f32 %v3869, 0.0
      %v3885 = vmax.f32 %v3611, 0.0
      %v3886 = vmax.f32 %v3698, 0.0
      %v3887 = vmax.f32 %v3785, 0.0
      %v3888 = vmax.f32 %v3872, 0.0
      %v3889 = vmax.f32 %v3614, 0.0
      %v3890 = vmax.f32 %v3701, 0.0
      %v3891 = vmax.f32 %v3788, 0.0
      %v3892 = vmax.f32 %v3875, 0.0
      %s3893 = scalar_lea.vmem %s658, 256
      %3894 = vst [vmem:[%s3893] sm:$0xff] %v3877
      %3895 = vst [vmem:[%s3893 + $0x8] sm:$0xff] %v3878
      %3896 = vst [vmem:[%s3893 + $0x10] sm:$0xff] %v3879
      %3897 = vst [vmem:[%s3893 + $0x18] sm:$0xff] %v3880
      %3898 = vst [vmem:[%s3893 + $0x20] sm:$0xff] %v3881
      %3899 = vst [vmem:[%s3893 + $0x28] sm:$0xff] %v3882
      %3900 = vst [vmem:[%s3893 + $0x30] sm:$0xff] %v3883
      %3901 = vst [vmem:[%s3893 + $0x38] sm:$0xff] %v3884
      %3902 = vst [vmem:[%s3893 + $0x40] sm:$0xff] %v3885
      %3903 = vst [vmem:[%s3893 + $0x48] sm:$0xff] %v3886
      %3904 = vst [vmem:[%s3893 + $0x50] sm:$0xff] %v3887
      %3905 = vst [vmem:[%s3893 + $0x58] sm:$0xff] %v3888
      %3906 = vst [vmem:[%s3893 + $0x60] sm:$0xff] %v3889
      %3907 = vst [vmem:[%s3893 + $0x68] sm:$0xff] %v3890
      %3908 = vst [vmem:[%s3893 + $0x70] sm:$0xff] %v3891
      %3909 = vst [vmem:[%s3893 + $0x78] sm:$0xff] %v3892
      %3910 = vrot.lane.b32.xlu0 %v3877, 17
      %v3911 = vpop.permute.xlu0 %3910
      %3912 = vrot.lane.b32.xlu0 %v3881, 17
      %v3913 = vpop.permute.xlu0 %3912
      %3914 = vrot.lane.b32.xlu0 %v3885, 17
      %v3915 = vpop.permute.xlu0 %3914
      %3916 = vrot.lane.b32.xlu0 %v3889, 17
      %v3917 = vpop.permute.xlu0 %3916
      %3918 = vrot.lane.b32.xlu0 %v3878, 17
      %v3919 = vpop.permute.xlu0 %3918
      %3920 = vrot.lane.b32.xlu0 %v3882, 17
      %v3921 = vpop.permute.xlu0 %3920
      %3922 = vrot.lane.b32.xlu0 %v3886, 17
      %v3923 = vpop.permute.xlu0 %3922
      %3924 = vrot.lane.b32.xlu0 %v3890, 17
      %v3925 = vpop.permute.xlu0 %3924
      %3926 = vrot.lane.b32.xlu0 %v3879, 17
      %v3927 = vpop.permute.xlu0 %3926
      %3928 = vrot.lane.b32.xlu0 %v3883, 17
      %v3929 = vpop.permute.xlu0 %3928
      %3930 = vrot.lane.b32.xlu0 %v3887, 17
      %v3931 = vpop.permute.xlu0 %3930
      %3932 = vrot.lane.b32.xlu0 %v3891, 17
      %v3933 = vpop.permute.xlu0 %3932
      %3934 = vrot.lane.b32.xlu0 %v3880, 17
      %v3935 = vpop.permute.xlu0 %3934
      %3936 = vrot.lane.b32.xlu0 %v3884, 17
      %v3937 = vpop.permute.xlu0 %3936
      %3938 = vrot.lane.b32.xlu0 %v3888, 17
      %v3939 = vpop.permute.xlu0 %3938
      %3940 = vrot.lane.b32.xlu0 %v3892, 17
      %v3941 = vpop.permute.xlu0 %3940
      %v3942 = vsel %vm702, %v3927, %v3935
      %v3943 = vsel %vm702, %v3929, %v3937
      %v3944 = vsel %vm702, %v3931, %v3939
      %v3945 = vsel %vm702, %v3933, %v3941
      %v3946 = vsel %vm702, %v3919, %v3927
      %v3947 = vsel %vm702, %v3921, %v3929
      %v3948 = vsel %vm702, %v3923, %v3931
      %v3949 = vsel %vm702, %v3925, %v3933
      %v3950 = vsel %vm702, %v3911, %v3919
      %v3951 = vsel %vm702, %v3913, %v3921
      %v3952 = vsel %vm702, %v3915, %v3923
      %v3953 = vsel %vm702, %v3917, %v3925
      %v3954 = vsel %vm702, %v3935, %v3911
      %v3955 = vsel %vm702, %v3937, %v3913
      %v3956 = vsel %vm702, %v3939, %v3915
      %v3957 = vsel %vm702, %v3941, %v3917
      %v3958 = vld [vmem:[%s3] ss:$8 sm:$0xf]
      %v3960 = vperm.slane %v3958, 0
      %v3961 = vperm.slane %v3958, 1
      %v3962 = vperm.slane %v3958, 2
      %v3963 = vperm.slane %v3958, 3
      %v3968 = vmul.f32 %v3954, %v3960
      %v3969 = vmul.f32 %v3950, %v3961
      %v3970 = vmul.f32 %v3946, %v3962
      %v3971 = vmul.f32 %v3942, %v3963
      %v3972 = vmul.f32 %v3955, %v3960
      %v3973 = vmul.f32 %v3951, %v3961
      %v3974 = vmul.f32 %v3947, %v3962
      %v3975 = vmul.f32 %v3943, %v3963
      %v3976 = vmul.f32 %v3956, %v3960
      %v3977 = vmul.f32 %v3952, %v3961
      %v3978 = vmul.f32 %v3948, %v3962
      %v3979 = vmul.f32 %v3944, %v3963
      %v3980 = vmul.f32 %v3957, %v3960
      %v3981 = vmul.f32 %v3953, %v3961
      %v3982 = vmul.f32 %v3949, %v3962
      %v3983 = vmul.f32 %v3945, %v3963
      %3984 = vst [vmem:[#allocation2] sm:$0xff] %v3968
      %3985 = vst [vmem:[#allocation2 + $0x8] sm:$0xff] %v3969
      %3986 = vst [vmem:[#allocation2 + $0x10] sm:$0xff] %v3970
      %3987 = vst [vmem:[#allocation2 + $0x18] sm:$0xff] %v3971
      %3988 = vst [vmem:[#allocation2 + $0x20] sm:$0xff] %v3972
      %3989 = vst [vmem:[#allocation2 + $0x28] sm:$0xff] %v3973
      %3990 = vst [vmem:[#allocation2 + $0x30] sm:$0xff] %v3974
      %3991 = vst [vmem:[#allocation2 + $0x38] sm:$0xff] %v3975
      %3992 = vst [vmem:[#allocation2 + $0x40] sm:$0xff] %v3976
      %3993 = vst [vmem:[#allocation2 + $0x48] sm:$0xff] %v3977
      %3994 = vst [vmem:[#allocation2 + $0x50] sm:$0xff] %v3978
      %3995 = vst [vmem:[#allocation2 + $0x58] sm:$0xff] %v3979
      %3996 = vst [vmem:[#allocation2 + $0x60] sm:$0xff] %v3980
      %3997 = vst [vmem:[#allocation2 + $0x68] sm:$0xff] %v3981
      %3998 = vst [vmem:[#allocation2 + $0x70] sm:$0xff] %v3982
      %3999 = vst [vmem:[#allocation2 + $0x78] sm:$0xff] %v3983
      %4000 = vrot.lane.b32.xlu0 %v3877, 16
      %v4001 = vpop.permute.xlu0 %4000
      %4002 = vrot.lane.b32.xlu0 %v3881, 16
      %v4003 = vpop.permute.xlu0 %4002
      %4004 = vrot.lane.b32.xlu0 %v3885, 16
      %v4005 = vpop.permute.xlu0 %4004
      %4006 = vrot.lane.b32.xlu0 %v3889, 16
      %v4007 = vpop.permute.xlu0 %4006
      %4008 = vrot.lane.b32.xlu0 %v3878, 16
      %v4009 = vpop.permute.xlu0 %4008
      %4010 = vrot.lane.b32.xlu0 %v3882, 16
      %v4011 = vpop.permute.xlu0 %4010
      %4012 = vrot.lane.b32.xlu0 %v3886, 16
      %v4013 = vpop.permute.xlu0 %4012
      %4014 = vrot.lane.b32.xlu0 %v3890, 16
      %v4015 = vpop.permute.xlu0 %4014
      %4016 = vrot.lane.b32.xlu0 %v3879, 16
      %v4017 = vpop.permute.xlu0 %4016
      %4018 = vrot.lane.b32.xlu0 %v3883, 16
      %v4019 = vpop.permute.xlu0 %4018
      %4020 = vrot.lane.b32.xlu0 %v3887, 16
      %v4021 = vpop.permute.xlu0 %4020
      %4022 = vrot.lane.b32.xlu0 %v3891, 16
      %v4023 = vpop.permute.xlu0 %4022
      %4024 = vrot.lane.b32.xlu0 %v3880, 16
      %v4025 = vpop.permute.xlu0 %4024
      %4026 = vrot.lane.b32.xlu0 %v3884, 16
      %v4027 = vpop.permute.xlu0 %4026
      %4028 = vrot.lane.b32.xlu0 %v3888, 16
      %v4029 = vpop.permute.xlu0 %4028
      %4030 = vrot.lane.b32.xlu0 %v3892, 16
      %v4031 = vpop.permute.xlu0 %4030
      %v4032 = vsel %vm729, %v4017, %v4025
      %v4033 = vsel %vm729, %v4019, %v4027
      %v4034 = vsel %vm729, %v4021, %v4029
      %v4035 = vsel %vm729, %v4023, %v4031
      %v4036 = vsel %vm729, %v4009, %v4017
      %v4037 = vsel %vm729, %v4011, %v4019
      %v4038 = vsel %vm729, %v4013, %v4021
      %v4039 = vsel %vm729, %v4015, %v4023
      %v4040 = vsel %vm729, %v4001, %v4009
      %v4041 = vsel %vm729, %v4003, %v4011
      %v4042 = vsel %vm729, %v4005, %v4013
      %v4043 = vsel %vm729, %v4007, %v4015
      %v4044 = vsel %vm729, %v4025, %v4001
      %v4045 = vsel %vm729, %v4027, %v4003
      %v4046 = vsel %vm729, %v4029, %v4005
      %v4047 = vsel %vm729, %v4031, %v4007
      %v4048 = vld [vmem:[%s734] ss:$8 sm:$0xf]
      %v4050 = vperm.slane %v4048, 0
      %v4051 = vperm.slane %v4048, 1
      %v4052 = vperm.slane %v4048, 2
      %v4053 = vperm.slane %v4048, 3
      %v4058 = vmul.f32 %v4044, %v4050
      %v4059 = vmul.f32 %v4040, %v4051
      %v4060 = vmul.f32 %v4036, %v4052
      %v4061 = vmul.f32 %v4032, %v4053
      %v4062 = vmul.f32 %v4045, %v4050
      %v4063 = vmul.f32 %v4041, %v4051
      %v4064 = vmul.f32 %v4037, %v4052
      %v4065 = vmul.f32 %v4033, %v4053
      %v4066 = vmul.f32 %v4046, %v4050
      %v4067 = vmul.f32 %v4042, %v4051
      %v4068 = vmul.f32 %v4038, %v4052
      %v4069 = vmul.f32 %v4034, %v4053
      %v4070 = vmul.f32 %v4047, %v4050
      %v4071 = vmul.f32 %v4043, %v4051
      %v4072 = vmul.f32 %v4039, %v4052
      %v4073 = vmul.f32 %v4035, %v4053
      %4074 = vst [vmem:[#allocation2 + $0x80] sm:$0xff] %v4058
      %4075 = vst [vmem:[#allocation2 + $0x88] sm:$0xff] %v4059
      %4076 = vst [vmem:[#allocation2 + $0x90] sm:$0xff] %v4060
      %4077 = vst [vmem:[#allocation2 + $0x98] sm:$0xff] %v4061
      %4078 = vst [vmem:[#allocation2 + $0xa0] sm:$0xff] %v4062
      %4079 = vst [vmem:[#allocation2 + $0xa8] sm:$0xff] %v4063
      %4080 = vst [vmem:[#allocation2 + $0xb0] sm:$0xff] %v4064
      %4081 = vst [vmem:[#allocation2 + $0xb8] sm:$0xff] %v4065
      %4082 = vst [vmem:[#allocation2 + $0xc0] sm:$0xff] %v4066
      %4083 = vst [vmem:[#allocation2 + $0xc8] sm:$0xff] %v4067
      %4084 = vst [vmem:[#allocation2 + $0xd0] sm:$0xff] %v4068
      %4085 = vst [vmem:[#allocation2 + $0xd8] sm:$0xff] %v4069
      %4086 = vst [vmem:[#allocation2 + $0xe0] sm:$0xff] %v4070
      %4087 = vst [vmem:[#allocation2 + $0xe8] sm:$0xff] %v4071
      %4088 = vst [vmem:[#allocation2 + $0xf0] sm:$0xff] %v4072
      %4089 = vst [vmem:[#allocation2 + $0xf8] sm:$0xff] %v4073
      %4090 = vrot.lane.b32.xlu0 %v3877, 15
      %v4091 = vpop.permute.xlu0 %4090
      %4092 = vrot.lane.b32.xlu0 %v3881, 15
      %v4093 = vpop.permute.xlu0 %4092
      %4094 = vrot.lane.b32.xlu0 %v3885, 15
      %v4095 = vpop.permute.xlu0 %4094
      %4096 = vrot.lane.b32.xlu0 %v3889, 15
      %v4097 = vpop.permute.xlu0 %4096
      %4098 = vrot.lane.b32.xlu0 %v3878, 15
      %v4099 = vpop.permute.xlu0 %4098
      %4100 = vrot.lane.b32.xlu0 %v3882, 15
      %v4101 = vpop.permute.xlu0 %4100
      %4102 = vrot.lane.b32.xlu0 %v3886, 15
      %v4103 = vpop.permute.xlu0 %4102
      %4104 = vrot.lane.b32.xlu0 %v3890, 15
      %v4105 = vpop.permute.xlu0 %4104
      %4106 = vrot.lane.b32.xlu0 %v3879, 15
      %v4107 = vpop.permute.xlu0 %4106
      %4108 = vrot.lane.b32.xlu0 %v3883, 15
      %v4109 = vpop.permute.xlu0 %4108
      %4110 = vrot.lane.b32.xlu0 %v3887, 15
      %v4111 = vpop.permute.xlu0 %4110
      %4112 = vrot.lane.b32.xlu0 %v3891, 15
      %v4113 = vpop.permute.xlu0 %4112
      %4114 = vrot.lane.b32.xlu0 %v3880, 15
      %v4115 = vpop.permute.xlu0 %4114
      %4116 = vrot.lane.b32.xlu0 %v3884, 15
      %v4117 = vpop.permute.xlu0 %4116
      %4118 = vrot.lane.b32.xlu0 %v3888, 15
      %v4119 = vpop.permute.xlu0 %4118
      %4120 = vrot.lane.b32.xlu0 %v3892, 15
      %v4121 = vpop.permute.xlu0 %4120
      %v4122 = vsel %vm757, %v4107, %v4115
      %v4123 = vsel %vm757, %v4109, %v4117
      %v4124 = vsel %vm757, %v4111, %v4119
      %v4125 = vsel %vm757, %v4113, %v4121
      %v4126 = vsel %vm757, %v4099, %v4107
      %v4127 = vsel %vm757, %v4101, %v4109
      %v4128 = vsel %vm757, %v4103, %v4111
      %v4129 = vsel %vm757, %v4105, %v4113
      %v4130 = vsel %vm757, %v4091, %v4099
      %v4131 = vsel %vm757, %v4093, %v4101
      %v4132 = vsel %vm757, %v4095, %v4103
      %v4133 = vsel %vm757, %v4097, %v4105
      %v4134 = vsel %vm757, %v4115, %v4091
      %v4135 = vsel %vm757, %v4117, %v4093
      %v4136 = vsel %vm757, %v4119, %v4095
      %v4137 = vsel %vm757, %v4121, %v4097
      %v4138 = vld [vmem:[%s762] ss:$8 sm:$0xf]
      %v4140 = vperm.slane %v4138, 0
      %v4141 = vperm.slane %v4138, 1
      %v4142 = vperm.slane %v4138, 2
      %v4143 = vperm.slane %v4138, 3
      %v4148 = vmul.f32 %v4134, %v4140
      %v4149 = vmul.f32 %v4130, %v4141
      %v4150 = vmul.f32 %v4126, %v4142
      %v4151 = vmul.f32 %v4122, %v4143
      %v4152 = vmul.f32 %v4135, %v4140
      %v4153 = vmul.f32 %v4131, %v4141
      %v4154 = vmul.f32 %v4127, %v4142
      %v4155 = vmul.f32 %v4123, %v4143
      %v4156 = vmul.f32 %v4136, %v4140
      %v4157 = vmul.f32 %v4132, %v4141
      %v4158 = vmul.f32 %v4128, %v4142
      %v4159 = vmul.f32 %v4124, %v4143
      %v4160 = vmul.f32 %v4137, %v4140
      %v4161 = vmul.f32 %v4133, %v4141
      %v4162 = vmul.f32 %v4129, %v4142
      %v4163 = vmul.f32 %v4125, %v4143
      %4164 = vst [vmem:[#allocation2 + $0x100] sm:$0xff] %v4148
      %4165 = vst [vmem:[#allocation2 + $0x108] sm:$0xff] %v4149
      %4166 = vst [vmem:[#allocation2 + $0x110] sm:$0xff] %v4150
      %4167 = vst [vmem:[#allocation2 + $0x118] sm:$0xff] %v4151
      %4168 = vst [vmem:[#allocation2 + $0x120] sm:$0xff] %v4152
      %4169 = vst [vmem:[#allocation2 + $0x128] sm:$0xff] %v4153
      %4170 = vst [vmem:[#allocation2 + $0x130] sm:$0xff] %v4154
      %4171 = vst [vmem:[#allocation2 + $0x138] sm:$0xff] %v4155
      %4172 = vst [vmem:[#allocation2 + $0x140] sm:$0xff] %v4156
      %4173 = vst [vmem:[#allocation2 + $0x148] sm:$0xff] %v4157
      %4174 = vst [vmem:[#allocation2 + $0x150] sm:$0xff] %v4158
      %4175 = vst [vmem:[#allocation2 + $0x158] sm:$0xff] %v4159
      %4176 = vst [vmem:[#allocation2 + $0x160] sm:$0xff] %v4160
      %4177 = vst [vmem:[#allocation2 + $0x168] sm:$0xff] %v4161
      %4178 = vst [vmem:[#allocation2 + $0x170] sm:$0xff] %v4162
      %4179 = vst [vmem:[#allocation2 + $0x178] sm:$0xff] %v4163
      %4180 = vrot.lane.b32.xlu0 %v3877, 1
      %v4181 = vpop.permute.xlu0 %4180
      %4182 = vrot.lane.b32.xlu0 %v3881, 1
      %v4183 = vpop.permute.xlu0 %4182
      %4184 = vrot.lane.b32.xlu0 %v3885, 1
      %v4185 = vpop.permute.xlu0 %4184
      %4186 = vrot.lane.b32.xlu0 %v3889, 1
      %v4187 = vpop.permute.xlu0 %4186
      %4188 = vrot.lane.b32.xlu0 %v3878, 1
      %v4189 = vpop.permute.xlu0 %4188
      %4190 = vrot.lane.b32.xlu0 %v3882, 1
      %v4191 = vpop.permute.xlu0 %4190
      %4192 = vrot.lane.b32.xlu0 %v3886, 1
      %v4193 = vpop.permute.xlu0 %4192
      %4194 = vrot.lane.b32.xlu0 %v3890, 1
      %v4195 = vpop.permute.xlu0 %4194
      %4196 = vrot.lane.b32.xlu0 %v3879, 1
      %v4197 = vpop.permute.xlu0 %4196
      %4198 = vrot.lane.b32.xlu0 %v3883, 1
      %v4199 = vpop.permute.xlu0 %4198
      %4200 = vrot.lane.b32.xlu0 %v3887, 1
      %v4201 = vpop.permute.xlu0 %4200
      %4202 = vrot.lane.b32.xlu0 %v3891, 1
      %v4203 = vpop.permute.xlu0 %4202
      %4204 = vrot.lane.b32.xlu0 %v3880, 1
      %v4205 = vpop.permute.xlu0 %4204
      %4206 = vrot.lane.b32.xlu0 %v3884, 1
      %v4207 = vpop.permute.xlu0 %4206
      %4208 = vrot.lane.b32.xlu0 %v3888, 1
      %v4209 = vpop.permute.xlu0 %4208
      %4210 = vrot.lane.b32.xlu0 %v3892, 1
      %v4211 = vpop.permute.xlu0 %4210
      %v4212 = vsel %vm785, %v4197, %v4205
      %v4213 = vsel %vm785, %v4199, %v4207
      %v4214 = vsel %vm785, %v4201, %v4209
      %v4215 = vsel %vm785, %v4203, %v4211
      %v4216 = vsel %vm785, %v4189, %v4197
      %v4217 = vsel %vm785, %v4191, %v4199
      %v4218 = vsel %vm785, %v4193, %v4201
      %v4219 = vsel %vm785, %v4195, %v4203
      %v4220 = vsel %vm785, %v4181, %v4189
      %v4221 = vsel %vm785, %v4183, %v4191
      %v4222 = vsel %vm785, %v4185, %v4193
      %v4223 = vsel %vm785, %v4187, %v4195
      %v4224 = vsel %vm785, %v4205, %v4181
      %v4225 = vsel %vm785, %v4207, %v4183
      %v4226 = vsel %vm785, %v4209, %v4185
      %v4227 = vsel %vm785, %v4211, %v4187
      %v4228 = vld [vmem:[%s790] ss:$8 sm:$0xf]
      %v4230 = vperm.slane %v4228, 0
      %v4231 = vperm.slane %v4228, 1
      %v4232 = vperm.slane %v4228, 2
      %v4233 = vperm.slane %v4228, 3
      %v4238 = vmul.f32 %v4224, %v4230
      %v4239 = vmul.f32 %v4220, %v4231
      %v4240 = vmul.f32 %v4216, %v4232
      %v4241 = vmul.f32 %v4212, %v4233
      %v4242 = vmul.f32 %v4225, %v4230
      %v4243 = vmul.f32 %v4221, %v4231
      %v4244 = vmul.f32 %v4217, %v4232
      %v4245 = vmul.f32 %v4213, %v4233
      %v4246 = vmul.f32 %v4226, %v4230
      %v4247 = vmul.f32 %v4222, %v4231
      %v4248 = vmul.f32 %v4218, %v4232
      %v4249 = vmul.f32 %v4214, %v4233
      %v4250 = vmul.f32 %v4227, %v4230
      %v4251 = vmul.f32 %v4223, %v4231
      %v4252 = vmul.f32 %v4219, %v4232
      %v4253 = vmul.f32 %v4215, %v4233
      %4254 = vst [vmem:[#allocation2 + $0x180] sm:$0xff] %v4238
      %4255 = vst [vmem:[#allocation2 + $0x188] sm:$0xff] %v4239
      %4256 = vst [vmem:[#allocation2 + $0x190] sm:$0xff] %v4240
      %4257 = vst [vmem:[#allocation2 + $0x198] sm:$0xff] %v4241
      %4258 = vst [vmem:[#allocation2 + $0x1a0] sm:$0xff] %v4242
      %4259 = vst [vmem:[#allocation2 + $0x1a8] sm:$0xff] %v4243
      %4260 = vst [vmem:[#allocation2 + $0x1b0] sm:$0xff] %v4244
      %4261 = vst [vmem:[#allocation2 + $0x1b8] sm:$0xff] %v4245
      %4262 = vst [vmem:[#allocation2 + $0x1c0] sm:$0xff] %v4246
      %4263 = vst [vmem:[#allocation2 + $0x1c8] sm:$0xff] %v4247
      %4264 = vst [vmem:[#allocation2 + $0x1d0] sm:$0xff] %v4248
      %4265 = vst [vmem:[#allocation2 + $0x1d8] sm:$0xff] %v4249
      %4266 = vst [vmem:[#allocation2 + $0x1e0] sm:$0xff] %v4250
      %4267 = vst [vmem:[#allocation2 + $0x1e8] sm:$0xff] %v4251
      %4268 = vst [vmem:[#allocation2 + $0x1f0] sm:$0xff] %v4252
      %4269 = vst [vmem:[#allocation2 + $0x1f8] sm:$0xff] %v4253
      %v4270 = vld [vmem:[%s805] ss:$8 sm:$0xf]
      %v4272 = vperm.slane %v4270, 0
      %v4273 = vperm.slane %v4270, 1
      %v4274 = vperm.slane %v4270, 2
      %v4275 = vperm.slane %v4270, 3
      %v4280 = vmul.f32 %v3877, %v4272
      %v4281 = vmul.f32 %v3878, %v4273
      %v4282 = vmul.f32 %v3879, %v4274
      %v4283 = vmul.f32 %v3880, %v4275
      %v4284 = vmul.f32 %v3881, %v4272
      %v4285 = vmul.f32 %v3882, %v4273
      %v4286 = vmul.f32 %v3883, %v4274
      %v4287 = vmul.f32 %v3884, %v4275
      %v4288 = vmul.f32 %v3885, %v4272
      %v4289 = vmul.f32 %v3886, %v4273
      %v4290 = vmul.f32 %v3887, %v4274
      %v4291 = vmul.f32 %v3888, %v4275
      %v4292 = vmul.f32 %v3889, %v4272
      %v4293 = vmul.f32 %v3890, %v4273
      %v4294 = vmul.f32 %v3891, %v4274
      %v4295 = vmul.f32 %v3892, %v4275
      %4296 = vst [vmem:[#allocation2 + $0x200] sm:$0xff] %v4280
      %4297 = vst [vmem:[#allocation2 + $0x208] sm:$0xff] %v4281
      %4298 = vst [vmem:[#allocation2 + $0x210] sm:$0xff] %v4282
      %4299 = vst [vmem:[#allocation2 + $0x218] sm:$0xff] %v4283
      %4300 = vst [vmem:[#allocation2 + $0x220] sm:$0xff] %v4284
      %4301 = vst [vmem:[#allocation2 + $0x228] sm:$0xff] %v4285
      %4302 = vst [vmem:[#allocation2 + $0x230] sm:$0xff] %v4286
      %4303 = vst [vmem:[#allocation2 + $0x238] sm:$0xff] %v4287
      %4304 = vst [vmem:[#allocation2 + $0x240] sm:$0xff] %v4288
      %4305 = vst [vmem:[#allocation2 + $0x248] sm:$0xff] %v4289
      %4306 = vst [vmem:[#allocation2 + $0x250] sm:$0xff] %v4290
      %4307 = vst [vmem:[#allocation2 + $0x258] sm:$0xff] %v4291
      %4308 = vst [vmem:[#allocation2 + $0x260] sm:$0xff] %v4292
      %4309 = vst [vmem:[#allocation2 + $0x268] sm:$0xff] %v4293
      %4310 = vst [vmem:[#allocation2 + $0x270] sm:$0xff] %v4294
      %4311 = vst [vmem:[#allocation2 + $0x278] sm:$0xff] %v4295
      %4312 = vrot.lane.b32.xlu0 %v3877, 127
      %v4313 = vpop.permute.xlu0 %4312
      %4314 = vrot.lane.b32.xlu0 %v3881, 127
      %v4315 = vpop.permute.xlu0 %4314
      %4316 = vrot.lane.b32.xlu0 %v3885, 127
      %v4317 = vpop.permute.xlu0 %4316
      %4318 = vrot.lane.b32.xlu0 %v3889, 127
      %v4319 = vpop.permute.xlu0 %4318
      %4320 = vrot.lane.b32.xlu0 %v3878, 127
      %v4321 = vpop.permute.xlu0 %4320
      %4322 = vrot.lane.b32.xlu0 %v3882, 127
      %v4323 = vpop.permute.xlu0 %4322
      %4324 = vrot.lane.b32.xlu0 %v3886, 127
      %v4325 = vpop.permute.xlu0 %4324
      %4326 = vrot.lane.b32.xlu0 %v3890, 127
      %v4327 = vpop.permute.xlu0 %4326
      %4328 = vrot.lane.b32.xlu0 %v3879, 127
      %v4329 = vpop.permute.xlu0 %4328
      %4330 = vrot.lane.b32.xlu0 %v3883, 127
      %v4331 = vpop.permute.xlu0 %4330
      %4332 = vrot.lane.b32.xlu0 %v3887, 127
      %v4333 = vpop.permute.xlu0 %4332
      %4334 = vrot.lane.b32.xlu0 %v3891, 127
      %v4335 = vpop.permute.xlu0 %4334
      %4336 = vrot.lane.b32.xlu0 %v3880, 127
      %v4337 = vpop.permute.xlu0 %4336
      %4338 = vrot.lane.b32.xlu0 %v3884, 127
      %v4339 = vpop.permute.xlu0 %4338
      %4340 = vrot.lane.b32.xlu0 %v3888, 127
      %v4341 = vpop.permute.xlu0 %4340
      %4342 = vrot.lane.b32.xlu0 %v3892, 127
      %v4343 = vpop.permute.xlu0 %4342
      %v4344 = vsel %vm816, %v4329, %v4337
      %v4345 = vsel %vm816, %v4331, %v4339
      %v4346 = vsel %vm816, %v4333, %v4341
      %v4347 = vsel %vm816, %v4335, %v4343
      %v4348 = vsel %vm816, %v4321, %v4329
      %v4349 = vsel %vm816, %v4323, %v4331
      %v4350 = vsel %vm816, %v4325, %v4333
      %v4351 = vsel %vm816, %v4327, %v4335
      %v4352 = vsel %vm816, %v4313, %v4321
      %v4353 = vsel %vm816, %v4315, %v4323
      %v4354 = vsel %vm816, %v4317, %v4325
      %v4355 = vsel %vm816, %v4319, %v4327
      %v4356 = vsel %vm816, %v4337, %v4313
      %v4357 = vsel %vm816, %v4339, %v4315
      %v4358 = vsel %vm816, %v4341, %v4317
      %v4359 = vsel %vm816, %v4343, %v4319
      %v4360 = vld [vmem:[%s821] ss:$8 sm:$0xf]
      %v4362 = vperm.slane %v4360, 0
      %v4363 = vperm.slane %v4360, 1
      %v4364 = vperm.slane %v4360, 2
      %v4365 = vperm.slane %v4360, 3
      %v4370 = vmul.f32 %v4352, %v4362
      %v4371 = vmul.f32 %v4348, %v4363
      %v4372 = vmul.f32 %v4344, %v4364
      %v4373 = vmul.f32 %v4356, %v4365
      %v4374 = vmul.f32 %v4353, %v4362
      %v4375 = vmul.f32 %v4349, %v4363
      %v4376 = vmul.f32 %v4345, %v4364
      %v4377 = vmul.f32 %v4357, %v4365
      %v4378 = vmul.f32 %v4354, %v4362
      %v4379 = vmul.f32 %v4350, %v4363
      %v4380 = vmul.f32 %v4346, %v4364
      %v4381 = vmul.f32 %v4358, %v4365
      %v4382 = vmul.f32 %v4355, %v4362
      %v4383 = vmul.f32 %v4351, %v4363
      %v4384 = vmul.f32 %v4347, %v4364
      %v4385 = vmul.f32 %v4359, %v4365
      %4386 = vst [vmem:[#allocation2 + $0x280] sm:$0xff] %v4370
      %4387 = vst [vmem:[#allocation2 + $0x288] sm:$0xff] %v4371
      %4388 = vst [vmem:[#allocation2 + $0x290] sm:$0xff] %v4372
      %4389 = vst [vmem:[#allocation2 + $0x298] sm:$0xff] %v4373
      %4390 = vst [vmem:[#allocation2 + $0x2a0] sm:$0xff] %v4374
      %4391 = vst [vmem:[#allocation2 + $0x2a8] sm:$0xff] %v4375
      %4392 = vst [vmem:[#allocation2 + $0x2b0] sm:$0xff] %v4376
      %4393 = vst [vmem:[#allocation2 + $0x2b8] sm:$0xff] %v4377
      %4394 = vst [vmem:[#allocation2 + $0x2c0] sm:$0xff] %v4378
      %4395 = vst [vmem:[#allocation2 + $0x2c8] sm:$0xff] %v4379
      %4396 = vst [vmem:[#allocation2 + $0x2d0] sm:$0xff] %v4380
      %4397 = vst [vmem:[#allocation2 + $0x2d8] sm:$0xff] %v4381
      %4398 = vst [vmem:[#allocation2 + $0x2e0] sm:$0xff] %v4382
      %4399 = vst [vmem:[#allocation2 + $0x2e8] sm:$0xff] %v4383
      %4400 = vst [vmem:[#allocation2 + $0x2f0] sm:$0xff] %v4384
      %4401 = vst [vmem:[#allocation2 + $0x2f8] sm:$0xff] %v4385
      %4402 = vrot.lane.b32.xlu0 %v3877, 113
      %v4403 = vpop.permute.xlu0 %4402
      %4404 = vrot.lane.b32.xlu0 %v3881, 113
      %v4405 = vpop.permute.xlu0 %4404
      %4406 = vrot.lane.b32.xlu0 %v3885, 113
      %v4407 = vpop.permute.xlu0 %4406
      %4408 = vrot.lane.b32.xlu0 %v3889, 113
      %v4409 = vpop.permute.xlu0 %4408
      %4410 = vrot.lane.b32.xlu0 %v3878, 113
      %v4411 = vpop.permute.xlu0 %4410
      %4412 = vrot.lane.b32.xlu0 %v3882, 113
      %v4413 = vpop.permute.xlu0 %4412
      %4414 = vrot.lane.b32.xlu0 %v3886, 113
      %v4415 = vpop.permute.xlu0 %4414
      %4416 = vrot.lane.b32.xlu0 %v3890, 113
      %v4417 = vpop.permute.xlu0 %4416
      %4418 = vrot.lane.b32.xlu0 %v3879, 113
      %v4419 = vpop.permute.xlu0 %4418
      %4420 = vrot.lane.b32.xlu0 %v3883, 113
      %v4421 = vpop.permute.xlu0 %4420
      %4422 = vrot.lane.b32.xlu0 %v3887, 113
      %v4423 = vpop.permute.xlu0 %4422
      %4424 = vrot.lane.b32.xlu0 %v3891, 113
      %v4425 = vpop.permute.xlu0 %4424
      %4426 = vrot.lane.b32.xlu0 %v3880, 113
      %v4427 = vpop.permute.xlu0 %4426
      %4428 = vrot.lane.b32.xlu0 %v3884, 113
      %v4429 = vpop.permute.xlu0 %4428
      %4430 = vrot.lane.b32.xlu0 %v3888, 113
      %v4431 = vpop.permute.xlu0 %4430
      %4432 = vrot.lane.b32.xlu0 %v3892, 113
      %v4433 = vpop.permute.xlu0 %4432
      %v4434 = vsel %vm844, %v4419, %v4427
      %v4435 = vsel %vm844, %v4421, %v4429
      %v4436 = vsel %vm844, %v4423, %v4431
      %v4437 = vsel %vm844, %v4425, %v4433
      %v4438 = vsel %vm844, %v4411, %v4419
      %v4439 = vsel %vm844, %v4413, %v4421
      %v4440 = vsel %vm844, %v4415, %v4423
      %v4441 = vsel %vm844, %v4417, %v4425
      %v4442 = vsel %vm844, %v4403, %v4411
      %v4443 = vsel %vm844, %v4405, %v4413
      %v4444 = vsel %vm844, %v4407, %v4415
      %v4445 = vsel %vm844, %v4409, %v4417
      %v4446 = vsel %vm844, %v4427, %v4403
      %v4447 = vsel %vm844, %v4429, %v4405
      %v4448 = vsel %vm844, %v4431, %v4407
      %v4449 = vsel %vm844, %v4433, %v4409
      %v4450 = vld [vmem:[%s849] ss:$8 sm:$0xf]
      %v4452 = vperm.slane %v4450, 0
      %v4453 = vperm.slane %v4450, 1
      %v4454 = vperm.slane %v4450, 2
      %v4455 = vperm.slane %v4450, 3
      %v4460 = vmul.f32 %v4442, %v4452
      %v4461 = vmul.f32 %v4438, %v4453
      %v4462 = vmul.f32 %v4434, %v4454
      %v4463 = vmul.f32 %v4446, %v4455
      %v4464 = vmul.f32 %v4443, %v4452
      %v4465 = vmul.f32 %v4439, %v4453
      %v4466 = vmul.f32 %v4435, %v4454
      %v4467 = vmul.f32 %v4447, %v4455
      %v4468 = vmul.f32 %v4444, %v4452
      %v4469 = vmul.f32 %v4440, %v4453
      %v4470 = vmul.f32 %v4436, %v4454
      %v4471 = vmul.f32 %v4448, %v4455
      %v4472 = vmul.f32 %v4445, %v4452
      %v4473 = vmul.f32 %v4441, %v4453
      %v4474 = vmul.f32 %v4437, %v4454
      %v4475 = vmul.f32 %v4449, %v4455
      %4476 = vst [vmem:[#allocation2 + $0x300] sm:$0xff] %v4460
      %4477 = vst [vmem:[#allocation2 + $0x308] sm:$0xff] %v4461
      %4478 = vst [vmem:[#allocation2 + $0x310] sm:$0xff] %v4462
      %4479 = vst [vmem:[#allocation2 + $0x318] sm:$0xff] %v4463
      %4480 = vst [vmem:[#allocation2 + $0x320] sm:$0xff] %v4464
      %4481 = vst [vmem:[#allocation2 + $0x328] sm:$0xff] %v4465
      %4482 = vst [vmem:[#allocation2 + $0x330] sm:$0xff] %v4466
      %4483 = vst [vmem:[#allocation2 + $0x338] sm:$0xff] %v4467
      %4484 = vst [vmem:[#allocation2 + $0x340] sm:$0xff] %v4468
      %4485 = vst [vmem:[#allocation2 + $0x348] sm:$0xff] %v4469
      %4486 = vst [vmem:[#allocation2 + $0x350] sm:$0xff] %v4470
      %4487 = vst [vmem:[#allocation2 + $0x358] sm:$0xff] %v4471
      %4488 = vst [vmem:[#allocation2 + $0x360] sm:$0xff] %v4472
      %4489 = vst [vmem:[#allocation2 + $0x368] sm:$0xff] %v4473
      %4490 = vst [vmem:[#allocation2 + $0x370] sm:$0xff] %v4474
      %4491 = vst [vmem:[#allocation2 + $0x378] sm:$0xff] %v4475
      %4492 = vrot.lane.b32.xlu0 %v3877, 112
      %v4493 = vpop.permute.xlu0 %4492
      %4494 = vrot.lane.b32.xlu0 %v3881, 112
      %v4495 = vpop.permute.xlu0 %4494
      %4496 = vrot.lane.b32.xlu0 %v3885, 112
      %v4497 = vpop.permute.xlu0 %4496
      %4498 = vrot.lane.b32.xlu0 %v3889, 112
      %v4499 = vpop.permute.xlu0 %4498
      %4500 = vrot.lane.b32.xlu0 %v3878, 112
      %v4501 = vpop.permute.xlu0 %4500
      %4502 = vrot.lane.b32.xlu0 %v3882, 112
      %v4503 = vpop.permute.xlu0 %4502
      %4504 = vrot.lane.b32.xlu0 %v3886, 112
      %v4505 = vpop.permute.xlu0 %4504
      %4506 = vrot.lane.b32.xlu0 %v3890, 112
      %v4507 = vpop.permute.xlu0 %4506
      %4508 = vrot.lane.b32.xlu0 %v3879, 112
      %v4509 = vpop.permute.xlu0 %4508
      %4510 = vrot.lane.b32.xlu0 %v3883, 112
      %v4511 = vpop.permute.xlu0 %4510
      %4512 = vrot.lane.b32.xlu0 %v3887, 112
      %v4513 = vpop.permute.xlu0 %4512
      %4514 = vrot.lane.b32.xlu0 %v3891, 112
      %v4515 = vpop.permute.xlu0 %4514
      %4516 = vrot.lane.b32.xlu0 %v3880, 112
      %v4517 = vpop.permute.xlu0 %4516
      %4518 = vrot.lane.b32.xlu0 %v3884, 112
      %v4519 = vpop.permute.xlu0 %4518
      %4520 = vrot.lane.b32.xlu0 %v3888, 112
      %v4521 = vpop.permute.xlu0 %4520
      %4522 = vrot.lane.b32.xlu0 %v3892, 112
      %v4523 = vpop.permute.xlu0 %4522
      %v4524 = vsel %vm872, %v4509, %v4517
      %v4525 = vsel %vm872, %v4511, %v4519
      %v4526 = vsel %vm872, %v4513, %v4521
      %v4527 = vsel %vm872, %v4515, %v4523
      %v4528 = vsel %vm872, %v4501, %v4509
      %v4529 = vsel %vm872, %v4503, %v4511
      %v4530 = vsel %vm872, %v4505, %v4513
      %v4531 = vsel %vm872, %v4507, %v4515
      %v4532 = vsel %vm872, %v4493, %v4501
      %v4533 = vsel %vm872, %v4495, %v4503
      %v4534 = vsel %vm872, %v4497, %v4505
      %v4535 = vsel %vm872, %v4499, %v4507
      %v4536 = vsel %vm872, %v4517, %v4493
      %v4537 = vsel %vm872, %v4519, %v4495
      %v4538 = vsel %vm872, %v4521, %v4497
      %v4539 = vsel %vm872, %v4523, %v4499
      %v4540 = vld [vmem:[%s877] ss:$8 sm:$0xf]
      %v4542 = vperm.slane %v4540, 0
      %v4543 = vperm.slane %v4540, 1
      %v4544 = vperm.slane %v4540, 2
      %v4545 = vperm.slane %v4540, 3
      %v4550 = vmul.f32 %v4532, %v4542
      %v4551 = vmul.f32 %v4528, %v4543
      %v4552 = vmul.f32 %v4524, %v4544
      %v4553 = vmul.f32 %v4536, %v4545
      %v4554 = vmul.f32 %v4533, %v4542
      %v4555 = vmul.f32 %v4529, %v4543
      %v4556 = vmul.f32 %v4525, %v4544
      %v4557 = vmul.f32 %v4537, %v4545
      %v4558 = vmul.f32 %v4534, %v4542
      %v4559 = vmul.f32 %v4530, %v4543
      %v4560 = vmul.f32 %v4526, %v4544
      %v4561 = vmul.f32 %v4538, %v4545
      %v4562 = vmul.f32 %v4535, %v4542
      %v4563 = vmul.f32 %v4531, %v4543
      %v4564 = vmul.f32 %v4527, %v4544
      %v4565 = vmul.f32 %v4539, %v4545
      %4566 = vst [vmem:[#allocation2 + $0x380] sm:$0xff] %v4550
      %4567 = vst [vmem:[#allocation2 + $0x388] sm:$0xff] %v4551
      %4568 = vst [vmem:[#allocation2 + $0x390] sm:$0xff] %v4552
      %4569 = vst [vmem:[#allocation2 + $0x398] sm:$0xff] %v4553
      %4570 = vst [vmem:[#allocation2 + $0x3a0] sm:$0xff] %v4554
      %4571 = vst [vmem:[#allocation2 + $0x3a8] sm:$0xff] %v4555
      %4572 = vst [vmem:[#allocation2 + $0x3b0] sm:$0xff] %v4556
      %4573 = vst [vmem:[#allocation2 + $0x3b8] sm:$0xff] %v4557
      %4574 = vst [vmem:[#allocation2 + $0x3c0] sm:$0xff] %v4558
      %4575 = vst [vmem:[#allocation2 + $0x3c8] sm:$0xff] %v4559
      %4576 = vst [vmem:[#allocation2 + $0x3d0] sm:$0xff] %v4560
      %4577 = vst [vmem:[#allocation2 + $0x3d8] sm:$0xff] %v4561
      %4578 = vst [vmem:[#allocation2 + $0x3e0] sm:$0xff] %v4562
      %4579 = vst [vmem:[#allocation2 + $0x3e8] sm:$0xff] %v4563
      %4580 = vst [vmem:[#allocation2 + $0x3f0] sm:$0xff] %v4564
      %4581 = vst [vmem:[#allocation2 + $0x3f8] sm:$0xff] %v4565
      %4582 = vrot.lane.b32.xlu0 %v3877, 111
      %v4583 = vpop.permute.xlu0 %4582
      %4584 = vrot.lane.b32.xlu0 %v3881, 111
      %v4585 = vpop.permute.xlu0 %4584
      %4586 = vrot.lane.b32.xlu0 %v3885, 111
      %v4587 = vpop.permute.xlu0 %4586
      %4588 = vrot.lane.b32.xlu0 %v3889, 111
      %v4589 = vpop.permute.xlu0 %4588
      %4590 = vrot.lane.b32.xlu0 %v3878, 111
      %v4591 = vpop.permute.xlu0 %4590
      %4592 = vrot.lane.b32.xlu0 %v3882, 111
      %v4593 = vpop.permute.xlu0 %4592
      %4594 = vrot.lane.b32.xlu0 %v3886, 111
      %v4595 = vpop.permute.xlu0 %4594
      %4596 = vrot.lane.b32.xlu0 %v3890, 111
      %v4597 = vpop.permute.xlu0 %4596
      %4598 = vrot.lane.b32.xlu0 %v3879, 111
      %v4599 = vpop.permute.xlu0 %4598
      %4600 = vrot.lane.b32.xlu0 %v3883, 111
      %v4601 = vpop.permute.xlu0 %4600
      %4602 = vrot.lane.b32.xlu0 %v3887, 111
      %v4603 = vpop.permute.xlu0 %4602
      %4604 = vrot.lane.b32.xlu0 %v3891, 111
      %v4605 = vpop.permute.xlu0 %4604
      %4606 = vrot.lane.b32.xlu0 %v3880, 111
      %v4607 = vpop.permute.xlu0 %4606
      %4608 = vrot.lane.b32.xlu0 %v3884, 111
      %v4609 = vpop.permute.xlu0 %4608
      %4610 = vrot.lane.b32.xlu0 %v3888, 111
      %v4611 = vpop.permute.xlu0 %4610
      %4612 = vrot.lane.b32.xlu0 %v3892, 111
      %v4613 = vpop.permute.xlu0 %4612
      %v4614 = vsel %vm900, %v4599, %v4607
      %v4615 = vsel %vm900, %v4601, %v4609
      %v4616 = vsel %vm900, %v4603, %v4611
      %v4617 = vsel %vm900, %v4605, %v4613
      %v4618 = vsel %vm900, %v4591, %v4599
      %v4619 = vsel %vm900, %v4593, %v4601
      %v4620 = vsel %vm900, %v4595, %v4603
      %v4621 = vsel %vm900, %v4597, %v4605
      %v4622 = vsel %vm900, %v4583, %v4591
      %v4623 = vsel %vm900, %v4585, %v4593
      %v4624 = vsel %vm900, %v4587, %v4595
      %v4625 = vsel %vm900, %v4589, %v4597
      %v4626 = vsel %vm900, %v4607, %v4583
      %v4627 = vsel %vm900, %v4609, %v4585
      %v4628 = vsel %vm900, %v4611, %v4587
      %v4629 = vsel %vm900, %v4613, %v4589
      %v4630 = vld [vmem:[%s905] ss:$8 sm:$0xf]
      %v4632 = vperm.slane %v4630, 0
      %v4633 = vperm.slane %v4630, 1
      %v4634 = vperm.slane %v4630, 2
      %v4635 = vperm.slane %v4630, 3
      %v4640 = vmul.f32 %v4622, %v4632
      %v4641 = vmul.f32 %v4618, %v4633
      %v4642 = vmul.f32 %v4614, %v4634
      %v4643 = vmul.f32 %v4626, %v4635
      %v4644 = vmul.f32 %v4623, %v4632
      %v4645 = vmul.f32 %v4619, %v4633
      %v4646 = vmul.f32 %v4615, %v4634
      %v4647 = vmul.f32 %v4627, %v4635
      %v4648 = vmul.f32 %v4624, %v4632
      %v4649 = vmul.f32 %v4620, %v4633
      %v4650 = vmul.f32 %v4616, %v4634
      %v4651 = vmul.f32 %v4628, %v4635
      %v4652 = vmul.f32 %v4625, %v4632
      %v4653 = vmul.f32 %v4621, %v4633
      %v4654 = vmul.f32 %v4617, %v4634
      %v4655 = vmul.f32 %v4629, %v4635
      %4656 = vst [vmem:[#allocation2 + $0x400] sm:$0xff] %v4640
      %4657 = vst [vmem:[#allocation2 + $0x408] sm:$0xff] %v4641
      %4658 = vst [vmem:[#allocation2 + $0x410] sm:$0xff] %v4642
      %4659 = vst [vmem:[#allocation2 + $0x418] sm:$0xff] %v4643
      %4660 = vst [vmem:[#allocation2 + $0x420] sm:$0xff] %v4644
      %4661 = vst [vmem:[#allocation2 + $0x428] sm:$0xff] %v4645
      %4662 = vst [vmem:[#allocation2 + $0x430] sm:$0xff] %v4646
      %4663 = vst [vmem:[#allocation2 + $0x438] sm:$0xff] %v4647
      %4664 = vst [vmem:[#allocation2 + $0x440] sm:$0xff] %v4648
      %4665 = vst [vmem:[#allocation2 + $0x448] sm:$0xff] %v4649
      %4666 = vst [vmem:[#allocation2 + $0x450] sm:$0xff] %v4650
      %4667 = vst [vmem:[#allocation2 + $0x458] sm:$0xff] %v4651
      %4668 = vst [vmem:[#allocation2 + $0x460] sm:$0xff] %v4652
      %4669 = vst [vmem:[#allocation2 + $0x468] sm:$0xff] %v4653
      %4670 = vst [vmem:[#allocation2 + $0x470] sm:$0xff] %v4654
      %4671 = vst [vmem:[#allocation2 + $0x478] sm:$0xff] %v4655
      %s4672 = scalar_lea.vmem %s636, 192
      %v4673 = vld [vmem:[%s4672] sm:$0xff]
      %v4674 = vld [vmem:[%s4672 + $0x8] sm:$0xff]
      %v4675 = vld [vmem:[%s4672 + $0x10] sm:$0xff]
      %v4676 = vld [vmem:[%s4672 + $0x18] sm:$0xff]
      %v4677 = vld [vmem:[%s4672 + $0x20] sm:$0xff]
      %v4678 = vld [vmem:[%s4672 + $0x28] sm:$0xff]
      %v4679 = vld [vmem:[%s4672 + $0x30] sm:$0xff]
      %v4680 = vld [vmem:[%s4672 + $0x38] sm:$0xff]
      %v4681 = vld [vmem:[%s4672 + $0x40] sm:$0xff]
      %v4682 = vld [vmem:[%s4672 + $0x48] sm:$0xff]
      %v4683 = vld [vmem:[%s4672 + $0x50] sm:$0xff]
      %v4684 = vld [vmem:[%s4672 + $0x58] sm:$0xff]
      %v4685 = vld [vmem:[#allocation2] sm:$0xff]
      %v4686 = vld [vmem:[#allocation2 + $0x8] sm:$0xff]
      %v4687 = vld [vmem:[#allocation2 + $0x10] sm:$0xff]
      %v4688 = vld [vmem:[#allocation2 + $0x18] sm:$0xff]
      %v4689 = vld [vmem:[#allocation2 + $0x20] sm:$0xff]
      %v4690 = vld [vmem:[#allocation2 + $0x28] sm:$0xff]
      %v4691 = vld [vmem:[#allocation2 + $0x30] sm:$0xff]
      %v4692 = vld [vmem:[#allocation2 + $0x38] sm:$0xff]
      %v4693 = vld [vmem:[#allocation2 + $0x40] sm:$0xff]
      %v4694 = vld [vmem:[#allocation2 + $0x48] sm:$0xff]
      %v4695 = vld [vmem:[#allocation2 + $0x50] sm:$0xff]
      %v4696 = vld [vmem:[#allocation2 + $0x58] sm:$0xff]
      %v4697 = vld [vmem:[#allocation2 + $0x60] sm:$0xff]
      %v4698 = vld [vmem:[#allocation2 + $0x68] sm:$0xff]
      %v4699 = vld [vmem:[#allocation2 + $0x70] sm:$0xff]
      %v4700 = vld [vmem:[#allocation2 + $0x78] sm:$0xff]
      %v4701 = vld [vmem:[#allocation2 + $0x80] sm:$0xff]
      %v4702 = vld [vmem:[#allocation2 + $0x88] sm:$0xff]
      %v4703 = vld [vmem:[#allocation2 + $0x90] sm:$0xff]
      %v4704 = vld [vmem:[#allocation2 + $0x98] sm:$0xff]
      %v4705 = vld [vmem:[#allocation2 + $0xa0] sm:$0xff]
      %v4706 = vld [vmem:[#allocation2 + $0xa8] sm:$0xff]
      %v4707 = vld [vmem:[#allocation2 + $0xb0] sm:$0xff]
      %v4708 = vld [vmem:[#allocation2 + $0xb8] sm:$0xff]
      %v4709 = vld [vmem:[#allocation2 + $0xc0] sm:$0xff]
      %v4710 = vld [vmem:[#allocation2 + $0xc8] sm:$0xff]
      %v4711 = vld [vmem:[#allocation2 + $0xd0] sm:$0xff]
      %v4712 = vld [vmem:[#allocation2 + $0xd8] sm:$0xff]
      %v4713 = vld [vmem:[#allocation2 + $0xe0] sm:$0xff]
      %v4714 = vld [vmem:[#allocation2 + $0xe8] sm:$0xff]
      %v4715 = vld [vmem:[#allocation2 + $0xf0] sm:$0xff]
      %v4716 = vld [vmem:[#allocation2 + $0xf8] sm:$0xff]
      %v4717 = vld [vmem:[#allocation2 + $0x100] sm:$0xff]
      %v4718 = vld [vmem:[#allocation2 + $0x108] sm:$0xff]
      %v4719 = vld [vmem:[#allocation2 + $0x110] sm:$0xff]
      %v4720 = vld [vmem:[#allocation2 + $0x118] sm:$0xff]
      %v4721 = vld [vmem:[#allocation2 + $0x120] sm:$0xff]
      %v4722 = vld [vmem:[#allocation2 + $0x128] sm:$0xff]
      %v4723 = vld [vmem:[#allocation2 + $0x130] sm:$0xff]
      %v4724 = vld [vmem:[#allocation2 + $0x138] sm:$0xff]
      %v4725 = vld [vmem:[#allocation2 + $0x140] sm:$0xff]
      %v4726 = vld [vmem:[#allocation2 + $0x148] sm:$0xff]
      %v4727 = vld [vmem:[#allocation2 + $0x150] sm:$0xff]
      %v4728 = vld [vmem:[#allocation2 + $0x158] sm:$0xff]
      %v4729 = vld [vmem:[#allocation2 + $0x160] sm:$0xff]
      %v4730 = vld [vmem:[#allocation2 + $0x168] sm:$0xff]
      %v4731 = vld [vmem:[#allocation2 + $0x170] sm:$0xff]
      %v4732 = vld [vmem:[#allocation2 + $0x178] sm:$0xff]
      %v4733 = vld [vmem:[#allocation2 + $0x180] sm:$0xff]
      %v4734 = vld [vmem:[#allocation2 + $0x188] sm:$0xff]
      %v4735 = vld [vmem:[#allocation2 + $0x190] sm:$0xff]
      %v4736 = vld [vmem:[#allocation2 + $0x198] sm:$0xff]
      %v4737 = vld [vmem:[#allocation2 + $0x1a0] sm:$0xff]
      %v4738 = vld [vmem:[#allocation2 + $0x1a8] sm:$0xff]
      %v4739 = vld [vmem:[#allocation2 + $0x1b0] sm:$0xff]
      %v4740 = vld [vmem:[#allocation2 + $0x1b8] sm:$0xff]
      %v4741 = vld [vmem:[#allocation2 + $0x1c0] sm:$0xff]
      %v4742 = vld [vmem:[#allocation2 + $0x1c8] sm:$0xff]
      %v4743 = vld [vmem:[#allocation2 + $0x1d0] sm:$0xff]
      %v4744 = vld [vmem:[#allocation2 + $0x1d8] sm:$0xff]
      %v4745 = vld [vmem:[#allocation2 + $0x1e0] sm:$0xff]
      %v4746 = vld [vmem:[#allocation2 + $0x1e8] sm:$0xff]
      %v4747 = vld [vmem:[#allocation2 + $0x1f0] sm:$0xff]
      %v4748 = vld [vmem:[#allocation2 + $0x1f8] sm:$0xff]
      %v4749 = vld [vmem:[#allocation2 + $0x200] sm:$0xff]
      %v4750 = vld [vmem:[#allocation2 + $0x208] sm:$0xff]
      %v4751 = vld [vmem:[#allocation2 + $0x210] sm:$0xff]
      %v4752 = vld [vmem:[#allocation2 + $0x218] sm:$0xff]
      %v4753 = vld [vmem:[#allocation2 + $0x220] sm:$0xff]
      %v4754 = vld [vmem:[#allocation2 + $0x228] sm:$0xff]
      %v4755 = vld [vmem:[#allocation2 + $0x230] sm:$0xff]
      %v4756 = vld [vmem:[#allocation2 + $0x238] sm:$0xff]
      %v4757 = vld [vmem:[#allocation2 + $0x240] sm:$0xff]
      %v4758 = vld [vmem:[#allocation2 + $0x248] sm:$0xff]
      %v4759 = vld [vmem:[#allocation2 + $0x250] sm:$0xff]
      %v4760 = vld [vmem:[#allocation2 + $0x258] sm:$0xff]
      %v4761 = vld [vmem:[#allocation2 + $0x260] sm:$0xff]
      %v4762 = vld [vmem:[#allocation2 + $0x268] sm:$0xff]
      %v4763 = vld [vmem:[#allocation2 + $0x270] sm:$0xff]
      %v4764 = vld [vmem:[#allocation2 + $0x278] sm:$0xff]
      %v4765 = vld [vmem:[#allocation2 + $0x280] sm:$0xff]
      %v4766 = vld [vmem:[#allocation2 + $0x288] sm:$0xff]
      %v4767 = vld [vmem:[#allocation2 + $0x290] sm:$0xff]
      %v4768 = vld [vmem:[#allocation2 + $0x298] sm:$0xff]
      %v4769 = vld [vmem:[#allocation2 + $0x2a0] sm:$0xff]
      %v4770 = vld [vmem:[#allocation2 + $0x2a8] sm:$0xff]
      %v4771 = vld [vmem:[#allocation2 + $0x2b0] sm:$0xff]
      %v4772 = vld [vmem:[#allocation2 + $0x2b8] sm:$0xff]
      %v4773 = vld [vmem:[#allocation2 + $0x2c0] sm:$0xff]
      %v4774 = vld [vmem:[#allocation2 + $0x2c8] sm:$0xff]
      %v4775 = vld [vmem:[#allocation2 + $0x2d0] sm:$0xff]
      %v4776 = vld [vmem:[#allocation2 + $0x2d8] sm:$0xff]
      %v4777 = vld [vmem:[#allocation2 + $0x2e0] sm:$0xff]
      %v4778 = vld [vmem:[#allocation2 + $0x2e8] sm:$0xff]
      %v4779 = vld [vmem:[#allocation2 + $0x2f0] sm:$0xff]
      %v4780 = vld [vmem:[#allocation2 + $0x2f8] sm:$0xff]
      %v4781 = vld [vmem:[#allocation2 + $0x300] sm:$0xff]
      %v4782 = vld [vmem:[#allocation2 + $0x308] sm:$0xff]
      %v4783 = vld [vmem:[#allocation2 + $0x310] sm:$0xff]
      %v4784 = vld [vmem:[#allocation2 + $0x318] sm:$0xff]
      %v4785 = vld [vmem:[#allocation2 + $0x320] sm:$0xff]
      %v4786 = vld [vmem:[#allocation2 + $0x328] sm:$0xff]
      %v4787 = vld [vmem:[#allocation2 + $0x330] sm:$0xff]
      %v4788 = vld [vmem:[#allocation2 + $0x338] sm:$0xff]
      %v4789 = vld [vmem:[#allocation2 + $0x340] sm:$0xff]
      %v4790 = vld [vmem:[#allocation2 + $0x348] sm:$0xff]
      %v4791 = vld [vmem:[#allocation2 + $0x350] sm:$0xff]
      %v4792 = vld [vmem:[#allocation2 + $0x358] sm:$0xff]
      %v4793 = vld [vmem:[#allocation2 + $0x360] sm:$0xff]
      %v4794 = vld [vmem:[#allocation2 + $0x368] sm:$0xff]
      %v4795 = vld [vmem:[#allocation2 + $0x370] sm:$0xff]
      %v4796 = vld [vmem:[#allocation2 + $0x378] sm:$0xff]
      %v4797 = vld [vmem:[#allocation2 + $0x380] sm:$0xff]
      %v4798 = vld [vmem:[#allocation2 + $0x388] sm:$0xff]
      %v4799 = vld [vmem:[#allocation2 + $0x390] sm:$0xff]
      %v4800 = vld [vmem:[#allocation2 + $0x398] sm:$0xff]
      %v4801 = vld [vmem:[#allocation2 + $0x3a0] sm:$0xff]
      %v4802 = vld [vmem:[#allocation2 + $0x3a8] sm:$0xff]
      %v4803 = vld [vmem:[#allocation2 + $0x3b0] sm:$0xff]
      %v4804 = vld [vmem:[#allocation2 + $0x3b8] sm:$0xff]
      %v4805 = vld [vmem:[#allocation2 + $0x3c0] sm:$0xff]
      %v4806 = vld [vmem:[#allocation2 + $0x3c8] sm:$0xff]
      %v4807 = vld [vmem:[#allocation2 + $0x3d0] sm:$0xff]
      %v4808 = vld [vmem:[#allocation2 + $0x3d8] sm:$0xff]
      %v4809 = vld [vmem:[#allocation2 + $0x3e0] sm:$0xff]
      %v4810 = vld [vmem:[#allocation2 + $0x3e8] sm:$0xff]
      %v4811 = vld [vmem:[#allocation2 + $0x3f0] sm:$0xff]
      %v4812 = vld [vmem:[#allocation2 + $0x3f8] sm:$0xff]
      %v4813 = vld [vmem:[#allocation2 + $0x400] sm:$0xff]
      %v4814 = vld [vmem:[#allocation2 + $0x408] sm:$0xff]
      %v4815 = vld [vmem:[#allocation2 + $0x410] sm:$0xff]
      %v4816 = vld [vmem:[#allocation2 + $0x418] sm:$0xff]
      %v4817 = vld [vmem:[#allocation2 + $0x420] sm:$0xff]
      %v4818 = vld [vmem:[#allocation2 + $0x428] sm:$0xff]
      %v4819 = vld [vmem:[#allocation2 + $0x430] sm:$0xff]
      %v4820 = vld [vmem:[#allocation2 + $0x438] sm:$0xff]
      %v4821 = vld [vmem:[#allocation2 + $0x440] sm:$0xff]
      %v4822 = vld [vmem:[#allocation2 + $0x448] sm:$0xff]
      %v4823 = vld [vmem:[#allocation2 + $0x450] sm:$0xff]
      %v4824 = vld [vmem:[#allocation2 + $0x458] sm:$0xff]
      %v4825 = vld [vmem:[#allocation2 + $0x460] sm:$0xff]
      %v4826 = vld [vmem:[#allocation2 + $0x468] sm:$0xff]
      %v4827 = vld [vmem:[#allocation2 + $0x470] sm:$0xff]
      %v4828 = vld [vmem:[#allocation2 + $0x478] sm:$0xff]
      %s4829 = scalar_lea.vmem %s641, 64
      %v4830 = vld [vmem:[%s4829] sm:$0xff]
      %v4831 = vld [vmem:[%s4829 + $0x8] sm:$0xff]
      %v4832 = vld [vmem:[%s4829 + $0x10] sm:$0xff]
      %v4833 = vld [vmem:[%s4829 + $0x18] sm:$0xff]
      %4835 = vset.pattern.permute.xlu0 0
      %4836 = vperm.xlu0 %4835, %v4830
      %v4837 = vpop.permute.xlu0 %4836
      %4840 = vset.pattern.permute.xlu0 0
      %4841 = vperm.xlu0 %4840, %v4831
      %v4842 = vpop.permute.xlu0 %4841
      %4845 = vset.pattern.permute.xlu0 0
      %4846 = vperm.xlu0 %4845, %v4832
      %v4847 = vpop.permute.xlu0 %4846
      %4850 = vset.pattern.permute.xlu0 0
      %4851 = vperm.xlu0 %4850, %v4833
      %v4852 = vpop.permute.xlu0 %4851
      %v4855 = vsel %vm2179, %v4675, 0
      %v4858 = vsel %vm2179, %v4678, 0
      %v4861 = vsel %vm2179, %v4681, 0
      %v4864 = vsel %vm2179, %v4684, 0
      %4866 = vmatpush.msra.mxu0 %v4745
      %4867 = vmatpush.msra.mxu0 %v4741
      %4868 = vmatpush.msra.mxu0 %v4737
      %4869 = vmatpush.msra.mxu0 %v4733
      %4870 = vmatpush.msra.mxu0 %v4729
      %4871 = vmatpush.msra.mxu0 %v4725
      %4872 = vmatpush.msra.mxu0 %v4721
      %4873 = vmatpush.msra.mxu0 %v4717
      %4874 = vmatpush.msra.mxu0 %v4713
      %4875 = vmatpush.msra.mxu0 %v4709
      %4876 = vmatpush.msra.mxu0 %v4705
      %4877 = vmatpush.msra.mxu0 %v4701
      %4878 = vmatpush.msra.mxu0 %v4697
      %4879 = vmatpush.msra.mxu0 %v4693
      %4880 = vmatpush.msra.mxu0 %v4689
      %4881 = vmatpush.msra.mxu0 %v4685
      %4882 = vmatmul.f32.gmra.mxu0 %v4673
      %v4883 = vpop.f32.mrf.mxu0
      %v4884 = vadd.f32 %v4837, %v4883
      %4885 = vmatmul.f32.gmra.mxu0 %v4676
      %v4886 = vpop.f32.mrf.mxu0
      %v4887 = vadd.f32 %v4842, %v4886
      %4888 = vmatmul.f32.gmra.mxu0 %v4679
      %v4889 = vpop.f32.mrf.mxu0
      %v4890 = vadd.f32 %v4847, %v4889
      %4891 = vmatmul.f32.gmra.mxu0 %v4682
      %v4892 = vpop.f32.mrf.mxu0
      %v4893 = vadd.f32 %v4852, %v4892
      %4894 = vdwg.mxu0
      %4895 = vmatpush.msra.mxu0 %v4809
      %4896 = vmatpush.msra.mxu0 %v4805
      %4897 = vmatpush.msra.mxu0 %v4801
      %4898 = vmatpush.msra.mxu0 %v4797
      %4899 = vmatpush.msra.mxu0 %v4793
      %4900 = vmatpush.msra.mxu0 %v4789
      %4901 = vmatpush.msra.mxu0 %v4785
      %4902 = vmatpush.msra.mxu0 %v4781
      %4903 = vmatpush.msra.mxu0 %v4777
      %4904 = vmatpush.msra.mxu0 %v4773
      %4905 = vmatpush.msra.mxu0 %v4769
      %4906 = vmatpush.msra.mxu0 %v4765
      %4907 = vmatpush.msra.mxu0 %v4761
      %4908 = vmatpush.msra.mxu0 %v4757
      %4909 = vmatpush.msra.mxu0 %v4753
      %4910 = vmatpush.msra.mxu0 %v4749
      %4911 = vmatmul.f32.gmra.mxu0 %v4674
      %v4912 = vpop.f32.mrf.mxu0
      %v4913 = vadd.f32 %v4884, %v4912
      %4914 = vmatmul.f32.gmra.mxu0 %v4677
      %v4915 = vpop.f32.mrf.mxu0
      %v4916 = vadd.f32 %v4887, %v4915
      %4917 = vmatmul.f32.gmra.mxu0 %v4680
      %v4918 = vpop.f32.mrf.mxu0
      %v4919 = vadd.f32 %v4890, %v4918
      %4920 = vmatmul.f32.gmra.mxu0 %v4683
      %v4921 = vpop.f32.mrf.mxu0
      %v4922 = vadd.f32 %v4893, %v4921
      %4923 = vdwg.mxu0
      %4924 = vmatpush.msra.mxu0 0.0
      %4925 = vmatpush.msra.mxu0 0.0
      %4926 = vmatpush.msra.mxu0 0.0
      %4927 = vmatpush.msra.mxu0 0.0
      %4928 = vmatpush.msra.mxu0 0.0
      %4929 = vmatpush.msra.mxu0 0.0
      %4930 = vmatpush.msra.mxu0 0.0
      %4931 = vmatpush.msra.mxu0 0.0
      %4932 = vmatpush.msra.mxu0 0.0
      %4933 = vmatpush.msra.mxu0 0.0
      %4934 = vmatpush.msra.mxu0 0.0
      %4935 = vmatpush.msra.mxu0 0.0
      %4936 = vmatpush.msra.mxu0 %v4825
      %4937 = vmatpush.msra.mxu0 %v4821
      %4938 = vmatpush.msra.mxu0 %v4817
      %4939 = vmatpush.msra.mxu0 %v4813
      %4940 = vmatmul.f32.gmra.mxu0 %v4855
      %v4941 = vpop.f32.mrf.mxu0
      %v4942 = vadd.f32 %v4913, %v4941
      %4943 = vmatmul.f32.gmra.mxu0 %v4858
      %v4944 = vpop.f32.mrf.mxu0
      %v4945 = vadd.f32 %v4916, %v4944
      %4946 = vmatmul.f32.gmra.mxu0 %v4861
      %v4947 = vpop.f32.mrf.mxu0
      %v4948 = vadd.f32 %v4919, %v4947
      %4949 = vmatmul.f32.gmra.mxu0 %v4864
      %v4950 = vpop.f32.mrf.mxu0
      %v4951 = vadd.f32 %v4922, %v4950
      %4952 = vdwg.mxu0
      %4953 = vmatpush.msra.mxu0 %v4746
      %4954 = vmatpush.msra.mxu0 %v4742
      %4955 = vmatpush.msra.mxu0 %v4738
      %4956 = vmatpush.msra.mxu0 %v4734
      %4957 = vmatpush.msra.mxu0 %v4730
      %4958 = vmatpush.msra.mxu0 %v4726
      %4959 = vmatpush.msra.mxu0 %v4722
      %4960 = vmatpush.msra.mxu0 %v4718
      %4961 = vmatpush.msra.mxu0 %v4714
      %4962 = vmatpush.msra.mxu0 %v4710
      %4963 = vmatpush.msra.mxu0 %v4706
      %4964 = vmatpush.msra.mxu0 %v4702
      %4965 = vmatpush.msra.mxu0 %v4698
      %4966 = vmatpush.msra.mxu0 %v4694
      %4967 = vmatpush.msra.mxu0 %v4690
      %4968 = vmatpush.msra.mxu0 %v4686
      %4969 = vmatmul.f32.gmra.mxu0 %v4673
      %v4970 = vpop.f32.mrf.mxu0
      %v4971 = vadd.f32 %v4837, %v4970
      %4972 = vmatmul.f32.gmra.mxu0 %v4676
      %v4973 = vpop.f32.mrf.mxu0
      %v4974 = vadd.f32 %v4842, %v4973
      %4975 = vmatmul.f32.gmra.mxu0 %v4679
      %v4976 = vpop.f32.mrf.mxu0
      %v4977 = vadd.f32 %v4847, %v4976
      %4978 = vmatmul.f32.gmra.mxu0 %v4682
      %v4979 = vpop.f32.mrf.mxu0
      %v4980 = vadd.f32 %v4852, %v4979
      %4981 = vdwg.mxu0
      %4982 = vmatpush.msra.mxu0 %v4810
      %4983 = vmatpush.msra.mxu0 %v4806
      %4984 = vmatpush.msra.mxu0 %v4802
      %4985 = vmatpush.msra.mxu0 %v4798
      %4986 = vmatpush.msra.mxu0 %v4794
      %4987 = vmatpush.msra.mxu0 %v4790
      %4988 = vmatpush.msra.mxu0 %v4786
      %4989 = vmatpush.msra.mxu0 %v4782
      %4990 = vmatpush.msra.mxu0 %v4778
      %4991 = vmatpush.msra.mxu0 %v4774
      %4992 = vmatpush.msra.mxu0 %v4770
      %4993 = vmatpush.msra.mxu0 %v4766
      %4994 = vmatpush.msra.mxu0 %v4762
      %4995 = vmatpush.msra.mxu0 %v4758
      %4996 = vmatpush.msra.mxu0 %v4754
      %4997 = vmatpush.msra.mxu0 %v4750
      %4998 = vmatmul.f32.gmra.mxu0 %v4674
      %v4999 = vpop.f32.mrf.mxu0
      %v5000 = vadd.f32 %v4971, %v4999
      %5001 = vmatmul.f32.gmra.mxu0 %v4677
      %v5002 = vpop.f32.mrf.mxu0
      %v5003 = vadd.f32 %v4974, %v5002
      %5004 = vmatmul.f32.gmra.mxu0 %v4680
      %v5005 = vpop.f32.mrf.mxu0
      %v5006 = vadd.f32 %v4977, %v5005
      %5007 = vmatmul.f32.gmra.mxu0 %v4683
      %v5008 = vpop.f32.mrf.mxu0
      %v5009 = vadd.f32 %v4980, %v5008
      %5010 = vdwg.mxu0
      %5011 = vmatpush.msra.mxu0 0.0
      %5012 = vmatpush.msra.mxu0 0.0
      %5013 = vmatpush.msra.mxu0 0.0
      %5014 = vmatpush.msra.mxu0 0.0
      %5015 = vmatpush.msra.mxu0 0.0
      %5016 = vmatpush.msra.mxu0 0.0
      %5017 = vmatpush.msra.mxu0 0.0
      %5018 = vmatpush.msra.mxu0 0.0
      %5019 = vmatpush.msra.mxu0 0.0
      %5020 = vmatpush.msra.mxu0 0.0
      %5021 = vmatpush.msra.mxu0 0.0
      %5022 = vmatpush.msra.mxu0 0.0
      %5023 = vmatpush.msra.mxu0 %v4826
      %5024 = vmatpush.msra.mxu0 %v4822
      %5025 = vmatpush.msra.mxu0 %v4818
      %5026 = vmatpush.msra.mxu0 %v4814
      %5027 = vmatmul.f32.gmra.mxu0 %v4855
      %v5028 = vpop.f32.mrf.mxu0
      %v5029 = vadd.f32 %v5000, %v5028
      %5030 = vmatmul.f32.gmra.mxu0 %v4858
      %v5031 = vpop.f32.mrf.mxu0
      %v5032 = vadd.f32 %v5003, %v5031
      %5033 = vmatmul.f32.gmra.mxu0 %v4861
      %v5034 = vpop.f32.mrf.mxu0
      %v5035 = vadd.f32 %v5006, %v5034
      %5036 = vmatmul.f32.gmra.mxu0 %v4864
      %v5037 = vpop.f32.mrf.mxu0
      %v5038 = vadd.f32 %v5009, %v5037
      %5039 = vdwg.mxu0
      %5040 = vmatpush.msra.mxu0 %v4747
      %5041 = vmatpush.msra.mxu0 %v4743
      %5042 = vmatpush.msra.mxu0 %v4739
      %5043 = vmatpush.msra.mxu0 %v4735
      %5044 = vmatpush.msra.mxu0 %v4731
      %5045 = vmatpush.msra.mxu0 %v4727
      %5046 = vmatpush.msra.mxu0 %v4723
      %5047 = vmatpush.msra.mxu0 %v4719
      %5048 = vmatpush.msra.mxu0 %v4715
      %5049 = vmatpush.msra.mxu0 %v4711
      %5050 = vmatpush.msra.mxu0 %v4707
      %5051 = vmatpush.msra.mxu0 %v4703
      %5052 = vmatpush.msra.mxu0 %v4699
      %5053 = vmatpush.msra.mxu0 %v4695
      %5054 = vmatpush.msra.mxu0 %v4691
      %5055 = vmatpush.msra.mxu0 %v4687
      %5056 = vmatmul.f32.gmra.mxu0 %v4673
      %v5057 = vpop.f32.mrf.mxu0
      %v5058 = vadd.f32 %v4837, %v5057
      %5059 = vmatmul.f32.gmra.mxu0 %v4676
      %v5060 = vpop.f32.mrf.mxu0
      %v5061 = vadd.f32 %v4842, %v5060
      %5062 = vmatmul.f32.gmra.mxu0 %v4679
      %v5063 = vpop.f32.mrf.mxu0
      %v5064 = vadd.f32 %v4847, %v5063
      %5065 = vmatmul.f32.gmra.mxu0 %v4682
      %v5066 = vpop.f32.mrf.mxu0
      %v5067 = vadd.f32 %v4852, %v5066
      %5068 = vdwg.mxu0
      %5069 = vmatpush.msra.mxu0 %v4811
      %5070 = vmatpush.msra.mxu0 %v4807
      %5071 = vmatpush.msra.mxu0 %v4803
      %5072 = vmatpush.msra.mxu0 %v4799
      %5073 = vmatpush.msra.mxu0 %v4795
      %5074 = vmatpush.msra.mxu0 %v4791
      %5075 = vmatpush.msra.mxu0 %v4787
      %5076 = vmatpush.msra.mxu0 %v4783
      %5077 = vmatpush.msra.mxu0 %v4779
      %5078 = vmatpush.msra.mxu0 %v4775
      %5079 = vmatpush.msra.mxu0 %v4771
      %5080 = vmatpush.msra.mxu0 %v4767
      %5081 = vmatpush.msra.mxu0 %v4763
      %5082 = vmatpush.msra.mxu0 %v4759
      %5083 = vmatpush.msra.mxu0 %v4755
      %5084 = vmatpush.msra.mxu0 %v4751
      %5085 = vmatmul.f32.gmra.mxu0 %v4674
      %v5086 = vpop.f32.mrf.mxu0
      %v5087 = vadd.f32 %v5058, %v5086
      %5088 = vmatmul.f32.gmra.mxu0 %v4677
      %v5089 = vpop.f32.mrf.mxu0
      %v5090 = vadd.f32 %v5061, %v5089
      %5091 = vmatmul.f32.gmra.mxu0 %v4680
      %v5092 = vpop.f32.mrf.mxu0
      %v5093 = vadd.f32 %v5064, %v5092
      %5094 = vmatmul.f32.gmra.mxu0 %v4683
      %v5095 = vpop.f32.mrf.mxu0
      %v5096 = vadd.f32 %v5067, %v5095
      %5097 = vdwg.mxu0
      %5098 = vmatpush.msra.mxu0 0.0
      %5099 = vmatpush.msra.mxu0 0.0
      %5100 = vmatpush.msra.mxu0 0.0
      %5101 = vmatpush.msra.mxu0 0.0
      %5102 = vmatpush.msra.mxu0 0.0
      %5103 = vmatpush.msra.mxu0 0.0
      %5104 = vmatpush.msra.mxu0 0.0
      %5105 = vmatpush.msra.mxu0 0.0
      %5106 = vmatpush.msra.mxu0 0.0
      %5107 = vmatpush.msra.mxu0 0.0
      %5108 = vmatpush.msra.mxu0 0.0
      %5109 = vmatpush.msra.mxu0 0.0
      %5110 = vmatpush.msra.mxu0 %v4827
      %5111 = vmatpush.msra.mxu0 %v4823
      %5112 = vmatpush.msra.mxu0 %v4819
      %5113 = vmatpush.msra.mxu0 %v4815
      %5114 = vmatmul.f32.gmra.mxu0 %v4855
      %v5115 = vpop.f32.mrf.mxu0
      %v5116 = vadd.f32 %v5087, %v5115
      %5117 = vmatmul.f32.gmra.mxu0 %v4858
      %v5118 = vpop.f32.mrf.mxu0
      %v5119 = vadd.f32 %v5090, %v5118
      %5120 = vmatmul.f32.gmra.mxu0 %v4861
      %v5121 = vpop.f32.mrf.mxu0
      %v5122 = vadd.f32 %v5093, %v5121
      %5123 = vmatmul.f32.gmra.mxu0 %v4864
      %v5124 = vpop.f32.mrf.mxu0
      %v5125 = vadd.f32 %v5096, %v5124
      %5126 = vdwg.mxu0
      %5127 = vmatpush.msra.mxu0 %v4748
      %5128 = vmatpush.msra.mxu0 %v4744
      %5129 = vmatpush.msra.mxu0 %v4740
      %5130 = vmatpush.msra.mxu0 %v4736
      %5131 = vmatpush.msra.mxu0 %v4732
      %5132 = vmatpush.msra.mxu0 %v4728
      %5133 = vmatpush.msra.mxu0 %v4724
      %5134 = vmatpush.msra.mxu0 %v4720
      %5135 = vmatpush.msra.mxu0 %v4716
      %5136 = vmatpush.msra.mxu0 %v4712
      %5137 = vmatpush.msra.mxu0 %v4708
      %5138 = vmatpush.msra.mxu0 %v4704
      %5139 = vmatpush.msra.mxu0 %v4700
      %5140 = vmatpush.msra.mxu0 %v4696
      %5141 = vmatpush.msra.mxu0 %v4692
      %5142 = vmatpush.msra.mxu0 %v4688
      %5143 = vmatmul.f32.gmra.mxu0 %v4673
      %v5144 = vpop.f32.mrf.mxu0
      %v5145 = vadd.f32 %v4837, %v5144
      %5146 = vmatmul.f32.gmra.mxu0 %v4676
      %v5147 = vpop.f32.mrf.mxu0
      %v5148 = vadd.f32 %v4842, %v5147
      %5149 = vmatmul.f32.gmra.mxu0 %v4679
      %v5150 = vpop.f32.mrf.mxu0
      %v5151 = vadd.f32 %v4847, %v5150
      %5152 = vmatmul.f32.gmra.mxu0 %v4682
      %v5153 = vpop.f32.mrf.mxu0
      %v5154 = vadd.f32 %v4852, %v5153
      %5155 = vdwg.mxu0
      %5156 = vmatpush.msra.mxu0 %v4812
      %5157 = vmatpush.msra.mxu0 %v4808
      %5158 = vmatpush.msra.mxu0 %v4804
      %5159 = vmatpush.msra.mxu0 %v4800
      %5160 = vmatpush.msra.mxu0 %v4796
      %5161 = vmatpush.msra.mxu0 %v4792
      %5162 = vmatpush.msra.mxu0 %v4788
      %5163 = vmatpush.msra.mxu0 %v4784
      %5164 = vmatpush.msra.mxu0 %v4780
      %5165 = vmatpush.msra.mxu0 %v4776
      %5166 = vmatpush.msra.mxu0 %v4772
      %5167 = vmatpush.msra.mxu0 %v4768
      %5168 = vmatpush.msra.mxu0 %v4764
      %5169 = vmatpush.msra.mxu0 %v4760
      %5170 = vmatpush.msra.mxu0 %v4756
      %5171 = vmatpush.msra.mxu0 %v4752
      %5172 = vmatmul.f32.gmra.mxu0 %v4674
      %v5173 = vpop.f32.mrf.mxu0
      %v5174 = vadd.f32 %v5145, %v5173
      %5175 = vmatmul.f32.gmra.mxu0 %v4677
      %v5176 = vpop.f32.mrf.mxu0
      %v5177 = vadd.f32 %v5148, %v5176
      %5178 = vmatmul.f32.gmra.mxu0 %v4680
      %v5179 = vpop.f32.mrf.mxu0
      %v5180 = vadd.f32 %v5151, %v5179
      %5181 = vmatmul.f32.gmra.mxu0 %v4683
      %v5182 = vpop.f32.mrf.mxu0
      %v5183 = vadd.f32 %v5154, %v5182
      %5184 = vdwg.mxu0
      %5185 = vmatpush.msra.mxu0 0.0
      %5186 = vmatpush.msra.mxu0 0.0
      %5187 = vmatpush.msra.mxu0 0.0
      %5188 = vmatpush.msra.mxu0 0.0
      %5189 = vmatpush.msra.mxu0 0.0
      %5190 = vmatpush.msra.mxu0 0.0
      %5191 = vmatpush.msra.mxu0 0.0
      %5192 = vmatpush.msra.mxu0 0.0
      %5193 = vmatpush.msra.mxu0 0.0
      %5194 = vmatpush.msra.mxu0 0.0
      %5195 = vmatpush.msra.mxu0 0.0
      %5196 = vmatpush.msra.mxu0 0.0
      %5197 = vmatpush.msra.mxu0 %v4828
      %5198 = vmatpush.msra.mxu0 %v4824
      %5199 = vmatpush.msra.mxu0 %v4820
      %5200 = vmatpush.msra.mxu0 %v4816
      %5201 = vmatmul.f32.gmra.mxu0 %v4855
      %v5202 = vpop.f32.mrf.mxu0
      %v5203 = vadd.f32 %v5174, %v5202
      %5204 = vmatmul.f32.gmra.mxu0 %v4858
      %v5205 = vpop.f32.mrf.mxu0
      %v5206 = vadd.f32 %v5177, %v5205
      %5207 = vmatmul.f32.gmra.mxu0 %v4861
      %v5208 = vpop.f32.mrf.mxu0
      %v5209 = vadd.f32 %v5180, %v5208
      %5210 = vmatmul.f32.gmra.mxu0 %v4864
      %v5211 = vpop.f32.mrf.mxu0
      %v5212 = vadd.f32 %v5183, %v5211
      %5213 = vdwg.mxu0
      %v5214 = vmax.f32 %v4942, 0.0
      %v5215 = vmax.f32 %v5029, 0.0
      %v5216 = vmax.f32 %v5116, 0.0
      %v5217 = vmax.f32 %v5203, 0.0
      %v5218 = vmax.f32 %v4945, 0.0
      %v5219 = vmax.f32 %v5032, 0.0
      %v5220 = vmax.f32 %v5119, 0.0
      %v5221 = vmax.f32 %v5206, 0.0
      %v5222 = vmax.f32 %v4948, 0.0
      %v5223 = vmax.f32 %v5035, 0.0
      %v5224 = vmax.f32 %v5122, 0.0
      %v5225 = vmax.f32 %v5209, 0.0
      %v5226 = vmax.f32 %v4951, 0.0
      %v5227 = vmax.f32 %v5038, 0.0
      %v5228 = vmax.f32 %v5125, 0.0
      %v5229 = vmax.f32 %v5212, 0.0
      %s5230 = scalar_lea.vmem %s658, 384
      %5231 = vst [vmem:[%s5230] sm:$0xff] %v5214
      %5232 = vst [vmem:[%s5230 + $0x8] sm:$0xff] %v5215
      %5233 = vst [vmem:[%s5230 + $0x10] sm:$0xff] %v5216
      %5234 = vst [vmem:[%s5230 + $0x18] sm:$0xff] %v5217
      %5235 = vst [vmem:[%s5230 + $0x20] sm:$0xff] %v5218
      %5236 = vst [vmem:[%s5230 + $0x28] sm:$0xff] %v5219
      %5237 = vst [vmem:[%s5230 + $0x30] sm:$0xff] %v5220
      %5238 = vst [vmem:[%s5230 + $0x38] sm:$0xff] %v5221
      %5239 = vst [vmem:[%s5230 + $0x40] sm:$0xff] %v5222
      %5240 = vst [vmem:[%s5230 + $0x48] sm:$0xff] %v5223
      %5241 = vst [vmem:[%s5230 + $0x50] sm:$0xff] %v5224
      %5242 = vst [vmem:[%s5230 + $0x58] sm:$0xff] %v5225
      %5243 = vst [vmem:[%s5230 + $0x60] sm:$0xff] %v5226
      %5244 = vst [vmem:[%s5230 + $0x68] sm:$0xff] %v5227
      %5245 = vst [vmem:[%s5230 + $0x70] sm:$0xff] %v5228
      %5246 = vst [vmem:[%s5230 + $0x78] sm:$0xff] %v5229
      %5247 = vrot.lane.b32.xlu0 %v5214, 17
      %v5248 = vpop.permute.xlu0 %5247
      %5249 = vrot.lane.b32.xlu0 %v5218, 17
      %v5250 = vpop.permute.xlu0 %5249
      %5251 = vrot.lane.b32.xlu0 %v5222, 17
      %v5252 = vpop.permute.xlu0 %5251
      %5253 = vrot.lane.b32.xlu0 %v5226, 17
      %v5254 = vpop.permute.xlu0 %5253
      %5255 = vrot.lane.b32.xlu0 %v5215, 17
      %v5256 = vpop.permute.xlu0 %5255
      %5257 = vrot.lane.b32.xlu0 %v5219, 17
      %v5258 = vpop.permute.xlu0 %5257
      %5259 = vrot.lane.b32.xlu0 %v5223, 17
      %v5260 = vpop.permute.xlu0 %5259
      %5261 = vrot.lane.b32.xlu0 %v5227, 17
      %v5262 = vpop.permute.xlu0 %5261
      %5263 = vrot.lane.b32.xlu0 %v5216, 17
      %v5264 = vpop.permute.xlu0 %5263
      %5265 = vrot.lane.b32.xlu0 %v5220, 17
      %v5266 = vpop.permute.xlu0 %5265
      %5267 = vrot.lane.b32.xlu0 %v5224, 17
      %v5268 = vpop.permute.xlu0 %5267
      %5269 = vrot.lane.b32.xlu0 %v5228, 17
      %v5270 = vpop.permute.xlu0 %5269
      %5271 = vrot.lane.b32.xlu0 %v5217, 17
      %v5272 = vpop.permute.xlu0 %5271
      %5273 = vrot.lane.b32.xlu0 %v5221, 17
      %v5274 = vpop.permute.xlu0 %5273
      %5275 = vrot.lane.b32.xlu0 %v5225, 17
      %v5276 = vpop.permute.xlu0 %5275
      %5277 = vrot.lane.b32.xlu0 %v5229, 17
      %v5278 = vpop.permute.xlu0 %5277
      %v5279 = vsel %vm702, %v5264, %v5272
      %v5280 = vsel %vm702, %v5266, %v5274
      %v5281 = vsel %vm702, %v5268, %v5276
      %v5282 = vsel %vm702, %v5270, %v5278
      %v5283 = vsel %vm702, %v5256, %v5264
      %v5284 = vsel %vm702, %v5258, %v5266
      %v5285 = vsel %vm702, %v5260, %v5268
      %v5286 = vsel %vm702, %v5262, %v5270
      %v5287 = vsel %vm702, %v5248, %v5256
      %v5288 = vsel %vm702, %v5250, %v5258
      %v5289 = vsel %vm702, %v5252, %v5260
      %v5290 = vsel %vm702, %v5254, %v5262
      %v5291 = vsel %vm702, %v5272, %v5248
      %v5292 = vsel %vm702, %v5274, %v5250
      %v5293 = vsel %vm702, %v5276, %v5252
      %v5294 = vsel %vm702, %v5278, %v5254
      %v5295 = vld [vmem:[%s3] ss:$8 sm:$0xf]
      %v5297 = vperm.slane %v5295, 0
      %v5298 = vperm.slane %v5295, 1
      %v5299 = vperm.slane %v5295, 2
      %v5300 = vperm.slane %v5295, 3
      %v5305 = vmul.f32 %v5291, %v5297
      %v5306 = vmul.f32 %v5287, %v5298
      %v5307 = vmul.f32 %v5283, %v5299
      %v5308 = vmul.f32 %v5279, %v5300
      %v5309 = vmul.f32 %v5292, %v5297
      %v5310 = vmul.f32 %v5288, %v5298
      %v5311 = vmul.f32 %v5284, %v5299
      %v5312 = vmul.f32 %v5280, %v5300
      %v5313 = vmul.f32 %v5293, %v5297
      %v5314 = vmul.f32 %v5289, %v5298
      %v5315 = vmul.f32 %v5285, %v5299
      %v5316 = vmul.f32 %v5281, %v5300
      %v5317 = vmul.f32 %v5294, %v5297
      %v5318 = vmul.f32 %v5290, %v5298
      %v5319 = vmul.f32 %v5286, %v5299
      %v5320 = vmul.f32 %v5282, %v5300
      %5321 = vst [vmem:[#allocation2] sm:$0xff] %v5305
      %5322 = vst [vmem:[#allocation2 + $0x8] sm:$0xff] %v5306
      %5323 = vst [vmem:[#allocation2 + $0x10] sm:$0xff] %v5307
      %5324 = vst [vmem:[#allocation2 + $0x18] sm:$0xff] %v5308
      %5325 = vst [vmem:[#allocation2 + $0x20] sm:$0xff] %v5309
      %5326 = vst [vmem:[#allocation2 + $0x28] sm:$0xff] %v5310
      %5327 = vst [vmem:[#allocation2 + $0x30] sm:$0xff] %v5311
      %5328 = vst [vmem:[#allocation2 + $0x38] sm:$0xff] %v5312
      %5329 = vst [vmem:[#allocation2 + $0x40] sm:$0xff] %v5313
      %5330 = vst [vmem:[#allocation2 + $0x48] sm:$0xff] %v5314
      %5331 = vst [vmem:[#allocation2 + $0x50] sm:$0xff] %v5315
      %5332 = vst [vmem:[#allocation2 + $0x58] sm:$0xff] %v5316
      %5333 = vst [vmem:[#allocation2 + $0x60] sm:$0xff] %v5317
      %5334 = vst [vmem:[#allocation2 + $0x68] sm:$0xff] %v5318
      %5335 = vst [vmem:[#allocation2 + $0x70] sm:$0xff] %v5319
      %5336 = vst [vmem:[#allocation2 + $0x78] sm:$0xff] %v5320
      %5337 = vrot.lane.b32.xlu0 %v5214, 16
      %v5338 = vpop.permute.xlu0 %5337
      %5339 = vrot.lane.b32.xlu0 %v5218, 16
      %v5340 = vpop.permute.xlu0 %5339
      %5341 = vrot.lane.b32.xlu0 %v5222, 16
      %v5342 = vpop.permute.xlu0 %5341
      %5343 = vrot.lane.b32.xlu0 %v5226, 16
      %v5344 = vpop.permute.xlu0 %5343
      %5345 = vrot.lane.b32.xlu0 %v5215, 16
      %v5346 = vpop.permute.xlu0 %5345
      %5347 = vrot.lane.b32.xlu0 %v5219, 16
      %v5348 = vpop.permute.xlu0 %5347
      %5349 = vrot.lane.b32.xlu0 %v5223, 16
      %v5350 = vpop.permute.xlu0 %5349
      %5351 = vrot.lane.b32.xlu0 %v5227, 16
      %v5352 = vpop.permute.xlu0 %5351
      %5353 = vrot.lane.b32.xlu0 %v5216, 16
      %v5354 = vpop.permute.xlu0 %5353
      %5355 = vrot.lane.b32.xlu0 %v5220, 16
      %v5356 = vpop.permute.xlu0 %5355
      %5357 = vrot.lane.b32.xlu0 %v5224, 16
      %v5358 = vpop.permute.xlu0 %5357
      %5359 = vrot.lane.b32.xlu0 %v5228, 16
      %v5360 = vpop.permute.xlu0 %5359
      %5361 = vrot.lane.b32.xlu0 %v5217, 16
      %v5362 = vpop.permute.xlu0 %5361
      %5363 = vrot.lane.b32.xlu0 %v5221, 16
      %v5364 = vpop.permute.xlu0 %5363
      %5365 = vrot.lane.b32.xlu0 %v5225, 16
      %v5366 = vpop.permute.xlu0 %5365
      %5367 = vrot.lane.b32.xlu0 %v5229, 16
      %v5368 = vpop.permute.xlu0 %5367
      %v5369 = vsel %vm729, %v5354, %v5362
      %v5370 = vsel %vm729, %v5356, %v5364
      %v5371 = vsel %vm729, %v5358, %v5366
      %v5372 = vsel %vm729, %v5360, %v5368
      %v5373 = vsel %vm729, %v5346, %v5354
      %v5374 = vsel %vm729, %v5348, %v5356
      %v5375 = vsel %vm729, %v5350, %v5358
      %v5376 = vsel %vm729, %v5352, %v5360
      %v5377 = vsel %vm729, %v5338, %v5346
      %v5378 = vsel %vm729, %v5340, %v5348
      %v5379 = vsel %vm729, %v5342, %v5350
      %v5380 = vsel %vm729, %v5344, %v5352
      %v5381 = vsel %vm729, %v5362, %v5338
      %v5382 = vsel %vm729, %v5364, %v5340
      %v5383 = vsel %vm729, %v5366, %v5342
      %v5384 = vsel %vm729, %v5368, %v5344
      %v5385 = vld [vmem:[%s734] ss:$8 sm:$0xf]
      %v5387 = vperm.slane %v5385, 0
      %v5388 = vperm.slane %v5385, 1
      %v5389 = vperm.slane %v5385, 2
      %v5390 = vperm.slane %v5385, 3
      %v5395 = vmul.f32 %v5381, %v5387
      %v5396 = vmul.f32 %v5377, %v5388
      %v5397 = vmul.f32 %v5373, %v5389
      %v5398 = vmul.f32 %v5369, %v5390
      %v5399 = vmul.f32 %v5382, %v5387
      %v5400 = vmul.f32 %v5378, %v5388
      %v5401 = vmul.f32 %v5374, %v5389
      %v5402 = vmul.f32 %v5370, %v5390
      %v5403 = vmul.f32 %v5383, %v5387
      %v5404 = vmul.f32 %v5379, %v5388
      %v5405 = vmul.f32 %v5375, %v5389
      %v5406 = vmul.f32 %v5371, %v5390
      %v5407 = vmul.f32 %v5384, %v5387
      %v5408 = vmul.f32 %v5380, %v5388
      %v5409 = vmul.f32 %v5376, %v5389
      %v5410 = vmul.f32 %v5372, %v5390
      %5411 = vst [vmem:[#allocation2 + $0x80] sm:$0xff] %v5395
      %5412 = vst [vmem:[#allocation2 + $0x88] sm:$0xff] %v5396
      %5413 = vst [vmem:[#allocation2 + $0x90] sm:$0xff] %v5397
      %5414 = vst [vmem:[#allocation2 + $0x98] sm:$0xff] %v5398
      %5415 = vst [vmem:[#allocation2 + $0xa0] sm:$0xff] %v5399
      %5416 = vst [vmem:[#allocation2 + $0xa8] sm:$0xff] %v5400
      %5417 = vst [vmem:[#allocation2 + $0xb0] sm:$0xff] %v5401
      %5418 = vst [vmem:[#allocation2 + $0xb8] sm:$0xff] %v5402
      %5419 = vst [vmem:[#allocation2 + $0xc0] sm:$0xff] %v5403
      %5420 = vst [vmem:[#allocation2 + $0xc8] sm:$0xff] %v5404
      %5421 = vst [vmem:[#allocation2 + $0xd0] sm:$0xff] %v5405
      %5422 = vst [vmem:[#allocation2 + $0xd8] sm:$0xff] %v5406
      %5423 = vst [vmem:[#allocation2 + $0xe0] sm:$0xff] %v5407
      %5424 = vst [vmem:[#allocation2 + $0xe8] sm:$0xff] %v5408
      %5425 = vst [vmem:[#allocation2 + $0xf0] sm:$0xff] %v5409
      %5426 = vst [vmem:[#allocation2 + $0xf8] sm:$0xff] %v5410
      %5427 = vrot.lane.b32.xlu0 %v5214, 15
      %v5428 = vpop.permute.xlu0 %5427
      %5429 = vrot.lane.b32.xlu0 %v5218, 15
      %v5430 = vpop.permute.xlu0 %5429
      %5431 = vrot.lane.b32.xlu0 %v5222, 15
      %v5432 = vpop.permute.xlu0 %5431
      %5433 = vrot.lane.b32.xlu0 %v5226, 15
      %v5434 = vpop.permute.xlu0 %5433
      %5435 = vrot.lane.b32.xlu0 %v5215, 15
      %v5436 = vpop.permute.xlu0 %5435
      %5437 = vrot.lane.b32.xlu0 %v5219, 15
      %v5438 = vpop.permute.xlu0 %5437
      %5439 = vrot.lane.b32.xlu0 %v5223, 15
      %v5440 = vpop.permute.xlu0 %5439
      %5441 = vrot.lane.b32.xlu0 %v5227, 15
      %v5442 = vpop.permute.xlu0 %5441
      %5443 = vrot.lane.b32.xlu0 %v5216, 15
      %v5444 = vpop.permute.xlu0 %5443
      %5445 = vrot.lane.b32.xlu0 %v5220, 15
      %v5446 = vpop.permute.xlu0 %5445
      %5447 = vrot.lane.b32.xlu0 %v5224, 15
      %v5448 = vpop.permute.xlu0 %5447
      %5449 = vrot.lane.b32.xlu0 %v5228, 15
      %v5450 = vpop.permute.xlu0 %5449
      %5451 = vrot.lane.b32.xlu0 %v5217, 15
      %v5452 = vpop.permute.xlu0 %5451
      %5453 = vrot.lane.b32.xlu0 %v5221, 15
      %v5454 = vpop.permute.xlu0 %5453
      %5455 = vrot.lane.b32.xlu0 %v5225, 15
      %v5456 = vpop.permute.xlu0 %5455
      %5457 = vrot.lane.b32.xlu0 %v5229, 15
      %v5458 = vpop.permute.xlu0 %5457
      %v5459 = vsel %vm757, %v5444, %v5452
      %v5460 = vsel %vm757, %v5446, %v5454
      %v5461 = vsel %vm757, %v5448, %v5456
      %v5462 = vsel %vm757, %v5450, %v5458
      %v5463 = vsel %vm757, %v5436, %v5444
      %v5464 = vsel %vm757, %v5438, %v5446
      %v5465 = vsel %vm757, %v5440, %v5448
      %v5466 = vsel %vm757, %v5442, %v5450
      %v5467 = vsel %vm757, %v5428, %v5436
      %v5468 = vsel %vm757, %v5430, %v5438
      %v5469 = vsel %vm757, %v5432, %v5440
      %v5470 = vsel %vm757, %v5434, %v5442
      %v5471 = vsel %vm757, %v5452, %v5428
      %v5472 = vsel %vm757, %v5454, %v5430
      %v5473 = vsel %vm757, %v5456, %v5432
      %v5474 = vsel %vm757, %v5458, %v5434
      %v5475 = vld [vmem:[%s762] ss:$8 sm:$0xf]
      %v5477 = vperm.slane %v5475, 0
      %v5478 = vperm.slane %v5475, 1
      %v5479 = vperm.slane %v5475, 2
      %v5480 = vperm.slane %v5475, 3
      %v5485 = vmul.f32 %v5471, %v5477
      %v5486 = vmul.f32 %v5467, %v5478
      %v5487 = vmul.f32 %v5463, %v5479
      %v5488 = vmul.f32 %v5459, %v5480
      %v5489 = vmul.f32 %v5472, %v5477
      %v5490 = vmul.f32 %v5468, %v5478
      %v5491 = vmul.f32 %v5464, %v5479
      %v5492 = vmul.f32 %v5460, %v5480
      %v5493 = vmul.f32 %v5473, %v5477
      %v5494 = vmul.f32 %v5469, %v5478
      %v5495 = vmul.f32 %v5465, %v5479
      %v5496 = vmul.f32 %v5461, %v5480
      %v5497 = vmul.f32 %v5474, %v5477
      %v5498 = vmul.f32 %v5470, %v5478
      %v5499 = vmul.f32 %v5466, %v5479
      %v5500 = vmul.f32 %v5462, %v5480
      %5501 = vst [vmem:[#allocation2 + $0x100] sm:$0xff] %v5485
      %5502 = vst [vmem:[#allocation2 + $0x108] sm:$0xff] %v5486
      %5503 = vst [vmem:[#allocation2 + $0x110] sm:$0xff] %v5487
      %5504 = vst [vmem:[#allocation2 + $0x118] sm:$0xff] %v5488
      %5505 = vst [vmem:[#allocation2 + $0x120] sm:$0xff] %v5489
      %5506 = vst [vmem:[#allocation2 + $0x128] sm:$0xff] %v5490
      %5507 = vst [vmem:[#allocation2 + $0x130] sm:$0xff] %v5491
      %5508 = vst [vmem:[#allocation2 + $0x138] sm:$0xff] %v5492
      %5509 = vst [vmem:[#allocation2 + $0x140] sm:$0xff] %v5493
      %5510 = vst [vmem:[#allocation2 + $0x148] sm:$0xff] %v5494
      %5511 = vst [vmem:[#allocation2 + $0x150] sm:$0xff] %v5495
      %5512 = vst [vmem:[#allocation2 + $0x158] sm:$0xff] %v5496
      %5513 = vst [vmem:[#allocation2 + $0x160] sm:$0xff] %v5497
      %5514 = vst [vmem:[#allocation2 + $0x168] sm:$0xff] %v5498
      %5515 = vst [vmem:[#allocation2 + $0x170] sm:$0xff] %v5499
      %5516 = vst [vmem:[#allocation2 + $0x178] sm:$0xff] %v5500
      %5517 = vrot.lane.b32.xlu0 %v5214, 1
      %v5518 = vpop.permute.xlu0 %5517
      %5519 = vrot.lane.b32.xlu0 %v5218, 1
      %v5520 = vpop.permute.xlu0 %5519
      %5521 = vrot.lane.b32.xlu0 %v5222, 1
      %v5522 = vpop.permute.xlu0 %5521
      %5523 = vrot.lane.b32.xlu0 %v5226, 1
      %v5524 = vpop.permute.xlu0 %5523
      %5525 = vrot.lane.b32.xlu0 %v5215, 1
      %v5526 = vpop.permute.xlu0 %5525
      %5527 = vrot.lane.b32.xlu0 %v5219, 1
      %v5528 = vpop.permute.xlu0 %5527
      %5529 = vrot.lane.b32.xlu0 %v5223, 1
      %v5530 = vpop.permute.xlu0 %5529
      %5531 = vrot.lane.b32.xlu0 %v5227, 1
      %v5532 = vpop.permute.xlu0 %5531
      %5533 = vrot.lane.b32.xlu0 %v5216, 1
      %v5534 = vpop.permute.xlu0 %5533
      %5535 = vrot.lane.b32.xlu0 %v5220, 1
      %v5536 = vpop.permute.xlu0 %5535
      %5537 = vrot.lane.b32.xlu0 %v5224, 1
      %v5538 = vpop.permute.xlu0 %5537
      %5539 = vrot.lane.b32.xlu0 %v5228, 1
      %v5540 = vpop.permute.xlu0 %5539
      %5541 = vrot.lane.b32.xlu0 %v5217, 1
      %v5542 = vpop.permute.xlu0 %5541
      %5543 = vrot.lane.b32.xlu0 %v5221, 1
      %v5544 = vpop.permute.xlu0 %5543
      %5545 = vrot.lane.b32.xlu0 %v5225, 1
      %v5546 = vpop.permute.xlu0 %5545
      %5547 = vrot.lane.b32.xlu0 %v5229, 1
      %v5548 = vpop.permute.xlu0 %5547
      %v5549 = vsel %vm785, %v5534, %v5542
      %v5550 = vsel %vm785, %v5536, %v5544
      %v5551 = vsel %vm785, %v5538, %v5546
      %v5552 = vsel %vm785, %v5540, %v5548
      %v5553 = vsel %vm785, %v5526, %v5534
      %v5554 = vsel %vm785, %v5528, %v5536
      %v5555 = vsel %vm785, %v5530, %v5538
      %v5556 = vsel %vm785, %v5532, %v5540
      %v5557 = vsel %vm785, %v5518, %v5526
      %v5558 = vsel %vm785, %v5520, %v5528
      %v5559 = vsel %vm785, %v5522, %v5530
      %v5560 = vsel %vm785, %v5524, %v5532
      %v5561 = vsel %vm785, %v5542, %v5518
      %v5562 = vsel %vm785, %v5544, %v5520
      %v5563 = vsel %vm785, %v5546, %v5522
      %v5564 = vsel %vm785, %v5548, %v5524
      %v5565 = vld [vmem:[%s790] ss:$8 sm:$0xf]
      %v5567 = vperm.slane %v5565, 0
      %v5568 = vperm.slane %v5565, 1
      %v5569 = vperm.slane %v5565, 2
      %v5570 = vperm.slane %v5565, 3
      %v5575 = vmul.f32 %v5561, %v5567
      %v5576 = vmul.f32 %v5557, %v5568
      %v5577 = vmul.f32 %v5553, %v5569
      %v5578 = vmul.f32 %v5549, %v5570
      %v5579 = vmul.f32 %v5562, %v5567
      %v5580 = vmul.f32 %v5558, %v5568
      %v5581 = vmul.f32 %v5554, %v5569
      %v5582 = vmul.f32 %v5550, %v5570
      %v5583 = vmul.f32 %v5563, %v5567
      %v5584 = vmul.f32 %v5559, %v5568
      %v5585 = vmul.f32 %v5555, %v5569
      %v5586 = vmul.f32 %v5551, %v5570
      %v5587 = vmul.f32 %v5564, %v5567
      %v5588 = vmul.f32 %v5560, %v5568
      %v5589 = vmul.f32 %v5556, %v5569
      %v5590 = vmul.f32 %v5552, %v5570
      %5591 = vst [vmem:[#allocation2 + $0x180] sm:$0xff] %v5575
      %5592 = vst [vmem:[#allocation2 + $0x188] sm:$0xff] %v5576
      %5593 = vst [vmem:[#allocation2 + $0x190] sm:$0xff] %v5577
      %5594 = vst [vmem:[#allocation2 + $0x198] sm:$0xff] %v5578
      %5595 = vst [vmem:[#allocation2 + $0x1a0] sm:$0xff] %v5579
      %5596 = vst [vmem:[#allocation2 + $0x1a8] sm:$0xff] %v5580
      %5597 = vst [vmem:[#allocation2 + $0x1b0] sm:$0xff] %v5581
      %5598 = vst [vmem:[#allocation2 + $0x1b8] sm:$0xff] %v5582
      %5599 = vst [vmem:[#allocation2 + $0x1c0] sm:$0xff] %v5583
      %5600 = vst [vmem:[#allocation2 + $0x1c8] sm:$0xff] %v5584
      %5601 = vst [vmem:[#allocation2 + $0x1d0] sm:$0xff] %v5585
      %5602 = vst [vmem:[#allocation2 + $0x1d8] sm:$0xff] %v5586
      %5603 = vst [vmem:[#allocation2 + $0x1e0] sm:$0xff] %v5587
      %5604 = vst [vmem:[#allocation2 + $0x1e8] sm:$0xff] %v5588
      %5605 = vst [vmem:[#allocation2 + $0x1f0] sm:$0xff] %v5589
      %5606 = vst [vmem:[#allocation2 + $0x1f8] sm:$0xff] %v5590
      %v5607 = vld [vmem:[%s805] ss:$8 sm:$0xf]
      %v5609 = vperm.slane %v5607, 0
      %v5610 = vperm.slane %v5607, 1
      %v5611 = vperm.slane %v5607, 2
      %v5612 = vperm.slane %v5607, 3
      %v5617 = vmul.f32 %v5214, %v5609
      %v5618 = vmul.f32 %v5215, %v5610
      %v5619 = vmul.f32 %v5216, %v5611
      %v5620 = vmul.f32 %v5217, %v5612
      %v5621 = vmul.f32 %v5218, %v5609
      %v5622 = vmul.f32 %v5219, %v5610
      %v5623 = vmul.f32 %v5220, %v5611
      %v5624 = vmul.f32 %v5221, %v5612
      %v5625 = vmul.f32 %v5222, %v5609
      %v5626 = vmul.f32 %v5223, %v5610
      %v5627 = vmul.f32 %v5224, %v5611
      %v5628 = vmul.f32 %v5225, %v5612
      %v5629 = vmul.f32 %v5226, %v5609
      %v5630 = vmul.f32 %v5227, %v5610
      %v5631 = vmul.f32 %v5228, %v5611
      %v5632 = vmul.f32 %v5229, %v5612
      %5633 = vst [vmem:[#allocation2 + $0x200] sm:$0xff] %v5617
      %5634 = vst [vmem:[#allocation2 + $0x208] sm:$0xff] %v5618
      %5635 = vst [vmem:[#allocation2 + $0x210] sm:$0xff] %v5619
      %5636 = vst [vmem:[#allocation2 + $0x218] sm:$0xff] %v5620
      %5637 = vst [vmem:[#allocation2 + $0x220] sm:$0xff] %v5621
      %5638 = vst [vmem:[#allocation2 + $0x228] sm:$0xff] %v5622
      %5639 = vst [vmem:[#allocation2 + $0x230] sm:$0xff] %v5623
      %5640 = vst [vmem:[#allocation2 + $0x238] sm:$0xff] %v5624
      %5641 = vst [vmem:[#allocation2 + $0x240] sm:$0xff] %v5625
      %5642 = vst [vmem:[#allocation2 + $0x248] sm:$0xff] %v5626
      %5643 = vst [vmem:[#allocation2 + $0x250] sm:$0xff] %v5627
      %5644 = vst [vmem:[#allocation2 + $0x258] sm:$0xff] %v5628
      %5645 = vst [vmem:[#allocation2 + $0x260] sm:$0xff] %v5629
      %5646 = vst [vmem:[#allocation2 + $0x268] sm:$0xff] %v5630
      %5647 = vst [vmem:[#allocation2 + $0x270] sm:$0xff] %v5631
      %5648 = vst [vmem:[#allocation2 + $0x278] sm:$0xff] %v5632
      %5649 = vrot.lane.b32.xlu0 %v5214, 127
      %v5650 = vpop.permute.xlu0 %5649
      %5651 = vrot.lane.b32.xlu0 %v5218, 127
      %v5652 = vpop.permute.xlu0 %5651
      %5653 = vrot.lane.b32.xlu0 %v5222, 127
      %v5654 = vpop.permute.xlu0 %5653
      %5655 = vrot.lane.b32.xlu0 %v5226, 127
      %v5656 = vpop.permute.xlu0 %5655
      %5657 = vrot.lane.b32.xlu0 %v5215, 127
      %v5658 = vpop.permute.xlu0 %5657
      %5659 = vrot.lane.b32.xlu0 %v5219, 127
      %v5660 = vpop.permute.xlu0 %5659
      %5661 = vrot.lane.b32.xlu0 %v5223, 127
      %v5662 = vpop.permute.xlu0 %5661
      %5663 = vrot.lane.b32.xlu0 %v5227, 127
      %v5664 = vpop.permute.xlu0 %5663
      %5665 = vrot.lane.b32.xlu0 %v5216, 127
      %v5666 = vpop.permute.xlu0 %5665
      %5667 = vrot.lane.b32.xlu0 %v5220, 127
      %v5668 = vpop.permute.xlu0 %5667
      %5669 = vrot.lane.b32.xlu0 %v5224, 127
      %v5670 = vpop.permute.xlu0 %5669
      %5671 = vrot.lane.b32.xlu0 %v5228, 127
      %v5672 = vpop.permute.xlu0 %5671
      %5673 = vrot.lane.b32.xlu0 %v5217, 127
      %v5674 = vpop.permute.xlu0 %5673
      %5675 = vrot.lane.b32.xlu0 %v5221, 127
      %v5676 = vpop.permute.xlu0 %5675
      %5677 = vrot.lane.b32.xlu0 %v5225, 127
      %v5678 = vpop.permute.xlu0 %5677
      %5679 = vrot.lane.b32.xlu0 %v5229, 127
      %v5680 = vpop.permute.xlu0 %5679
      %v5681 = vsel %vm816, %v5666, %v5674
      %v5682 = vsel %vm816, %v5668, %v5676
      %v5683 = vsel %vm816, %v5670, %v5678
      %v5684 = vsel %vm816, %v5672, %v5680
      %v5685 = vsel %vm816, %v5658, %v5666
      %v5686 = vsel %vm816, %v5660, %v5668
      %v5687 = vsel %vm816, %v5662, %v5670
      %v5688 = vsel %vm816, %v5664, %v5672
      %v5689 = vsel %vm816, %v5650, %v5658
      %v5690 = vsel %vm816, %v5652, %v5660
      %v5691 = vsel %vm816, %v5654, %v5662
      %v5692 = vsel %vm816, %v5656, %v5664
      %v5693 = vsel %vm816, %v5674, %v5650
      %v5694 = vsel %vm816, %v5676, %v5652
      %v5695 = vsel %vm816, %v5678, %v5654
      %v5696 = vsel %vm816, %v5680, %v5656
      %v5697 = vld [vmem:[%s821] ss:$8 sm:$0xf]
      %v5699 = vperm.slane %v5697, 0
      %v5700 = vperm.slane %v5697, 1
      %v5701 = vperm.slane %v5697, 2
      %v5702 = vperm.slane %v5697, 3
      %v5707 = vmul.f32 %v5689, %v5699
      %v5708 = vmul.f32 %v5685, %v5700
      %v5709 = vmul.f32 %v5681, %v5701
      %v5710 = vmul.f32 %v5693, %v5702
      %v5711 = vmul.f32 %v5690, %v5699
      %v5712 = vmul.f32 %v5686, %v5700
      %v5713 = vmul.f32 %v5682, %v5701
      %v5714 = vmul.f32 %v5694, %v5702
      %v5715 = vmul.f32 %v5691, %v5699
      %v5716 = vmul.f32 %v5687, %v5700
      %v5717 = vmul.f32 %v5683, %v5701
      %v5718 = vmul.f32 %v5695, %v5702
      %v5719 = vmul.f32 %v5692, %v5699
      %v5720 = vmul.f32 %v5688, %v5700
      %v5721 = vmul.f32 %v5684, %v5701
      %v5722 = vmul.f32 %v5696, %v5702
      %5723 = vst [vmem:[#allocation2 + $0x280] sm:$0xff] %v5707
      %5724 = vst [vmem:[#allocation2 + $0x288] sm:$0xff] %v5708
      %5725 = vst [vmem:[#allocation2 + $0x290] sm:$0xff] %v5709
      %5726 = vst [vmem:[#allocation2 + $0x298] sm:$0xff] %v5710
      %5727 = vst [vmem:[#allocation2 + $0x2a0] sm:$0xff] %v5711
      %5728 = vst [vmem:[#allocation2 + $0x2a8] sm:$0xff] %v5712
      %5729 = vst [vmem:[#allocation2 + $0x2b0] sm:$0xff] %v5713
      %5730 = vst [vmem:[#allocation2 + $0x2b8] sm:$0xff] %v5714
      %5731 = vst [vmem:[#allocation2 + $0x2c0] sm:$0xff] %v5715
      %5732 = vst [vmem:[#allocation2 + $0x2c8] sm:$0xff] %v5716
      %5733 = vst [vmem:[#allocation2 + $0x2d0] sm:$0xff] %v5717
      %5734 = vst [vmem:[#allocation2 + $0x2d8] sm:$0xff] %v5718
      %5735 = vst [vmem:[#allocation2 + $0x2e0] sm:$0xff] %v5719
      %5736 = vst [vmem:[#allocation2 + $0x2e8] sm:$0xff] %v5720
      %5737 = vst [vmem:[#allocation2 + $0x2f0] sm:$0xff] %v5721
      %5738 = vst [vmem:[#allocation2 + $0x2f8] sm:$0xff] %v5722
      %5739 = vrot.lane.b32.xlu0 %v5214, 113
      %v5740 = vpop.permute.xlu0 %5739
      %5741 = vrot.lane.b32.xlu0 %v5218, 113
      %v5742 = vpop.permute.xlu0 %5741
      %5743 = vrot.lane.b32.xlu0 %v5222, 113
      %v5744 = vpop.permute.xlu0 %5743
      %5745 = vrot.lane.b32.xlu0 %v5226, 113
      %v5746 = vpop.permute.xlu0 %5745
      %5747 = vrot.lane.b32.xlu0 %v5215, 113
      %v5748 = vpop.permute.xlu0 %5747
      %5749 = vrot.lane.b32.xlu0 %v5219, 113
      %v5750 = vpop.permute.xlu0 %5749
      %5751 = vrot.lane.b32.xlu0 %v5223, 113
      %v5752 = vpop.permute.xlu0 %5751
      %5753 = vrot.lane.b32.xlu0 %v5227, 113
      %v5754 = vpop.permute.xlu0 %5753
      %5755 = vrot.lane.b32.xlu0 %v5216, 113
      %v5756 = vpop.permute.xlu0 %5755
      %5757 = vrot.lane.b32.xlu0 %v5220, 113
      %v5758 = vpop.permute.xlu0 %5757
      %5759 = vrot.lane.b32.xlu0 %v5224, 113
      %v5760 = vpop.permute.xlu0 %5759
      %5761 = vrot.lane.b32.xlu0 %v5228, 113
      %v5762 = vpop.permute.xlu0 %5761
      %5763 = vrot.lane.b32.xlu0 %v5217, 113
      %v5764 = vpop.permute.xlu0 %5763
      %5765 = vrot.lane.b32.xlu0 %v5221, 113
      %v5766 = vpop.permute.xlu0 %5765
      %5767 = vrot.lane.b32.xlu0 %v5225, 113
      %v5768 = vpop.permute.xlu0 %5767
      %5769 = vrot.lane.b32.xlu0 %v5229, 113
      %v5770 = vpop.permute.xlu0 %5769
      %v5771 = vsel %vm844, %v5756, %v5764
      %v5772 = vsel %vm844, %v5758, %v5766
      %v5773 = vsel %vm844, %v5760, %v5768
      %v5774 = vsel %vm844, %v5762, %v5770
      %v5775 = vsel %vm844, %v5748, %v5756
      %v5776 = vsel %vm844, %v5750, %v5758
      %v5777 = vsel %vm844, %v5752, %v5760
      %v5778 = vsel %vm844, %v5754, %v5762
      %v5779 = vsel %vm844, %v5740, %v5748
      %v5780 = vsel %vm844, %v5742, %v5750
      %v5781 = vsel %vm844, %v5744, %v5752
      %v5782 = vsel %vm844, %v5746, %v5754
      %v5783 = vsel %vm844, %v5764, %v5740
      %v5784 = vsel %vm844, %v5766, %v5742
      %v5785 = vsel %vm844, %v5768, %v5744
      %v5786 = vsel %vm844, %v5770, %v5746
      %v5787 = vld [vmem:[%s849] ss:$8 sm:$0xf]
      %v5789 = vperm.slane %v5787, 0
      %v5790 = vperm.slane %v5787, 1
      %v5791 = vperm.slane %v5787, 2
      %v5792 = vperm.slane %v5787, 3
      %v5797 = vmul.f32 %v5779, %v5789
      %v5798 = vmul.f32 %v5775, %v5790
      %v5799 = vmul.f32 %v5771, %v5791
      %v5800 = vmul.f32 %v5783, %v5792
      %v5801 = vmul.f32 %v5780, %v5789
      %v5802 = vmul.f32 %v5776, %v5790
      %v5803 = vmul.f32 %v5772, %v5791
      %v5804 = vmul.f32 %v5784, %v5792
      %v5805 = vmul.f32 %v5781, %v5789
      %v5806 = vmul.f32 %v5777, %v5790
      %v5807 = vmul.f32 %v5773, %v5791
      %v5808 = vmul.f32 %v5785, %v5792
      %v5809 = vmul.f32 %v5782, %v5789
      %v5810 = vmul.f32 %v5778, %v5790
      %v5811 = vmul.f32 %v5774, %v5791
      %v5812 = vmul.f32 %v5786, %v5792
      %5813 = vst [vmem:[#allocation2 + $0x300] sm:$0xff] %v5797
      %5814 = vst [vmem:[#allocation2 + $0x308] sm:$0xff] %v5798
      %5815 = vst [vmem:[#allocation2 + $0x310] sm:$0xff] %v5799
      %5816 = vst [vmem:[#allocation2 + $0x318] sm:$0xff] %v5800
      %5817 = vst [vmem:[#allocation2 + $0x320] sm:$0xff] %v5801
      %5818 = vst [vmem:[#allocation2 + $0x328] sm:$0xff] %v5802
      %5819 = vst [vmem:[#allocation2 + $0x330] sm:$0xff] %v5803
      %5820 = vst [vmem:[#allocation2 + $0x338] sm:$0xff] %v5804
      %5821 = vst [vmem:[#allocation2 + $0x340] sm:$0xff] %v5805
      %5822 = vst [vmem:[#allocation2 + $0x348] sm:$0xff] %v5806
      %5823 = vst [vmem:[#allocation2 + $0x350] sm:$0xff] %v5807
      %5824 = vst [vmem:[#allocation2 + $0x358] sm:$0xff] %v5808
      %5825 = vst [vmem:[#allocation2 + $0x360] sm:$0xff] %v5809
      %5826 = vst [vmem:[#allocation2 + $0x368] sm:$0xff] %v5810
      %5827 = vst [vmem:[#allocation2 + $0x370] sm:$0xff] %v5811
      %5828 = vst [vmem:[#allocation2 + $0x378] sm:$0xff] %v5812
      %5829 = vrot.lane.b32.xlu0 %v5214, 112
      %v5830 = vpop.permute.xlu0 %5829
      %5831 = vrot.lane.b32.xlu0 %v5218, 112
      %v5832 = vpop.permute.xlu0 %5831
      %5833 = vrot.lane.b32.xlu0 %v5222, 112
      %v5834 = vpop.permute.xlu0 %5833
      %5835 = vrot.lane.b32.xlu0 %v5226, 112
      %v5836 = vpop.permute.xlu0 %5835
      %5837 = vrot.lane.b32.xlu0 %v5215, 112
      %v5838 = vpop.permute.xlu0 %5837
      %5839 = vrot.lane.b32.xlu0 %v5219, 112
      %v5840 = vpop.permute.xlu0 %5839
      %5841 = vrot.lane.b32.xlu0 %v5223, 112
      %v5842 = vpop.permute.xlu0 %5841
      %5843 = vrot.lane.b32.xlu0 %v5227, 112
      %v5844 = vpop.permute.xlu0 %5843
      %5845 = vrot.lane.b32.xlu0 %v5216, 112
      %v5846 = vpop.permute.xlu0 %5845
      %5847 = vrot.lane.b32.xlu0 %v5220, 112
      %v5848 = vpop.permute.xlu0 %5847
      %5849 = vrot.lane.b32.xlu0 %v5224, 112
      %v5850 = vpop.permute.xlu0 %5849
      %5851 = vrot.lane.b32.xlu0 %v5228, 112
      %v5852 = vpop.permute.xlu0 %5851
      %5853 = vrot.lane.b32.xlu0 %v5217, 112
      %v5854 = vpop.permute.xlu0 %5853
      %5855 = vrot.lane.b32.xlu0 %v5221, 112
      %v5856 = vpop.permute.xlu0 %5855
      %5857 = vrot.lane.b32.xlu0 %v5225, 112
      %v5858 = vpop.permute.xlu0 %5857
      %5859 = vrot.lane.b32.xlu0 %v5229, 112
      %v5860 = vpop.permute.xlu0 %5859
      %v5861 = vsel %vm872, %v5846, %v5854
      %v5862 = vsel %vm872, %v5848, %v5856
      %v5863 = vsel %vm872, %v5850, %v5858
      %v5864 = vsel %vm872, %v5852, %v5860
      %v5865 = vsel %vm872, %v5838, %v5846
      %v5866 = vsel %vm872, %v5840, %v5848
      %v5867 = vsel %vm872, %v5842, %v5850
      %v5868 = vsel %vm872, %v5844, %v5852
      %v5869 = vsel %vm872, %v5830, %v5838
      %v5870 = vsel %vm872, %v5832, %v5840
      %v5871 = vsel %vm872, %v5834, %v5842
      %v5872 = vsel %vm872, %v5836, %v5844
      %v5873 = vsel %vm872, %v5854, %v5830
      %v5874 = vsel %vm872, %v5856, %v5832
      %v5875 = vsel %vm872, %v5858, %v5834
      %v5876 = vsel %vm872, %v5860, %v5836
      %v5877 = vld [vmem:[%s877] ss:$8 sm:$0xf]
      %v5879 = vperm.slane %v5877, 0
      %v5880 = vperm.slane %v5877, 1
      %v5881 = vperm.slane %v5877, 2
      %v5882 = vperm.slane %v5877, 3
      %v5887 = vmul.f32 %v5869, %v5879
      %v5888 = vmul.f32 %v5865, %v5880
      %v5889 = vmul.f32 %v5861, %v5881
      %v5890 = vmul.f32 %v5873, %v5882
      %v5891 = vmul.f32 %v5870, %v5879
      %v5892 = vmul.f32 %v5866, %v5880
      %v5893 = vmul.f32 %v5862, %v5881
      %v5894 = vmul.f32 %v5874, %v5882
      %v5895 = vmul.f32 %v5871, %v5879
      %v5896 = vmul.f32 %v5867, %v5880
      %v5897 = vmul.f32 %v5863, %v5881
      %v5898 = vmul.f32 %v5875, %v5882
      %v5899 = vmul.f32 %v5872, %v5879
      %v5900 = vmul.f32 %v5868, %v5880
      %v5901 = vmul.f32 %v5864, %v5881
      %v5902 = vmul.f32 %v5876, %v5882
      %5903 = vst [vmem:[#allocation2 + $0x380] sm:$0xff] %v5887
      %5904 = vst [vmem:[#allocation2 + $0x388] sm:$0xff] %v5888
      %5905 = vst [vmem:[#allocation2 + $0x390] sm:$0xff] %v5889
      %5906 = vst [vmem:[#allocation2 + $0x398] sm:$0xff] %v5890
      %5907 = vst [vmem:[#allocation2 + $0x3a0] sm:$0xff] %v5891
      %5908 = vst [vmem:[#allocation2 + $0x3a8] sm:$0xff] %v5892
      %5909 = vst [vmem:[#allocation2 + $0x3b0] sm:$0xff] %v5893
      %5910 = vst [vmem:[#allocation2 + $0x3b8] sm:$0xff] %v5894
      %5911 = vst [vmem:[#allocation2 + $0x3c0] sm:$0xff] %v5895
      %5912 = vst [vmem:[#allocation2 + $0x3c8] sm:$0xff] %v5896
      %5913 = vst [vmem:[#allocation2 + $0x3d0] sm:$0xff] %v5897
      %5914 = vst [vmem:[#allocation2 + $0x3d8] sm:$0xff] %v5898
      %5915 = vst [vmem:[#allocation2 + $0x3e0] sm:$0xff] %v5899
      %5916 = vst [vmem:[#allocation2 + $0x3e8] sm:$0xff] %v5900
      %5917 = vst [vmem:[#allocation2 + $0x3f0] sm:$0xff] %v5901
      %5918 = vst [vmem:[#allocation2 + $0x3f8] sm:$0xff] %v5902
      %5919 = vrot.lane.b32.xlu0 %v5214, 111
      %v5920 = vpop.permute.xlu0 %5919
      %5921 = vrot.lane.b32.xlu0 %v5218, 111
      %v5922 = vpop.permute.xlu0 %5921
      %5923 = vrot.lane.b32.xlu0 %v5222, 111
      %v5924 = vpop.permute.xlu0 %5923
      %5925 = vrot.lane.b32.xlu0 %v5226, 111
      %v5926 = vpop.permute.xlu0 %5925
      %5927 = vrot.lane.b32.xlu0 %v5215, 111
      %v5928 = vpop.permute.xlu0 %5927
      %5929 = vrot.lane.b32.xlu0 %v5219, 111
      %v5930 = vpop.permute.xlu0 %5929
      %5931 = vrot.lane.b32.xlu0 %v5223, 111
      %v5932 = vpop.permute.xlu0 %5931
      %5933 = vrot.lane.b32.xlu0 %v5227, 111
      %v5934 = vpop.permute.xlu0 %5933
      %5935 = vrot.lane.b32.xlu0 %v5216, 111
      %v5936 = vpop.permute.xlu0 %5935
      %5937 = vrot.lane.b32.xlu0 %v5220, 111
      %v5938 = vpop.permute.xlu0 %5937
      %5939 = vrot.lane.b32.xlu0 %v5224, 111
      %v5940 = vpop.permute.xlu0 %5939
      %5941 = vrot.lane.b32.xlu0 %v5228, 111
      %v5942 = vpop.permute.xlu0 %5941
      %5943 = vrot.lane.b32.xlu0 %v5217, 111
      %v5944 = vpop.permute.xlu0 %5943
      %5945 = vrot.lane.b32.xlu0 %v5221, 111
      %v5946 = vpop.permute.xlu0 %5945
      %5947 = vrot.lane.b32.xlu0 %v5225, 111
      %v5948 = vpop.permute.xlu0 %5947
      %5949 = vrot.lane.b32.xlu0 %v5229, 111
      %v5950 = vpop.permute.xlu0 %5949
      %v5951 = vsel %vm900, %v5936, %v5944
      %v5952 = vsel %vm900, %v5938, %v5946
      %v5953 = vsel %vm900, %v5940, %v5948
      %v5954 = vsel %vm900, %v5942, %v5950
      %v5955 = vsel %vm900, %v5928, %v5936
      %v5956 = vsel %vm900, %v5930, %v5938
      %v5957 = vsel %vm900, %v5932, %v5940
      %v5958 = vsel %vm900, %v5934, %v5942
      %v5959 = vsel %vm900, %v5920, %v5928
      %v5960 = vsel %vm900, %v5922, %v5930
      %v5961 = vsel %vm900, %v5924, %v5932
      %v5962 = vsel %vm900, %v5926, %v5934
      %v5963 = vsel %vm900, %v5944, %v5920
      %v5964 = vsel %vm900, %v5946, %v5922
      %v5965 = vsel %vm900, %v5948, %v5924
      %v5966 = vsel %vm900, %v5950, %v5926
      %v5967 = vld [vmem:[%s905] ss:$8 sm:$0xf]
      %v5969 = vperm.slane %v5967, 0
      %v5970 = vperm.slane %v5967, 1
      %v5971 = vperm.slane %v5967, 2
      %v5972 = vperm.slane %v5967, 3
      %v5977 = vmul.f32 %v5959, %v5969
      %v5978 = vmul.f32 %v5955, %v5970
      %v5979 = vmul.f32 %v5951, %v5971
      %v5980 = vmul.f32 %v5963, %v5972
      %v5981 = vmul.f32 %v5960, %v5969
      %v5982 = vmul.f32 %v5956, %v5970
      %v5983 = vmul.f32 %v5952, %v5971
      %v5984 = vmul.f32 %v5964, %v5972
      %v5985 = vmul.f32 %v5961, %v5969
      %v5986 = vmul.f32 %v5957, %v5970
      %v5987 = vmul.f32 %v5953, %v5971
      %v5988 = vmul.f32 %v5965, %v5972
      %v5989 = vmul.f32 %v5962, %v5969
      %v5990 = vmul.f32 %v5958, %v5970
      %v5991 = vmul.f32 %v5954, %v5971
      %v5992 = vmul.f32 %v5966, %v5972
      %5993 = vst [vmem:[#allocation2 + $0x400] sm:$0xff] %v5977
      %5994 = vst [vmem:[#allocation2 + $0x408] sm:$0xff] %v5978
      %5995 = vst [vmem:[#allocation2 + $0x410] sm:$0xff] %v5979
      %5996 = vst [vmem:[#allocation2 + $0x418] sm:$0xff] %v5980
      %5997 = vst [vmem:[#allocation2 + $0x420] sm:$0xff] %v5981
      %5998 = vst [vmem:[#allocation2 + $0x428] sm:$0xff] %v5982
      %5999 = vst [vmem:[#allocation2 + $0x430] sm:$0xff] %v5983
      %6000 = vst [vmem:[#allocation2 + $0x438] sm:$0xff] %v5984
      %6001 = vst [vmem:[#allocation2 + $0x440] sm:$0xff] %v5985
      %6002 = vst [vmem:[#allocation2 + $0x448] sm:$0xff] %v5986
      %6003 = vst [vmem:[#allocation2 + $0x450] sm:$0xff] %v5987
      %6004 = vst [vmem:[#allocation2 + $0x458] sm:$0xff] %v5988
      %6005 = vst [vmem:[#allocation2 + $0x460] sm:$0xff] %v5989
      %6006 = vst [vmem:[#allocation2 + $0x468] sm:$0xff] %v5990
      %6007 = vst [vmem:[#allocation2 + $0x470] sm:$0xff] %v5991
      %6008 = vst [vmem:[#allocation2 + $0x478] sm:$0xff] %v5992
      %v6009 = vld [vmem:[%s645] sm:$0x7]
      %v6010 = vld [vmem:[#allocation2] sm:$0xff]
      %v6011 = vld [vmem:[#allocation2 + $0x8] sm:$0xff]
      %v6012 = vld [vmem:[#allocation2 + $0x10] sm:$0xff]
      %v6013 = vld [vmem:[#allocation2 + $0x18] sm:$0xff]
      %v6014 = vld [vmem:[#allocation2 + $0x20] sm:$0xff]
      %v6015 = vld [vmem:[#allocation2 + $0x28] sm:$0xff]
      %v6016 = vld [vmem:[#allocation2 + $0x30] sm:$0xff]
      %v6017 = vld [vmem:[#allocation2 + $0x38] sm:$0xff]
      %v6018 = vld [vmem:[#allocation2 + $0x40] sm:$0xff]
      %v6019 = vld [vmem:[#allocation2 + $0x48] sm:$0xff]
      %v6020 = vld [vmem:[#allocation2 + $0x50] sm:$0xff]
      %v6021 = vld [vmem:[#allocation2 + $0x58] sm:$0xff]
      %v6022 = vld [vmem:[#allocation2 + $0x60] sm:$0xff]
      %v6023 = vld [vmem:[#allocation2 + $0x68] sm:$0xff]
      %v6024 = vld [vmem:[#allocation2 + $0x70] sm:$0xff]
      %v6025 = vld [vmem:[#allocation2 + $0x78] sm:$0xff]
      %v6026 = vld [vmem:[#allocation2 + $0x80] sm:$0xff]
      %v6027 = vld [vmem:[#allocation2 + $0x88] sm:$0xff]
      %v6028 = vld [vmem:[#allocation2 + $0x90] sm:$0xff]
      %v6029 = vld [vmem:[#allocation2 + $0x98] sm:$0xff]
      %v6030 = vld [vmem:[#allocation2 + $0xa0] sm:$0xff]
      %v6031 = vld [vmem:[#allocation2 + $0xa8] sm:$0xff]
      %v6032 = vld [vmem:[#allocation2 + $0xb0] sm:$0xff]
      %v6033 = vld [vmem:[#allocation2 + $0xb8] sm:$0xff]
      %v6034 = vld [vmem:[#allocation2 + $0xc0] sm:$0xff]
      %v6035 = vld [vmem:[#allocation2 + $0xc8] sm:$0xff]
      %v6036 = vld [vmem:[#allocation2 + $0xd0] sm:$0xff]
      %v6037 = vld [vmem:[#allocation2 + $0xd8] sm:$0xff]
      %v6038 = vld [vmem:[#allocation2 + $0xe0] sm:$0xff]
      %v6039 = vld [vmem:[#allocation2 + $0xe8] sm:$0xff]
      %v6040 = vld [vmem:[#allocation2 + $0xf0] sm:$0xff]
      %v6041 = vld [vmem:[#allocation2 + $0xf8] sm:$0xff]
      %v6042 = vld [vmem:[#allocation2 + $0x100] sm:$0xff]
      %v6043 = vld [vmem:[#allocation2 + $0x108] sm:$0xff]
      %v6044 = vld [vmem:[#allocation2 + $0x110] sm:$0xff]
      %v6045 = vld [vmem:[#allocation2 + $0x118] sm:$0xff]
      %v6046 = vld [vmem:[#allocation2 + $0x120] sm:$0xff]
      %v6047 = vld [vmem:[#allocation2 + $0x128] sm:$0xff]
      %v6048 = vld [vmem:[#allocation2 + $0x130] sm:$0xff]
      %v6049 = vld [vmem:[#allocation2 + $0x138] sm:$0xff]
      %v6050 = vld [vmem:[#allocation2 + $0x140] sm:$0xff]
      %v6051 = vld [vmem:[#allocation2 + $0x148] sm:$0xff]
      %v6052 = vld [vmem:[#allocation2 + $0x150] sm:$0xff]
      %v6053 = vld [vmem:[#allocation2 + $0x158] sm:$0xff]
      %v6054 = vld [vmem:[#allocation2 + $0x160] sm:$0xff]
      %v6055 = vld [vmem:[#allocation2 + $0x168] sm:$0xff]
      %v6056 = vld [vmem:[#allocation2 + $0x170] sm:$0xff]
      %v6057 = vld [vmem:[#allocation2 + $0x178] sm:$0xff]
      %v6058 = vld [vmem:[#allocation2 + $0x180] sm:$0xff]
      %v6059 = vld [vmem:[#allocation2 + $0x188] sm:$0xff]
      %v6060 = vld [vmem:[#allocation2 + $0x190] sm:$0xff]
      %v6061 = vld [vmem:[#allocation2 + $0x198] sm:$0xff]
      %v6062 = vld [vmem:[#allocation2 + $0x1a0] sm:$0xff]
      %v6063 = vld [vmem:[#allocation2 + $0x1a8] sm:$0xff]
      %v6064 = vld [vmem:[#allocation2 + $0x1b0] sm:$0xff]
      %v6065 = vld [vmem:[#allocation2 + $0x1b8] sm:$0xff]
      %v6066 = vld [vmem:[#allocation2 + $0x1c0] sm:$0xff]
      %v6067 = vld [vmem:[#allocation2 + $0x1c8] sm:$0xff]
      %v6068 = vld [vmem:[#allocation2 + $0x1d0] sm:$0xff]
      %v6069 = vld [vmem:[#allocation2 + $0x1d8] sm:$0xff]
      %v6070 = vld [vmem:[#allocation2 + $0x1e0] sm:$0xff]
      %v6071 = vld [vmem:[#allocation2 + $0x1e8] sm:$0xff]
      %v6072 = vld [vmem:[#allocation2 + $0x1f0] sm:$0xff]
      %v6073 = vld [vmem:[#allocation2 + $0x1f8] sm:$0xff]
      %v6074 = vld [vmem:[#allocation2 + $0x200] sm:$0xff]
      %v6075 = vld [vmem:[#allocation2 + $0x208] sm:$0xff]
      %v6076 = vld [vmem:[#allocation2 + $0x210] sm:$0xff]
      %v6077 = vld [vmem:[#allocation2 + $0x218] sm:$0xff]
      %v6078 = vld [vmem:[#allocation2 + $0x220] sm:$0xff]
      %v6079 = vld [vmem:[#allocation2 + $0x228] sm:$0xff]
      %v6080 = vld [vmem:[#allocation2 + $0x230] sm:$0xff]
      %v6081 = vld [vmem:[#allocation2 + $0x238] sm:$0xff]
      %v6082 = vld [vmem:[#allocation2 + $0x240] sm:$0xff]
      %v6083 = vld [vmem:[#allocation2 + $0x248] sm:$0xff]
      %v6084 = vld [vmem:[#allocation2 + $0x250] sm:$0xff]
      %v6085 = vld [vmem:[#allocation2 + $0x258] sm:$0xff]
      %v6086 = vld [vmem:[#allocation2 + $0x260] sm:$0xff]
      %v6087 = vld [vmem:[#allocation2 + $0x268] sm:$0xff]
      %v6088 = vld [vmem:[#allocation2 + $0x270] sm:$0xff]
      %v6089 = vld [vmem:[#allocation2 + $0x278] sm:$0xff]
      %v6090 = vld [vmem:[#allocation2 + $0x280] sm:$0xff]
      %v6091 = vld [vmem:[#allocation2 + $0x288] sm:$0xff]
      %v6092 = vld [vmem:[#allocation2 + $0x290] sm:$0xff]
      %v6093 = vld [vmem:[#allocation2 + $0x298] sm:$0xff]
      %v6094 = vld [vmem:[#allocation2 + $0x2a0] sm:$0xff]
      %v6095 = vld [vmem:[#allocation2 + $0x2a8] sm:$0xff]
      %v6096 = vld [vmem:[#allocation2 + $0x2b0] sm:$0xff]
      %v6097 = vld [vmem:[#allocation2 + $0x2b8] sm:$0xff]
      %v6098 = vld [vmem:[#allocation2 + $0x2c0] sm:$0xff]
      %v6099 = vld [vmem:[#allocation2 + $0x2c8] sm:$0xff]
      %v6100 = vld [vmem:[#allocation2 + $0x2d0] sm:$0xff]
      %v6101 = vld [vmem:[#allocation2 + $0x2d8] sm:$0xff]
      %v6102 = vld [vmem:[#allocation2 + $0x2e0] sm:$0xff]
      %v6103 = vld [vmem:[#allocation2 + $0x2e8] sm:$0xff]
      %v6104 = vld [vmem:[#allocation2 + $0x2f0] sm:$0xff]
      %v6105 = vld [vmem:[#allocation2 + $0x2f8] sm:$0xff]
      %v6106 = vld [vmem:[#allocation2 + $0x300] sm:$0xff]
      %v6107 = vld [vmem:[#allocation2 + $0x308] sm:$0xff]
      %v6108 = vld [vmem:[#allocation2 + $0x310] sm:$0xff]
      %v6109 = vld [vmem:[#allocation2 + $0x318] sm:$0xff]
      %v6110 = vld [vmem:[#allocation2 + $0x320] sm:$0xff]
      %v6111 = vld [vmem:[#allocation2 + $0x328] sm:$0xff]
      %v6112 = vld [vmem:[#allocation2 + $0x330] sm:$0xff]
      %v6113 = vld [vmem:[#allocation2 + $0x338] sm:$0xff]
      %v6114 = vld [vmem:[#allocation2 + $0x340] sm:$0xff]
      %v6115 = vld [vmem:[#allocation2 + $0x348] sm:$0xff]
      %v6116 = vld [vmem:[#allocation2 + $0x350] sm:$0xff]
      %v6117 = vld [vmem:[#allocation2 + $0x358] sm:$0xff]
      %v6118 = vld [vmem:[#allocation2 + $0x360] sm:$0xff]
      %v6119 = vld [vmem:[#allocation2 + $0x368] sm:$0xff]
      %v6120 = vld [vmem:[#allocation2 + $0x370] sm:$0xff]
      %v6121 = vld [vmem:[#allocation2 + $0x378] sm:$0xff]
      %v6122 = vld [vmem:[#allocation2 + $0x380] sm:$0xff]
      %v6123 = vld [vmem:[#allocation2 + $0x388] sm:$0xff]
      %v6124 = vld [vmem:[#allocation2 + $0x390] sm:$0xff]
      %v6125 = vld [vmem:[#allocation2 + $0x398] sm:$0xff]
      %v6126 = vld [vmem:[#allocation2 + $0x3a0] sm:$0xff]
      %v6127 = vld [vmem:[#allocation2 + $0x3a8] sm:$0xff]
      %v6128 = vld [vmem:[#allocation2 + $0x3b0] sm:$0xff]
      %v6129 = vld [vmem:[#allocation2 + $0x3b8] sm:$0xff]
      %v6130 = vld [vmem:[#allocation2 + $0x3c0] sm:$0xff]
      %v6131 = vld [vmem:[#allocation2 + $0x3c8] sm:$0xff]
      %v6132 = vld [vmem:[#allocation2 + $0x3d0] sm:$0xff]
      %v6133 = vld [vmem:[#allocation2 + $0x3d8] sm:$0xff]
      %v6134 = vld [vmem:[#allocation2 + $0x3e0] sm:$0xff]
      %v6135 = vld [vmem:[#allocation2 + $0x3e8] sm:$0xff]
      %v6136 = vld [vmem:[#allocation2 + $0x3f0] sm:$0xff]
      %v6137 = vld [vmem:[#allocation2 + $0x3f8] sm:$0xff]
      %v6138 = vld [vmem:[#allocation2 + $0x400] sm:$0xff]
      %v6139 = vld [vmem:[#allocation2 + $0x408] sm:$0xff]
      %v6140 = vld [vmem:[#allocation2 + $0x410] sm:$0xff]
      %v6141 = vld [vmem:[#allocation2 + $0x418] sm:$0xff]
      %v6142 = vld [vmem:[#allocation2 + $0x420] sm:$0xff]
      %v6143 = vld [vmem:[#allocation2 + $0x428] sm:$0xff]
      %v6144 = vld [vmem:[#allocation2 + $0x430] sm:$0xff]
      %v6145 = vld [vmem:[#allocation2 + $0x438] sm:$0xff]
      %v6146 = vld [vmem:[#allocation2 + $0x440] sm:$0xff]
      %v6147 = vld [vmem:[#allocation2 + $0x448] sm:$0xff]
      %v6148 = vld [vmem:[#allocation2 + $0x450] sm:$0xff]
      %v6149 = vld [vmem:[#allocation2 + $0x458] sm:$0xff]
      %v6150 = vld [vmem:[#allocation2 + $0x460] sm:$0xff]
      %v6151 = vld [vmem:[#allocation2 + $0x468] sm:$0xff]
      %v6152 = vld [vmem:[#allocation2 + $0x470] sm:$0xff]
      %v6153 = vld [vmem:[#allocation2 + $0x478] sm:$0xff]
      %v6154 = vld [vmem:[%s648] sm:$0x1]
      %6156 = vset.pattern.permute.xlu0 0
      %6157 = vperm.xlu0 %6156, %v6154
      %v6158 = vpop.permute.xlu0 %6157
      %v6160 = vperm.slane %v6158, 0
      %v6162 = vperm.slane %v6009, 0
      %v6163 = vperm.slane %v6009, 1
      %v6164 = vperm.slane %v6009, 2
      %v6167 = vsel %vm2179, %v6164, 0
      %6169 = vmatpush.msra.mxu0 %v6070
      %6170 = vmatpush.msra.mxu0 %v6066
      %6171 = vmatpush.msra.mxu0 %v6062
      %6172 = vmatpush.msra.mxu0 %v6058
      %6173 = vmatpush.msra.mxu0 %v6054
      %6174 = vmatpush.msra.mxu0 %v6050
      %6175 = vmatpush.msra.mxu0 %v6046
      %6176 = vmatpush.msra.mxu0 %v6042
      %6177 = vmatpush.msra.mxu0 %v6038
      %6178 = vmatpush.msra.mxu0 %v6034
      %6179 = vmatpush.msra.mxu0 %v6030
      %6180 = vmatpush.msra.mxu0 %v6026
      %6181 = vmatpush.msra.mxu0 %v6022
      %6182 = vmatpush.msra.mxu0 %v6018
      %6183 = vmatpush.msra.mxu0 %v6014
      %6184 = vmatpush.msra.mxu0 %v6010
      %6185 = vmatmul.f32.gmra.mxu0 %v6162
      %v6186 = vpop.f32.mrf.mxu0
      %v6187 = vadd.f32 %v6160, %v6186
      %6188 = vdwg.mxu0
      %6189 = vmatpush.msra.mxu0 %v6134
      %6190 = vmatpush.msra.mxu0 %v6130
      %6191 = vmatpush.msra.mxu0 %v6126
      %6192 = vmatpush.msra.mxu0 %v6122
      %6193 = vmatpush.msra.mxu0 %v6118
      %6194 = vmatpush.msra.mxu0 %v6114
      %6195 = vmatpush.msra.mxu0 %v6110
      %6196 = vmatpush.msra.mxu0 %v6106
      %6197 = vmatpush.msra.mxu0 %v6102
      %6198 = vmatpush.msra.mxu0 %v6098
      %6199 = vmatpush.msra.mxu0 %v6094
      %6200 = vmatpush.msra.mxu0 %v6090
      %6201 = vmatpush.msra.mxu0 %v6086
      %6202 = vmatpush.msra.mxu0 %v6082
      %6203 = vmatpush.msra.mxu0 %v6078
      %6204 = vmatpush.msra.mxu0 %v6074
      %6205 = vmatmul.f32.gmra.mxu0 %v6163
      %v6206 = vpop.f32.mrf.mxu0
      %v6207 = vadd.f32 %v6187, %v6206
      %6208 = vdwg.mxu0
      %6209 = vmatpush.msra.mxu0 0.0
      %6210 = vmatpush.msra.mxu0 0.0
      %6211 = vmatpush.msra.mxu0 0.0
      %6212 = vmatpush.msra.mxu0 0.0
      %6213 = vmatpush.msra.mxu0 0.0
      %6214 = vmatpush.msra.mxu0 0.0
      %6215 = vmatpush.msra.mxu0 0.0
      %6216 = vmatpush.msra.mxu0 0.0
      %6217 = vmatpush.msra.mxu0 0.0
      %6218 = vmatpush.msra.mxu0 0.0
      %6219 = vmatpush.msra.mxu0 0.0
      %6220 = vmatpush.msra.mxu0 0.0
      %6221 = vmatpush.msra.mxu0 %v6150
      %6222 = vmatpush.msra.mxu0 %v6146
      %6223 = vmatpush.msra.mxu0 %v6142
      %6224 = vmatpush.msra.mxu0 %v6138
      %6225 = vmatmul.f32.gmra.mxu0 %v6167
      %v6226 = vpop.f32.mrf.mxu0
      %v6227 = vadd.f32 %v6207, %v6226
      %6228 = vdwg.mxu0
      %6229 = vmatpush.msra.mxu0 %v6071
      %6230 = vmatpush.msra.mxu0 %v6067
      %6231 = vmatpush.msra.mxu0 %v6063
      %6232 = vmatpush.msra.mxu0 %v6059
      %6233 = vmatpush.msra.mxu0 %v6055
      %6234 = vmatpush.msra.mxu0 %v6051
      %6235 = vmatpush.msra.mxu0 %v6047
      %6236 = vmatpush.msra.mxu0 %v6043
      %6237 = vmatpush.msra.mxu0 %v6039
      %6238 = vmatpush.msra.mxu0 %v6035
      %6239 = vmatpush.msra.mxu0 %v6031
      %6240 = vmatpush.msra.mxu0 %v6027
      %6241 = vmatpush.msra.mxu0 %v6023
      %6242 = vmatpush.msra.mxu0 %v6019
      %6243 = vmatpush.msra.mxu0 %v6015
      %6244 = vmatpush.msra.mxu0 %v6011
      %6245 = vmatmul.f32.gmra.mxu0 %v6162
      %v6246 = vpop.f32.mrf.mxu0
      %v6247 = vadd.f32 %v6160, %v6246
      %6248 = vdwg.mxu0
      %6249 = vmatpush.msra.mxu0 %v6135
      %6250 = vmatpush.msra.mxu0 %v6131
      %6251 = vmatpush.msra.mxu0 %v6127
      %6252 = vmatpush.msra.mxu0 %v6123
      %6253 = vmatpush.msra.mxu0 %v6119
      %6254 = vmatpush.msra.mxu0 %v6115
      %6255 = vmatpush.msra.mxu0 %v6111
      %6256 = vmatpush.msra.mxu0 %v6107
      %6257 = vmatpush.msra.mxu0 %v6103
      %6258 = vmatpush.msra.mxu0 %v6099
      %6259 = vmatpush.msra.mxu0 %v6095
      %6260 = vmatpush.msra.mxu0 %v6091
      %6261 = vmatpush.msra.mxu0 %v6087
      %6262 = vmatpush.msra.mxu0 %v6083
      %6263 = vmatpush.msra.mxu0 %v6079
      %6264 = vmatpush.msra.mxu0 %v6075
      %6265 = vmatmul.f32.gmra.mxu0 %v6163
      %v6266 = vpop.f32.mrf.mxu0
      %v6267 = vadd.f32 %v6247, %v6266
      %6268 = vdwg.mxu0
      %6269 = vmatpush.msra.mxu0 0.0
      %6270 = vmatpush.msra.mxu0 0.0
      %6271 = vmatpush.msra.mxu0 0.0
      %6272 = vmatpush.msra.mxu0 0.0
      %6273 = vmatpush.msra.mxu0 0.0
      %6274 = vmatpush.msra.mxu0 0.0
      %6275 = vmatpush.msra.mxu0 0.0
      %6276 = vmatpush.msra.mxu0 0.0
      %6277 = vmatpush.msra.mxu0 0.0
      %6278 = vmatpush.msra.mxu0 0.0
      %6279 = vmatpush.msra.mxu0 0.0
      %6280 = vmatpush.msra.mxu0 0.0
      %6281 = vmatpush.msra.mxu0 %v6151
      %6282 = vmatpush.msra.mxu0 %v6147
      %6283 = vmatpush.msra.mxu0 %v6143
      %6284 = vmatpush.msra.mxu0 %v6139
      %6285 = vmatmul.f32.gmra.mxu0 %v6167
      %v6286 = vpop.f32.mrf.mxu0
      %v6287 = vadd.f32 %v6267, %v6286
      %6288 = vdwg.mxu0
      %6289 = vmatpush.msra.mxu0 %v6072
      %6290 = vmatpush.msra.mxu0 %v6068
      %6291 = vmatpush.msra.mxu0 %v6064
      %6292 = vmatpush.msra.mxu0 %v6060
      %6293 = vmatpush.msra.mxu0 %v6056
      %6294 = vmatpush.msra.mxu0 %v6052
      %6295 = vmatpush.msra.mxu0 %v6048
      %6296 = vmatpush.msra.mxu0 %v6044
      %6297 = vmatpush.msra.mxu0 %v6040
      %6298 = vmatpush.msra.mxu0 %v6036
      %6299 = vmatpush.msra.mxu0 %v6032
      %6300 = vmatpush.msra.mxu0 %v6028
      %6301 = vmatpush.msra.mxu0 %v6024
      %6302 = vmatpush.msra.mxu0 %v6020
      %6303 = vmatpush.msra.mxu0 %v6016
      %6304 = vmatpush.msra.mxu0 %v6012
      %6305 = vmatmul.f32.gmra.mxu0 %v6162
      %v6306 = vpop.f32.mrf.mxu0
      %v6307 = vadd.f32 %v6160, %v6306
      %6308 = vdwg.mxu0
      %6309 = vmatpush.msra.mxu0 %v6136
      %6310 = vmatpush.msra.mxu0 %v6132
      %6311 = vmatpush.msra.mxu0 %v6128
      %6312 = vmatpush.msra.mxu0 %v6124
      %6313 = vmatpush.msra.mxu0 %v6120
      %6314 = vmatpush.msra.mxu0 %v6116
      %6315 = vmatpush.msra.mxu0 %v6112
      %6316 = vmatpush.msra.mxu0 %v6108
      %6317 = vmatpush.msra.mxu0 %v6104
      %6318 = vmatpush.msra.mxu0 %v6100
      %6319 = vmatpush.msra.mxu0 %v6096
      %6320 = vmatpush.msra.mxu0 %v6092
      %6321 = vmatpush.msra.mxu0 %v6088
      %6322 = vmatpush.msra.mxu0 %v6084
      %6323 = vmatpush.msra.mxu0 %v6080
      %6324 = vmatpush.msra.mxu0 %v6076
      %6325 = vmatmul.f32.gmra.mxu0 %v6163
      %v6326 = vpop.f32.mrf.mxu0
      %v6327 = vadd.f32 %v6307, %v6326
      %6328 = vdwg.mxu0
      %6329 = vmatpush.msra.mxu0 0.0
      %6330 = vmatpush.msra.mxu0 0.0
      %6331 = vmatpush.msra.mxu0 0.0
      %6332 = vmatpush.msra.mxu0 0.0
      %6333 = vmatpush.msra.mxu0 0.0
      %6334 = vmatpush.msra.mxu0 0.0
      %6335 = vmatpush.msra.mxu0 0.0
      %6336 = vmatpush.msra.mxu0 0.0
      %6337 = vmatpush.msra.mxu0 0.0
      %6338 = vmatpush.msra.mxu0 0.0
      %6339 = vmatpush.msra.mxu0 0.0
      %6340 = vmatpush.msra.mxu0 0.0
      %6341 = vmatpush.msra.mxu0 %v6152
      %6342 = vmatpush.msra.mxu0 %v6148
      %6343 = vmatpush.msra.mxu0 %v6144
      %6344 = vmatpush.msra.mxu0 %v6140
      %6345 = vmatmul.f32.gmra.mxu0 %v6167
      %v6346 = vpop.f32.mrf.mxu0
      %v6347 = vadd.f32 %v6327, %v6346
      %6348 = vdwg.mxu0
      %6349 = vmatpush.msra.mxu0 %v6073
      %6350 = vmatpush.msra.mxu0 %v6069
      %6351 = vmatpush.msra.mxu0 %v6065
      %6352 = vmatpush.msra.mxu0 %v6061
      %6353 = vmatpush.msra.mxu0 %v6057
      %6354 = vmatpush.msra.mxu0 %v6053
      %6355 = vmatpush.msra.mxu0 %v6049
      %6356 = vmatpush.msra.mxu0 %v6045
      %6357 = vmatpush.msra.mxu0 %v6041
      %6358 = vmatpush.msra.mxu0 %v6037
      %6359 = vmatpush.msra.mxu0 %v6033
      %6360 = vmatpush.msra.mxu0 %v6029
      %6361 = vmatpush.msra.mxu0 %v6025
      %6362 = vmatpush.msra.mxu0 %v6021
      %6363 = vmatpush.msra.mxu0 %v6017
      %6364 = vmatpush.msra.mxu0 %v6013
      %6365 = vmatmul.f32.gmra.mxu0 %v6162
      %v6366 = vpop.f32.mrf.mxu0
      %v6367 = vadd.f32 %v6160, %v6366
      %6368 = vdwg.mxu0
      %6369 = vmatpush.msra.mxu0 %v6137
      %6370 = vmatpush.msra.mxu0 %v6133
      %6371 = vmatpush.msra.mxu0 %v6129
      %6372 = vmatpush.msra.mxu0 %v6125
      %6373 = vmatpush.msra.mxu0 %v6121
      %6374 = vmatpush.msra.mxu0 %v6117
      %6375 = vmatpush.msra.mxu0 %v6113
      %6376 = vmatpush.msra.mxu0 %v6109
      %6377 = vmatpush.msra.mxu0 %v6105
      %6378 = vmatpush.msra.mxu0 %v6101
      %6379 = vmatpush.msra.mxu0 %v6097
      %6380 = vmatpush.msra.mxu0 %v6093
      %6381 = vmatpush.msra.mxu0 %v6089
      %6382 = vmatpush.msra.mxu0 %v6085
      %6383 = vmatpush.msra.mxu0 %v6081
      %6384 = vmatpush.msra.mxu0 %v6077
      %6385 = vmatmul.f32.gmra.mxu0 %v6163
      %v6386 = vpop.f32.mrf.mxu0
      %v6387 = vadd.f32 %v6367, %v6386
      %6388 = vdwg.mxu0
      %6389 = vmatpush.msra.mxu0 0.0
      %6390 = vmatpush.msra.mxu0 0.0
      %6391 = vmatpush.msra.mxu0 0.0
      %6392 = vmatpush.msra.mxu0 0.0
      %6393 = vmatpush.msra.mxu0 0.0
      %6394 = vmatpush.msra.mxu0 0.0
      %6395 = vmatpush.msra.mxu0 0.0
      %6396 = vmatpush.msra.mxu0 0.0
      %6397 = vmatpush.msra.mxu0 0.0
      %6398 = vmatpush.msra.mxu0 0.0
      %6399 = vmatpush.msra.mxu0 0.0
      %6400 = vmatpush.msra.mxu0 0.0
      %6401 = vmatpush.msra.mxu0 %v6153
      %6402 = vmatpush.msra.mxu0 %v6149
      %6403 = vmatpush.msra.mxu0 %v6145
      %6404 = vmatpush.msra.mxu0 %v6141
      %6405 = vmatmul.f32.gmra.mxu0 %v6167
      %v6406 = vpop.f32.mrf.mxu0
      %v6407 = vadd.f32 %v6387, %v6406
      %6408 = vdwg.mxu0
      %v6413 = vrot.slane %v6287, 7
      %v6414 = vrot.slane %v6347, 6
      %v6415 = vrot.slane %v6407, 5
      %v6416 = vsel %vm1001, %v6227, %v6413
      %vm6417 = vcmask 1042434
      %v6418 = vsel %vm6417, %v6414, %v6415
      %v6419 = vsel %vm1006, %v6416, %v6418
      %v6421 = vlaneseq
      %vm6422 = vcmp.ge.s32.totalorder %v6421, 0
      %vm6423 = vcmp.lt.s32.totalorder %v6421, 512
      %vm6424 = vmand %vm6422, %vm6423
      %6425 = vst.msk [vmem:[%s667] sm:$0xf] %vm6424, %v6419
      %vm6427 = vcmp.lt.s32.totalorder %v6421, 256
      %vm6428 = vmand %vm6422, %vm6427
      %6429 = vst.msk [vmem:[#allocation4] ss:$2 sm:$0x3] %vm6428, %v6416
      %v6430 = vrot.slane %v6407, 7
      %v6431 = vsel %vm1001, %v6347, %v6430
      %s6433 = scalar_lea.vmem [#allocation4], 1
      %6434 = vst.msk [vmem:[%s6433] ss:$2 sm:$0x3] %vm6428, %v6431
      %v6435 = vld [vmem:[#allocation4] sm:$0xf]
      %v6436 = vld [vmem:[%s10] sm:$0xff]
      %v6437 = vld [vmem:[%s10 + $0x8] sm:$0xff]
      %v6438 = vld [vmem:[%s10 + $0x10] sm:$0xff]
      %v6439 = vld [vmem:[%s10 + $0x18] sm:$0xff]
      %v6440 = vld [vmem:[%s10 + $0x20] sm:$0xff]
      %v6441 = vld [vmem:[%s10 + $0x28] sm:$0xff]
      %v6442 = vld [vmem:[%s10 + $0x30] sm:$0xff]
      %v6443 = vld [vmem:[%s10 + $0x38] sm:$0xff]
      %v6444 = vld [vmem:[%s10 + $0x40] sm:$0xff]
      %v6445 = vld [vmem:[%s10 + $0x48] sm:$0xff]
      %v6446 = vld [vmem:[%s10 + $0x50] sm:$0xff]
      %v6447 = vld [vmem:[%s10 + $0x58] sm:$0xff]
      %v6448 = vld [vmem:[%s10 + $0x60] sm:$0xff]
      %v6449 = vld [vmem:[%s10 + $0x68] sm:$0xff]
      %v6450 = vld [vmem:[%s10 + $0x70] sm:$0xff]
      %v6451 = vld [vmem:[%s10 + $0x78] sm:$0xff]
      %v6452 = vld [vmem:[%s10 + $0x80] sm:$0xff]
      %v6453 = vld [vmem:[%s10 + $0x88] sm:$0xff]
      %v6454 = vld [vmem:[%s10 + $0x90] sm:$0xff]
      %v6455 = vld [vmem:[%s10 + $0x98] sm:$0xff]
      %v6456 = vld [vmem:[%s10 + $0xa0] sm:$0xff]
      %v6457 = vld [vmem:[%s10 + $0xa8] sm:$0xff]
      %v6458 = vld [vmem:[%s10 + $0xb0] sm:$0xff]
      %v6459 = vld [vmem:[%s10 + $0xb8] sm:$0xff]
      %v6460 = vld [vmem:[%s10 + $0xc0] sm:$0xff]
      %v6461 = vld [vmem:[%s10 + $0xc8] sm:$0xff]
      %v6462 = vld [vmem:[%s10 + $0xd0] sm:$0xff]
      %v6463 = vld [vmem:[%s10 + $0xd8] sm:$0xff]
      %v6464 = vld [vmem:[%s10 + $0xe0] sm:$0xff]
      %v6465 = vld [vmem:[%s10 + $0xe8] sm:$0xff]
      %v6466 = vld [vmem:[%s10 + $0xf0] sm:$0xff]
      %v6467 = vld [vmem:[%s10 + $0xf8] sm:$0xff]
      %v6468 = vld [vmem:[%s10 + $0x100] sm:$0xff]
      %v6469 = vld [vmem:[%s10 + $0x108] sm:$0xff]
      %v6470 = vld [vmem:[%s10 + $0x110] sm:$0xff]
      %v6471 = vld [vmem:[%s10 + $0x118] sm:$0xff]
      %v6472 = vld [vmem:[%s10 + $0x120] sm:$0xff]
      %v6473 = vld [vmem:[%s10 + $0x128] sm:$0xff]
      %v6474 = vld [vmem:[%s10 + $0x130] sm:$0xff]
      %v6475 = vld [vmem:[%s10 + $0x138] sm:$0xff]
      %v6476 = vld [vmem:[%s10 + $0x140] sm:$0xff]
      %v6477 = vld [vmem:[%s10 + $0x148] sm:$0xff]
      %v6478 = vld [vmem:[%s10 + $0x150] sm:$0xff]
      %v6479 = vld [vmem:[%s10 + $0x158] sm:$0xff]
      %v6480 = vld [vmem:[%s10 + $0x160] sm:$0xff]
      %v6481 = vld [vmem:[%s10 + $0x168] sm:$0xff]
      %v6482 = vld [vmem:[%s10 + $0x170] sm:$0xff]
      %v6483 = vld [vmem:[%s10 + $0x178] sm:$0xff]
      %v6484 = vld [vmem:[%s10 + $0x180] sm:$0xff]
      %v6485 = vld [vmem:[%s10 + $0x188] sm:$0xff]
      %v6486 = vld [vmem:[%s10 + $0x190] sm:$0xff]
      %v6487 = vld [vmem:[%s10 + $0x198] sm:$0xff]
      %v6488 = vld [vmem:[%s10 + $0x1a0] sm:$0xff]
      %v6489 = vld [vmem:[%s10 + $0x1a8] sm:$0xff]
      %v6490 = vld [vmem:[%s10 + $0x1b0] sm:$0xff]
      %v6491 = vld [vmem:[%s10 + $0x1b8] sm:$0xff]
      %v6492 = vld [vmem:[%s10 + $0x1c0] sm:$0xff]
      %v6493 = vld [vmem:[%s10 + $0x1c8] sm:$0xff]
      %v6494 = vld [vmem:[%s10 + $0x1d0] sm:$0xff]
      %v6495 = vld [vmem:[%s10 + $0x1d8] sm:$0xff]
      %v6496 = vld [vmem:[%s10 + $0x1e0] sm:$0xff]
      %v6497 = vld [vmem:[%s10 + $0x1e8] sm:$0xff]
      %v6498 = vld [vmem:[%s10 + $0x1f0] sm:$0xff]
      %v6499 = vld [vmem:[%s10 + $0x1f8] sm:$0xff]
      %v6500 = vld [vmem:[%s10 + $0x200] sm:$0xff]
      %v6501 = vld [vmem:[%s10 + $0x208] sm:$0xff]
      %v6502 = vld [vmem:[%s10 + $0x210] sm:$0xff]
      %v6503 = vld [vmem:[%s10 + $0x218] sm:$0xff]
      %v6504 = vld [vmem:[%s10 + $0x220] sm:$0xff]
      %v6505 = vld [vmem:[%s10 + $0x228] sm:$0xff]
      %v6506 = vld [vmem:[%s10 + $0x230] sm:$0xff]
      %v6507 = vld [vmem:[%s10 + $0x238] sm:$0xff]
      %v6508 = vld [vmem:[%s10 + $0x240] sm:$0xff]
      %v6509 = vld [vmem:[%s10 + $0x248] sm:$0xff]
      %v6510 = vld [vmem:[%s10 + $0x250] sm:$0xff]
      %v6511 = vld [vmem:[%s10 + $0x258] sm:$0xff]
      %v6512 = vld [vmem:[%s10 + $0x260] sm:$0xff]
      %v6513 = vld [vmem:[%s10 + $0x268] sm:$0xff]
      %v6514 = vld [vmem:[%s10 + $0x270] sm:$0xff]
      %v6515 = vld [vmem:[%s10 + $0x278] sm:$0xff]
      %v6516 = vld [vmem:[%s10 + $0x280] sm:$0xff]
      %v6517 = vld [vmem:[%s10 + $0x288] sm:$0xff]
      %v6518 = vld [vmem:[%s10 + $0x290] sm:$0xff]
      %v6519 = vld [vmem:[%s10 + $0x298] sm:$0xff]
      %v6520 = vld [vmem:[%s10 + $0x2a0] sm:$0xff]
      %v6521 = vld [vmem:[%s10 + $0x2a8] sm:$0xff]
      %v6522 = vld [vmem:[%s10 + $0x2b0] sm:$0xff]
      %v6523 = vld [vmem:[%s10 + $0x2b8] sm:$0xff]
      %v6524 = vld [vmem:[%s10 + $0x2c0] sm:$0xff]
      %v6525 = vld [vmem:[%s10 + $0x2c8] sm:$0xff]
      %v6526 = vld [vmem:[%s10 + $0x2d0] sm:$0xff]
      %v6527 = vld [vmem:[%s10 + $0x2d8] sm:$0xff]
      %v6528 = vld [vmem:[%s10 + $0x2e0] sm:$0xff]
      %v6529 = vld [vmem:[%s10 + $0x2e8] sm:$0xff]
      %v6530 = vld [vmem:[%s10 + $0x2f0] sm:$0xff]
      %v6531 = vld [vmem:[%s10 + $0x2f8] sm:$0xff]
      %v6532 = vld [vmem:[%s10 + $0x300] sm:$0xff]
      %v6533 = vld [vmem:[%s10 + $0x308] sm:$0xff]
      %v6534 = vld [vmem:[%s10 + $0x310] sm:$0xff]
      %v6535 = vld [vmem:[%s10 + $0x318] sm:$0xff]
      %v6536 = vld [vmem:[%s10 + $0x320] sm:$0xff]
      %v6537 = vld [vmem:[%s10 + $0x328] sm:$0xff]
      %v6538 = vld [vmem:[%s10 + $0x330] sm:$0xff]
      %v6539 = vld [vmem:[%s10 + $0x338] sm:$0xff]
      %v6540 = vld [vmem:[%s10 + $0x340] sm:$0xff]
      %v6541 = vld [vmem:[%s10 + $0x348] sm:$0xff]
      %v6542 = vld [vmem:[%s10 + $0x350] sm:$0xff]
      %v6543 = vld [vmem:[%s10 + $0x358] sm:$0xff]
      %v6544 = vld [vmem:[%s10 + $0x360] sm:$0xff]
      %v6545 = vld [vmem:[%s10 + $0x368] sm:$0xff]
      %v6546 = vld [vmem:[%s10 + $0x370] sm:$0xff]
      %v6547 = vld [vmem:[%s10 + $0x378] sm:$0xff]
      %v6548 = vld [vmem:[%s10 + $0x380] sm:$0xff]
      %v6549 = vld [vmem:[%s10 + $0x388] sm:$0xff]
      %v6550 = vld [vmem:[%s10 + $0x390] sm:$0xff]
      %v6551 = vld [vmem:[%s10 + $0x398] sm:$0xff]
      %v6552 = vld [vmem:[%s10 + $0x3a0] sm:$0xff]
      %v6553 = vld [vmem:[%s10 + $0x3a8] sm:$0xff]
      %v6554 = vld [vmem:[%s10 + $0x3b0] sm:$0xff]
      %v6555 = vld [vmem:[%s10 + $0x3b8] sm:$0xff]
      %v6556 = vld [vmem:[%s10 + $0x3c0] sm:$0xff]
      %v6557 = vld [vmem:[%s10 + $0x3c8] sm:$0xff]
      %v6558 = vld [vmem:[%s10 + $0x3d0] sm:$0xff]
      %v6559 = vld [vmem:[%s10 + $0x3d8] sm:$0xff]
      %v6560 = vld [vmem:[%s10 + $0x3e0] sm:$0xff]
      %v6561 = vld [vmem:[%s10 + $0x3e8] sm:$0xff]
      %v6562 = vld [vmem:[%s10 + $0x3f0] sm:$0xff]
      %v6563 = vld [vmem:[%s10 + $0x3f8] sm:$0xff]
      %6565 = vst [vmem:[#allocation1] ss:$4 sm:$0xff] %v6435
      %v6566 = vld.sshfl [vmem:[#allocation1] sm:$0xff pattern:$0x73625140]
      %v6567 = vld.sshfl [vmem:[#allocation1 + $0x8] sm:$0xff pattern:$0x73625140]
      %6570 = vmatpush.msra.mxu0 %v6496
      %6571 = vmatpush.msra.mxu0 %v6492
      %6572 = vmatpush.msra.mxu0 %v6488
      %6573 = vmatpush.msra.mxu0 %v6484
      %6574 = vmatpush.msra.mxu0 %v6480
      %6575 = vmatpush.msra.mxu0 %v6476
      %6576 = vmatpush.msra.mxu0 %v6472
      %6577 = vmatpush.msra.mxu0 %v6468
      %6578 = vmatpush.msra.mxu0 %v6464
      %6579 = vmatpush.msra.mxu0 %v6460
      %6580 = vmatpush.msra.mxu0 %v6456
      %6581 = vmatpush.msra.mxu0 %v6452
      %6582 = vmatpush.msra.mxu0 %v6448
      %6583 = vmatpush.msra.mxu0 %v6444
      %6584 = vmatpush.msra.mxu0 %v6440
      %6585 = vmatpush.msra.mxu0 %v6436
      %6586 = vmatmul.f32.gmra.mxu0 %v6566
      %v6587 = vpop.f32.mrf.mxu0
      %v6588 = vadd.f32 0.0, %v6587
      %6589 = vdwg.mxu0
      %6590 = vmatpush.msra.mxu0 %v6560
      %6591 = vmatpush.msra.mxu0 %v6556
      %6592 = vmatpush.msra.mxu0 %v6552
      %6593 = vmatpush.msra.mxu0 %v6548
      %6594 = vmatpush.msra.mxu0 %v6544
      %6595 = vmatpush.msra.mxu0 %v6540
      %6596 = vmatpush.msra.mxu0 %v6536
      %6597 = vmatpush.msra.mxu0 %v6532
      %6598 = vmatpush.msra.mxu0 %v6528
      %6599 = vmatpush.msra.mxu0 %v6524
      %6600 = vmatpush.msra.mxu0 %v6520
      %6601 = vmatpush.msra.mxu0 %v6516
      %6602 = vmatpush.msra.mxu0 %v6512
      %6603 = vmatpush.msra.mxu0 %v6508
      %6604 = vmatpush.msra.mxu0 %v6504
      %6605 = vmatpush.msra.mxu0 %v6500
      %6606 = vmatmul.f32.gmra.mxu0 %v6567
      %v6607 = vpop.f32.mrf.mxu0
      %v6608 = vadd.f32 %v6588, %v6607
      %6609 = vdwg.mxu0
      %6610 = vmatpush.msra.mxu0 %v6497
      %6611 = vmatpush.msra.mxu0 %v6493
      %6612 = vmatpush.msra.mxu0 %v6489
      %6613 = vmatpush.msra.mxu0 %v6485
      %6614 = vmatpush.msra.mxu0 %v6481
      %6615 = vmatpush.msra.mxu0 %v6477
      %6616 = vmatpush.msra.mxu0 %v6473
      %6617 = vmatpush.msra.mxu0 %v6469
      %6618 = vmatpush.msra.mxu0 %v6465
      %6619 = vmatpush.msra.mxu0 %v6461
      %6620 = vmatpush.msra.mxu0 %v6457
      %6621 = vmatpush.msra.mxu0 %v6453
      %6622 = vmatpush.msra.mxu0 %v6449
      %6623 = vmatpush.msra.mxu0 %v6445
      %6624 = vmatpush.msra.mxu0 %v6441
      %6625 = vmatpush.msra.mxu0 %v6437
      %6626 = vmatmul.f32.gmra.mxu0 %v6566
      %v6627 = vpop.f32.mrf.mxu0
      %v6628 = vadd.f32 0.0, %v6627
      %6629 = vdwg.mxu0
      %6630 = vmatpush.msra.mxu0 %v6561
      %6631 = vmatpush.msra.mxu0 %v6557
      %6632 = vmatpush.msra.mxu0 %v6553
      %6633 = vmatpush.msra.mxu0 %v6549
      %6634 = vmatpush.msra.mxu0 %v6545
      %6635 = vmatpush.msra.mxu0 %v6541
      %6636 = vmatpush.msra.mxu0 %v6537
      %6637 = vmatpush.msra.mxu0 %v6533
      %6638 = vmatpush.msra.mxu0 %v6529
      %6639 = vmatpush.msra.mxu0 %v6525
      %6640 = vmatpush.msra.mxu0 %v6521
      %6641 = vmatpush.msra.mxu0 %v6517
      %6642 = vmatpush.msra.mxu0 %v6513
      %6643 = vmatpush.msra.mxu0 %v6509
      %6644 = vmatpush.msra.mxu0 %v6505
      %6645 = vmatpush.msra.mxu0 %v6501
      %6646 = vmatmul.f32.gmra.mxu0 %v6567
      %v6647 = vpop.f32.mrf.mxu0
      %v6648 = vadd.f32 %v6628, %v6647
      %6649 = vdwg.mxu0
      %6650 = vmatpush.msra.mxu0 %v6498
      %6651 = vmatpush.msra.mxu0 %v6494
      %6652 = vmatpush.msra.mxu0 %v6490
      %6653 = vmatpush.msra.mxu0 %v6486
      %6654 = vmatpush.msra.mxu0 %v6482
      %6655 = vmatpush.msra.mxu0 %v6478
      %6656 = vmatpush.msra.mxu0 %v6474
      %6657 = vmatpush.msra.mxu0 %v6470
      %6658 = vmatpush.msra.mxu0 %v6466
      %6659 = vmatpush.msra.mxu0 %v6462
      %6660 = vmatpush.msra.mxu0 %v6458
      %6661 = vmatpush.msra.mxu0 %v6454
      %6662 = vmatpush.msra.mxu0 %v6450
      %6663 = vmatpush.msra.mxu0 %v6446
      %6664 = vmatpush.msra.mxu0 %v6442
      %6665 = vmatpush.msra.mxu0 %v6438
      %6666 = vmatmul.f32.gmra.mxu0 %v6566
      %v6667 = vpop.f32.mrf.mxu0
      %v6668 = vadd.f32 0.0, %v6667
      %6669 = vdwg.mxu0
      %6670 = vmatpush.msra.mxu0 %v6562
      %6671 = vmatpush.msra.mxu0 %v6558
      %6672 = vmatpush.msra.mxu0 %v6554
      %6673 = vmatpush.msra.mxu0 %v6550
      %6674 = vmatpush.msra.mxu0 %v6546
      %6675 = vmatpush.msra.mxu0 %v6542
      %6676 = vmatpush.msra.mxu0 %v6538
      %6677 = vmatpush.msra.mxu0 %v6534
      %6678 = vmatpush.msra.mxu0 %v6530
      %6679 = vmatpush.msra.mxu0 %v6526
      %6680 = vmatpush.msra.mxu0 %v6522
      %6681 = vmatpush.msra.mxu0 %v6518
      %6682 = vmatpush.msra.mxu0 %v6514
      %6683 = vmatpush.msra.mxu0 %v6510
      %6684 = vmatpush.msra.mxu0 %v6506
      %6685 = vmatpush.msra.mxu0 %v6502
      %6686 = vmatmul.f32.gmra.mxu0 %v6567
      %v6687 = vpop.f32.mrf.mxu0
      %v6688 = vadd.f32 %v6668, %v6687
      %6689 = vdwg.mxu0
      %6690 = vmatpush.msra.mxu0 %v6499
      %6691 = vmatpush.msra.mxu0 %v6495
      %6692 = vmatpush.msra.mxu0 %v6491
      %6693 = vmatpush.msra.mxu0 %v6487
      %6694 = vmatpush.msra.mxu0 %v6483
      %6695 = vmatpush.msra.mxu0 %v6479
      %6696 = vmatpush.msra.mxu0 %v6475
      %6697 = vmatpush.msra.mxu0 %v6471
      %6698 = vmatpush.msra.mxu0 %v6467
      %6699 = vmatpush.msra.mxu0 %v6463
      %6700 = vmatpush.msra.mxu0 %v6459
      %6701 = vmatpush.msra.mxu0 %v6455
      %6702 = vmatpush.msra.mxu0 %v6451
      %6703 = vmatpush.msra.mxu0 %v6447
      %6704 = vmatpush.msra.mxu0 %v6443
      %6705 = vmatpush.msra.mxu0 %v6439
      %6706 = vmatmul.f32.gmra.mxu0 %v6566
      %v6707 = vpop.f32.mrf.mxu0
      %v6708 = vadd.f32 0.0, %v6707
      %6709 = vdwg.mxu0
      %6710 = vmatpush.msra.mxu0 %v6563
      %6711 = vmatpush.msra.mxu0 %v6559
      %6712 = vmatpush.msra.mxu0 %v6555
      %6713 = vmatpush.msra.mxu0 %v6551
      %6714 = vmatpush.msra.mxu0 %v6547
      %6715 = vmatpush.msra.mxu0 %v6543
      %6716 = vmatpush.msra.mxu0 %v6539
      %6717 = vmatpush.msra.mxu0 %v6535
      %6718 = vmatpush.msra.mxu0 %v6531
      %6719 = vmatpush.msra.mxu0 %v6527
      %6720 = vmatpush.msra.mxu0 %v6523
      %6721 = vmatpush.msra.mxu0 %v6519
      %6722 = vmatpush.msra.mxu0 %v6515
      %6723 = vmatpush.msra.mxu0 %v6511
      %6724 = vmatpush.msra.mxu0 %v6507
      %6725 = vmatpush.msra.mxu0 %v6503
      %6726 = vmatmul.f32.gmra.mxu0 %v6567
      %v6727 = vpop.f32.mrf.mxu0
      %v6728 = vadd.f32 %v6708, %v6727
      %6729 = vdwg.mxu0
      %v6730 = vld [vmem:[%s616] sm:$0xff]
      %v6731 = vld [vmem:[%s621] sm:$0xff]
      %v6736 = vrot.slane %v6648, 6
      %v6737 = vrot.slane %v6688, 4
      %v6738 = vrot.slane %v6728, 2
      %v6739 = vsel %vm1006, %v6608, %v6736
      %vm6740 = vcmask 1045508
      %v6741 = vsel %vm6740, %v6737, %v6738
      %v6742 = vsel %vm1016, %v6739, %v6741
      %v6744 = vmul.f32 %v6731, %v6742
      %v6745 = vadd.f32 %v6730, %v6744
      %v6746 = vld [vmem:[%s11] sm:$0xff]
      %v6747 = vld [vmem:[%s11 + $0x8] sm:$0xff]
      %v6748 = vld [vmem:[%s11 + $0x10] sm:$0xff]
      %v6749 = vld [vmem:[%s11 + $0x18] sm:$0xff]
      %v6750 = vld [vmem:[%s11 + $0x20] sm:$0xff]
      %v6751 = vld [vmem:[%s11 + $0x28] sm:$0xff]
      %v6752 = vld [vmem:[%s11 + $0x30] sm:$0xff]
      %v6753 = vld [vmem:[%s11 + $0x38] sm:$0xff]
      %v6754 = vld [vmem:[%s11 + $0x40] sm:$0xff]
      %v6755 = vld [vmem:[%s11 + $0x48] sm:$0xff]
      %v6756 = vld [vmem:[%s11 + $0x50] sm:$0xff]
      %v6757 = vld [vmem:[%s11 + $0x58] sm:$0xff]
      %v6758 = vld [vmem:[%s11 + $0x60] sm:$0xff]
      %v6759 = vld [vmem:[%s11 + $0x68] sm:$0xff]
      %v6760 = vld [vmem:[%s11 + $0x70] sm:$0xff]
      %v6761 = vld [vmem:[%s11 + $0x78] sm:$0xff]
      %v6762 = vld [vmem:[%s11 + $0x80] sm:$0xff]
      %v6763 = vld [vmem:[%s11 + $0x88] sm:$0xff]
      %v6764 = vld [vmem:[%s11 + $0x90] sm:$0xff]
      %v6765 = vld [vmem:[%s11 + $0x98] sm:$0xff]
      %v6766 = vld [vmem:[%s11 + $0xa0] sm:$0xff]
      %v6767 = vld [vmem:[%s11 + $0xa8] sm:$0xff]
      %v6768 = vld [vmem:[%s11 + $0xb0] sm:$0xff]
      %v6769 = vld [vmem:[%s11 + $0xb8] sm:$0xff]
      %v6770 = vld [vmem:[%s11 + $0xc0] sm:$0xff]
      %v6771 = vld [vmem:[%s11 + $0xc8] sm:$0xff]
      %v6772 = vld [vmem:[%s11 + $0xd0] sm:$0xff]
      %v6773 = vld [vmem:[%s11 + $0xd8] sm:$0xff]
      %v6774 = vld [vmem:[%s11 + $0xe0] sm:$0xff]
      %v6775 = vld [vmem:[%s11 + $0xe8] sm:$0xff]
      %v6776 = vld [vmem:[%s11 + $0xf0] sm:$0xff]
      %v6777 = vld [vmem:[%s11 + $0xf8] sm:$0xff]
      %v6778 = vld [vmem:[%s11 + $0x100] sm:$0xff]
      %v6779 = vld [vmem:[%s11 + $0x108] sm:$0xff]
      %v6780 = vld [vmem:[%s11 + $0x110] sm:$0xff]
      %v6781 = vld [vmem:[%s11 + $0x118] sm:$0xff]
      %v6782 = vld [vmem:[%s11 + $0x120] sm:$0xff]
      %v6783 = vld [vmem:[%s11 + $0x128] sm:$0xff]
      %v6784 = vld [vmem:[%s11 + $0x130] sm:$0xff]
      %v6785 = vld [vmem:[%s11 + $0x138] sm:$0xff]
      %v6786 = vld [vmem:[%s11 + $0x140] sm:$0xff]
      %v6787 = vld [vmem:[%s11 + $0x148] sm:$0xff]
      %v6788 = vld [vmem:[%s11 + $0x150] sm:$0xff]
      %v6789 = vld [vmem:[%s11 + $0x158] sm:$0xff]
      %v6790 = vld [vmem:[%s11 + $0x160] sm:$0xff]
      %v6791 = vld [vmem:[%s11 + $0x168] sm:$0xff]
      %v6792 = vld [vmem:[%s11 + $0x170] sm:$0xff]
      %v6793 = vld [vmem:[%s11 + $0x178] sm:$0xff]
      %v6794 = vld [vmem:[%s11 + $0x180] sm:$0xff]
      %v6795 = vld [vmem:[%s11 + $0x188] sm:$0xff]
      %v6796 = vld [vmem:[%s11 + $0x190] sm:$0xff]
      %v6797 = vld [vmem:[%s11 + $0x198] sm:$0xff]
      %v6798 = vld [vmem:[%s11 + $0x1a0] sm:$0xff]
      %v6799 = vld [vmem:[%s11 + $0x1a8] sm:$0xff]
      %v6800 = vld [vmem:[%s11 + $0x1b0] sm:$0xff]
      %v6801 = vld [vmem:[%s11 + $0x1b8] sm:$0xff]
      %v6802 = vld [vmem:[%s11 + $0x1c0] sm:$0xff]
      %v6803 = vld [vmem:[%s11 + $0x1c8] sm:$0xff]
      %v6804 = vld [vmem:[%s11 + $0x1d0] sm:$0xff]
      %v6805 = vld [vmem:[%s11 + $0x1d8] sm:$0xff]
      %v6806 = vld [vmem:[%s11 + $0x1e0] sm:$0xff]
      %v6807 = vld [vmem:[%s11 + $0x1e8] sm:$0xff]
      %v6808 = vld [vmem:[%s11 + $0x1f0] sm:$0xff]
      %v6809 = vld [vmem:[%s11 + $0x1f8] sm:$0xff]
      %v6810 = vld [vmem:[%s11 + $0x200] sm:$0xff]
      %v6811 = vld [vmem:[%s11 + $0x208] sm:$0xff]
      %v6812 = vld [vmem:[%s11 + $0x210] sm:$0xff]
      %v6813 = vld [vmem:[%s11 + $0x218] sm:$0xff]
      %v6814 = vld [vmem:[%s11 + $0x220] sm:$0xff]
      %v6815 = vld [vmem:[%s11 + $0x228] sm:$0xff]
      %v6816 = vld [vmem:[%s11 + $0x230] sm:$0xff]
      %v6817 = vld [vmem:[%s11 + $0x238] sm:$0xff]
      %v6818 = vld [vmem:[%s11 + $0x240] sm:$0xff]
      %v6819 = vld [vmem:[%s11 + $0x248] sm:$0xff]
      %v6820 = vld [vmem:[%s11 + $0x250] sm:$0xff]
      %v6821 = vld [vmem:[%s11 + $0x258] sm:$0xff]
      %v6822 = vld [vmem:[%s11 + $0x260] sm:$0xff]
      %v6823 = vld [vmem:[%s11 + $0x268] sm:$0xff]
      %v6824 = vld [vmem:[%s11 + $0x270] sm:$0xff]
      %v6825 = vld [vmem:[%s11 + $0x278] sm:$0xff]
      %v6826 = vld [vmem:[%s11 + $0x280] sm:$0xff]
      %v6827 = vld [vmem:[%s11 + $0x288] sm:$0xff]
      %v6828 = vld [vmem:[%s11 + $0x290] sm:$0xff]
      %v6829 = vld [vmem:[%s11 + $0x298] sm:$0xff]
      %v6830 = vld [vmem:[%s11 + $0x2a0] sm:$0xff]
      %v6831 = vld [vmem:[%s11 + $0x2a8] sm:$0xff]
      %v6832 = vld [vmem:[%s11 + $0x2b0] sm:$0xff]
      %v6833 = vld [vmem:[%s11 + $0x2b8] sm:$0xff]
      %v6834 = vld [vmem:[%s11 + $0x2c0] sm:$0xff]
      %v6835 = vld [vmem:[%s11 + $0x2c8] sm:$0xff]
      %v6836 = vld [vmem:[%s11 + $0x2d0] sm:$0xff]
      %v6837 = vld [vmem:[%s11 + $0x2d8] sm:$0xff]
      %v6838 = vld [vmem:[%s11 + $0x2e0] sm:$0xff]
      %v6839 = vld [vmem:[%s11 + $0x2e8] sm:$0xff]
      %v6840 = vld [vmem:[%s11 + $0x2f0] sm:$0xff]
      %v6841 = vld [vmem:[%s11 + $0x2f8] sm:$0xff]
      %v6842 = vld [vmem:[%s11 + $0x300] sm:$0xff]
      %v6843 = vld [vmem:[%s11 + $0x308] sm:$0xff]
      %v6844 = vld [vmem:[%s11 + $0x310] sm:$0xff]
      %v6845 = vld [vmem:[%s11 + $0x318] sm:$0xff]
      %v6846 = vld [vmem:[%s11 + $0x320] sm:$0xff]
      %v6847 = vld [vmem:[%s11 + $0x328] sm:$0xff]
      %v6848 = vld [vmem:[%s11 + $0x330] sm:$0xff]
      %v6849 = vld [vmem:[%s11 + $0x338] sm:$0xff]
      %v6850 = vld [vmem:[%s11 + $0x340] sm:$0xff]
      %v6851 = vld [vmem:[%s11 + $0x348] sm:$0xff]
      %v6852 = vld [vmem:[%s11 + $0x350] sm:$0xff]
      %v6853 = vld [vmem:[%s11 + $0x358] sm:$0xff]
      %v6854 = vld [vmem:[%s11 + $0x360] sm:$0xff]
      %v6855 = vld [vmem:[%s11 + $0x368] sm:$0xff]
      %v6856 = vld [vmem:[%s11 + $0x370] sm:$0xff]
      %v6857 = vld [vmem:[%s11 + $0x378] sm:$0xff]
      %v6858 = vld [vmem:[%s11 + $0x380] sm:$0xff]
      %v6859 = vld [vmem:[%s11 + $0x388] sm:$0xff]
      %v6860 = vld [vmem:[%s11 + $0x390] sm:$0xff]
      %v6861 = vld [vmem:[%s11 + $0x398] sm:$0xff]
      %v6862 = vld [vmem:[%s11 + $0x3a0] sm:$0xff]
      %v6863 = vld [vmem:[%s11 + $0x3a8] sm:$0xff]
      %v6864 = vld [vmem:[%s11 + $0x3b0] sm:$0xff]
      %v6865 = vld [vmem:[%s11 + $0x3b8] sm:$0xff]
      %v6866 = vld [vmem:[%s11 + $0x3c0] sm:$0xff]
      %v6867 = vld [vmem:[%s11 + $0x3c8] sm:$0xff]
      %v6868 = vld [vmem:[%s11 + $0x3d0] sm:$0xff]
      %v6869 = vld [vmem:[%s11 + $0x3d8] sm:$0xff]
      %v6870 = vld [vmem:[%s11 + $0x3e0] sm:$0xff]
      %v6871 = vld [vmem:[%s11 + $0x3e8] sm:$0xff]
      %v6872 = vld [vmem:[%s11 + $0x3f0] sm:$0xff]
      %v6873 = vld [vmem:[%s11 + $0x3f8] sm:$0xff]
      %6875 = vst [vmem:[#allocation1] ss:$4 sm:$0xff] %v6745
      %v6876 = vld.sshfl [vmem:[#allocation1] sm:$0xff pattern:$0x73625140]
      %v6877 = vld.sshfl [vmem:[#allocation1 + $0x8] sm:$0xff pattern:$0x73625140]
      %v6878 = vld.sshfl [vmem:[#allocation1 + $0x10] sm:$0xff pattern:$0x73625140]
      %v6879 = vld.sshfl [vmem:[#allocation1 + $0x18] sm:$0xff pattern:$0x73625140]
      %6884 = vmatpush.msra.mxu0 %v6776
      %6885 = vmatpush.msra.mxu0 %v6774
      %6886 = vmatpush.msra.mxu0 %v6772
      %6887 = vmatpush.msra.mxu0 %v6770
      %6888 = vmatpush.msra.mxu0 %v6768
      %6889 = vmatpush.msra.mxu0 %v6766
      %6890 = vmatpush.msra.mxu0 %v6764
      %6891 = vmatpush.msra.mxu0 %v6762
      %6892 = vmatpush.msra.mxu0 %v6760
      %6893 = vmatpush.msra.mxu0 %v6758
      %6894 = vmatpush.msra.mxu0 %v6756
      %6895 = vmatpush.msra.mxu0 %v6754
      %6896 = vmatpush.msra.mxu0 %v6752
      %6897 = vmatpush.msra.mxu0 %v6750
      %6898 = vmatpush.msra.mxu0 %v6748
      %6899 = vmatpush.msra.mxu0 %v6746
      %6900 = vmatmul.f32.gmra.mxu0 %v6876
      %v6901 = vpop.f32.mrf.mxu0
      %v6902 = vadd.f32 0.0, %v6901
      %6903 = vdwg.mxu0
      %6904 = vmatpush.msra.mxu0 %v6808
      %6905 = vmatpush.msra.mxu0 %v6806
      %6906 = vmatpush.msra.mxu0 %v6804
      %6907 = vmatpush.msra.mxu0 %v6802
      %6908 = vmatpush.msra.mxu0 %v6800
      %6909 = vmatpush.msra.mxu0 %v6798
      %6910 = vmatpush.msra.mxu0 %v6796
      %6911 = vmatpush.msra.mxu0 %v6794
      %6912 = vmatpush.msra.mxu0 %v6792
      %6913 = vmatpush.msra.mxu0 %v6790
      %6914 = vmatpush.msra.mxu0 %v6788
      %6915 = vmatpush.msra.mxu0 %v6786
      %6916 = vmatpush.msra.mxu0 %v6784
      %6917 = vmatpush.msra.mxu0 %v6782
      %6918 = vmatpush.msra.mxu0 %v6780
      %6919 = vmatpush.msra.mxu0 %v6778
      %6920 = vmatmul.f32.gmra.mxu0 %v6877
      %v6921 = vpop.f32.mrf.mxu0
      %v6922 = vadd.f32 %v6902, %v6921
      %6923 = vdwg.mxu0
      %6924 = vmatpush.msra.mxu0 %v6840
      %6925 = vmatpush.msra.mxu0 %v6838
      %6926 = vmatpush.msra.mxu0 %v6836
      %6927 = vmatpush.msra.mxu0 %v6834
      %6928 = vmatpush.msra.mxu0 %v6832
      %6929 = vmatpush.msra.mxu0 %v6830
      %6930 = vmatpush.msra.mxu0 %v6828
      %6931 = vmatpush.msra.mxu0 %v6826
      %6932 = vmatpush.msra.mxu0 %v6824
      %6933 = vmatpush.msra.mxu0 %v6822
      %6934 = vmatpush.msra.mxu0 %v6820
      %6935 = vmatpush.msra.mxu0 %v6818
      %6936 = vmatpush.msra.mxu0 %v6816
      %6937 = vmatpush.msra.mxu0 %v6814
      %6938 = vmatpush.msra.mxu0 %v6812
      %6939 = vmatpush.msra.mxu0 %v6810
      %6940 = vmatmul.f32.gmra.mxu0 %v6878
      %v6941 = vpop.f32.mrf.mxu0
      %v6942 = vadd.f32 %v6922, %v6941
      %6943 = vdwg.mxu0
      %6944 = vmatpush.msra.mxu0 %v6872
      %6945 = vmatpush.msra.mxu0 %v6870
      %6946 = vmatpush.msra.mxu0 %v6868
      %6947 = vmatpush.msra.mxu0 %v6866
      %6948 = vmatpush.msra.mxu0 %v6864
      %6949 = vmatpush.msra.mxu0 %v6862
      %6950 = vmatpush.msra.mxu0 %v6860
      %6951 = vmatpush.msra.mxu0 %v6858
      %6952 = vmatpush.msra.mxu0 %v6856
      %6953 = vmatpush.msra.mxu0 %v6854
      %6954 = vmatpush.msra.mxu0 %v6852
      %6955 = vmatpush.msra.mxu0 %v6850
      %6956 = vmatpush.msra.mxu0 %v6848
      %6957 = vmatpush.msra.mxu0 %v6846
      %6958 = vmatpush.msra.mxu0 %v6844
      %6959 = vmatpush.msra.mxu0 %v6842
      %6960 = vmatmul.f32.gmra.mxu0 %v6879
      %v6961 = vpop.f32.mrf.mxu0
      %v6962 = vadd.f32 %v6942, %v6961
      %6963 = vdwg.mxu0
      %6964 = vmatpush.msra.mxu0 %v6777
      %6965 = vmatpush.msra.mxu0 %v6775
      %6966 = vmatpush.msra.mxu0 %v6773
      %6967 = vmatpush.msra.mxu0 %v6771
      %6968 = vmatpush.msra.mxu0 %v6769
      %6969 = vmatpush.msra.mxu0 %v6767
      %6970 = vmatpush.msra.mxu0 %v6765
      %6971 = vmatpush.msra.mxu0 %v6763
      %6972 = vmatpush.msra.mxu0 %v6761
      %6973 = vmatpush.msra.mxu0 %v6759
      %6974 = vmatpush.msra.mxu0 %v6757
      %6975 = vmatpush.msra.mxu0 %v6755
      %6976 = vmatpush.msra.mxu0 %v6753
      %6977 = vmatpush.msra.mxu0 %v6751
      %6978 = vmatpush.msra.mxu0 %v6749
      %6979 = vmatpush.msra.mxu0 %v6747
      %6980 = vmatmul.f32.gmra.mxu0 %v6876
      %v6981 = vpop.f32.mrf.mxu0
      %v6982 = vadd.f32 0.0, %v6981
      %6983 = vdwg.mxu0
      %6984 = vmatpush.msra.mxu0 %v6809
      %6985 = vmatpush.msra.mxu0 %v6807
      %6986 = vmatpush.msra.mxu0 %v6805
      %6987 = vmatpush.msra.mxu0 %v6803
      %6988 = vmatpush.msra.mxu0 %v6801
      %6989 = vmatpush.msra.mxu0 %v6799
      %6990 = vmatpush.msra.mxu0 %v6797
      %6991 = vmatpush.msra.mxu0 %v6795
      %6992 = vmatpush.msra.mxu0 %v6793
      %6993 = vmatpush.msra.mxu0 %v6791
      %6994 = vmatpush.msra.mxu0 %v6789
      %6995 = vmatpush.msra.mxu0 %v6787
      %6996 = vmatpush.msra.mxu0 %v6785
      %6997 = vmatpush.msra.mxu0 %v6783
      %6998 = vmatpush.msra.mxu0 %v6781
      %6999 = vmatpush.msra.mxu0 %v6779
      %7000 = vmatmul.f32.gmra.mxu0 %v6877
      %v7001 = vpop.f32.mrf.mxu0
      %v7002 = vadd.f32 %v6982, %v7001
      %7003 = vdwg.mxu0
      %7004 = vmatpush.msra.mxu0 %v6841
      %7005 = vmatpush.msra.mxu0 %v6839
      %7006 = vmatpush.msra.mxu0 %v6837
      %7007 = vmatpush.msra.mxu0 %v6835
      %7008 = vmatpush.msra.mxu0 %v6833
      %7009 = vmatpush.msra.mxu0 %v6831
      %7010 = vmatpush.msra.mxu0 %v6829
      %7011 = vmatpush.msra.mxu0 %v6827
      %7012 = vmatpush.msra.mxu0 %v6825
      %7013 = vmatpush.msra.mxu0 %v6823
      %7014 = vmatpush.msra.mxu0 %v6821
      %7015 = vmatpush.msra.mxu0 %v6819
      %7016 = vmatpush.msra.mxu0 %v6817
      %7017 = vmatpush.msra.mxu0 %v6815
      %7018 = vmatpush.msra.mxu0 %v6813
      %7019 = vmatpush.msra.mxu0 %v6811
      %7020 = vmatmul.f32.gmra.mxu0 %v6878
      %v7021 = vpop.f32.mrf.mxu0
      %v7022 = vadd.f32 %v7002, %v7021
      %7023 = vdwg.mxu0
      %7024 = vmatpush.msra.mxu0 %v6873
      %7025 = vmatpush.msra.mxu0 %v6871
      %7026 = vmatpush.msra.mxu0 %v6869
      %7027 = vmatpush.msra.mxu0 %v6867
      %7028 = vmatpush.msra.mxu0 %v6865
      %7029 = vmatpush.msra.mxu0 %v6863
      %7030 = vmatpush.msra.mxu0 %v6861
      %7031 = vmatpush.msra.mxu0 %v6859
      %7032 = vmatpush.msra.mxu0 %v6857
      %7033 = vmatpush.msra.mxu0 %v6855
      %7034 = vmatpush.msra.mxu0 %v6853
      %7035 = vmatpush.msra.mxu0 %v6851
      %7036 = vmatpush.msra.mxu0 %v6849
      %7037 = vmatpush.msra.mxu0 %v6847
      %7038 = vmatpush.msra.mxu0 %v6845
      %7039 = vmatpush.msra.mxu0 %v6843
      %7040 = vmatmul.f32.gmra.mxu0 %v6879
      %v7041 = vpop.f32.mrf.mxu0
      %v7042 = vadd.f32 %v7022, %v7041
      %7043 = vdwg.mxu0
      %v7046 = vrot.slane %v6962, 1
      %v7047 = vrot.slane %v7042, 1
      %v7048 = vrot.slane %v7042, 7
      %v7049 = vrot.slane %v7046, 6
      %v7050 = vrot.slane %v7047, 5
      %v7051 = vsel %vm1001, %v6962, %v7048
      %v7052 = vsel %vm6417, %v7049, %v7050
      %v7053 = vsel %vm1006, %v7051, %v7052
      %7055 = vst.msk [vmem:[#allocation3] sm:$0xf] %vm6424, %v7053
      %7056 = vst.msk [vmem:[%s671] sm:$0xf] %vm6424, %v7053
      %s7057 = smul.u32 4, %s31
      %p7058 = scmp.lt.s32.totalorder %s30, 0
      %s7059 = scalar_select %p7058, %s30, 0
      %p7060 = scmp.lt.s32.totalorder %s7057, 19
      %s7061 = scalar_select %p7060, %s7057, 19
      %s7062 = smul.addr %s7061, 16
      %s7063 = smul.addr %s7059, 320
      %s7064 = sadd.s32 %s7062, %s7063
      %s7065 = smul.addr %s7064, 8
      %s7066 = scalar_lea.vmem %s12, %s7065
      %p7067 = scmp.lt.s32.totalorder %s30, 0
      %s7068 = scalar_select %p7067, %s30, 0
      %p7069 = scmp.lt.s32.totalorder %s31, 4
      %s7070 = scalar_select %p7069, %s31, 4
      %s7071 = smul.addr %s7070, 4
      %s7072 = smul.addr %s7068, 20
      %s7073 = sadd.s32 %s7071, %s7072
      %s7074 = scalar_lea.vmem %s13, %s7073
      %p7075 = scmp.lt.s32.totalorder %s30, 0
      %s7076 = scalar_select %p7075, %s30, 0
      %s7077 = smul.addr %s7076, 4
      %s7078 = scalar_lea.vmem %s14, %s7077
      // Predicated region
      $region73: #{dc_teacher_net.1} parent=67 // pred_check
        %p7079 = pneg %p355
      $region74: #{dc_teacher_net.1} parent=67 // pred_check_branch
        %7081 = sbr.rel (%p7079) target = $region76
      $region75: #{dc_teacher_net.1} parent=67 // pred_region
        %s7082 = smul.u32 4, %s31
      $region76: #{dc_teacher_net.1} parent=67 // pred_fallthru
        _
      // Predicated region
      $region77: #{dc_teacher_net.1} parent=67 // pred_check
        %p7083 = pneg %p383
      $region78: #{dc_teacher_net.1} parent=67 // pred_check_branch
        %7085 = sbr.rel (%p7083) target = $region80
      $region79: #{dc_teacher_net.1} parent=67 // pred_region
        _
      $region80: #{dc_teacher_net.1} parent=67 // pred_fallthru
        _
      // Predicated region
      $region81: #{dc_teacher_net.1} parent=67 // pred_check
        %p7086 = pneg %p409
      $region82: #{dc_teacher_net.1} parent=67 // pred_check_branch
        %7088 = sbr.rel (%p7086) target = $region84
      $region83: #{dc_teacher_net.1} parent=67 // pred_region
        _
      $region84: #{dc_teacher_net.1} parent=67 // pred_fallthru
        _
      // Predicated region
      $region85: #{dc_teacher_net.1} parent=67 // pred_check
        %p7089 = pneg %p409
      $region86: #{dc_teacher_net.1} parent=67 // pred_check_branch
        %7091 = sbr.rel (%p7089) target = $region88
      $region87: #{dc_teacher_net.1} parent=67 // pred_region
        %p7092 = scmp.lt.s32.totalorder %s30, 0
        %s7093 = scalar_select %p7092, %s30, 0
        %s7094 = smul.addr %s7093, 4
        %s7095 = scalar_lea.vmem %s14, %s7094
      $region88: #{dc_teacher_net.1} parent=67 // pred_fallthru
        _
    $region68: #{dc_teacher_net.1} parent=5 // pred_fallthru
      _
    %p7096 = scmp.le.s32.totalorder 2, %s21
    // Predicated region
    $region89: #{dc_teacher_net.1} parent=5 // pred_check
      %p7097 = pneg %p7096
    $region90: #{dc_teacher_net.1} parent=5 // pred_check_branch
      %7099 = sbr.rel (%p7097) target = $region92
    $region91: #{dc_teacher_net.1} parent=5 // pred_region
      %s7100 = ssub.s32 %s21, 2
      // Predicated region
      $region93: #{dc_teacher_net.1} parent=91 // pred_check
        %p7101 = pneg %p361
      $region94: #{dc_teacher_net.1} parent=91 // pred_check_branch
        %7103 = sbr.rel (%p7101) target = $region96
      $region95: #{dc_teacher_net.1} parent=91 // pred_region
        %s7104 = smul.u32 4, %s33
        %p7105 = scmp.lt.s32.totalorder %s32, 0
        %s7106 = scalar_select %p7105, %s32, 0
        %p7107 = scmp.lt.s32.totalorder %s7104, 19
        %s7108 = scalar_select %p7107, %s7104, 19
        %s7109 = smul.addr %s7108, 16
        %s7110 = smul.addr %s7106, 320
        %s7111 = sadd.s32 %s7109, %s7110
        %s7112 = smul.addr %s7111, 8
        %s7113 = scalar_lea.vmem %s12, %s7112
      $region96: #{dc_teacher_net.1} parent=91 // pred_fallthru
        _
      // Predicated region
      $region97: #{dc_teacher_net.1} parent=91 // pred_check
        %p7114 = pneg %p389
      $region98: #{dc_teacher_net.1} parent=91 // pred_check_branch
        %7116 = sbr.rel (%p7114) target = $region100
      $region99: #{dc_teacher_net.1} parent=91 // pred_region
        %p7117 = scmp.lt.s32.totalorder %s32, 0
        %s7118 = scalar_select %p7117, %s32, 0
        %p7119 = scmp.lt.s32.totalorder %s33, 4
        %s7120 = scalar_select %p7119, %s33, 4
        %s7121 = smul.addr %s7120, 4
        %s7122 = smul.addr %s7118, 20
        %s7123 = sadd.s32 %s7121, %s7122
        %s7124 = scalar_lea.vmem %s13, %s7123
      $region100: #{dc_teacher_net.1} parent=91 // pred_fallthru
        _
    $region92: #{dc_teacher_net.1} parent=5 // pred_fallthru
      _
  $region6: #{dc_teacher_net.1} parent=0 // loop_footer
    %s25 = sadd.s32 1, %s21
  $region7: #{dc_teacher_net.1} parent=0 // loop_footer_branch
    %20 = sbr.rel target = $region3
  $region8: #{dc_teacher_net.1} parent=0 // loop_exit
    _

</llo_original>
